<compile_context>
chip_gen: v5e
topology: v5e:2x2
jax: 0.10.0
libtpu: 0.0.40
codegen_flags: <defaults>
</compile_context>

<pallas_src>
import jax
import jax.numpy as jnp
from jax.experimental import pallas as pl
from jax.experimental.pallas import tpu as pltpu

EPS = 1e-5                    # nn.InstanceNorm3d default eps (affine=False)
MXU_DTYPE = jnp.float32       # TODO(synk): jnp.bfloat16 on v6e/v7x (keeps f32 accumulation)


# ---------------------------------------------------------------------------
# Host-side helpers (static, tiny)
# ---------------------------------------------------------------------------
def _interp_matrix(n_in, pad_before, pad_after):
    """(pad + 2*n_in + pad, n_in) linear-interp matrix, align_corners=True,
    with the centered F.pad zero rows folded in."""
    n_out = 2 * n_in
    if n_in == 1:
        u = jnp.ones((n_out, 1), jnp.float32)
    else:
        src = jnp.arange(n_out, dtype=jnp.float32) * ((n_in - 1) / (n_out - 1))
        lo = jnp.clip(jnp.floor(src).astype(jnp.int32), 0, n_in - 2)
        frac = src - lo.astype(jnp.float32)
        rows = jnp.arange(n_out)
        u = jnp.zeros((n_out, n_in), jnp.float32)
        u = u.at[rows, lo].add(1.0 - frac)
        u = u.at[rows, lo + 1].add(frac)
    return jnp.pad(u, ((pad_before, pad_after), (0, 0)))


def _interp_plan(n_in):
    """Static (lo, frac) pairs for the 2*n_in align_corners=True output positions."""
    n_out = 2 * n_in
    plan = []
    for i in range(n_out):
        if n_in == 1:
            plan.append((0, 0.0))
        else:
            src = i * (n_in - 1) / (n_out - 1)
            lo = min(int(src), n_in - 2)
            plan.append((lo, float(src - lo)))
    return tuple(plan)


def _band_weights(w, wp):
    """(3,3,3,C,Co) conv weight -> (3,3,(wp+2)*C, wp*Co) W-banded block-Toeplitz
    matrices so each (kd,kh) tap is one big-K, lane-dense MXU matmul."""
    _, _, _, c, co = w.shape
    wi_n = wp + 2
    wi = jnp.arange(wi_n)[:, None]          # padded input W coordinate
    wo = jnp.arange(wp)[None, :]            # output W coordinate
    kw = wi - wo                            # required tap index
    valid = ((kw >= 0) & (kw <= 2)).astype(w.dtype)
    kwc = jnp.clip(kw, 0, 2)
    wt = w[:, :, kwc, :, :]                 # (3,3,wi,wp,c,co)
    wt = wt * valid[None, None, :, :, None, None]
    wt = jnp.transpose(wt, (0, 1, 2, 4, 3, 5))   # (3,3,wi,c,wp,co)
    return wt.reshape(3, 3, wi_n * c, wp * co)


# ---------------------------------------------------------------------------
# Fused Up_single kernel (per batch item)
# ---------------------------------------------------------------------------
def _make_up_single_kernel(din, hin, dp, hp, wp, cin, cout, d_plan, d_pad):
    f32 = jnp.float32
    wpcin = wp * cin
    wpcout = wp * cout
    m = dp * hp
    n_vox = float(m * wp)

    def kernel(x_ref, uwc_ref, uh_ref, r_ref, rt_ref, wb1_ref, wb2_ref,
               o_ref, ap1_ref, ap2_ref):
        # ---- 1. trilinear upsample (align_corners=True) + F.pad, fused ----------
        # W axis (+channels) as one matmul with kron(Uw, I_Cin); H axis as per-D
        # matmuls with Uh; D axis as a static lerp over whole (Hp, Wp*Cin) blocks.
        x2d = x_ref[0]                                               # (din*hin, win*cin)
        xw = jnp.dot(x2d, uwc_ref[...], preferred_element_type=f32)  # (din*hin, wp*cin)
        uh = uh_ref[...]                                             # (hp, hin)
        hblocks = []
        for d in range(din):
            blk = xw[d * hin:(d + 1) * hin, :]                       # (hin, wp*cin)
            hblocks.append(jnp.dot(uh, blk, preferred_element_type=f32))
        zero_blk = jnp.zeros((hp, wpcin), f32)
        xu_blocks = [zero_blk] * d_pad[0]
        for lo, frac in d_plan:
            if frac == 0.0:
                xu_blocks.append(hblocks[lo])
            else:
                xu_blocks.append(hblocks[lo] * (1.0 - frac) + hblocks[lo + 1] * frac)
        xu_blocks += [zero_blk] * d_pad[1]
        xu = jnp.concatenate(xu_blocks, axis=0)                      # (dp*hp, wp*cin)

        # ---- 2. conv1 halo buffer in VMEM (zero halo; no host jnp.pad) ----------
        ap1_ref[...] = jnp.zeros(ap1_ref.shape, f32)
        ap1_ref[1:dp + 1, 1:hp + 1, cin:(wp + 1) * cin] = xu.reshape(dp, hp, wpcin)

        r = r_ref[...]                    # (wp*cout, cout)  lane -> channel reducer
        rt = rt_ref[...]                  # (cout, wp*cout)  channel -> lane broadcaster

        def conv_in_relu(ap_ref, wb_ref, c_in):
            # 9 big-K lane-dense matmuls: K = (wp+2)*c_in, N = wp*cout.
            acc = jnp.zeros((m, wpcout), f32)
            for kd in range(3):
                for kh in range(3):
                    lhs = ap_ref[kd:kd + dp, kh:kh + hp, :]
                    lhs = lhs.reshape(m, (wp + 2) * c_in).astype(MXU_DTYPE)
                    acc = acc + jnp.dot(lhs, wb_ref[kd, kh].astype(MXU_DTYPE),
                                        preferred_element_type=f32)
            # Conv bias omitted: InstanceNorm(affine=False) mean-subtraction cancels it.
            # One-pass InstanceNorm (biased var) + ReLU, f32 throughout.
            s1 = jnp.sum(acc, axis=0, keepdims=True)                 # (1, wp*cout)
            s2 = jnp.sum(acc * acc, axis=0, keepdims=True)
            mean_c = jnp.dot(s1, r, preferred_element_type=f32) * (1.0 / n_vox)
            var_c = jnp.dot(s2, r, preferred_element_type=f32) * (1.0 / n_vox)
            var_c = var_c - mean_c * mean_c
            inv_c = jax.lax.rsqrt(var_c + EPS)                        # (1, cout)
            mean_l = jnp.dot(mean_c, rt, preferred_element_type=f32)  # (1, wp*cout)
            inv_l = jnp.dot(inv_c, rt, preferred_element_type=f32)
            return jnp.maximum((acc - mean_l) * inv_l, 0.0)           # (m, wp*cout)

        y1 = conv_in_relu(ap1_ref, wb1_ref, cin)

        # intermediate activation stays in VMEM (no HBM round trip)
        ap2_ref[...] = jnp.zeros(ap2_ref.shape, f32)
        ap2_ref[1:dp + 1, 1:hp + 1, cout:(wp + 1) * cout] = y1.reshape(dp, hp, wpcout)

        y2 = conv_in_relu(ap2_ref, wb2_ref, cout)

        # ---- 3. lane-dense store (last dim presented to Pallas is wp*cout) ------
        o_ref[0] = y2.astype(o_ref.dtype)

    return kernel


def up_single_forward(x, x2, params):
    """Up_single.forward in NDHWC layout.

    x:  (N, Din, Hin, Win, T_channels) -- tensor to upsample
    x2: only its spatial shape is used (as in the PyTorch module)
    params: (w1, b1, w2, b2); conv weights in (kd, kh, kw, Cin, Cout) layout.
            Biases are accepted but mathematically dropped (IN cancels them).
    """
    n, din, hin, win, cin = x.shape
    d2, h2, w2sz = x2.shape[1], x2.shape[2], x2.shape[3]
    du, hu, wu = 2 * din, 2 * hin, 2 * win
    dz, dy, dx = d2 - du, h2 - hu, w2sz - wu
    if dz > 0 or dy > 0 or dx > 0:
        # TODO(synk): negative diffs (cropping) in F.pad are not supported here.
        pad_d = (dz // 2, dz - dz // 2)
        pad_h = (dy // 2, dy - dy // 2)
        pad_w = (dx // 2, dx - dx // 2)
    else:
        pad_d = pad_h = pad_w = (0, 0)
    dp, hp, wp = du + sum(pad_d), hu + sum(pad_h), wu + sum(pad_w)

    w1, b1, w2, b2 = params
    cout = w1.shape[-1]

    uw = _interp_matrix(win, *pad_w)                                   # (wp, win)
    uwc = jnp.kron(uw.T, jnp.eye(cin, dtype=jnp.float32))              # (win*cin, wp*cin)
    uh = _interp_matrix(hin, *pad_h)                                   # (hp, hin)
    d_plan = _interp_plan(din)

    wb1 = _band_weights(w1.astype(jnp.float32), wp)                    # (3,3,(wp+2)*cin, wp*cout)
    wb2 = _band_weights(w2.astype(jnp.float32), wp)                    # (3,3,(wp+2)*cout, wp*cout)

    eye_c = jnp.eye(cout, dtype=jnp.float32)
    r = jnp.tile(eye_c, (wp, 1))                                       # (wp*cout, cout)
    rt = jnp.tile(eye_c, (1, wp))                                      # (cout, wp*cout)

    x3 = x.reshape(n, din * hin, win * cin).astype(jnp.float32)        # metadata-only

    kernel = _make_up_single_kernel(din, hin, dp, hp, wp, cin, cout, d_plan, pad_d)

    out = pl.pallas_call(
        kernel,
        out_shape=jax.ShapeDtypeStruct((n, dp * hp, wp * cout), jnp.float32),
        grid=(n,),
        in_specs=[
            pl.BlockSpec((1, din * hin, win * cin), lambda i: (i, 0, 0)),
            pl.BlockSpec((win * cin, wp * cin), lambda i: (0, 0)),
            pl.BlockSpec((hp, hin), lambda i: (0, 0)),
            pl.BlockSpec((wp * cout, cout), lambda i: (0, 0)),
            pl.BlockSpec((cout, wp * cout), lambda i: (0, 0)),
            pl.BlockSpec((3, 3, (wp + 2) * cin, wp * cout), lambda i: (0, 0, 0, 0)),
            pl.BlockSpec((3, 3, (wp + 2) * cout, wp * cout), lambda i: (0, 0, 0, 0)),
        ],
        out_specs=pl.BlockSpec((1, dp * hp, wp * cout), lambda i: (i, 0, 0)),
        scratch_shapes=[
            pltpu.VMEM((dp + 2, hp + 2, (wp + 2) * cin), jnp.float32),
            pltpu.VMEM((dp + 2, hp + 2, (wp + 2) * cout), jnp.float32),
        ],
        compiler_params=pltpu.CompilerParams(
            dimension_semantics=("parallel",),
            vmem_limit_bytes=32 * 1024 * 1024,
        ),
    )(x3, uwc, uh, r, rt, wb1, wb2)

    return out.reshape(n, dp, hp, wp, cout)


# ---------------------------------------------------------------------------
# Pure-JAX reference (for correctness check only)
# ---------------------------------------------------------------------------
def _ref_up_single(x, x2, w1, b1, w2, b2):
    def up2_align_corners(v, axis):
        n_in = v.shape[axis]
        n_out = 2 * n_in
        if n_in == 1:
            return jnp.repeat(v, n_out, axis=axis)
        src = jnp.arange(n_out, dtype=jnp.float32) * ((n_in - 1) / (n_out - 1))
        lo = jnp.clip(jnp.floor(src).astype(jnp.int32), 0, n_in - 2)
        frac = src - lo.astype(jnp.float32)
        a = jnp.take(v, lo, axis=axis)
        b = jnp.take(v, lo + 1, axis=axis)
        shape = [1] * v.ndim
        shape[axis] = n_out
        frac = frac.reshape(shape)
        return a * (1.0 - frac) + b * frac

    y = up2_align_corners(x, 1)
    y = up2_align_corners(y, 2)
    y = up2_align_corners(y, 3)
    dz = x2.shape[1] - y.shape[1]
    dy = x2.shape[2] - y.shape[2]
    dx = x2.shape[3] - y.shape[3]
    if dz > 0 or dy > 0 or dx > 0:
        y = jnp.pad(y, ((0, 0),
                        (dz // 2, dz - dz // 2),
                        (dy // 2, dy - dy // 2),
                        (dx // 2, dx - dx // 2),
                        (0, 0)))

    def conv(v, w, b):
        out = jax.lax.conv_general_dilated(
            v, w, window_strides=(1, 1, 1), padding="SAME",
            dimension_numbers=("NDHWC", "DHWIO", "NDHWC"))
        return out + b

    def inorm_relu(v):
        mean = v.mean(axis=(1, 2, 3), keepdims=True)
        var = ((v - mean) ** 2).mean(axis=(1, 2, 3), keepdims=True)
        return jnp.maximum((v - mean) * jax.lax.rsqrt(var + EPS), 0.0)

    y = inorm_relu(conv(y, w1, b1))
    y = inorm_relu(conv(y, w2, b2))
    return y


if __name__ == "__main__":
    key = jax.random.PRNGKey(0)
    n, t_ch, c_out = 2, 4, 8
    din = hin = win = 8                      # upsampled to 16^3 (matches x2)

    k1, k2, k3, k4, k5, k6 = jax.random.split(key, 6)
    # PyTorch-convention NCDHW inputs, transposed to the kernel's NDHWC layout.
    x_ncdhw = jax.random.normal(k1, (n, t_ch, din, hin, win), jnp.float32)
    x2_ncdhw = jax.random.normal(k2, (n, c_out, 2 * din, 2 * hin, 2 * win), jnp.float32)
    x = jnp.transpose(x_ncdhw, (0, 2, 3, 4, 1))
    x2 = jnp.transpose(x2_ncdhw, (0, 2, 3, 4, 1))

    # Conv3d params (PyTorch weight (Cout,Cin,3,3,3) -> DHWIO (3,3,3,Cin,Cout)).
    w1 = jax.random.normal(k3, (3, 3, 3, t_ch, c_out), jnp.float32) * 0.1
    b1 = jax.random.normal(k4, (c_out,), jnp.float32) * 0.01
    w2 = jax.random.normal(k5, (3, 3, 3, c_out, c_out), jnp.float32) * 0.1
    b2 = jax.random.normal(k6, (c_out,), jnp.float32) * 0.01

    out = up_single_forward(x, x2, (w1, b1, w2, b2))
    out = jax.block_until_ready(out)
    assert out.shape == (n, 2 * din, 2 * hin, 2 * win, c_out), out.shape

    ref = _ref_up_single(x, x2, w1, b1, w2, b2)
    err = float(jnp.max(jnp.abs(out - ref)))
    assert err < 2e-2, f"max abs err too large: {err}"

    print("KERNEL_OK")
</pallas_src>

<mosaic_0001>
module attributes {stable_mosaic.version = 11 : i64} {
  func.func @kernel(%arg0: i32, %arg1: memref<1x64x32xf32, #tpu.memory_space<vmem>>, %arg2: memref<32x64xf32, #tpu.memory_space<vmem>>, %arg3: memref<16x8xf32, #tpu.memory_space<vmem>>, %arg4: memref<128x8xf32, #tpu.memory_space<vmem>>, %arg5: memref<8x128xf32, #tpu.memory_space<vmem>>, %arg6: memref<3x3x72x128xf32, #tpu.memory_space<vmem>>, %arg7: memref<3x3x144x128xf32, #tpu.memory_space<vmem>>, %arg8: memref<1x256x128xf32, #tpu.memory_space<vmem>>, %arg9: memref<18x18x72xf32, #tpu.memory_space<vmem>>, %arg10: memref<18x18x144xf32, #tpu.memory_space<vmem>>) attributes {dimension_semantics = [#tpu.dimension_semantics<parallel>], iteration_bounds = array<i64: 2>, scalar_prefetch = 0 : i64, scratch_operands = 2 : i64, tpu.core_type = #tpu.core_type<tc>, window_params = [{transform_indices = @transform_0, window_bounds = array<i64: 1, 64, 32>}, {pipeline_mode = #tpu.pipeline_mode<synchronous>, transform_indices = @transform_1, window_bounds = array<i64: 32, 64>}, {pipeline_mode = #tpu.pipeline_mode<synchronous>, transform_indices = @transform_2, window_bounds = array<i64: 16, 8>}, {pipeline_mode = #tpu.pipeline_mode<synchronous>, transform_indices = @transform_3, window_bounds = array<i64: 128, 8>}, {pipeline_mode = #tpu.pipeline_mode<synchronous>, transform_indices = @transform_4, window_bounds = array<i64: 8, 128>}, {pipeline_mode = #tpu.pipeline_mode<synchronous>, transform_indices = @transform_5, window_bounds = array<i64: 3, 3, 72, 128>}, {pipeline_mode = #tpu.pipeline_mode<synchronous>, transform_indices = @transform_6, window_bounds = array<i64: 3, 3, 144, 128>}, {transform_indices = @transform_7, window_bounds = array<i64: 1, 256, 128>}]} {
    %c0 = arith.constant 0 : index
    %c0_0 = arith.constant 0 : index
    %c0_1 = arith.constant 0 : index
    %0 = vector.load %arg1[%c0, %c0_0, %c0_1] : memref<1x64x32xf32, #tpu.memory_space<vmem>>, vector<1x64x32xf32>
    %1 = vector.shape_cast %0 : vector<1x64x32xf32> to vector<64x32xf32>
    %c0_2 = arith.constant 0 : index
    %c0_3 = arith.constant 0 : index
    %2 = vector.load %arg2[%c0_2, %c0_3] : memref<32x64xf32, #tpu.memory_space<vmem>>, vector<32x64xf32>
    %cst = arith.constant dense<0.000000e+00> : vector<64x64xf32>
    %3 = tpu.matmul %1, %2, %cst {dimension_numbers = #tpu.dot_dimension_numbers<[1], [0], [0], [1], [0, 0, 1, 1], [], []>} : vector<64x32xf32>, vector<32x64xf32>, vector<64x64xf32> -> vector<64x64xf32>
    %c0_4 = arith.constant 0 : index
    %c0_5 = arith.constant 0 : index
    %4 = vector.load %arg3[%c0_4, %c0_5] : memref<16x8xf32, #tpu.memory_space<vmem>>, vector<16x8xf32>
    %5 = vector.extract_strided_slice %3 {offsets = [0, 0], sizes = [8, 64], strides = [1, 1]} : vector<64x64xf32> to vector<8x64xf32>
    %cst_6 = arith.constant dense<0.000000e+00> : vector<16x64xf32>
    %6 = tpu.matmul %4, %5, %cst_6 {dimension_numbers = #tpu.dot_dimension_numbers<[1], [0], [0], [1], [0, 0, 1, 1], [], []>} : vector<16x8xf32>, vector<8x64xf32>, vector<16x64xf32> -> vector<16x64xf32>
    %7 = vector.extract_strided_slice %3 {offsets = [8, 0], sizes = [8, 64], strides = [1, 1]} : vector<64x64xf32> to vector<8x64xf32>
    %cst_7 = arith.constant dense<0.000000e+00> : vector<16x64xf32>
    %8 = tpu.matmul %4, %7, %cst_7 {dimension_numbers = #tpu.dot_dimension_numbers<[1], [0], [0], [1], [0, 0, 1, 1], [], []>} : vector<16x8xf32>, vector<8x64xf32>, vector<16x64xf32> -> vector<16x64xf32>
    %9 = vector.extract_strided_slice %3 {offsets = [16, 0], sizes = [8, 64], strides = [1, 1]} : vector<64x64xf32> to vector<8x64xf32>
    %cst_8 = arith.constant dense<0.000000e+00> : vector<16x64xf32>
    %10 = tpu.matmul %4, %9, %cst_8 {dimension_numbers = #tpu.dot_dimension_numbers<[1], [0], [0], [1], [0, 0, 1, 1], [], []>} : vector<16x8xf32>, vector<8x64xf32>, vector<16x64xf32> -> vector<16x64xf32>
    %11 = vector.extract_strided_slice %3 {offsets = [24, 0], sizes = [8, 64], strides = [1, 1]} : vector<64x64xf32> to vector<8x64xf32>
    %cst_9 = arith.constant dense<0.000000e+00> : vector<16x64xf32>
    %12 = tpu.matmul %4, %11, %cst_9 {dimension_numbers = #tpu.dot_dimension_numbers<[1], [0], [0], [1], [0, 0, 1, 1], [], []>} : vector<16x8xf32>, vector<8x64xf32>, vector<16x64xf32> -> vector<16x64xf32>
    %13 = vector.extract_strided_slice %3 {offsets = [32, 0], sizes = [8, 64], strides = [1, 1]} : vector<64x64xf32> to vector<8x64xf32>
    %cst_10 = arith.constant dense<0.000000e+00> : vector<16x64xf32>
    %14 = tpu.matmul %4, %13, %cst_10 {dimension_numbers = #tpu.dot_dimension_numbers<[1], [0], [0], [1], [0, 0, 1, 1], [], []>} : vector<16x8xf32>, vector<8x64xf32>, vector<16x64xf32> -> vector<16x64xf32>
    %15 = vector.extract_strided_slice %3 {offsets = [40, 0], sizes = [8, 64], strides = [1, 1]} : vector<64x64xf32> to vector<8x64xf32>
    %cst_11 = arith.constant dense<0.000000e+00> : vector<16x64xf32>
    %16 = tpu.matmul %4, %15, %cst_11 {dimension_numbers = #tpu.dot_dimension_numbers<[1], [0], [0], [1], [0, 0, 1, 1], [], []>} : vector<16x8xf32>, vector<8x64xf32>, vector<16x64xf32> -> vector<16x64xf32>
    %17 = vector.extract_strided_slice %3 {offsets = [48, 0], sizes = [8, 64], strides = [1, 1]} : vector<64x64xf32> to vector<8x64xf32>
    %cst_12 = arith.constant dense<0.000000e+00> : vector<16x64xf32>
    %18 = tpu.matmul %4, %17, %cst_12 {dimension_numbers = #tpu.dot_dimension_numbers<[1], [0], [0], [1], [0, 0, 1, 1], [], []>} : vector<16x8xf32>, vector<8x64xf32>, vector<16x64xf32> -> vector<16x64xf32>
    %19 = vector.extract_strided_slice %3 {offsets = [56, 0], sizes = [8, 64], strides = [1, 1]} : vector<64x64xf32> to vector<8x64xf32>
    %cst_13 = arith.constant dense<0.000000e+00> : vector<16x64xf32>
    %20 = tpu.matmul %4, %19, %cst_13 {dimension_numbers = #tpu.dot_dimension_numbers<[1], [0], [0], [1], [0, 0, 1, 1], [], []>} : vector<16x8xf32>, vector<8x64xf32>, vector<16x64xf32> -> vector<16x64xf32>
    %cst_14 = arith.constant 0.533333361 : f32
    %21 = vector.broadcast %cst_14 : f32 to vector<16x64xf32>
    %22 = arith.mulf %6, %21 : vector<16x64xf32>
    %cst_15 = arith.constant 0.466666669 : f32
    %23 = vector.broadcast %cst_15 : f32 to vector<16x64xf32>
    %24 = arith.mulf %8, %23 : vector<16x64xf32>
    %25 = arith.addf %22, %24 : vector<16x64xf32>
    %cst_16 = arith.constant 0.0666666701 : f32
    %26 = vector.broadcast %cst_16 : f32 to vector<16x64xf32>
    %27 = arith.mulf %6, %26 : vector<16x64xf32>
    %cst_17 = arith.constant 0.933333337 : f32
    %28 = vector.broadcast %cst_17 : f32 to vector<16x64xf32>
    %29 = arith.mulf %8, %28 : vector<16x64xf32>
    %30 = arith.addf %27, %29 : vector<16x64xf32>
    %cst_18 = arith.constant 6.000000e-01 : f32
    %31 = vector.broadcast %cst_18 : f32 to vector<16x64xf32>
    %32 = arith.mulf %8, %31 : vector<16x64xf32>
    %cst_19 = arith.constant 4.000000e-01 : f32
    %33 = vector.broadcast %cst_19 : f32 to vector<16x64xf32>
    %34 = arith.mulf %10, %33 : vector<16x64xf32>
    %35 = arith.addf %32, %34 : vector<16x64xf32>
    %cst_20 = arith.constant 0.13333334 : f32
    %36 = vector.broadcast %cst_20 : f32 to vector<16x64xf32>
    %37 = arith.mulf %8, %36 : vector<16x64xf32>
    %cst_21 = arith.constant 0.866666674 : f32
    %38 = vector.broadcast %cst_21 : f32 to vector<16x64xf32>
    %39 = arith.mulf %10, %38 : vector<16x64xf32>
    %40 = arith.addf %37, %39 : vector<16x64xf32>
    %cst_22 = arith.constant 0.666666686 : f32
    %41 = vector.broadcast %cst_22 : f32 to vector<16x64xf32>
    %42 = arith.mulf %10, %41 : vector<16x64xf32>
    %cst_23 = arith.constant 0.333333343 : f32
    %43 = vector.broadcast %cst_23 : f32 to vector<16x64xf32>
    %44 = arith.mulf %12, %43 : vector<16x64xf32>
    %45 = arith.addf %42, %44 : vector<16x64xf32>
    %cst_24 = arith.constant 2.000000e-01 : f32
    %46 = vector.broadcast %cst_24 : f32 to vector<16x64xf32>
    %47 = arith.mulf %10, %46 : vector<16x64xf32>
    %cst_25 = arith.constant 8.000000e-01 : f32
    %48 = vector.broadcast %cst_25 : f32 to vector<16x64xf32>
    %49 = arith.mulf %12, %48 : vector<16x64xf32>
    %50 = arith.addf %47, %49 : vector<16x64xf32>
    %cst_26 = arith.constant 0.733333349 : f32
    %51 = vector.broadcast %cst_26 : f32 to vector<16x64xf32>
    %52 = arith.mulf %12, %51 : vector<16x64xf32>
    %cst_27 = arith.constant 0.266666681 : f32
    %53 = vector.broadcast %cst_27 : f32 to vector<16x64xf32>
    %54 = arith.mulf %14, %53 : vector<16x64xf32>
    %55 = arith.addf %52, %54 : vector<16x64xf32>
    %cst_28 = arith.constant 0.266666681 : f32
    %56 = vector.broadcast %cst_28 : f32 to vector<16x64xf32>
    %57 = arith.mulf %12, %56 : vector<16x64xf32>
    %cst_29 = arith.constant 0.733333349 : f32
    %58 = vector.broadcast %cst_29 : f32 to vector<16x64xf32>
    %59 = arith.mulf %14, %58 : vector<16x64xf32>
    %60 = arith.addf %57, %59 : vector<16x64xf32>
    %cst_30 = arith.constant 8.000000e-01 : f32
    %61 = vector.broadcast %cst_30 : f32 to vector<16x64xf32>
    %62 = arith.mulf %14, %61 : vector<16x64xf32>
    %cst_31 = arith.constant 2.000000e-01 : f32
    %63 = vector.broadcast %cst_31 : f32 to vector<16x64xf32>
    %64 = arith.mulf %16, %63 : vector<16x64xf32>
    %65 = arith.addf %62, %64 : vector<16x64xf32>
    %cst_32 = arith.constant 0.333333343 : f32
    %66 = vector.broadcast %cst_32 : f32 to vector<16x64xf32>
    %67 = arith.mulf %14, %66 : vector<16x64xf32>
    %cst_33 = arith.constant 0.666666686 : f32
    %68 = vector.broadcast %cst_33 : f32 to vector<16x64xf32>
    %69 = arith.mulf %16, %68 : vector<16x64xf32>
    %70 = arith.addf %67, %69 : vector<16x64xf32>
    %cst_34 = arith.constant 0.866666674 : f32
    %71 = vector.broadcast %cst_34 : f32 to vector<16x64xf32>
    %72 = arith.mulf %16, %71 : vector<16x64xf32>
    %cst_35 = arith.constant 0.13333334 : f32
    %73 = vector.broadcast %cst_35 : f32 to vector<16x64xf32>
    %74 = arith.mulf %18, %73 : vector<16x64xf32>
    %75 = arith.addf %72, %74 : vector<16x64xf32>
    %cst_36 = arith.constant 4.000000e-01 : f32
    %76 = vector.broadcast %cst_36 : f32 to vector<16x64xf32>
    %77 = arith.mulf %16, %76 : vector<16x64xf32>
    %cst_37 = arith.constant 6.000000e-01 : f32
    %78 = vector.broadcast %cst_37 : f32 to vector<16x64xf32>
    %79 = arith.mulf %18, %78 : vector<16x64xf32>
    %80 = arith.addf %77, %79 : vector<16x64xf32>
    %cst_38 = arith.constant 0.933333337 : f32
    %81 = vector.broadcast %cst_38 : f32 to vector<16x64xf32>
    %82 = arith.mulf %18, %81 : vector<16x64xf32>
    %cst_39 = arith.constant 0.0666666701 : f32
    %83 = vector.broadcast %cst_39 : f32 to vector<16x64xf32>
    %84 = arith.mulf %20, %83 : vector<16x64xf32>
    %85 = arith.addf %82, %84 : vector<16x64xf32>
    %cst_40 = arith.constant 0.466666669 : f32
    %86 = vector.broadcast %cst_40 : f32 to vector<16x64xf32>
    %87 = arith.mulf %18, %86 : vector<16x64xf32>
    %cst_41 = arith.constant 0.533333361 : f32
    %88 = vector.broadcast %cst_41 : f32 to vector<16x64xf32>
    %89 = arith.mulf %20, %88 : vector<16x64xf32>
    %90 = arith.addf %87, %89 : vector<16x64xf32>
    %cst_42 = arith.constant 0.000000e+00 : f32
    %91 = vector.broadcast %cst_42 : f32 to vector<16x64xf32>
    %92 = arith.mulf %18, %91 : vector<16x64xf32>
    %cst_43 = arith.constant 1.000000e+00 : f32
    %93 = vector.broadcast %cst_43 : f32 to vector<16x64xf32>
    %94 = arith.mulf %20, %93 : vector<16x64xf32>
    %95 = arith.addf %92, %94 : vector<16x64xf32>
    %96 = tpu.concatenate %6, %25, %30, %35, %40, %45, %50, %55, %60, %65, %70, %75, %80, %85, %90, %95 in 0 : vector<16x64xf32>, vector<16x64xf32>, vector<16x64xf32>, vector<16x64xf32>, vector<16x64xf32>, vector<16x64xf32>, vector<16x64xf32>, vector<16x64xf32>, vector<16x64xf32>, vector<16x64xf32>, vector<16x64xf32>, vector<16x64xf32>, vector<16x64xf32>, vector<16x64xf32>, vector<16x64xf32>, vector<16x64xf32> -> vector<256x64xf32>
    %cst_44 = arith.constant 0.000000e+00 : f32
    %97 = vector.broadcast %cst_44 : f32 to vector<18x18x72xf32>
    %c0_45 = arith.constant 0 : index
    %c0_46 = arith.constant 0 : index
    %c0_47 = arith.constant 0 : index
    %98 = vector.load %arg9[%c0_45, %c0_46, %c0_47] : memref<18x18x72xf32, #tpu.memory_space<vmem>>, vector<18x18x72xf32>
    tpu.vector_store %arg9[%c0_45, %c0_46, %c0_47], %97 {strides = array<i32>} : memref<18x18x72xf32, #tpu.memory_space<vmem>>, vector<18x18x72xf32>,
    %99 = vector.shape_cast %96 : vector<256x64xf32> to vector<16x16x64xf32>
    %c1 = arith.constant 1 : index
    %c1_48 = arith.constant 1 : index
    %c4 = arith.constant 4 : index
    %100 = vector.load %arg9[%c1, %c1_48, %c4] : memref<18x18x72xf32, #tpu.memory_space<vmem>>, vector<16x16x64xf32>
    tpu.vector_store %arg9[%c1, %c1_48, %c4], %99 {strides = array<i32>} : memref<18x18x72xf32, #tpu.memory_space<vmem>>, vector<16x16x64xf32>,
    %c0_49 = arith.constant 0 : index
    %c0_50 = arith.constant 0 : index
    %101 = vector.load %arg4[%c0_49, %c0_50] : memref<128x8xf32, #tpu.memory_space<vmem>>, vector<128x8xf32>
    %c0_51 = arith.constant 0 : index
    %c0_52 = arith.constant 0 : index
    %102 = vector.load %arg5[%c0_51, %c0_52] : memref<8x128xf32, #tpu.memory_space<vmem>>, vector<8x128xf32>
    %cst_53 = arith.constant 0.000000e+00 : f32
    %103 = vector.broadcast %cst_53 : f32 to vector<256x128xf32>
    %c0_54 = arith.constant 0 : index
    %c0_55 = arith.constant 0 : index
    %c0_56 = arith.constant 0 : index
    %104 = vector.load %arg9[%c0_54, %c0_55, %c0_56] : memref<18x18x72xf32, #tpu.memory_space<vmem>>, vector<16x16x72xf32>
    %105 = vector.shape_cast %104 : vector<16x16x72xf32> to vector<256x72xf32>
    %c0_57 = arith.constant 0 : index
    %c0_58 = arith.constant 0 : index
    %c0_59 = arith.constant 0 : index
    %c0_60 = arith.constant 0 : index
    %106 = vector.load %arg6[%c0_57, %c0_58, %c0_59, %c0_60] : memref<3x3x72x128xf32, #tpu.memory_space<vmem>>, vector<1x1x72x128xf32>
    %107 = vector.shape_cast %106 : vector<1x1x72x128xf32> to vector<72x128xf32>
    %cst_61 = arith.constant dense<0.000000e+00> : vector<256x128xf32>
    %108 = tpu.matmul %105, %107, %cst_61 {dimension_numbers = #tpu.dot_dimension_numbers<[1], [0], [0], [1], [0, 0, 1, 1], [], []>} : vector<256x72xf32>, vector<72x128xf32>, vector<256x128xf32> -> vector<256x128xf32>
    %109 = arith.addf %103, %108 : vector<256x128xf32>
    %c0_62 = arith.constant 0 : index
    %c1_63 = arith.constant 1 : index
    %c0_64 = arith.constant 0 : index
    %110 = vector.load %arg9[%c0_62, %c1_63, %c0_64] : memref<18x18x72xf32, #tpu.memory_space<vmem>>, vector<16x16x72xf32>
    %111 = vector.shape_cast %110 : vector<16x16x72xf32> to vector<256x72xf32>
    %c0_65 = arith.constant 0 : index
    %c1_66 = arith.constant 1 : index
    %c0_67 = arith.constant 0 : index
    %c0_68 = arith.constant 0 : index
    %112 = vector.load %arg6[%c0_65, %c1_66, %c0_67, %c0_68] : memref<3x3x72x128xf32, #tpu.memory_space<vmem>>, vector<1x1x72x128xf32>
    %113 = vector.shape_cast %112 : vector<1x1x72x128xf32> to vector<72x128xf32>
    %cst_69 = arith.constant dense<0.000000e+00> : vector<256x128xf32>
    %114 = tpu.matmul %111, %113, %cst_69 {dimension_numbers = #tpu.dot_dimension_numbers<[1], [0], [0], [1], [0, 0, 1, 1], [], []>} : vector<256x72xf32>, vector<72x128xf32>, vector<256x128xf32> -> vector<256x128xf32>
    %115 = arith.addf %109, %114 : vector<256x128xf32>
    %c0_70 = arith.constant 0 : index
    %c2 = arith.constant 2 : index
    %c0_71 = arith.constant 0 : index
    %116 = vector.load %arg9[%c0_70, %c2, %c0_71] : memref<18x18x72xf32, #tpu.memory_space<vmem>>, vector<16x16x72xf32>
    %117 = vector.shape_cast %116 : vector<16x16x72xf32> to vector<256x72xf32>
    %c0_72 = arith.constant 0 : index
    %c2_73 = arith.constant 2 : index
    %c0_74 = arith.constant 0 : index
    %c0_75 = arith.constant 0 : index
    %118 = vector.load %arg6[%c0_72, %c2_73, %c0_74, %c0_75] : memref<3x3x72x128xf32, #tpu.memory_space<vmem>>, vector<1x1x72x128xf32>
    %119 = vector.shape_cast %118 : vector<1x1x72x128xf32> to vector<72x128xf32>
    %cst_76 = arith.constant dense<0.000000e+00> : vector<256x128xf32>
    %120 = tpu.matmul %117, %119, %cst_76 {dimension_numbers = #tpu.dot_dimension_numbers<[1], [0], [0], [1], [0, 0, 1, 1], [], []>} : vector<256x72xf32>, vector<72x128xf32>, vector<256x128xf32> -> vector<256x128xf32>
    %121 = arith.addf %115, %120 : vector<256x128xf32>
    %c1_77 = arith.constant 1 : index
    %c0_78 = arith.constant 0 : index
    %c0_79 = arith.constant 0 : index
    %122 = vector.load %arg9[%c1_77, %c0_78, %c0_79] : memref<18x18x72xf32, #tpu.memory_space<vmem>>, vector<16x16x72xf32>
    %123 = vector.shape_cast %122 : vector<16x16x72xf32> to vector<256x72xf32>
    %c1_80 = arith.constant 1 : index
    %c0_81 = arith.constant 0 : index
    %c0_82 = arith.constant 0 : index
    %c0_83 = arith.constant 0 : index
    %124 = vector.load %arg6[%c1_80, %c0_81, %c0_82, %c0_83] : memref<3x3x72x128xf32, #tpu.memory_space<vmem>>, vector<1x1x72x128xf32>
    %125 = vector.shape_cast %124 : vector<1x1x72x128xf32> to vector<72x128xf32>
    %cst_84 = arith.constant dense<0.000000e+00> : vector<256x128xf32>
    %126 = tpu.matmul %123, %125, %cst_84 {dimension_numbers = #tpu.dot_dimension_numbers<[1], [0], [0], [1], [0, 0, 1, 1], [], []>} : vector<256x72xf32>, vector<72x128xf32>, vector<256x128xf32> -> vector<256x128xf32>
    %127 = arith.addf %121, %126 : vector<256x128xf32>
    %c1_85 = arith.constant 1 : index
    %c1_86 = arith.constant 1 : index
    %c0_87 = arith.constant 0 : index
    %128 = vector.load %arg9[%c1_85, %c1_86, %c0_87] : memref<18x18x72xf32, #tpu.memory_space<vmem>>, vector<16x16x72xf32>
    %129 = vector.shape_cast %128 : vector<16x16x72xf32> to vector<256x72xf32>
    %c1_88 = arith.constant 1 : index
    %c1_89 = arith.constant 1 : index
    %c0_90 = arith.constant 0 : index
    %c0_91 = arith.constant 0 : index
    %130 = vector.load %arg6[%c1_88, %c1_89, %c0_90, %c0_91] : memref<3x3x72x128xf32, #tpu.memory_space<vmem>>, vector<1x1x72x128xf32>
    %131 = vector.shape_cast %130 : vector<1x1x72x128xf32> to vector<72x128xf32>
    %cst_92 = arith.constant dense<0.000000e+00> : vector<256x128xf32>
    %132 = tpu.matmul %129, %131, %cst_92 {dimension_numbers = #tpu.dot_dimension_numbers<[1], [0], [0], [1], [0, 0, 1, 1], [], []>} : vector<256x72xf32>, vector<72x128xf32>, vector<256x128xf32> -> vector<256x128xf32>
    %133 = arith.addf %127, %132 : vector<256x128xf32>
    %c1_93 = arith.constant 1 : index
    %c2_94 = arith.constant 2 : index
    %c0_95 = arith.constant 0 : index
    %134 = vector.load %arg9[%c1_93, %c2_94, %c0_95] : memref<18x18x72xf32, #tpu.memory_space<vmem>>, vector<16x16x72xf32>
    %135 = vector.shape_cast %134 : vector<16x16x72xf32> to vector<256x72xf32>
    %c1_96 = arith.constant 1 : index
    %c2_97 = arith.constant 2 : index
    %c0_98 = arith.constant 0 : index
    %c0_99 = arith.constant 0 : index
    %136 = vector.load %arg6[%c1_96, %c2_97, %c0_98, %c0_99] : memref<3x3x72x128xf32, #tpu.memory_space<vmem>>, vector<1x1x72x128xf32>
    %137 = vector.shape_cast %136 : vector<1x1x72x128xf32> to vector<72x128xf32>
    %cst_100 = arith.constant dense<0.000000e+00> : vector<256x128xf32>
    %138 = tpu.matmul %135, %137, %cst_100 {dimension_numbers = #tpu.dot_dimension_numbers<[1], [0], [0], [1], [0, 0, 1, 1], [], []>} : vector<256x72xf32>, vector<72x128xf32>, vector<256x128xf32> -> vector<256x128xf32>
    %139 = arith.addf %133, %138 : vector<256x128xf32>
    %c2_101 = arith.constant 2 : index
    %c0_102 = arith.constant 0 : index
    %c0_103 = arith.constant 0 : index
    %140 = vector.load %arg9[%c2_101, %c0_102, %c0_103] : memref<18x18x72xf32, #tpu.memory_space<vmem>>, vector<16x16x72xf32>
    %141 = vector.shape_cast %140 : vector<16x16x72xf32> to vector<256x72xf32>
    %c2_104 = arith.constant 2 : index
    %c0_105 = arith.constant 0 : index
    %c0_106 = arith.constant 0 : index
    %c0_107 = arith.constant 0 : index
    %142 = vector.load %arg6[%c2_104, %c0_105, %c0_106, %c0_107] : memref<3x3x72x128xf32, #tpu.memory_space<vmem>>, vector<1x1x72x128xf32>
    %143 = vector.shape_cast %142 : vector<1x1x72x128xf32> to vector<72x128xf32>
    %cst_108 = arith.constant dense<0.000000e+00> : vector<256x128xf32>
    %144 = tpu.matmul %141, %143, %cst_108 {dimension_numbers = #tpu.dot_dimension_numbers<[1], [0], [0], [1], [0, 0, 1, 1], [], []>} : vector<256x72xf32>, vector<72x128xf32>, vector<256x128xf32> -> vector<256x128xf32>
    %145 = arith.addf %139, %144 : vector<256x128xf32>
    %c2_109 = arith.constant 2 : index
    %c1_110 = arith.constant 1 : index
    %c0_111 = arith.constant 0 : index
    %146 = vector.load %arg9[%c2_109, %c1_110, %c0_111] : memref<18x18x72xf32, #tpu.memory_space<vmem>>, vector<16x16x72xf32>
    %147 = vector.shape_cast %146 : vector<16x16x72xf32> to vector<256x72xf32>
    %c2_112 = arith.constant 2 : index
    %c1_113 = arith.constant 1 : index
    %c0_114 = arith.constant 0 : index
    %c0_115 = arith.constant 0 : index
    %148 = vector.load %arg6[%c2_112, %c1_113, %c0_114, %c0_115] : memref<3x3x72x128xf32, #tpu.memory_space<vmem>>, vector<1x1x72x128xf32>
    %149 = vector.shape_cast %148 : vector<1x1x72x128xf32> to vector<72x128xf32>
    %cst_116 = arith.constant dense<0.000000e+00> : vector<256x128xf32>
    %150 = tpu.matmul %147, %149, %cst_116 {dimension_numbers = #tpu.dot_dimension_numbers<[1], [0], [0], [1], [0, 0, 1, 1], [], []>} : vector<256x72xf32>, vector<72x128xf32>, vector<256x128xf32> -> vector<256x128xf32>
    %151 = arith.addf %145, %150 : vector<256x128xf32>
    %c2_117 = arith.constant 2 : index
    %c2_118 = arith.constant 2 : index
    %c0_119 = arith.constant 0 : index
    %152 = vector.load %arg9[%c2_117, %c2_118, %c0_119] : memref<18x18x72xf32, #tpu.memory_space<vmem>>, vector<16x16x72xf32>
    %153 = vector.shape_cast %152 : vector<16x16x72xf32> to vector<256x72xf32>
    %c2_120 = arith.constant 2 : index
    %c2_121 = arith.constant 2 : index
    %c0_122 = arith.constant 0 : index
    %c0_123 = arith.constant 0 : index
    %154 = vector.load %arg6[%c2_120, %c2_121, %c0_122, %c0_123] : memref<3x3x72x128xf32, #tpu.memory_space<vmem>>, vector<1x1x72x128xf32>
    %155 = vector.shape_cast %154 : vector<1x1x72x128xf32> to vector<72x128xf32>
    %cst_124 = arith.constant dense<0.000000e+00> : vector<256x128xf32>
    %156 = tpu.matmul %153, %155, %cst_124 {dimension_numbers = #tpu.dot_dimension_numbers<[1], [0], [0], [1], [0, 0, 1, 1], [], []>} : vector<256x72xf32>, vector<72x128xf32>, vector<256x128xf32> -> vector<256x128xf32>
    %157 = arith.addf %151, %156 : vector<256x128xf32>
    %cst_125 = arith.constant dense<0.000000e+00> : vector<128xf32>
    %158 = vector.multi_reduction <add>, %157, %cst_125 [0] : vector<256x128xf32> to vector<128xf32>
    %159 = vector.shape_cast %158 : vector<128xf32> to vector<1x128xf32>
    %160 = arith.mulf %157, %157 : vector<256x128xf32>
    %cst_126 = arith.constant dense<0.000000e+00> : vector<128xf32>
    %161 = vector.multi_reduction <add>, %160, %cst_126 [0] : vector<256x128xf32> to vector<128xf32>
    %162 = vector.shape_cast %161 : vector<128xf32> to vector<1x128xf32>
    %cst_127 = arith.constant dense<0.000000e+00> : vector<1x8xf32>
    %163 = tpu.matmul %159, %101, %cst_127 {dimension_numbers = #tpu.dot_dimension_numbers<[1], [0], [0], [1], [0, 0, 1, 1], [], []>} : vector<1x128xf32>, vector<128x8xf32>, vector<1x8xf32> -> vector<1x8xf32>
    %cst_128 = arith.constant 2.44140625E-4 : f32
    %164 = vector.broadcast %cst_128 : f32 to vector<1x8xf32>
    %165 = arith.mulf %163, %164 : vector<1x8xf32>
    %cst_129 = arith.constant dense<0.000000e+00> : vector<1x8xf32>
    %166 = tpu.matmul %162, %101, %cst_129 {dimension_numbers = #tpu.dot_dimension_numbers<[1], [0], [0], [1], [0, 0, 1, 1], [], []>} : vector<1x128xf32>, vector<128x8xf32>, vector<1x8xf32> -> vector<1x8xf32>
    %cst_130 = arith.constant 2.44140625E-4 : f32
    %167 = vector.broadcast %cst_130 : f32 to vector<1x8xf32>
    %168 = arith.mulf %166, %167 : vector<1x8xf32>
    %169 = arith.mulf %165, %165 : vector<1x8xf32>
    %170 = arith.subf %168, %169 : vector<1x8xf32>
    %cst_131 = arith.constant 9.99999974E-6 : f32
    %171 = vector.broadcast %cst_131 : f32 to vector<1x8xf32>
    %172 = arith.addf %170, %171 : vector<1x8xf32>
    %173 = math.rsqrt %172 : vector<1x8xf32>
    %cst_132 = arith.constant dense<0.000000e+00> : vector<1x128xf32>
    %174 = tpu.matmul %165, %102, %cst_132 {dimension_numbers = #tpu.dot_dimension_numbers<[1], [0], [0], [1], [0, 0, 1, 1], [], []>} : vector<1x8xf32>, vector<8x128xf32>, vector<1x128xf32> -> vector<1x128xf32>
    %cst_133 = arith.constant dense<0.000000e+00> : vector<1x128xf32>
    %175 = tpu.matmul %173, %102, %cst_133 {dimension_numbers = #tpu.dot_dimension_numbers<[1], [0], [0], [1], [0, 0, 1, 1], [], []>} : vector<1x8xf32>, vector<8x128xf32>, vector<1x128xf32> -> vector<1x128xf32>
    %176 = vector.broadcast %174 : vector<1x128xf32> to vector<256x128xf32>
    %177 = arith.subf %157, %176 : vector<256x128xf32>
    %178 = vector.broadcast %175 : vector<1x128xf32> to vector<256x128xf32>
    %179 = arith.mulf %177, %178 : vector<256x128xf32>
    %cst_134 = arith.constant 0.000000e+00 : f32
    %180 = vector.broadcast %cst_134 : f32 to vector<256x128xf32>
    %181 = arith.maximumf %179, %180 : vector<256x128xf32>
    %cst_135 = arith.constant 0.000000e+00 : f32
    %182 = vector.broadcast %cst_135 : f32 to vector<18x18x144xf32>
    %c0_136 = arith.constant 0 : index
    %c0_137 = arith.constant 0 : index
    %c0_138 = arith.constant 0 : index
    %183 = vector.load %arg10[%c0_136, %c0_137, %c0_138] : memref<18x18x144xf32, #tpu.memory_space<vmem>>, vector<18x18x144xf32>
    tpu.vector_store %arg10[%c0_136, %c0_137, %c0_138], %182 {strides = array<i32>} : memref<18x18x144xf32, #tpu.memory_space<vmem>>, vector<18x18x144xf32>,
    %184 = vector.shape_cast %181 : vector<256x128xf32> to vector<16x16x128xf32>
    %c1_139 = arith.constant 1 : index
    %c1_140 = arith.constant 1 : index
    %c8 = arith.constant 8 : index
    %185 = vector.load %arg10[%c1_139, %c1_140, %c8] : memref<18x18x144xf32, #tpu.memory_space<vmem>>, vector<16x16x128xf32>
    tpu.vector_store %arg10[%c1_139, %c1_140, %c8], %184 {strides = array<i32>} : memref<18x18x144xf32, #tpu.memory_space<vmem>>, vector<16x16x128xf32>,
    %cst_141 = arith.constant 0.000000e+00 : f32
    %186 = vector.broadcast %cst_141 : f32 to vector<256x128xf32>
    %c0_142 = arith.constant 0 : index
    %c0_143 = arith.constant 0 : index
    %c0_144 = arith.constant 0 : index
    %187 = vector.load %arg10[%c0_142, %c0_143, %c0_144] : memref<18x18x144xf32, #tpu.memory_space<vmem>>, vector<16x16x144xf32>
    %188 = vector.shape_cast %187 : vector<16x16x144xf32> to vector<256x144xf32>
    %c0_145 = arith.constant 0 : index
    %c0_146 = arith.constant 0 : index
    %c0_147 = arith.constant 0 : index
    %c0_148 = arith.constant 0 : index
    %189 = vector.load %arg7[%c0_145, %c0_146, %c0_147, %c0_148] : memref<3x3x144x128xf32, #tpu.memory_space<vmem>>, vector<1x1x144x128xf32>
    %190 = vector.shape_cast %189 : vector<1x1x144x128xf32> to vector<144x128xf32>
    %cst_149 = arith.constant dense<0.000000e+00> : vector<256x128xf32>
    %191 = tpu.matmul %188, %190, %cst_149 {dimension_numbers = #tpu.dot_dimension_numbers<[1], [0], [0], [1], [0, 0, 1, 1], [], []>} : vector<256x144xf32>, vector<144x128xf32>, vector<256x128xf32> -> vector<256x128xf32>
    %192 = arith.addf %186, %191 : vector<256x128xf32>
    %c0_150 = arith.constant 0 : index
    %c1_151 = arith.constant 1 : index
    %c0_152 = arith.constant 0 : index
    %193 = vector.load %arg10[%c0_150, %c1_151, %c0_152] : memref<18x18x144xf32, #tpu.memory_space<vmem>>, vector<16x16x144xf32>
    %194 = vector.shape_cast %193 : vector<16x16x144xf32> to vector<256x144xf32>
    %c0_153 = arith.constant 0 : index
    %c1_154 = arith.constant 1 : index
    %c0_155 = arith.constant 0 : index
    %c0_156 = arith.constant 0 : index
    %195 = vector.load %arg7[%c0_153, %c1_154, %c0_155, %c0_156] : memref<3x3x144x128xf32, #tpu.memory_space<vmem>>, vector<1x1x144x128xf32>
    %196 = vector.shape_cast %195 : vector<1x1x144x128xf32> to vector<144x128xf32>
    %cst_157 = arith.constant dense<0.000000e+00> : vector<256x128xf32>
    %197 = tpu.matmul %194, %196, %cst_157 {dimension_numbers = #tpu.dot_dimension_numbers<[1], [0], [0], [1], [0, 0, 1, 1], [], []>} : vector<256x144xf32>, vector<144x128xf32>, vector<256x128xf32> -> vector<256x128xf32>
    %198 = arith.addf %192, %197 : vector<256x128xf32>
    %c0_158 = arith.constant 0 : index
    %c2_159 = arith.constant 2 : index
    %c0_160 = arith.constant 0 : index
    %199 = vector.load %arg10[%c0_158, %c2_159, %c0_160] : memref<18x18x144xf32, #tpu.memory_space<vmem>>, vector<16x16x144xf32>
    %200 = vector.shape_cast %199 : vector<16x16x144xf32> to vector<256x144xf32>
    %c0_161 = arith.constant 0 : index
    %c2_162 = arith.constant 2 : index
    %c0_163 = arith.constant 0 : index
    %c0_164 = arith.constant 0 : index
    %201 = vector.load %arg7[%c0_161, %c2_162, %c0_163, %c0_164] : memref<3x3x144x128xf32, #tpu.memory_space<vmem>>, vector<1x1x144x128xf32>
    %202 = vector.shape_cast %201 : vector<1x1x144x128xf32> to vector<144x128xf32>
    %cst_165 = arith.constant dense<0.000000e+00> : vector<256x128xf32>
    %203 = tpu.matmul %200, %202, %cst_165 {dimension_numbers = #tpu.dot_dimension_numbers<[1], [0], [0], [1], [0, 0, 1, 1], [], []>} : vector<256x144xf32>, vector<144x128xf32>, vector<256x128xf32> -> vector<256x128xf32>
    %204 = arith.addf %198, %203 : vector<256x128xf32>
    %c1_166 = arith.constant 1 : index
    %c0_167 = arith.constant 0 : index
    %c0_168 = arith.constant 0 : index
    %205 = vector.load %arg10[%c1_166, %c0_167, %c0_168] : memref<18x18x144xf32, #tpu.memory_space<vmem>>, vector<16x16x144xf32>
    %206 = vector.shape_cast %205 : vector<16x16x144xf32> to vector<256x144xf32>
    %c1_169 = arith.constant 1 : index
    %c0_170 = arith.constant 0 : index
    %c0_171 = arith.constant 0 : index
    %c0_172 = arith.constant 0 : index
    %207 = vector.load %arg7[%c1_169, %c0_170, %c0_171, %c0_172] : memref<3x3x144x128xf32, #tpu.memory_space<vmem>>, vector<1x1x144x128xf32>
    %208 = vector.shape_cast %207 : vector<1x1x144x128xf32> to vector<144x128xf32>
    %cst_173 = arith.constant dense<0.000000e+00> : vector<256x128xf32>
    %209 = tpu.matmul %206, %208, %cst_173 {dimension_numbers = #tpu.dot_dimension_numbers<[1], [0], [0], [1], [0, 0, 1, 1], [], []>} : vector<256x144xf32>, vector<144x128xf32>, vector<256x128xf32> -> vector<256x128xf32>
    %210 = arith.addf %204, %209 : vector<256x128xf32>
    %c1_174 = arith.constant 1 : index
    %c1_175 = arith.constant 1 : index
    %c0_176 = arith.constant 0 : index
    %211 = vector.load %arg10[%c1_174, %c1_175, %c0_176] : memref<18x18x144xf32, #tpu.memory_space<vmem>>, vector<16x16x144xf32>
    %212 = vector.shape_cast %211 : vector<16x16x144xf32> to vector<256x144xf32>
    %c1_177 = arith.constant 1 : index
    %c1_178 = arith.constant 1 : index
    %c0_179 = arith.constant 0 : index
    %c0_180 = arith.constant 0 : index
    %213 = vector.load %arg7[%c1_177, %c1_178, %c0_179, %c0_180] : memref<3x3x144x128xf32, #tpu.memory_space<vmem>>, vector<1x1x144x128xf32>
    %214 = vector.shape_cast %213 : vector<1x1x144x128xf32> to vector<144x128xf32>
    %cst_181 = arith.constant dense<0.000000e+00> : vector<256x128xf32>
    %215 = tpu.matmul %212, %214, %cst_181 {dimension_numbers = #tpu.dot_dimension_numbers<[1], [0], [0], [1], [0, 0, 1, 1], [], []>} : vector<256x144xf32>, vector<144x128xf32>, vector<256x128xf32> -> vector<256x128xf32>
    %216 = arith.addf %210, %215 : vector<256x128xf32>
    %c1_182 = arith.constant 1 : index
    %c2_183 = arith.constant 2 : index
    %c0_184 = arith.constant 0 : index
    %217 = vector.load %arg10[%c1_182, %c2_183, %c0_184] : memref<18x18x144xf32, #tpu.memory_space<vmem>>, vector<16x16x144xf32>
    %218 = vector.shape_cast %217 : vector<16x16x144xf32> to vector<256x144xf32>
    %c1_185 = arith.constant 1 : index
    %c2_186 = arith.constant 2 : index
    %c0_187 = arith.constant 0 : index
    %c0_188 = arith.constant 0 : index
    %219 = vector.load %arg7[%c1_185, %c2_186, %c0_187, %c0_188] : memref<3x3x144x128xf32, #tpu.memory_space<vmem>>, vector<1x1x144x128xf32>
    %220 = vector.shape_cast %219 : vector<1x1x144x128xf32> to vector<144x128xf32>
    %cst_189 = arith.constant dense<0.000000e+00> : vector<256x128xf32>
    %221 = tpu.matmul %218, %220, %cst_189 {dimension_numbers = #tpu.dot_dimension_numbers<[1], [0], [0], [1], [0, 0, 1, 1], [], []>} : vector<256x144xf32>, vector<144x128xf32>, vector<256x128xf32> -> vector<256x128xf32>
    %222 = arith.addf %216, %221 : vector<256x128xf32>
    %c2_190 = arith.constant 2 : index
    %c0_191 = arith.constant 0 : index
    %c0_192 = arith.constant 0 : index
    %223 = vector.load %arg10[%c2_190, %c0_191, %c0_192] : memref<18x18x144xf32, #tpu.memory_space<vmem>>, vector<16x16x144xf32>
    %224 = vector.shape_cast %223 : vector<16x16x144xf32> to vector<256x144xf32>
    %c2_193 = arith.constant 2 : index
    %c0_194 = arith.constant 0 : index
    %c0_195 = arith.constant 0 : index
    %c0_196 = arith.constant 0 : index
    %225 = vector.load %arg7[%c2_193, %c0_194, %c0_195, %c0_196] : memref<3x3x144x128xf32, #tpu.memory_space<vmem>>, vector<1x1x144x128xf32>
    %226 = vector.shape_cast %225 : vector<1x1x144x128xf32> to vector<144x128xf32>
    %cst_197 = arith.constant dense<0.000000e+00> : vector<256x128xf32>
    %227 = tpu.matmul %224, %226, %cst_197 {dimension_numbers = #tpu.dot_dimension_numbers<[1], [0], [0], [1], [0, 0, 1, 1], [], []>} : vector<256x144xf32>, vector<144x128xf32>, vector<256x128xf32> -> vector<256x128xf32>
    %228 = arith.addf %222, %227 : vector<256x128xf32>
    %c2_198 = arith.constant 2 : index
    %c1_199 = arith.constant 1 : index
    %c0_200 = arith.constant 0 : index
    %229 = vector.load %arg10[%c2_198, %c1_199, %c0_200] : memref<18x18x144xf32, #tpu.memory_space<vmem>>, vector<16x16x144xf32>
    %230 = vector.shape_cast %229 : vector<16x16x144xf32> to vector<256x144xf32>
    %c2_201 = arith.constant 2 : index
    %c1_202 = arith.constant 1 : index
    %c0_203 = arith.constant 0 : index
    %c0_204 = arith.constant 0 : index
    %231 = vector.load %arg7[%c2_201, %c1_202, %c0_203, %c0_204] : memref<3x3x144x128xf32, #tpu.memory_space<vmem>>, vector<1x1x144x128xf32>
    %232 = vector.shape_cast %231 : vector<1x1x144x128xf32> to vector<144x128xf32>
    %cst_205 = arith.constant dense<0.000000e+00> : vector<256x128xf32>
    %233 = tpu.matmul %230, %232, %cst_205 {dimension_numbers = #tpu.dot_dimension_numbers<[1], [0], [0], [1], [0, 0, 1, 1], [], []>} : vector<256x144xf32>, vector<144x128xf32>, vector<256x128xf32> -> vector<256x128xf32>
    %234 = arith.addf %228, %233 : vector<256x128xf32>
    %c2_206 = arith.constant 2 : index
    %c2_207 = arith.constant 2 : index
    %c0_208 = arith.constant 0 : index
    %235 = vector.load %arg10[%c2_206, %c2_207, %c0_208] : memref<18x18x144xf32, #tpu.memory_space<vmem>>, vector<16x16x144xf32>
    %236 = vector.shape_cast %235 : vector<16x16x144xf32> to vector<256x144xf32>
    %c2_209 = arith.constant 2 : index
    %c2_210 = arith.constant 2 : index
    %c0_211 = arith.constant 0 : index
    %c0_212 = arith.constant 0 : index
    %237 = vector.load %arg7[%c2_209, %c2_210, %c0_211, %c0_212] : memref<3x3x144x128xf32, #tpu.memory_space<vmem>>, vector<1x1x144x128xf32>
    %238 = vector.shape_cast %237 : vector<1x1x144x128xf32> to vector<144x128xf32>
    %cst_213 = arith.constant dense<0.000000e+00> : vector<256x128xf32>
    %239 = tpu.matmul %236, %238, %cst_213 {dimension_numbers = #tpu.dot_dimension_numbers<[1], [0], [0], [1], [0, 0, 1, 1], [], []>} : vector<256x144xf32>, vector<144x128xf32>, vector<256x128xf32> -> vector<256x128xf32>
    %240 = arith.addf %234, %239 : vector<256x128xf32>
    %cst_214 = arith.constant dense<0.000000e+00> : vector<128xf32>
    %241 = vector.multi_reduction <add>, %240, %cst_214 [0] : vector<256x128xf32> to vector<128xf32>
    %242 = vector.shape_cast %241 : vector<128xf32> to vector<1x128xf32>
    %243 = arith.mulf %240, %240 : vector<256x128xf32>
    %cst_215 = arith.constant dense<0.000000e+00> : vector<128xf32>
    %244 = vector.multi_reduction <add>, %243, %cst_215 [0] : vector<256x128xf32> to vector<128xf32>
    %245 = vector.shape_cast %244 : vector<128xf32> to vector<1x128xf32>
    %cst_216 = arith.constant dense<0.000000e+00> : vector<1x8xf32>
    %246 = tpu.matmul %242, %101, %cst_216 {dimension_numbers = #tpu.dot_dimension_numbers<[1], [0], [0], [1], [0, 0, 1, 1], [], []>} : vector<1x128xf32>, vector<128x8xf32>, vector<1x8xf32> -> vector<1x8xf32>
    %cst_217 = arith.constant 2.44140625E-4 : f32
    %247 = vector.broadcast %cst_217 : f32 to vector<1x8xf32>
    %248 = arith.mulf %246, %247 : vector<1x8xf32>
    %cst_218 = arith.constant dense<0.000000e+00> : vector<1x8xf32>
    %249 = tpu.matmul %245, %101, %cst_218 {dimension_numbers = #tpu.dot_dimension_numbers<[1], [0], [0], [1], [0, 0, 1, 1], [], []>} : vector<1x128xf32>, vector<128x8xf32>, vector<1x8xf32> -> vector<1x8xf32>
    %cst_219 = arith.constant 2.44140625E-4 : f32
    %250 = vector.broadcast %cst_219 : f32 to vector<1x8xf32>
    %251 = arith.mulf %249, %250 : vector<1x8xf32>
    %252 = arith.mulf %248, %248 : vector<1x8xf32>
    %253 = arith.subf %251, %252 : vector<1x8xf32>
    %cst_220 = arith.constant 9.99999974E-6 : f32
    %254 = vector.broadcast %cst_220 : f32 to vector<1x8xf32>
    %255 = arith.addf %253, %254 : vector<1x8xf32>
    %256 = math.rsqrt %255 : vector<1x8xf32>
    %cst_221 = arith.constant dense<0.000000e+00> : vector<1x128xf32>
    %257 = tpu.matmul %248, %102, %cst_221 {dimension_numbers = #tpu.dot_dimension_numbers<[1], [0], [0], [1], [0, 0, 1, 1], [], []>} : vector<1x8xf32>, vector<8x128xf32>, vector<1x128xf32> -> vector<1x128xf32>
    %cst_222 = arith.constant dense<0.000000e+00> : vector<1x128xf32>
    %258 = tpu.matmul %256, %102, %cst_222 {dimension_numbers = #tpu.dot_dimension_numbers<[1], [0], [0], [1], [0, 0, 1, 1], [], []>} : vector<1x8xf32>, vector<8x128xf32>, vector<1x128xf32> -> vector<1x128xf32>
    %259 = vector.broadcast %257 : vector<1x128xf32> to vector<256x128xf32>
    %260 = arith.subf %240, %259 : vector<256x128xf32>
    %261 = vector.broadcast %258 : vector<1x128xf32> to vector<256x128xf32>
    %262 = arith.mulf %260, %261 : vector<256x128xf32>
    %cst_223 = arith.constant 0.000000e+00 : f32
    %263 = vector.broadcast %cst_223 : f32 to vector<256x128xf32>
    %264 = arith.maximumf %262, %263 : vector<256x128xf32>
    %c0_224 = arith.constant 0 : index
    %c0_225 = arith.constant 0 : index
    %c0_226 = arith.constant 0 : index
    %265 = vector.load %arg8[%c0_224, %c0_225, %c0_226] : memref<1x256x128xf32, #tpu.memory_space<vmem>>, vector<1x256x128xf32>
    %266 = vector.shape_cast %265 : vector<1x256x128xf32> to vector<256x128xf32>
    %267 = vector.shape_cast %264 : vector<256x128xf32> to vector<1x256x128xf32>
    tpu.vector_store %arg8[%c0_224, %c0_225, %c0_226], %267 {strides = array<i32>} : memref<1x256x128xf32, #tpu.memory_space<vmem>>, vector<1x256x128xf32>,
    return
  }
  func.func @transform_0(%arg0: i32) -> (i32, i32, i32) {
    %c0_i32 = arith.constant 0 : i32
    %c0_i32_0 = arith.constant 0 : i32
    %c0_i32_1 = arith.constant 0 : i32
    return %arg0, %c0_i32, %c0_i32_0 : i32, i32, i32
  }
  func.func @transform_1(%arg0: i32) -> (i32, i32) {
    %c0_i32 = arith.constant 0 : i32
    %c0_i32_0 = arith.constant 0 : i32
    %c0_i32_1 = arith.constant 0 : i32
    return %c0_i32, %c0_i32_0 : i32, i32
  }
  func.func @transform_2(%arg0: i32) -> (i32, i32) {
    %c0_i32 = arith.constant 0 : i32
    %c0_i32_0 = arith.constant 0 : i32
    %c0_i32_1 = arith.constant 0 : i32
    return %c0_i32, %c0_i32_0 : i32, i32
  }
  func.func @transform_3(%arg0: i32) -> (i32, i32) {
    %c0_i32 = arith.constant 0 : i32
    %c0_i32_0 = arith.constant 0 : i32
    %c0_i32_1 = arith.constant 0 : i32
    return %c0_i32, %c0_i32_0 : i32, i32
  }
  func.func @transform_4(%arg0: i32) -> (i32, i32) {
    %c0_i32 = arith.constant 0 : i32
    %c0_i32_0 = arith.constant 0 : i32
    %c0_i32_1 = arith.constant 0 : i32
    return %c0_i32, %c0_i32_0 : i32, i32
  }
  func.func @transform_5(%arg0: i32) -> (i32, i32, i32, i32) {
    %c0_i32 = arith.constant 0 : i32
    %c0_i32_0 = arith.constant 0 : i32
    %c0_i32_1 = arith.constant 0 : i32
    %c0_i32_2 = arith.constant 0 : i32
    %c0_i32_3 = arith.constant 0 : i32
    return %c0_i32, %c0_i32_0, %c0_i32_1, %c0_i32_2 : i32, i32, i32, i32
  }
  func.func @transform_6(%arg0: i32) -> (i32, i32, i32, i32) {
    %c0_i32 = arith.constant 0 : i32
    %c0_i32_0 = arith.constant 0 : i32
    %c0_i32_1 = arith.constant 0 : i32
    %c0_i32_2 = arith.constant 0 : i32
    %c0_i32_3 = arith.constant 0 : i32
    return %c0_i32, %c0_i32_0, %c0_i32_1, %c0_i32_2 : i32, i32, i32, i32
  }
  func.func @transform_7(%arg0: i32) -> (i32, i32, i32) {
    %c0_i32 = arith.constant 0 : i32
    %c0_i32_0 = arith.constant 0 : i32
    %c0_i32_1 = arith.constant 0 : i32
    return %arg0, %c0_i32, %c0_i32_0 : i32, i32, i32
  }
}

</mosaic_0001>

<llo_original>
// kernel: tpu_custom_call.1
$region0: #{tpu_custom_call.1}
  #allocation0 [shape = 'u32[]', space=smem, size = 0x4, offset = 0x4, fixed_abs, tag = 'smem constant byte address 0x4 - core index']
  #allocation1 [shape = 'u32[72,128]{1,0:T(1,128)}', space=vmem, size = 0x9000, scoped, tag = 'internal scratch']
  #allocation2 [shape = 'f32[18,18,72]{2,1,0:T(8,128)}', space=vmem, size = 0x36000, scoped, tag = 'scratch operand']
  #allocation3 [shape = 'f32[18,18,144]{2,1,0:T(8,128)}', space=vmem, size = 0x6c000, scoped, tag = 'scratch operand']
  %s0 = inlined_call_operand.vmem [shape: f32[2,64,32], index: 0, kind: input, shape index: {}]
  %s1 = inlined_call_operand.vmem [shape: f32[32,64], index: 1, kind: input, shape index: {}]
  %s2 = inlined_call_operand.vmem [shape: f32[16,8], index: 2, kind: input, shape index: {}]
  %s3 = inlined_call_operand.vmem [shape: f32[128,8], index: 3, kind: input, shape index: {}]
  %s4 = inlined_call_operand.vmem [shape: f32[8,128], index: 4, kind: input, shape index: {}]
  %s5 = inlined_call_operand.hbm [shape: f32[3,3,72,128], index: 5, kind: input, shape index: {}]
  %s6 = inlined_call_operand.hbm [shape: f32[3,3,144,128], index: 6, kind: input, shape index: {}]
  %s7 = inlined_call_operand.hbm [shape: f32[2,256,128], index: 7, kind: output, shape index: {}]
  %s8 = sld [smem:[#allocation0]]
  $region69: #{tpu_custom_call.1} parent=0
    _
  %s10 = ssub.s32 1, %s8
  %s11 = scalar_select 0, %s10, %s8
  $region1: #{tpu_custom_call.1} parent=0
    #allocation4 [shape = 'u8[331776]{0}', space=vmem, size = 0x51000, scoped, tag = 'input window, operand 5, single buffered']
    #allocation5 [shape = 's32[2]{0}', space=sflag, size = 0x8, scoped, tag = 'scoped memory for tpu_custom_call.1']
    #allocation6 [shape = 's32[2]{0}', space=sflag, size = 0x8, scoped, tag = 'scoped memory for tpu_custom_call.1']
    #allocation7 [shape = 'u8[663552]{0}', space=vmem, size = 0xa2000, scoped, tag = 'input window, operand 6, single buffered']
    #allocation8 [shape = 's32[1]{0}', space=sflag, size = 0x4, scoped, tag = 'scoped memory for tpu_custom_call.1']
    #allocation9 [shape = 'u8[262144]{0}', space=vmem, size = 0x40000, scoped, tag = 'output window, operand 0']
    %12 = vsyncpa [#allocation5], 0
    %13 = vsyncpa [#allocation8], 0
    %14 = vsyncpa [#allocation6], 0
    %s15 = scalar_lea.sflag [#allocation6], 1
    %16 = vsyncpa %s15, 0
    loop: start=0, step=1, limit=4
    $region2: #{tpu_custom_call.1} parent=1 // loop_pre_header
      _
    $region3: #{tpu_custom_call.1} parent=1 // loop_header
      %s18 = sphi 0, %s22
      %p19 = scmp.ge.s32.totalorder %s18, 4
      %s28 = sphi 0, %s30
      %s31 = sphi 0, %s28
      %s32 = sphi 0, %s31
      %s48 = sphi 0, %s32
      %s52 = sphi 0, %s52
      %s54 = sphi 0, %s52
      %s55 = sphi 0, %s54
      %s69 = sphi 0, %s55
      %s73 = sphi 0, %s73
      %s75 = sphi 0, %s73
      %s76 = sphi 0, %s75
      %s90 = sphi 0, %s76
      %s94 = sphi 0, %s94
      %s96 = sphi 0, %s94
      %s97 = sphi 0, %s96
      %s111 = sphi 0, %s97
      %s115 = sphi 0, %s115
      %s117 = sphi 0, %s115
      %s118 = sphi 0, %s117
      %s132 = sphi 0, %s118
      %s136 = sphi 0, %s136
      %s138 = sphi 0, %s136
      %s139 = sphi 0, %s138
      %s153 = sphi 0, %s139
      %s157 = sphi 0, %s157
      %s159 = sphi 0, %s157
      %s160 = sphi 0, %s159
      %s174 = sphi 0, %s160
      %s180 = sphi 0, %s182
      %s183 = sphi 0, %s180
      %s184 = sphi 0, %s183
      %s200 = sphi 0, %s184
    $region4: #{tpu_custom_call.1} parent=1 // loop_header_branch
      %21 = sbr.rel (%p19) target = $region8
    $region5: #{tpu_custom_call.1} parent=1 // loop_body
      %s23 = ssub.s32 %s18, 1
      %s24 = ssub.s32 %s18, 2
      %s25 = sadd.s32 %s18, 1
      %s26 = ssub.s32 %s18, %s25
      %p27 = scmp.eq.s32.totalorder %s26, 0
      %s29 = sadd.s32 %s28, 1
      %s30 = scalar_select %p27, %s28, %s29
      %p33 = pneg %p27
      %p34 = scmp.eq.s32.totalorder %s18, 1
      %p35 = por %p33, %p34
      %p36 = scmp.ne.s32.totalorder %s28, %s31
      %p37 = scmp.eq.s32.totalorder %s18, 0
      %p38 = por %p36, %p37
      %p39 = scmp.ne.s32.totalorder %s28, %s31
      %p40 = scmp.eq.s32.totalorder %s23, 1
      %p41 = por %p39, %p40
      %p42 = scmp.ne.s32.totalorder %s31, %s32
      %p43 = scmp.eq.s32.totalorder %s23, 0
      %p44 = por %p42, %p43
      %p45 = scmp.ne.s32.totalorder %s31, %s32
      %p46 = scmp.eq.s32.totalorder %s24, 1
      %p47 = por %p45, %p46
      %p49 = scmp.ne.s32.totalorder %s32, %s48
      %p50 = scmp.eq.s32.totalorder %s24, 0
      %p51 = por %p49, %p50
      %s53 = sadd.s32 %s52, 1
      %p56 = scmp.eq.s32.totalorder %s18, 1
      %p57 = scmp.ne.s32.totalorder %s52, %s54
      %p58 = scmp.eq.s32.totalorder %s18, 0
      %p59 = por %p57, %p58
      %p60 = scmp.ne.s32.totalorder %s52, %s54
      %p61 = scmp.eq.s32.totalorder %s23, 1
      %p62 = por %p60, %p61
      %p63 = scmp.ne.s32.totalorder %s54, %s55
      %p64 = scmp.eq.s32.totalorder %s23, 0
      %p65 = por %p63, %p64
      %p66 = scmp.ne.s32.totalorder %s54, %s55
      %p67 = scmp.eq.s32.totalorder %s24, 1
      %p68 = por %p66, %p67
      %p70 = scmp.ne.s32.totalorder %s55, %s69
      %p71 = scmp.eq.s32.totalorder %s24, 0
      %p72 = por %p70, %p71
      %s74 = sadd.s32 %s73, 1
      %p77 = scmp.eq.s32.totalorder %s18, 1
      %p78 = scmp.ne.s32.totalorder %s73, %s75
      %p79 = scmp.eq.s32.totalorder %s18, 0
      %p80 = por %p78, %p79
      %p81 = scmp.ne.s32.totalorder %s73, %s75
      %p82 = scmp.eq.s32.totalorder %s23, 1
      %p83 = por %p81, %p82
      %p84 = scmp.ne.s32.totalorder %s75, %s76
      %p85 = scmp.eq.s32.totalorder %s23, 0
      %p86 = por %p84, %p85
      %p87 = scmp.ne.s32.totalorder %s75, %s76
      %p88 = scmp.eq.s32.totalorder %s24, 1
      %p89 = por %p87, %p88
      %p91 = scmp.ne.s32.totalorder %s76, %s90
      %p92 = scmp.eq.s32.totalorder %s24, 0
      %p93 = por %p91, %p92
      %s95 = sadd.s32 %s94, 1
      %p98 = scmp.eq.s32.totalorder %s18, 1
      %p99 = scmp.ne.s32.totalorder %s94, %s96
      %p100 = scmp.eq.s32.totalorder %s18, 0
      %p101 = por %p99, %p100
      %p102 = scmp.ne.s32.totalorder %s94, %s96
      %p103 = scmp.eq.s32.totalorder %s23, 1
      %p104 = por %p102, %p103
      %p105 = scmp.ne.s32.totalorder %s96, %s97
      %p106 = scmp.eq.s32.totalorder %s23, 0
      %p107 = por %p105, %p106
      %p108 = scmp.ne.s32.totalorder %s96, %s97
      %p109 = scmp.eq.s32.totalorder %s24, 1
      %p110 = por %p108, %p109
      %p112 = scmp.ne.s32.totalorder %s97, %s111
      %p113 = scmp.eq.s32.totalorder %s24, 0
      %p114 = por %p112, %p113
      %s116 = sadd.s32 %s115, 1
      %p119 = scmp.eq.s32.totalorder %s18, 1
      %p120 = scmp.ne.s32.totalorder %s115, %s117
      %p121 = scmp.eq.s32.totalorder %s18, 0
      %p122 = por %p120, %p121
      %p123 = scmp.ne.s32.totalorder %s115, %s117
      %p124 = scmp.eq.s32.totalorder %s23, 1
      %p125 = por %p123, %p124
      %p126 = scmp.ne.s32.totalorder %s117, %s118
      %p127 = scmp.eq.s32.totalorder %s23, 0
      %p128 = por %p126, %p127
      %p129 = scmp.ne.s32.totalorder %s117, %s118
      %p130 = scmp.eq.s32.totalorder %s24, 1
      %p131 = por %p129, %p130
      %p133 = scmp.ne.s32.totalorder %s118, %s132
      %p134 = scmp.eq.s32.totalorder %s24, 0
      %p135 = por %p133, %p134
      %s137 = sadd.s32 %s136, 1
      %p140 = scmp.eq.s32.totalorder %s18, 1
      %p141 = scmp.ne.s32.totalorder %s136, %s138
      %p142 = scmp.eq.s32.totalorder %s18, 0
      %p143 = por %p141, %p142
      %p144 = scmp.ne.s32.totalorder %s136, %s138
      %p145 = scmp.eq.s32.totalorder %s23, 1
      %p146 = por %p144, %p145
      %p147 = scmp.ne.s32.totalorder %s138, %s139
      %p148 = scmp.eq.s32.totalorder %s23, 0
      %p149 = por %p147, %p148
      %p150 = scmp.ne.s32.totalorder %s138, %s139
      %p151 = scmp.eq.s32.totalorder %s24, 1
      %p152 = por %p150, %p151
      %p154 = scmp.ne.s32.totalorder %s139, %s153
      %p155 = scmp.eq.s32.totalorder %s24, 0
      %p156 = por %p154, %p155
      %s158 = sadd.s32 %s157, 1
      %p161 = scmp.eq.s32.totalorder %s18, 1
      %p162 = scmp.ne.s32.totalorder %s157, %s159
      %p163 = scmp.eq.s32.totalorder %s18, 0
      %p164 = por %p162, %p163
      %p165 = scmp.ne.s32.totalorder %s157, %s159
      %p166 = scmp.eq.s32.totalorder %s23, 1
      %p167 = por %p165, %p166
      %p168 = scmp.ne.s32.totalorder %s159, %s160
      %p169 = scmp.eq.s32.totalorder %s23, 0
      %p170 = por %p168, %p169
      %p171 = scmp.ne.s32.totalorder %s159, %s160
      %p172 = scmp.eq.s32.totalorder %s24, 1
      %p173 = por %p171, %p172
      %p175 = scmp.ne.s32.totalorder %s160, %s174
      %p176 = scmp.eq.s32.totalorder %s24, 0
      %p177 = por %p175, %p176
      %s178 = ssub.s32 %s18, %s25
      %p179 = scmp.eq.s32.totalorder %s178, 0
      %s181 = sadd.s32 %s180, 1
      %s182 = scalar_select %p179, %s180, %s181
      %p185 = pneg %p179
      %p186 = scmp.eq.s32.totalorder %s18, 1
      %p187 = por %p185, %p186
      %p188 = scmp.ne.s32.totalorder %s180, %s183
      %p189 = scmp.eq.s32.totalorder %s18, 0
      %p190 = por %p188, %p189
      %p191 = scmp.ne.s32.totalorder %s180, %s183
      %p192 = scmp.eq.s32.totalorder %s23, 1
      %p193 = por %p191, %p192
      %p194 = scmp.ne.s32.totalorder %s183, %s184
      %p195 = scmp.eq.s32.totalorder %s23, 0
      %p196 = por %p194, %p195
      %p197 = scmp.ne.s32.totalorder %s183, %s184
      %p198 = scmp.eq.s32.totalorder %s24, 1
      %p199 = por %p197, %p198
      %p201 = scmp.ne.s32.totalorder %s184, %s200
      %p202 = scmp.eq.s32.totalorder %s24, 0
      %p203 = por %p201, %p202
      %p204 = scmp.le.s32.totalorder 1, %s18
      %p205 = scmp.lt.s32.totalorder %s18, 3
      %p206 = pnand %p204, %p205
      %p207 = pneg %p206
      // Predicated region
      $region9: #{tpu_custom_call.1} parent=5 // pred_check
        _
      $region10: #{tpu_custom_call.1} parent=5 // pred_check_branch
        %209 = sbr.rel (%p206) target = $region12
      $region11: #{tpu_custom_call.1} parent=5 // pred_region
        %s210 = ssub.s32 %s18, 1
        // Predicated region
        $region13: #{tpu_custom_call.1} parent=11 // pred_check
          %p211 = pneg %p65
        $region14: #{tpu_custom_call.1} parent=11 // pred_check_branch
          %213 = sbr.rel (%p211) target = $region16
        $region15: #{tpu_custom_call.1} parent=11 // pred_region
          _
        $region16: #{tpu_custom_call.1} parent=11 // pred_fallthru
          _
        // Predicated region
        $region17: #{tpu_custom_call.1} parent=11 // pred_check
          %p214 = pneg %p86
        $region18: #{tpu_custom_call.1} parent=11 // pred_check_branch
          %216 = sbr.rel (%p214) target = $region20
        $region19: #{tpu_custom_call.1} parent=11 // pred_region
          _
        $region20: #{tpu_custom_call.1} parent=11 // pred_fallthru
          _
        // Predicated region
        $region21: #{tpu_custom_call.1} parent=11 // pred_check
          %p217 = pneg %p107
        $region22: #{tpu_custom_call.1} parent=11 // pred_check_branch
          %219 = sbr.rel (%p217) target = $region24
        $region23: #{tpu_custom_call.1} parent=11 // pred_region
          _
        $region24: #{tpu_custom_call.1} parent=11 // pred_fallthru
          _
        // Predicated region
        $region25: #{tpu_custom_call.1} parent=11 // pred_check
          %p220 = pneg %p128
        $region26: #{tpu_custom_call.1} parent=11 // pred_check_branch
          %222 = sbr.rel (%p220) target = $region28
        $region27: #{tpu_custom_call.1} parent=11 // pred_region
          _
        $region28: #{tpu_custom_call.1} parent=11 // pred_fallthru
          _
        // Predicated region
        $region29: #{tpu_custom_call.1} parent=11 // pred_check
          %p223 = pneg %p149
        $region30: #{tpu_custom_call.1} parent=11 // pred_check_branch
          %225 = sbr.rel (%p223) target = $region32
        $region31: #{tpu_custom_call.1} parent=11 // pred_region
          %227 = vsyncadd [#allocation5], 0
          %s228 = sshll.u32 %s5, 4
          %s229 = int_to_ptr.hbm [resolvable:$true] %s228
          %s230 = sshll.u32 [#allocation4], 4
          %s231 = int_to_ptr.vmem [resolvable:$true] %s230
          %236 = dma.hbm_to_vmem [thread:$0]  %s229, 10368, %s231, [#allocation5], 128, 128, 8
        $region32: #{tpu_custom_call.1} parent=11 // pred_fallthru
          _
        // Predicated region
        $region33: #{tpu_custom_call.1} parent=11 // pred_check
          %p237 = pneg %p170
        $region34: #{tpu_custom_call.1} parent=11 // pred_check_branch
          %239 = sbr.rel (%p237) target = $region36
        $region35: #{tpu_custom_call.1} parent=11 // pred_region
          %241 = vsyncadd [#allocation8], 0
          %s242 = sshll.u32 %s6, 4
          %s243 = int_to_ptr.hbm [resolvable:$true] %s242
          %s244 = sshll.u32 [#allocation7], 4
          %s245 = int_to_ptr.vmem [resolvable:$true] %s244
          %250 = dma.hbm_to_vmem [thread:$0]  %s243, 20736, %s245, [#allocation8], 128, 128, 8
        $region36: #{tpu_custom_call.1} parent=11 // pred_fallthru
          _
      $region12: #{tpu_custom_call.1} parent=5 // pred_fallthru
        _
      %p251 = scmp.lt.s32.totalorder %s18, 2
      // Predicated region
      $region37: #{tpu_custom_call.1} parent=5 // pred_check
        %p252 = pneg %p251
      $region38: #{tpu_custom_call.1} parent=5 // pred_check_branch
        %254 = sbr.rel (%p252) target = $region40
      $region39: #{tpu_custom_call.1} parent=5 // pred_region
        // Predicated region
        $region41: #{tpu_custom_call.1} parent=39 // pred_check
          %p255 = pneg %p38
        $region42: #{tpu_custom_call.1} parent=39 // pred_check_branch
          %257 = sbr.rel (%p255) target = $region44
        $region43: #{tpu_custom_call.1} parent=39 // pred_region
          %p258 = scmp.lt.s32.totalorder %s18, 1
          %s259 = scalar_select %p258, %s18, 1
          %s260 = smul.addr %s259, 8
          %s261 = smul.addr %s260, 8
          %s262 = scalar_lea.vmem %s0, %s261
        $region44: #{tpu_custom_call.1} parent=39 // pred_fallthru
          _
      $region40: #{tpu_custom_call.1} parent=5 // pred_fallthru
        _
      %p263 = scmp.le.s32.totalorder 1, %s18
      %p264 = scmp.lt.s32.totalorder %s18, 3
      %p265 = pnand %p263, %p264
      %p266 = pneg %p265
      // Predicated region
      $region45: #{tpu_custom_call.1} parent=5 // pred_check
        _
      $region46: #{tpu_custom_call.1} parent=5 // pred_check_branch
        %268 = sbr.rel (%p265) target = $region48
      $region47: #{tpu_custom_call.1} parent=5 // pred_region
        %s269 = ssub.s32 %s18, 1
        // Predicated region
        $region49: #{tpu_custom_call.1} parent=47 // pred_check
          %p270 = pneg %p149
        $region50: #{tpu_custom_call.1} parent=47 // pred_check_branch
          %272 = sbr.rel (%p270) target = $region52
        $region51: #{tpu_custom_call.1} parent=47 // pred_region
          %274 = dma.done [#allocation5], 10368
        $region52: #{tpu_custom_call.1} parent=47 // pred_fallthru
          _
        // Predicated region
        $region53: #{tpu_custom_call.1} parent=47 // pred_check
          %p275 = pneg %p170
        $region54: #{tpu_custom_call.1} parent=47 // pred_check_branch
          %277 = sbr.rel (%p275) target = $region56
        $region55: #{tpu_custom_call.1} parent=47 // pred_region
          %279 = dma.done [#allocation8], 20736
        $region56: #{tpu_custom_call.1} parent=47 // pred_fallthru
          _
        %p280 = scmp.lt.s32.totalorder %s23, 1
        %s281 = scalar_select %p280, %s23, 1
        %s282 = smul.addr %s281, 8
        %s283 = smul.addr %s282, 8
        %s284 = scalar_lea.vmem %s0, %s283
        %p285 = pneg %p44
        %p286 = pneg %p41
        %p287 = pneg %p65
        %p288 = pneg %p62
        %p289 = pneg %p86
        %p290 = pneg %p83
        %p291 = pneg %p107
        %p292 = pneg %p104
        %p293 = pneg %p128
        %p294 = pneg %p125
        %p295 = pneg %p149
        %p296 = pneg %p146
        %p297 = pneg %p170
        %p298 = pneg %p167
        %p299 = pneg %p196
        %p300 = pneg %p193
        %s301 = sand.u32 %s183, 1
        %s302 = scalar_lea.sflag [#allocation6], %s301
        %s303 = sand.u32 %s183, 1
        %s304 = smul.addr %s303, 256
        %s305 = scalar_lea.vmem [#allocation9], %s304
        %p306 = scmp.lt.s32.totalorder %s23, 1
        %s307 = scalar_select %p306, %s23, 1
        %s308 = smul.addr %s307, 8
        %s309 = smul.addr %s308, 8
        %s310 = scalar_lea.vmem %s0, %s309
        %v311 = vld [vmem:[%s310] sm:$0xff]
        %v312 = vld [vmem:[%s310 + $0x8] sm:$0xff]
        %v313 = vld [vmem:[%s310 + $0x10] sm:$0xff]
        %v314 = vld [vmem:[%s310 + $0x18] sm:$0xff]
        %v315 = vld [vmem:[%s310 + $0x20] sm:$0xff]
        %v316 = vld [vmem:[%s310 + $0x28] sm:$0xff]
        %v317 = vld [vmem:[%s310 + $0x30] sm:$0xff]
        %v318 = vld [vmem:[%s310 + $0x38] sm:$0xff]
        %v319 = vld [vmem:[%s1] sm:$0xff]
        %v320 = vld [vmem:[%s1 + $0x8] sm:$0xff]
        %v321 = vld [vmem:[%s1 + $0x10] sm:$0xff]
        %v322 = vld [vmem:[%s1 + $0x18] sm:$0xff]
        %vm323 = vcmask 261120
        %v325 = vsel %vm323, %v311, 0
        %v328 = vsel %vm323, %v312, 0
        %v331 = vsel %vm323, %v313, 0
        %v334 = vsel %vm323, %v314, 0
        %v337 = vsel %vm323, %v315, 0
        %v340 = vsel %vm323, %v316, 0
        %v343 = vsel %vm323, %v317, 0
        %v346 = vsel %vm323, %v318, 0
        %348 = vmatpush.msra.mxu0 0.0
        %349 = vmatpush.msra.mxu0 0.0
        %350 = vmatpush.msra.mxu0 0.0
        %351 = vmatpush.msra.mxu0 0.0
        %352 = vmatpush.msra.mxu0 0.0
        %353 = vmatpush.msra.mxu0 0.0
        %354 = vmatpush.msra.mxu0 0.0
        %355 = vmatpush.msra.mxu0 0.0
        %356 = vmatpush.msra.mxu0 0.0
        %357 = vmatpush.msra.mxu0 0.0
        %358 = vmatpush.msra.mxu0 0.0
        %359 = vmatpush.msra.mxu0 0.0
        %360 = vmatpush.msra.mxu0 %v322
        %361 = vmatpush.msra.mxu0 %v321
        %362 = vmatpush.msra.mxu0 %v320
        %363 = vmatpush.msra.mxu0 %v319
        %364 = vmatmul.f32.gmra.mxu0 %v325
        %v365 = vpop.f32.mrf.mxu0
        %v366 = vadd.f32 0.0, %v365
        %367 = vmatmul.f32.gmra.mxu0 %v328
        %v368 = vpop.f32.mrf.mxu0
        %v369 = vadd.f32 0.0, %v368
        %370 = vmatmul.f32.gmra.mxu0 %v331
        %v371 = vpop.f32.mrf.mxu0
        %v372 = vadd.f32 0.0, %v371
        %373 = vmatmul.f32.gmra.mxu0 %v334
        %v374 = vpop.f32.mrf.mxu0
        %v375 = vadd.f32 0.0, %v374
        %376 = vmatmul.f32.gmra.mxu0 %v337
        %v377 = vpop.f32.mrf.mxu0
        %v378 = vadd.f32 0.0, %v377
        %379 = vmatmul.f32.gmra.mxu0 %v340
        %v380 = vpop.f32.mrf.mxu0
        %v381 = vadd.f32 0.0, %v380
        %382 = vmatmul.f32.gmra.mxu0 %v343
        %v383 = vpop.f32.mrf.mxu0
        %v384 = vadd.f32 0.0, %v383
        %385 = vmatmul.f32.gmra.mxu0 %v346
        %v386 = vpop.f32.mrf.mxu0
        %v387 = vadd.f32 0.0, %v386
        %388 = vdwg.mxu0
        %v389 = vld [vmem:[%s2] sm:$0xff]
        %v390 = vld [vmem:[%s2 + $0x8] sm:$0xff]
        %vm391 = vcmask 64512
        %v393 = vsel %vm391, %v389, 0
        %v396 = vsel %vm391, %v390, 0
        %398 = vmatpush.msra.mxu0 0.0
        %399 = vmatpush.msra.mxu0 0.0
        %400 = vmatpush.msra.mxu0 0.0
        %401 = vmatpush.msra.mxu0 0.0
        %402 = vmatpush.msra.mxu0 0.0
        %403 = vmatpush.msra.mxu0 0.0
        %404 = vmatpush.msra.mxu0 0.0
        %405 = vmatpush.msra.mxu0 0.0
        %406 = vmatpush.msra.mxu0 0.0
        %407 = vmatpush.msra.mxu0 0.0
        %408 = vmatpush.msra.mxu0 0.0
        %409 = vmatpush.msra.mxu0 0.0
        %410 = vmatpush.msra.mxu0 0.0
        %411 = vmatpush.msra.mxu0 0.0
        %412 = vmatpush.msra.mxu0 0.0
        %413 = vmatpush.msra.mxu0 %v366
        %414 = vmatmul.f32.gmra.mxu0 %v393
        %v415 = vpop.f32.mrf.mxu0
        %v416 = vadd.f32 0.0, %v415
        %417 = vmatmul.f32.gmra.mxu0 %v396
        %v418 = vpop.f32.mrf.mxu0
        %v419 = vadd.f32 0.0, %v418
        %420 = vdwg.mxu0
        %421 = vmatpush.msra.mxu0 0.0
        %422 = vmatpush.msra.mxu0 0.0
        %423 = vmatpush.msra.mxu0 0.0
        %424 = vmatpush.msra.mxu0 0.0
        %425 = vmatpush.msra.mxu0 0.0
        %426 = vmatpush.msra.mxu0 0.0
        %427 = vmatpush.msra.mxu0 0.0
        %428 = vmatpush.msra.mxu0 0.0
        %429 = vmatpush.msra.mxu0 0.0
        %430 = vmatpush.msra.mxu0 0.0
        %431 = vmatpush.msra.mxu0 0.0
        %432 = vmatpush.msra.mxu0 0.0
        %433 = vmatpush.msra.mxu0 0.0
        %434 = vmatpush.msra.mxu0 0.0
        %435 = vmatpush.msra.mxu0 0.0
        %436 = vmatpush.msra.mxu0 %v369
        %437 = vmatmul.f32.gmra.mxu0 %v393
        %v438 = vpop.f32.mrf.mxu0
        %v439 = vadd.f32 0.0, %v438
        %440 = vmatmul.f32.gmra.mxu0 %v396
        %v441 = vpop.f32.mrf.mxu0
        %v442 = vadd.f32 0.0, %v441
        %443 = vdwg.mxu0
        %444 = vmatpush.msra.mxu0 0.0
        %445 = vmatpush.msra.mxu0 0.0
        %446 = vmatpush.msra.mxu0 0.0
        %447 = vmatpush.msra.mxu0 0.0
        %448 = vmatpush.msra.mxu0 0.0
        %449 = vmatpush.msra.mxu0 0.0
        %450 = vmatpush.msra.mxu0 0.0
        %451 = vmatpush.msra.mxu0 0.0
        %452 = vmatpush.msra.mxu0 0.0
        %453 = vmatpush.msra.mxu0 0.0
        %454 = vmatpush.msra.mxu0 0.0
        %455 = vmatpush.msra.mxu0 0.0
        %456 = vmatpush.msra.mxu0 0.0
        %457 = vmatpush.msra.mxu0 0.0
        %458 = vmatpush.msra.mxu0 0.0
        %459 = vmatpush.msra.mxu0 %v372
        %460 = vmatmul.f32.gmra.mxu0 %v393
        %v461 = vpop.f32.mrf.mxu0
        %v462 = vadd.f32 0.0, %v461
        %463 = vmatmul.f32.gmra.mxu0 %v396
        %v464 = vpop.f32.mrf.mxu0
        %v465 = vadd.f32 0.0, %v464
        %466 = vdwg.mxu0
        %467 = vmatpush.msra.mxu0 0.0
        %468 = vmatpush.msra.mxu0 0.0
        %469 = vmatpush.msra.mxu0 0.0
        %470 = vmatpush.msra.mxu0 0.0
        %471 = vmatpush.msra.mxu0 0.0
        %472 = vmatpush.msra.mxu0 0.0
        %473 = vmatpush.msra.mxu0 0.0
        %474 = vmatpush.msra.mxu0 0.0
        %475 = vmatpush.msra.mxu0 0.0
        %476 = vmatpush.msra.mxu0 0.0
        %477 = vmatpush.msra.mxu0 0.0
        %478 = vmatpush.msra.mxu0 0.0
        %479 = vmatpush.msra.mxu0 0.0
        %480 = vmatpush.msra.mxu0 0.0
        %481 = vmatpush.msra.mxu0 0.0
        %482 = vmatpush.msra.mxu0 %v375
        %483 = vmatmul.f32.gmra.mxu0 %v393
        %v484 = vpop.f32.mrf.mxu0
        %v485 = vadd.f32 0.0, %v484
        %486 = vmatmul.f32.gmra.mxu0 %v396
        %v487 = vpop.f32.mrf.mxu0
        %v488 = vadd.f32 0.0, %v487
        %489 = vdwg.mxu0
        %490 = vmatpush.msra.mxu0 0.0
        %491 = vmatpush.msra.mxu0 0.0
        %492 = vmatpush.msra.mxu0 0.0
        %493 = vmatpush.msra.mxu0 0.0
        %494 = vmatpush.msra.mxu0 0.0
        %495 = vmatpush.msra.mxu0 0.0
        %496 = vmatpush.msra.mxu0 0.0
        %497 = vmatpush.msra.mxu0 0.0
        %498 = vmatpush.msra.mxu0 0.0
        %499 = vmatpush.msra.mxu0 0.0
        %500 = vmatpush.msra.mxu0 0.0
        %501 = vmatpush.msra.mxu0 0.0
        %502 = vmatpush.msra.mxu0 0.0
        %503 = vmatpush.msra.mxu0 0.0
        %504 = vmatpush.msra.mxu0 0.0
        %505 = vmatpush.msra.mxu0 %v378
        %506 = vmatmul.f32.gmra.mxu0 %v393
        %v507 = vpop.f32.mrf.mxu0
        %v508 = vadd.f32 0.0, %v507
        %509 = vmatmul.f32.gmra.mxu0 %v396
        %v510 = vpop.f32.mrf.mxu0
        %v511 = vadd.f32 0.0, %v510
        %512 = vdwg.mxu0
        %513 = vmatpush.msra.mxu0 0.0
        %514 = vmatpush.msra.mxu0 0.0
        %515 = vmatpush.msra.mxu0 0.0
        %516 = vmatpush.msra.mxu0 0.0
        %517 = vmatpush.msra.mxu0 0.0
        %518 = vmatpush.msra.mxu0 0.0
        %519 = vmatpush.msra.mxu0 0.0
        %520 = vmatpush.msra.mxu0 0.0
        %521 = vmatpush.msra.mxu0 0.0
        %522 = vmatpush.msra.mxu0 0.0
        %523 = vmatpush.msra.mxu0 0.0
        %524 = vmatpush.msra.mxu0 0.0
        %525 = vmatpush.msra.mxu0 0.0
        %526 = vmatpush.msra.mxu0 0.0
        %527 = vmatpush.msra.mxu0 0.0
        %528 = vmatpush.msra.mxu0 %v381
        %529 = vmatmul.f32.gmra.mxu0 %v393
        %v530 = vpop.f32.mrf.mxu0
        %v531 = vadd.f32 0.0, %v530
        %532 = vmatmul.f32.gmra.mxu0 %v396
        %v533 = vpop.f32.mrf.mxu0
        %v534 = vadd.f32 0.0, %v533
        %535 = vdwg.mxu0
        %536 = vmatpush.msra.mxu0 0.0
        %537 = vmatpush.msra.mxu0 0.0
        %538 = vmatpush.msra.mxu0 0.0
        %539 = vmatpush.msra.mxu0 0.0
        %540 = vmatpush.msra.mxu0 0.0
        %541 = vmatpush.msra.mxu0 0.0
        %542 = vmatpush.msra.mxu0 0.0
        %543 = vmatpush.msra.mxu0 0.0
        %544 = vmatpush.msra.mxu0 0.0
        %545 = vmatpush.msra.mxu0 0.0
        %546 = vmatpush.msra.mxu0 0.0
        %547 = vmatpush.msra.mxu0 0.0
        %548 = vmatpush.msra.mxu0 0.0
        %549 = vmatpush.msra.mxu0 0.0
        %550 = vmatpush.msra.mxu0 0.0
        %551 = vmatpush.msra.mxu0 %v384
        %552 = vmatmul.f32.gmra.mxu0 %v393
        %v553 = vpop.f32.mrf.mxu0
        %v554 = vadd.f32 0.0, %v553
        %555 = vmatmul.f32.gmra.mxu0 %v396
        %v556 = vpop.f32.mrf.mxu0
        %v557 = vadd.f32 0.0, %v556
        %558 = vdwg.mxu0
        %559 = vmatpush.msra.mxu0 0.0
        %560 = vmatpush.msra.mxu0 0.0
        %561 = vmatpush.msra.mxu0 0.0
        %562 = vmatpush.msra.mxu0 0.0
        %563 = vmatpush.msra.mxu0 0.0
        %564 = vmatpush.msra.mxu0 0.0
        %565 = vmatpush.msra.mxu0 0.0
        %566 = vmatpush.msra.mxu0 0.0
        %567 = vmatpush.msra.mxu0 0.0
        %568 = vmatpush.msra.mxu0 0.0
        %569 = vmatpush.msra.mxu0 0.0
        %570 = vmatpush.msra.mxu0 0.0
        %571 = vmatpush.msra.mxu0 0.0
        %572 = vmatpush.msra.mxu0 0.0
        %573 = vmatpush.msra.mxu0 0.0
        %574 = vmatpush.msra.mxu0 %v387
        %575 = vmatmul.f32.gmra.mxu0 %v393
        %v576 = vpop.f32.mrf.mxu0
        %v577 = vadd.f32 0.0, %v576
        %578 = vmatmul.f32.gmra.mxu0 %v396
        %v579 = vpop.f32.mrf.mxu0
        %v580 = vadd.f32 0.0, %v579
        %581 = vdwg.mxu0
        %v582 = vmul.f32 %v416, 0.53333336
        %v583 = vmul.f32 %v419, 0.53333336
        %v584 = vmul.f32 %v439, 0.46666667
        %v585 = vmul.f32 %v442, 0.46666667
        %v586 = vadd.f32 %v582, %v584
        %v587 = vadd.f32 %v583, %v585
        %v588 = vmul.f32 %v416, 0.06666667
        %v589 = vmul.f32 %v419, 0.06666667
        %v590 = vmul.f32 %v439, 0.93333334
        %v591 = vmul.f32 %v442, 0.93333334
        %v592 = vadd.f32 %v588, %v590
        %v593 = vadd.f32 %v589, %v591
        %v594 = vmul.f32 %v439, 0.6
        %v595 = vmul.f32 %v442, 0.6
        %v596 = vmul.f32 %v462, 0.4
        %v597 = vmul.f32 %v465, 0.4
        %v598 = vadd.f32 %v594, %v596
        %v599 = vadd.f32 %v595, %v597
        %v600 = vmul.f32 %v439, 0.13333334
        %v601 = vmul.f32 %v442, 0.13333334
        %v602 = vmul.f32 %v462, 0.8666667
        %v603 = vmul.f32 %v465, 0.8666667
        %v604 = vadd.f32 %v600, %v602
        %v605 = vadd.f32 %v601, %v603
        %v606 = vmul.f32 %v462, 0.6666667
        %v607 = vmul.f32 %v465, 0.6666667
        %v608 = vmul.f32 %v485, 0.33333334
        %v609 = vmul.f32 %v488, 0.33333334
        %v610 = vadd.f32 %v606, %v608
        %v611 = vadd.f32 %v607, %v609
        %v612 = vmul.f32 %v462, 0.2
        %v613 = vmul.f32 %v465, 0.2
        %v614 = vmul.f32 %v485, 0.8
        %v615 = vmul.f32 %v488, 0.8
        %v616 = vadd.f32 %v612, %v614
        %v617 = vadd.f32 %v613, %v615
        %v618 = vmul.f32 %v485, 0.73333335
        %v619 = vmul.f32 %v488, 0.73333335
        %v620 = vmul.f32 %v508, 0.26666668
        %v621 = vmul.f32 %v511, 0.26666668
        %v622 = vadd.f32 %v618, %v620
        %v623 = vadd.f32 %v619, %v621
        %v624 = vmul.f32 %v485, 0.26666668
        %v625 = vmul.f32 %v488, 0.26666668
        %v626 = vmul.f32 %v508, 0.73333335
        %v627 = vmul.f32 %v511, 0.73333335
        %v628 = vadd.f32 %v624, %v626
        %v629 = vadd.f32 %v625, %v627
        %v630 = vmul.f32 %v508, 0.8
        %v631 = vmul.f32 %v511, 0.8
        %v632 = vmul.f32 %v531, 0.2
        %v633 = vmul.f32 %v534, 0.2
        %v634 = vadd.f32 %v630, %v632
        %v635 = vadd.f32 %v631, %v633
        %v636 = vmul.f32 %v508, 0.33333334
        %v637 = vmul.f32 %v511, 0.33333334
        %v638 = vmul.f32 %v531, 0.6666667
        %v639 = vmul.f32 %v534, 0.6666667
        %v640 = vadd.f32 %v636, %v638
        %v641 = vadd.f32 %v637, %v639
        %v642 = vmul.f32 %v531, 0.8666667
        %v643 = vmul.f32 %v534, 0.8666667
        %v644 = vmul.f32 %v554, 0.13333334
        %v645 = vmul.f32 %v557, 0.13333334
        %v646 = vadd.f32 %v642, %v644
        %v647 = vadd.f32 %v643, %v645
        %v648 = vmul.f32 %v531, 0.4
        %v649 = vmul.f32 %v534, 0.4
        %v650 = vmul.f32 %v554, 0.6
        %v651 = vmul.f32 %v557, 0.6
        %v652 = vadd.f32 %v648, %v650
        %v653 = vadd.f32 %v649, %v651
        %v654 = vmul.f32 %v554, 0.93333334
        %v655 = vmul.f32 %v557, 0.93333334
        %v656 = vmul.f32 %v577, 0.06666667
        %v657 = vmul.f32 %v580, 0.06666667
        %v658 = vadd.f32 %v654, %v656
        %v659 = vadd.f32 %v655, %v657
        %v660 = vmul.f32 %v554, 0.46666667
        %v661 = vmul.f32 %v557, 0.46666667
        %v662 = vmul.f32 %v577, 0.53333336
        %v663 = vmul.f32 %v580, 0.53333336
        %v664 = vadd.f32 %v660, %v662
        %v665 = vadd.f32 %v661, %v663
        %v666 = vmul.f32 %v554, 0.0
        %v667 = vmul.f32 %v557, 0.0
        %v668 = vadd.f32 %v666, %v577
        %v669 = vadd.f32 %v667, %v580
        %vm670 = vcmask 588800
        %671 = vst.msk [vmem:[#allocation2] sm:$0xff] %vm670, 0.0
        %672 = vst.msk [vmem:[#allocation2 + $0x8] sm:$0xff] %vm670, 0.0
        %vm673 = vcmask 582656
        %674 = vst.msk [vmem:[#allocation2 + $0x10] sm:$0x3] %vm673, 0.0
        %675 = vst.msk [vmem:[#allocation2 + $0x18] sm:$0xff] %vm670, 0.0
        %676 = vst.msk [vmem:[#allocation2 + $0x20] sm:$0xff] %vm670, 0.0
        %677 = vst.msk [vmem:[#allocation2 + $0x28] sm:$0x3] %vm673, 0.0
        %678 = vst.msk [vmem:[#allocation2 + $0x30] sm:$0xff] %vm670, 0.0
        %679 = vst.msk [vmem:[#allocation2 + $0x38] sm:$0xff] %vm670, 0.0
        %680 = vst.msk [vmem:[#allocation2 + $0x40] sm:$0x3] %vm673, 0.0
        %681 = vst.msk [vmem:[#allocation2 + $0x48] sm:$0xff] %vm670, 0.0
        %682 = vst.msk [vmem:[#allocation2 + $0x50] sm:$0xff] %vm670, 0.0
        %683 = vst.msk [vmem:[#allocation2 + $0x58] sm:$0x3] %vm673, 0.0
        %684 = vst.msk [vmem:[#allocation2 + $0x60] sm:$0xff] %vm670, 0.0
        %685 = vst.msk [vmem:[#allocation2 + $0x68] sm:$0xff] %vm670, 0.0
        %686 = vst.msk [vmem:[#allocation2 + $0x70] sm:$0x3] %vm673, 0.0
        %687 = vst.msk [vmem:[#allocation2 + $0x78] sm:$0xff] %vm670, 0.0
        %688 = vst.msk [vmem:[#allocation2 + $0x80] sm:$0xff] %vm670, 0.0
        %689 = vst.msk [vmem:[#allocation2 + $0x88] sm:$0x3] %vm673, 0.0
        %690 = vst.msk [vmem:[#allocation2 + $0x90] sm:$0xff] %vm670, 0.0
        %691 = vst.msk [vmem:[#allocation2 + $0x98] sm:$0xff] %vm670, 0.0
        %692 = vst.msk [vmem:[#allocation2 + $0xa0] sm:$0x3] %vm673, 0.0
        %693 = vst.msk [vmem:[#allocation2 + $0xa8] sm:$0xff] %vm670, 0.0
        %694 = vst.msk [vmem:[#allocation2 + $0xb0] sm:$0xff] %vm670, 0.0
        %695 = vst.msk [vmem:[#allocation2 + $0xb8] sm:$0x3] %vm673, 0.0
        %696 = vst.msk [vmem:[#allocation2 + $0xc0] sm:$0xff] %vm670, 0.0
        %697 = vst.msk [vmem:[#allocation2 + $0xc8] sm:$0xff] %vm670, 0.0
        %698 = vst.msk [vmem:[#allocation2 + $0xd0] sm:$0x3] %vm673, 0.0
        %699 = vst.msk [vmem:[#allocation2 + $0xd8] sm:$0xff] %vm670, 0.0
        %700 = vst.msk [vmem:[#allocation2 + $0xe0] sm:$0xff] %vm670, 0.0
        %701 = vst.msk [vmem:[#allocation2 + $0xe8] sm:$0x3] %vm673, 0.0
        %702 = vst.msk [vmem:[#allocation2 + $0xf0] sm:$0xff] %vm670, 0.0
        %703 = vst.msk [vmem:[#allocation2 + $0xf8] sm:$0xff] %vm670, 0.0
        %704 = vst.msk [vmem:[#allocation2 + $0x100] sm:$0x3] %vm673, 0.0
        %705 = vst.msk [vmem:[#allocation2 + $0x108] sm:$0xff] %vm670, 0.0
        %706 = vst.msk [vmem:[#allocation2 + $0x110] sm:$0xff] %vm670, 0.0
        %707 = vst.msk [vmem:[#allocation2 + $0x118] sm:$0x3] %vm673, 0.0
        %708 = vst.msk [vmem:[#allocation2 + $0x120] sm:$0xff] %vm670, 0.0
        %709 = vst.msk [vmem:[#allocation2 + $0x128] sm:$0xff] %vm670, 0.0
        %710 = vst.msk [vmem:[#allocation2 + $0x130] sm:$0x3] %vm673, 0.0
        %711 = vst.msk [vmem:[#allocation2 + $0x138] sm:$0xff] %vm670, 0.0
        %712 = vst.msk [vmem:[#allocation2 + $0x140] sm:$0xff] %vm670, 0.0
        %713 = vst.msk [vmem:[#allocation2 + $0x148] sm:$0x3] %vm673, 0.0
        %714 = vst.msk [vmem:[#allocation2 + $0x150] sm:$0xff] %vm670, 0.0
        %715 = vst.msk [vmem:[#allocation2 + $0x158] sm:$0xff] %vm670, 0.0
        %716 = vst.msk [vmem:[#allocation2 + $0x160] sm:$0x3] %vm673, 0.0
        %717 = vst.msk [vmem:[#allocation2 + $0x168] sm:$0xff] %vm670, 0.0
        %718 = vst.msk [vmem:[#allocation2 + $0x170] sm:$0xff] %vm670, 0.0
        %719 = vst.msk [vmem:[#allocation2 + $0x178] sm:$0x3] %vm673, 0.0
        %720 = vst.msk [vmem:[#allocation2 + $0x180] sm:$0xff] %vm670, 0.0
        %721 = vst.msk [vmem:[#allocation2 + $0x188] sm:$0xff] %vm670, 0.0
        %722 = vst.msk [vmem:[#allocation2 + $0x190] sm:$0x3] %vm673, 0.0
        %723 = vst.msk [vmem:[#allocation2 + $0x198] sm:$0xff] %vm670, 0.0
        %724 = vst.msk [vmem:[#allocation2 + $0x1a0] sm:$0xff] %vm670, 0.0
        %725 = vst.msk [vmem:[#allocation2 + $0x1a8] sm:$0x3] %vm673, 0.0
        %758 = vrot.lane.b32.xlu0 %v416, 4
        %v759 = vpop.permute.xlu0 %758
        %760 = vrot.lane.b32.xlu0 %v419, 4
        %v761 = vpop.permute.xlu0 %760
        %762 = vrot.lane.b32.xlu0 %v586, 4
        %v763 = vpop.permute.xlu0 %762
        %764 = vrot.lane.b32.xlu0 %v587, 4
        %v765 = vpop.permute.xlu0 %764
        %766 = vrot.lane.b32.xlu0 %v592, 4
        %v767 = vpop.permute.xlu0 %766
        %768 = vrot.lane.b32.xlu0 %v593, 4
        %v769 = vpop.permute.xlu0 %768
        %770 = vrot.lane.b32.xlu0 %v598, 4
        %v771 = vpop.permute.xlu0 %770
        %772 = vrot.lane.b32.xlu0 %v599, 4
        %v773 = vpop.permute.xlu0 %772
        %774 = vrot.lane.b32.xlu0 %v604, 4
        %v775 = vpop.permute.xlu0 %774
        %776 = vrot.lane.b32.xlu0 %v605, 4
        %v777 = vpop.permute.xlu0 %776
        %778 = vrot.lane.b32.xlu0 %v610, 4
        %v779 = vpop.permute.xlu0 %778
        %780 = vrot.lane.b32.xlu0 %v611, 4
        %v781 = vpop.permute.xlu0 %780
        %782 = vrot.lane.b32.xlu0 %v616, 4
        %v783 = vpop.permute.xlu0 %782
        %784 = vrot.lane.b32.xlu0 %v617, 4
        %v785 = vpop.permute.xlu0 %784
        %786 = vrot.lane.b32.xlu0 %v622, 4
        %v787 = vpop.permute.xlu0 %786
        %788 = vrot.lane.b32.xlu0 %v623, 4
        %v789 = vpop.permute.xlu0 %788
        %790 = vrot.lane.b32.xlu0 %v628, 4
        %v791 = vpop.permute.xlu0 %790
        %792 = vrot.lane.b32.xlu0 %v629, 4
        %v793 = vpop.permute.xlu0 %792
        %794 = vrot.lane.b32.xlu0 %v634, 4
        %v795 = vpop.permute.xlu0 %794
        %796 = vrot.lane.b32.xlu0 %v635, 4
        %v797 = vpop.permute.xlu0 %796
        %798 = vrot.lane.b32.xlu0 %v640, 4
        %v799 = vpop.permute.xlu0 %798
        %800 = vrot.lane.b32.xlu0 %v641, 4
        %v801 = vpop.permute.xlu0 %800
        %802 = vrot.lane.b32.xlu0 %v646, 4
        %v803 = vpop.permute.xlu0 %802
        %804 = vrot.lane.b32.xlu0 %v647, 4
        %v805 = vpop.permute.xlu0 %804
        %806 = vrot.lane.b32.xlu0 %v652, 4
        %v807 = vpop.permute.xlu0 %806
        %808 = vrot.lane.b32.xlu0 %v653, 4
        %v809 = vpop.permute.xlu0 %808
        %810 = vrot.lane.b32.xlu0 %v658, 4
        %v811 = vpop.permute.xlu0 %810
        %812 = vrot.lane.b32.xlu0 %v659, 4
        %v813 = vpop.permute.xlu0 %812
        %814 = vrot.lane.b32.xlu0 %v664, 4
        %v815 = vpop.permute.xlu0 %814
        %816 = vrot.lane.b32.xlu0 %v665, 4
        %v817 = vpop.permute.xlu0 %816
        %818 = vrot.lane.b32.xlu0 %v668, 4
        %v819 = vpop.permute.xlu0 %818
        %820 = vrot.lane.b32.xlu0 %v669, 4
        %v821 = vpop.permute.xlu0 %820
        %s854 = scalar_lea.vmem [#allocation2], 24
        %vm855 = vcmask 556064
        %856 = vst.msk [vmem:[%s854 + $0x1] sm:$0xff] %vm855, %v759
        %857 = vst.msk [vmem:[%s854 + $0x9] sm:$0xff] %vm855, %v761
        %858 = vst.msk [vmem:[%s854 + $0x19] sm:$0xff] %vm855, %v763
        %859 = vst.msk [vmem:[%s854 + $0x21] sm:$0xff] %vm855, %v765
        %860 = vst.msk [vmem:[%s854 + $0x31] sm:$0xff] %vm855, %v767
        %861 = vst.msk [vmem:[%s854 + $0x39] sm:$0xff] %vm855, %v769
        %862 = vst.msk [vmem:[%s854 + $0x49] sm:$0xff] %vm855, %v771
        %863 = vst.msk [vmem:[%s854 + $0x51] sm:$0xff] %vm855, %v773
        %864 = vst.msk [vmem:[%s854 + $0x61] sm:$0xff] %vm855, %v775
        %865 = vst.msk [vmem:[%s854 + $0x69] sm:$0xff] %vm855, %v777
        %866 = vst.msk [vmem:[%s854 + $0x79] sm:$0xff] %vm855, %v779
        %867 = vst.msk [vmem:[%s854 + $0x81] sm:$0xff] %vm855, %v781
        %868 = vst.msk [vmem:[%s854 + $0x91] sm:$0xff] %vm855, %v783
        %869 = vst.msk [vmem:[%s854 + $0x99] sm:$0xff] %vm855, %v785
        %870 = vst.msk [vmem:[%s854 + $0xa9] sm:$0xff] %vm855, %v787
        %871 = vst.msk [vmem:[%s854 + $0xb1] sm:$0xff] %vm855, %v789
        %872 = vst.msk [vmem:[%s854 + $0xc1] sm:$0xff] %vm855, %v791
        %873 = vst.msk [vmem:[%s854 + $0xc9] sm:$0xff] %vm855, %v793
        %874 = vst.msk [vmem:[%s854 + $0xd9] sm:$0xff] %vm855, %v795
        %875 = vst.msk [vmem:[%s854 + $0xe1] sm:$0xff] %vm855, %v797
        %876 = vst.msk [vmem:[%s854 + $0xf1] sm:$0xff] %vm855, %v799
        %877 = vst.msk [vmem:[%s854 + $0xf9] sm:$0xff] %vm855, %v801
        %878 = vst.msk [vmem:[%s854 + $0x109] sm:$0xff] %vm855, %v803
        %879 = vst.msk [vmem:[%s854 + $0x111] sm:$0xff] %vm855, %v805
        %880 = vst.msk [vmem:[%s854 + $0x121] sm:$0xff] %vm855, %v807
        %881 = vst.msk [vmem:[%s854 + $0x129] sm:$0xff] %vm855, %v809
        %882 = vst.msk [vmem:[%s854 + $0x139] sm:$0xff] %vm855, %v811
        %883 = vst.msk [vmem:[%s854 + $0x141] sm:$0xff] %vm855, %v813
        %884 = vst.msk [vmem:[%s854 + $0x151] sm:$0xff] %vm855, %v815
        %885 = vst.msk [vmem:[%s854 + $0x159] sm:$0xff] %vm855, %v817
        %886 = vst.msk [vmem:[%s854 + $0x169] sm:$0xff] %vm855, %v819
        %887 = vst.msk [vmem:[%s854 + $0x171] sm:$0xff] %vm855, %v821
        %v888 = vld [vmem:[%s3] sm:$0xff]
        %v889 = vld [vmem:[%s3 + $0x8] sm:$0xff]
        %v890 = vld [vmem:[%s3 + $0x10] sm:$0xff]
        %v891 = vld [vmem:[%s3 + $0x18] sm:$0xff]
        %v892 = vld [vmem:[%s3 + $0x20] sm:$0xff]
        %v893 = vld [vmem:[%s3 + $0x28] sm:$0xff]
        %v894 = vld [vmem:[%s3 + $0x30] sm:$0xff]
        %v895 = vld [vmem:[%s3 + $0x38] sm:$0xff]
        %v896 = vld [vmem:[%s3 + $0x40] sm:$0xff]
        %v897 = vld [vmem:[%s3 + $0x48] sm:$0xff]
        %v898 = vld [vmem:[%s3 + $0x50] sm:$0xff]
        %v899 = vld [vmem:[%s3 + $0x58] sm:$0xff]
        %v900 = vld [vmem:[%s3 + $0x60] sm:$0xff]
        %v901 = vld [vmem:[%s3 + $0x68] sm:$0xff]
        %v902 = vld [vmem:[%s3 + $0x70] sm:$0xff]
        %v903 = vld [vmem:[%s3 + $0x78] sm:$0xff]
        %v904 = vld [vmem:[%s4] sm:$0xff]
        %v905 = vld [vmem:[#allocation2] sm:$0xff]
        %v906 = vld [vmem:[#allocation2 + $0x8] sm:$0xff]
        %v907 = vld [vmem:[#allocation2 + $0x18] sm:$0xff]
        %v908 = vld [vmem:[#allocation2 + $0x20] sm:$0xff]
        %v909 = vld [vmem:[#allocation2 + $0x30] sm:$0xff]
        %v910 = vld [vmem:[#allocation2 + $0x38] sm:$0xff]
        %v911 = vld [vmem:[#allocation2 + $0x48] sm:$0xff]
        %v912 = vld [vmem:[#allocation2 + $0x50] sm:$0xff]
        %v913 = vld [vmem:[#allocation2 + $0x60] sm:$0xff]
        %v914 = vld [vmem:[#allocation2 + $0x68] sm:$0xff]
        %v915 = vld [vmem:[#allocation2 + $0x78] sm:$0xff]
        %v916 = vld [vmem:[#allocation2 + $0x80] sm:$0xff]
        %v917 = vld [vmem:[#allocation2 + $0x90] sm:$0xff]
        %v918 = vld [vmem:[#allocation2 + $0x98] sm:$0xff]
        %v919 = vld [vmem:[#allocation2 + $0xa8] sm:$0xff]
        %v920 = vld [vmem:[#allocation2 + $0xb0] sm:$0xff]
        %v921 = vld [vmem:[#allocation2 + $0xc0] sm:$0xff]
        %v922 = vld [vmem:[#allocation2 + $0xc8] sm:$0xff]
        %v923 = vld [vmem:[#allocation2 + $0xd8] sm:$0xff]
        %v924 = vld [vmem:[#allocation2 + $0xe0] sm:$0xff]
        %v925 = vld [vmem:[#allocation2 + $0xf0] sm:$0xff]
        %v926 = vld [vmem:[#allocation2 + $0xf8] sm:$0xff]
        %v927 = vld [vmem:[#allocation2 + $0x108] sm:$0xff]
        %v928 = vld [vmem:[#allocation2 + $0x110] sm:$0xff]
        %v929 = vld [vmem:[#allocation2 + $0x120] sm:$0xff]
        %v930 = vld [vmem:[#allocation2 + $0x128] sm:$0xff]
        %v931 = vld [vmem:[#allocation2 + $0x138] sm:$0xff]
        %v932 = vld [vmem:[#allocation2 + $0x140] sm:$0xff]
        %v933 = vld [vmem:[#allocation2 + $0x150] sm:$0xff]
        %v934 = vld [vmem:[#allocation2 + $0x158] sm:$0xff]
        %v935 = vld [vmem:[#allocation2 + $0x168] sm:$0xff]
        %v936 = vld [vmem:[#allocation2 + $0x170] sm:$0xff]
        %v937 = vld [vmem:[#allocation4] sm:$0xff]
        %v938 = vld [vmem:[#allocation4 + $0x8] sm:$0xff]
        %v939 = vld [vmem:[#allocation4 + $0x10] sm:$0xff]
        %v940 = vld [vmem:[#allocation4 + $0x18] sm:$0xff]
        %v941 = vld [vmem:[#allocation4 + $0x20] sm:$0xff]
        %v942 = vld [vmem:[#allocation4 + $0x28] sm:$0xff]
        %v943 = vld [vmem:[#allocation4 + $0x30] sm:$0xff]
        %v944 = vld [vmem:[#allocation4 + $0x38] sm:$0xff]
        %v945 = vld [vmem:[#allocation4 + $0x40] sm:$0xff]
        %v946 = vld [vmem:[#allocation2 + $0x1] sm:$0xff]
        %v947 = vld [vmem:[#allocation2 + $0x9] sm:$0xff]
        %v948 = vld [vmem:[#allocation2 + $0x19] sm:$0xff]
        %v949 = vld [vmem:[#allocation2 + $0x21] sm:$0xff]
        %v950 = vld [vmem:[#allocation2 + $0x31] sm:$0xff]
        %v951 = vld [vmem:[#allocation2 + $0x39] sm:$0xff]
        %v952 = vld [vmem:[#allocation2 + $0x49] sm:$0xff]
        %v953 = vld [vmem:[#allocation2 + $0x51] sm:$0xff]
        %v954 = vld [vmem:[#allocation2 + $0x61] sm:$0xff]
        %v955 = vld [vmem:[#allocation2 + $0x69] sm:$0xff]
        %v956 = vld [vmem:[#allocation2 + $0x79] sm:$0xff]
        %v957 = vld [vmem:[#allocation2 + $0x81] sm:$0xff]
        %v958 = vld [vmem:[#allocation2 + $0x91] sm:$0xff]
        %v959 = vld [vmem:[#allocation2 + $0x99] sm:$0xff]
        %v960 = vld [vmem:[#allocation2 + $0xa9] sm:$0xff]
        %v961 = vld [vmem:[#allocation2 + $0xb1] sm:$0xff]
        %v962 = vld [vmem:[#allocation2 + $0xc1] sm:$0xff]
        %v963 = vld [vmem:[#allocation2 + $0xc9] sm:$0xff]
        %v964 = vld [vmem:[#allocation2 + $0xd9] sm:$0xff]
        %v965 = vld [vmem:[#allocation2 + $0xe1] sm:$0xff]
        %v966 = vld [vmem:[#allocation2 + $0xf1] sm:$0xff]
        %v967 = vld [vmem:[#allocation2 + $0xf9] sm:$0xff]
        %v968 = vld [vmem:[#allocation2 + $0x109] sm:$0xff]
        %v969 = vld [vmem:[#allocation2 + $0x111] sm:$0xff]
        %v970 = vld [vmem:[#allocation2 + $0x121] sm:$0xff]
        %v971 = vld [vmem:[#allocation2 + $0x129] sm:$0xff]
        %v972 = vld [vmem:[#allocation2 + $0x139] sm:$0xff]
        %v973 = vld [vmem:[#allocation2 + $0x141] sm:$0xff]
        %v974 = vld [vmem:[#allocation2 + $0x151] sm:$0xff]
        %v975 = vld [vmem:[#allocation2 + $0x159] sm:$0xff]
        %v976 = vld [vmem:[#allocation2 + $0x169] sm:$0xff]
        %v977 = vld [vmem:[#allocation2 + $0x171] sm:$0xff]
        %s978 = scalar_lea.vmem [#allocation4], 72
        %v979 = vld [vmem:[%s978] sm:$0xff]
        %v980 = vld [vmem:[%s978 + $0x8] sm:$0xff]
        %v981 = vld [vmem:[%s978 + $0x10] sm:$0xff]
        %v982 = vld [vmem:[%s978 + $0x18] sm:$0xff]
        %v983 = vld [vmem:[%s978 + $0x20] sm:$0xff]
        %v984 = vld [vmem:[%s978 + $0x28] sm:$0xff]
        %v985 = vld [vmem:[%s978 + $0x30] sm:$0xff]
        %v986 = vld [vmem:[%s978 + $0x38] sm:$0xff]
        %v987 = vld [vmem:[%s978 + $0x40] sm:$0xff]
        %v989 = vsel %vm670, %v946, 0
        %v992 = vsel %vm670, %v947, 0
        %v995 = vsel %vm670, %v948, 0
        %v998 = vsel %vm670, %v949, 0
        %v1001 = vsel %vm670, %v950, 0
        %v1004 = vsel %vm670, %v951, 0
        %v1007 = vsel %vm670, %v952, 0
        %v1010 = vsel %vm670, %v953, 0
        %v1013 = vsel %vm670, %v954, 0
        %v1016 = vsel %vm670, %v955, 0
        %v1019 = vsel %vm670, %v956, 0
        %v1022 = vsel %vm670, %v957, 0
        %v1025 = vsel %vm670, %v958, 0
        %v1028 = vsel %vm670, %v959, 0
        %v1031 = vsel %vm670, %v960, 0
        %v1034 = vsel %vm670, %v961, 0
        %v1037 = vsel %vm670, %v962, 0
        %v1040 = vsel %vm670, %v963, 0
        %v1043 = vsel %vm670, %v964, 0
        %v1046 = vsel %vm670, %v965, 0
        %v1049 = vsel %vm670, %v966, 0
        %v1052 = vsel %vm670, %v967, 0
        %v1055 = vsel %vm670, %v968, 0
        %v1058 = vsel %vm670, %v969, 0
        %v1061 = vsel %vm670, %v970, 0
        %v1064 = vsel %vm670, %v971, 0
        %v1067 = vsel %vm670, %v972, 0
        %v1070 = vsel %vm670, %v973, 0
        %v1073 = vsel %vm670, %v974, 0
        %v1076 = vsel %vm670, %v975, 0
        %v1079 = vsel %vm670, %v976, 0
        %v1082 = vsel %vm670, %v977, 0
        %1084 = vmatpush.msra.mxu0 0.0
        %1085 = vmatpush.msra.mxu0 0.0
        %1086 = vmatpush.msra.mxu0 0.0
        %1087 = vmatpush.msra.mxu0 0.0
        %1088 = vmatpush.msra.mxu0 0.0
        %1089 = vmatpush.msra.mxu0 0.0
        %1090 = vmatpush.msra.mxu0 0.0
        %1091 = vmatpush.msra.mxu0 %v987
        %1092 = vmatpush.msra.mxu0 %v986
        %1093 = vmatpush.msra.mxu0 %v985
        %1094 = vmatpush.msra.mxu0 %v984
        %1095 = vmatpush.msra.mxu0 %v983
        %1096 = vmatpush.msra.mxu0 %v982
        %1097 = vmatpush.msra.mxu0 %v981
        %1098 = vmatpush.msra.mxu0 %v980
        %1099 = vmatpush.msra.mxu0 %v979
        %1100 = vmatmul.f32.gmra.mxu0 %v989
        %v1101 = vpop.f32.mrf.mxu0
        %v1102 = vadd.f32 0.0, %v1101
        %1103 = vmatmul.f32.gmra.mxu0 %v992
        %v1104 = vpop.f32.mrf.mxu0
        %v1105 = vadd.f32 0.0, %v1104
        %1106 = vmatmul.f32.gmra.mxu0 %v995
        %v1107 = vpop.f32.mrf.mxu0
        %v1108 = vadd.f32 0.0, %v1107
        %1109 = vmatmul.f32.gmra.mxu0 %v998
        %v1110 = vpop.f32.mrf.mxu0
        %v1111 = vadd.f32 0.0, %v1110
        %1112 = vmatmul.f32.gmra.mxu0 %v1001
        %v1113 = vpop.f32.mrf.mxu0
        %v1114 = vadd.f32 0.0, %v1113
        %1115 = vmatmul.f32.gmra.mxu0 %v1004
        %v1116 = vpop.f32.mrf.mxu0
        %v1117 = vadd.f32 0.0, %v1116
        %1118 = vmatmul.f32.gmra.mxu0 %v1007
        %v1119 = vpop.f32.mrf.mxu0
        %v1120 = vadd.f32 0.0, %v1119
        %1121 = vmatmul.f32.gmra.mxu0 %v1010
        %v1122 = vpop.f32.mrf.mxu0
        %v1123 = vadd.f32 0.0, %v1122
        %1124 = vmatmul.f32.gmra.mxu0 %v1013
        %v1125 = vpop.f32.mrf.mxu0
        %v1126 = vadd.f32 0.0, %v1125
        %1127 = vmatmul.f32.gmra.mxu0 %v1016
        %v1128 = vpop.f32.mrf.mxu0
        %v1129 = vadd.f32 0.0, %v1128
        %1130 = vmatmul.f32.gmra.mxu0 %v1019
        %v1131 = vpop.f32.mrf.mxu0
        %v1132 = vadd.f32 0.0, %v1131
        %1133 = vmatmul.f32.gmra.mxu0 %v1022
        %v1134 = vpop.f32.mrf.mxu0
        %v1135 = vadd.f32 0.0, %v1134
        %1136 = vmatmul.f32.gmra.mxu0 %v1025
        %v1137 = vpop.f32.mrf.mxu0
        %v1138 = vadd.f32 0.0, %v1137
        %1139 = vmatmul.f32.gmra.mxu0 %v1028
        %v1140 = vpop.f32.mrf.mxu0
        %v1141 = vadd.f32 0.0, %v1140
        %1142 = vmatmul.f32.gmra.mxu0 %v1031
        %v1143 = vpop.f32.mrf.mxu0
        %v1144 = vadd.f32 0.0, %v1143
        %1145 = vmatmul.f32.gmra.mxu0 %v1034
        %v1146 = vpop.f32.mrf.mxu0
        %v1147 = vadd.f32 0.0, %v1146
        %1148 = vmatmul.f32.gmra.mxu0 %v1037
        %v1149 = vpop.f32.mrf.mxu0
        %v1150 = vadd.f32 0.0, %v1149
        %1151 = vmatmul.f32.gmra.mxu0 %v1040
        %v1152 = vpop.f32.mrf.mxu0
        %v1153 = vadd.f32 0.0, %v1152
        %1154 = vmatmul.f32.gmra.mxu0 %v1043
        %v1155 = vpop.f32.mrf.mxu0
        %v1156 = vadd.f32 0.0, %v1155
        %1157 = vmatmul.f32.gmra.mxu0 %v1046
        %v1158 = vpop.f32.mrf.mxu0
        %v1159 = vadd.f32 0.0, %v1158
        %1160 = vmatmul.f32.gmra.mxu0 %v1049
        %v1161 = vpop.f32.mrf.mxu0
        %v1162 = vadd.f32 0.0, %v1161
        %1163 = vmatmul.f32.gmra.mxu0 %v1052
        %v1164 = vpop.f32.mrf.mxu0
        %v1165 = vadd.f32 0.0, %v1164
        %1166 = vmatmul.f32.gmra.mxu0 %v1055
        %v1167 = vpop.f32.mrf.mxu0
        %v1168 = vadd.f32 0.0, %v1167
        %1169 = vmatmul.f32.gmra.mxu0 %v1058
        %v1170 = vpop.f32.mrf.mxu0
        %v1171 = vadd.f32 0.0, %v1170
        %1172 = vmatmul.f32.gmra.mxu0 %v1061
        %v1173 = vpop.f32.mrf.mxu0
        %v1174 = vadd.f32 0.0, %v1173
        %1175 = vmatmul.f32.gmra.mxu0 %v1064
        %v1176 = vpop.f32.mrf.mxu0
        %v1177 = vadd.f32 0.0, %v1176
        %1178 = vmatmul.f32.gmra.mxu0 %v1067
        %v1179 = vpop.f32.mrf.mxu0
        %v1180 = vadd.f32 0.0, %v1179
        %1181 = vmatmul.f32.gmra.mxu0 %v1070
        %v1182 = vpop.f32.mrf.mxu0
        %v1183 = vadd.f32 0.0, %v1182
        %1184 = vmatmul.f32.gmra.mxu0 %v1073
        %v1185 = vpop.f32.mrf.mxu0
        %v1186 = vadd.f32 0.0, %v1185
        %1187 = vmatmul.f32.gmra.mxu0 %v1076
        %v1188 = vpop.f32.mrf.mxu0
        %v1189 = vadd.f32 0.0, %v1188
        %1190 = vmatmul.f32.gmra.mxu0 %v1079
        %v1191 = vpop.f32.mrf.mxu0
        %v1192 = vadd.f32 0.0, %v1191
        %1193 = vmatmul.f32.gmra.mxu0 %v1082
        %v1194 = vpop.f32.mrf.mxu0
        %v1195 = vadd.f32 0.0, %v1194
        %1196 = vdwg.mxu0
        %v1198 = vsel %vm670, %v905, 0
        %v1201 = vsel %vm670, %v906, 0
        %v1204 = vsel %vm670, %v907, 0
        %v1207 = vsel %vm670, %v908, 0
        %v1210 = vsel %vm670, %v909, 0
        %v1213 = vsel %vm670, %v910, 0
        %v1216 = vsel %vm670, %v911, 0
        %v1219 = vsel %vm670, %v912, 0
        %v1222 = vsel %vm670, %v913, 0
        %v1225 = vsel %vm670, %v914, 0
        %v1228 = vsel %vm670, %v915, 0
        %v1231 = vsel %vm670, %v916, 0
        %v1234 = vsel %vm670, %v917, 0
        %v1237 = vsel %vm670, %v918, 0
        %v1240 = vsel %vm670, %v919, 0
        %v1243 = vsel %vm670, %v920, 0
        %v1246 = vsel %vm670, %v921, 0
        %v1249 = vsel %vm670, %v922, 0
        %v1252 = vsel %vm670, %v923, 0
        %v1255 = vsel %vm670, %v924, 0
        %v1258 = vsel %vm670, %v925, 0
        %v1261 = vsel %vm670, %v926, 0
        %v1264 = vsel %vm670, %v927, 0
        %v1267 = vsel %vm670, %v928, 0
        %v1270 = vsel %vm670, %v929, 0
        %v1273 = vsel %vm670, %v930, 0
        %v1276 = vsel %vm670, %v931, 0
        %v1279 = vsel %vm670, %v932, 0
        %v1282 = vsel %vm670, %v933, 0
        %v1285 = vsel %vm670, %v934, 0
        %v1288 = vsel %vm670, %v935, 0
        %v1291 = vsel %vm670, %v936, 0
        %1293 = vmatpush.msra.mxu0 0.0
        %1294 = vmatpush.msra.mxu0 0.0
        %1295 = vmatpush.msra.mxu0 0.0
        %1296 = vmatpush.msra.mxu0 0.0
        %1297 = vmatpush.msra.mxu0 0.0
        %1298 = vmatpush.msra.mxu0 0.0
        %1299 = vmatpush.msra.mxu0 0.0
        %1300 = vmatpush.msra.mxu0 %v945
        %1301 = vmatpush.msra.mxu0 %v944
        %1302 = vmatpush.msra.mxu0 %v943
        %1303 = vmatpush.msra.mxu0 %v942
        %1304 = vmatpush.msra.mxu0 %v941
        %1305 = vmatpush.msra.mxu0 %v940
        %1306 = vmatpush.msra.mxu0 %v939
        %1307 = vmatpush.msra.mxu0 %v938
        %1308 = vmatpush.msra.mxu0 %v937
        %1309 = vmatmul.f32.gmra.mxu0 %v1198
        %v1310 = vpop.f32.mrf.mxu0
        %v1311 = vadd.f32 %v1102, %v1310
        %1312 = vmatmul.f32.gmra.mxu0 %v1201
        %v1313 = vpop.f32.mrf.mxu0
        %v1314 = vadd.f32 %v1105, %v1313
        %1315 = vmatmul.f32.gmra.mxu0 %v1204
        %v1316 = vpop.f32.mrf.mxu0
        %v1317 = vadd.f32 %v1108, %v1316
        %1318 = vmatmul.f32.gmra.mxu0 %v1207
        %v1319 = vpop.f32.mrf.mxu0
        %v1320 = vadd.f32 %v1111, %v1319
        %1321 = vmatmul.f32.gmra.mxu0 %v1210
        %v1322 = vpop.f32.mrf.mxu0
        %v1323 = vadd.f32 %v1114, %v1322
        %1324 = vmatmul.f32.gmra.mxu0 %v1213
        %v1325 = vpop.f32.mrf.mxu0
        %v1326 = vadd.f32 %v1117, %v1325
        %1327 = vmatmul.f32.gmra.mxu0 %v1216
        %v1328 = vpop.f32.mrf.mxu0
        %v1329 = vadd.f32 %v1120, %v1328
        %1330 = vmatmul.f32.gmra.mxu0 %v1219
        %v1331 = vpop.f32.mrf.mxu0
        %v1332 = vadd.f32 %v1123, %v1331
        %1333 = vmatmul.f32.gmra.mxu0 %v1222
        %v1334 = vpop.f32.mrf.mxu0
        %v1335 = vadd.f32 %v1126, %v1334
        %1336 = vmatmul.f32.gmra.mxu0 %v1225
        %v1337 = vpop.f32.mrf.mxu0
        %v1338 = vadd.f32 %v1129, %v1337
        %1339 = vmatmul.f32.gmra.mxu0 %v1228
        %v1340 = vpop.f32.mrf.mxu0
        %v1341 = vadd.f32 %v1132, %v1340
        %1342 = vmatmul.f32.gmra.mxu0 %v1231
        %v1343 = vpop.f32.mrf.mxu0
        %v1344 = vadd.f32 %v1135, %v1343
        %1345 = vmatmul.f32.gmra.mxu0 %v1234
        %v1346 = vpop.f32.mrf.mxu0
        %v1347 = vadd.f32 %v1138, %v1346
        %1348 = vmatmul.f32.gmra.mxu0 %v1237
        %v1349 = vpop.f32.mrf.mxu0
        %v1350 = vadd.f32 %v1141, %v1349
        %1351 = vmatmul.f32.gmra.mxu0 %v1240
        %v1352 = vpop.f32.mrf.mxu0
        %v1353 = vadd.f32 %v1144, %v1352
        %1354 = vmatmul.f32.gmra.mxu0 %v1243
        %v1355 = vpop.f32.mrf.mxu0
        %v1356 = vadd.f32 %v1147, %v1355
        %1357 = vmatmul.f32.gmra.mxu0 %v1246
        %v1358 = vpop.f32.mrf.mxu0
        %v1359 = vadd.f32 %v1150, %v1358
        %1360 = vmatmul.f32.gmra.mxu0 %v1249
        %v1361 = vpop.f32.mrf.mxu0
        %v1362 = vadd.f32 %v1153, %v1361
        %1363 = vmatmul.f32.gmra.mxu0 %v1252
        %v1364 = vpop.f32.mrf.mxu0
        %v1365 = vadd.f32 %v1156, %v1364
        %1366 = vmatmul.f32.gmra.mxu0 %v1255
        %v1367 = vpop.f32.mrf.mxu0
        %v1368 = vadd.f32 %v1159, %v1367
        %1369 = vmatmul.f32.gmra.mxu0 %v1258
        %v1370 = vpop.f32.mrf.mxu0
        %v1371 = vadd.f32 %v1162, %v1370
        %1372 = vmatmul.f32.gmra.mxu0 %v1261
        %v1373 = vpop.f32.mrf.mxu0
        %v1374 = vadd.f32 %v1165, %v1373
        %1375 = vmatmul.f32.gmra.mxu0 %v1264
        %v1376 = vpop.f32.mrf.mxu0
        %v1377 = vadd.f32 %v1168, %v1376
        %1378 = vmatmul.f32.gmra.mxu0 %v1267
        %v1379 = vpop.f32.mrf.mxu0
        %v1380 = vadd.f32 %v1171, %v1379
        %1381 = vmatmul.f32.gmra.mxu0 %v1270
        %v1382 = vpop.f32.mrf.mxu0
        %v1383 = vadd.f32 %v1174, %v1382
        %1384 = vmatmul.f32.gmra.mxu0 %v1273
        %v1385 = vpop.f32.mrf.mxu0
        %v1386 = vadd.f32 %v1177, %v1385
        %1387 = vmatmul.f32.gmra.mxu0 %v1276
        %v1388 = vpop.f32.mrf.mxu0
        %v1389 = vadd.f32 %v1180, %v1388
        %1390 = vmatmul.f32.gmra.mxu0 %v1279
        %v1391 = vpop.f32.mrf.mxu0
        %v1392 = vadd.f32 %v1183, %v1391
        %1393 = vmatmul.f32.gmra.mxu0 %v1282
        %v1394 = vpop.f32.mrf.mxu0
        %v1395 = vadd.f32 %v1186, %v1394
        %1396 = vmatmul.f32.gmra.mxu0 %v1285
        %v1397 = vpop.f32.mrf.mxu0
        %v1398 = vadd.f32 %v1189, %v1397
        %1399 = vmatmul.f32.gmra.mxu0 %v1288
        %v1400 = vpop.f32.mrf.mxu0
        %v1401 = vadd.f32 %v1192, %v1400
        %1402 = vmatmul.f32.gmra.mxu0 %v1291
        %v1403 = vpop.f32.mrf.mxu0
        %v1404 = vadd.f32 %v1195, %v1403
        %1405 = vdwg.mxu0
        %v1406 = vld [vmem:[#allocation2 + $0x2] sm:$0xff]
        %v1407 = vld [vmem:[#allocation2 + $0xa] sm:$0xff]
        %v1408 = vld [vmem:[#allocation2 + $0x1a] sm:$0xff]
        %v1409 = vld [vmem:[#allocation2 + $0x22] sm:$0xff]
        %v1410 = vld [vmem:[#allocation2 + $0x32] sm:$0xff]
        %v1411 = vld [vmem:[#allocation2 + $0x3a] sm:$0xff]
        %v1412 = vld [vmem:[#allocation2 + $0x4a] sm:$0xff]
        %v1413 = vld [vmem:[#allocation2 + $0x52] sm:$0xff]
        %v1414 = vld [vmem:[#allocation2 + $0x62] sm:$0xff]
        %v1415 = vld [vmem:[#allocation2 + $0x6a] sm:$0xff]
        %v1416 = vld [vmem:[#allocation2 + $0x7a] sm:$0xff]
        %v1417 = vld [vmem:[#allocation2 + $0x82] sm:$0xff]
        %v1418 = vld [vmem:[#allocation2 + $0x92] sm:$0xff]
        %v1419 = vld [vmem:[#allocation2 + $0x9a] sm:$0xff]
        %v1420 = vld [vmem:[#allocation2 + $0xaa] sm:$0xff]
        %v1421 = vld [vmem:[#allocation2 + $0xb2] sm:$0xff]
        %v1422 = vld [vmem:[#allocation2 + $0xc2] sm:$0xff]
        %v1423 = vld [vmem:[#allocation2 + $0xca] sm:$0xff]
        %v1424 = vld [vmem:[#allocation2 + $0xda] sm:$0xff]
        %v1425 = vld [vmem:[#allocation2 + $0xe2] sm:$0xff]
        %v1426 = vld [vmem:[#allocation2 + $0xf2] sm:$0xff]
        %v1427 = vld [vmem:[#allocation2 + $0xfa] sm:$0xff]
        %v1428 = vld [vmem:[#allocation2 + $0x10a] sm:$0xff]
        %v1429 = vld [vmem:[#allocation2 + $0x112] sm:$0xff]
        %v1430 = vld [vmem:[#allocation2 + $0x122] sm:$0xff]
        %v1431 = vld [vmem:[#allocation2 + $0x12a] sm:$0xff]
        %v1432 = vld [vmem:[#allocation2 + $0x13a] sm:$0xff]
        %v1433 = vld [vmem:[#allocation2 + $0x142] sm:$0xff]
        %v1434 = vld [vmem:[#allocation2 + $0x152] sm:$0xff]
        %v1435 = vld [vmem:[#allocation2 + $0x15a] sm:$0xff]
        %v1436 = vld [vmem:[#allocation2 + $0x16a] sm:$0xff]
        %v1437 = vld [vmem:[#allocation2 + $0x172] sm:$0xff]
        %s1438 = scalar_lea.vmem [#allocation4], 144
        %v1439 = vld [vmem:[%s1438] sm:$0xff]
        %v1440 = vld [vmem:[%s1438 + $0x8] sm:$0xff]
        %v1441 = vld [vmem:[%s1438 + $0x10] sm:$0xff]
        %v1442 = vld [vmem:[%s1438 + $0x18] sm:$0xff]
        %v1443 = vld [vmem:[%s1438 + $0x20] sm:$0xff]
        %v1444 = vld [vmem:[%s1438 + $0x28] sm:$0xff]
        %v1445 = vld [vmem:[%s1438 + $0x30] sm:$0xff]
        %v1446 = vld [vmem:[%s1438 + $0x38] sm:$0xff]
        %v1447 = vld [vmem:[%s1438 + $0x40] sm:$0xff]
        %v1449 = vsel %vm670, %v1406, 0
        %v1452 = vsel %vm670, %v1407, 0
        %v1455 = vsel %vm670, %v1408, 0
        %v1458 = vsel %vm670, %v1409, 0
        %v1461 = vsel %vm670, %v1410, 0
        %v1464 = vsel %vm670, %v1411, 0
        %v1467 = vsel %vm670, %v1412, 0
        %v1470 = vsel %vm670, %v1413, 0
        %v1473 = vsel %vm670, %v1414, 0
        %v1476 = vsel %vm670, %v1415, 0
        %v1479 = vsel %vm670, %v1416, 0
        %v1482 = vsel %vm670, %v1417, 0
        %v1485 = vsel %vm670, %v1418, 0
        %v1488 = vsel %vm670, %v1419, 0
        %v1491 = vsel %vm670, %v1420, 0
        %v1494 = vsel %vm670, %v1421, 0
        %v1497 = vsel %vm670, %v1422, 0
        %v1500 = vsel %vm670, %v1423, 0
        %v1503 = vsel %vm670, %v1424, 0
        %v1506 = vsel %vm670, %v1425, 0
        %v1509 = vsel %vm670, %v1426, 0
        %v1512 = vsel %vm670, %v1427, 0
        %v1515 = vsel %vm670, %v1428, 0
        %v1518 = vsel %vm670, %v1429, 0
        %v1521 = vsel %vm670, %v1430, 0
        %v1524 = vsel %vm670, %v1431, 0
        %v1527 = vsel %vm670, %v1432, 0
        %v1530 = vsel %vm670, %v1433, 0
        %v1533 = vsel %vm670, %v1434, 0
        %v1536 = vsel %vm670, %v1435, 0
        %v1539 = vsel %vm670, %v1436, 0
        %v1542 = vsel %vm670, %v1437, 0
        %1544 = vmatpush.msra.mxu0 0.0
        %1545 = vmatpush.msra.mxu0 0.0
        %1546 = vmatpush.msra.mxu0 0.0
        %1547 = vmatpush.msra.mxu0 0.0
        %1548 = vmatpush.msra.mxu0 0.0
        %1549 = vmatpush.msra.mxu0 0.0
        %1550 = vmatpush.msra.mxu0 0.0
        %1551 = vmatpush.msra.mxu0 %v1447
        %1552 = vmatpush.msra.mxu0 %v1446
        %1553 = vmatpush.msra.mxu0 %v1445
        %1554 = vmatpush.msra.mxu0 %v1444
        %1555 = vmatpush.msra.mxu0 %v1443
        %1556 = vmatpush.msra.mxu0 %v1442
        %1557 = vmatpush.msra.mxu0 %v1441
        %1558 = vmatpush.msra.mxu0 %v1440
        %1559 = vmatpush.msra.mxu0 %v1439
        %1560 = vmatmul.f32.gmra.mxu0 %v1449
        %v1561 = vpop.f32.mrf.mxu0
        %v1562 = vadd.f32 0.0, %v1561
        %1563 = vmatmul.f32.gmra.mxu0 %v1452
        %v1564 = vpop.f32.mrf.mxu0
        %v1565 = vadd.f32 0.0, %v1564
        %1566 = vmatmul.f32.gmra.mxu0 %v1455
        %v1567 = vpop.f32.mrf.mxu0
        %v1568 = vadd.f32 0.0, %v1567
        %1569 = vmatmul.f32.gmra.mxu0 %v1458
        %v1570 = vpop.f32.mrf.mxu0
        %v1571 = vadd.f32 0.0, %v1570
        %1572 = vmatmul.f32.gmra.mxu0 %v1461
        %v1573 = vpop.f32.mrf.mxu0
        %v1574 = vadd.f32 0.0, %v1573
        %1575 = vmatmul.f32.gmra.mxu0 %v1464
        %v1576 = vpop.f32.mrf.mxu0
        %v1577 = vadd.f32 0.0, %v1576
        %1578 = vmatmul.f32.gmra.mxu0 %v1467
        %v1579 = vpop.f32.mrf.mxu0
        %v1580 = vadd.f32 0.0, %v1579
        %1581 = vmatmul.f32.gmra.mxu0 %v1470
        %v1582 = vpop.f32.mrf.mxu0
        %v1583 = vadd.f32 0.0, %v1582
        %1584 = vmatmul.f32.gmra.mxu0 %v1473
        %v1585 = vpop.f32.mrf.mxu0
        %v1586 = vadd.f32 0.0, %v1585
        %1587 = vmatmul.f32.gmra.mxu0 %v1476
        %v1588 = vpop.f32.mrf.mxu0
        %v1589 = vadd.f32 0.0, %v1588
        %1590 = vmatmul.f32.gmra.mxu0 %v1479
        %v1591 = vpop.f32.mrf.mxu0
        %v1592 = vadd.f32 0.0, %v1591
        %1593 = vmatmul.f32.gmra.mxu0 %v1482
        %v1594 = vpop.f32.mrf.mxu0
        %v1595 = vadd.f32 0.0, %v1594
        %1596 = vmatmul.f32.gmra.mxu0 %v1485
        %v1597 = vpop.f32.mrf.mxu0
        %v1598 = vadd.f32 0.0, %v1597
        %1599 = vmatmul.f32.gmra.mxu0 %v1488
        %v1600 = vpop.f32.mrf.mxu0
        %v1601 = vadd.f32 0.0, %v1600
        %1602 = vmatmul.f32.gmra.mxu0 %v1491
        %v1603 = vpop.f32.mrf.mxu0
        %v1604 = vadd.f32 0.0, %v1603
        %1605 = vmatmul.f32.gmra.mxu0 %v1494
        %v1606 = vpop.f32.mrf.mxu0
        %v1607 = vadd.f32 0.0, %v1606
        %1608 = vmatmul.f32.gmra.mxu0 %v1497
        %v1609 = vpop.f32.mrf.mxu0
        %v1610 = vadd.f32 0.0, %v1609
        %1611 = vmatmul.f32.gmra.mxu0 %v1500
        %v1612 = vpop.f32.mrf.mxu0
        %v1613 = vadd.f32 0.0, %v1612
        %1614 = vmatmul.f32.gmra.mxu0 %v1503
        %v1615 = vpop.f32.mrf.mxu0
        %v1616 = vadd.f32 0.0, %v1615
        %1617 = vmatmul.f32.gmra.mxu0 %v1506
        %v1618 = vpop.f32.mrf.mxu0
        %v1619 = vadd.f32 0.0, %v1618
        %1620 = vmatmul.f32.gmra.mxu0 %v1509
        %v1621 = vpop.f32.mrf.mxu0
        %v1622 = vadd.f32 0.0, %v1621
        %1623 = vmatmul.f32.gmra.mxu0 %v1512
        %v1624 = vpop.f32.mrf.mxu0
        %v1625 = vadd.f32 0.0, %v1624
        %1626 = vmatmul.f32.gmra.mxu0 %v1515
        %v1627 = vpop.f32.mrf.mxu0
        %v1628 = vadd.f32 0.0, %v1627
        %1629 = vmatmul.f32.gmra.mxu0 %v1518
        %v1630 = vpop.f32.mrf.mxu0
        %v1631 = vadd.f32 0.0, %v1630
        %1632 = vmatmul.f32.gmra.mxu0 %v1521
        %v1633 = vpop.f32.mrf.mxu0
        %v1634 = vadd.f32 0.0, %v1633
        %1635 = vmatmul.f32.gmra.mxu0 %v1524
        %v1636 = vpop.f32.mrf.mxu0
        %v1637 = vadd.f32 0.0, %v1636
        %1638 = vmatmul.f32.gmra.mxu0 %v1527
        %v1639 = vpop.f32.mrf.mxu0
        %v1640 = vadd.f32 0.0, %v1639
        %1641 = vmatmul.f32.gmra.mxu0 %v1530
        %v1642 = vpop.f32.mrf.mxu0
        %v1643 = vadd.f32 0.0, %v1642
        %1644 = vmatmul.f32.gmra.mxu0 %v1533
        %v1645 = vpop.f32.mrf.mxu0
        %v1646 = vadd.f32 0.0, %v1645
        %1647 = vmatmul.f32.gmra.mxu0 %v1536
        %v1648 = vpop.f32.mrf.mxu0
        %v1649 = vadd.f32 0.0, %v1648
        %1650 = vmatmul.f32.gmra.mxu0 %v1539
        %v1651 = vpop.f32.mrf.mxu0
        %v1652 = vadd.f32 0.0, %v1651
        %1653 = vmatmul.f32.gmra.mxu0 %v1542
        %v1654 = vpop.f32.mrf.mxu0
        %v1655 = vadd.f32 0.0, %v1654
        %1656 = vdwg.mxu0
        %v1657 = vadd.f32 %v1311, %v1562
        %v1658 = vadd.f32 %v1314, %v1565
        %v1659 = vadd.f32 %v1317, %v1568
        %v1660 = vadd.f32 %v1320, %v1571
        %v1661 = vadd.f32 %v1323, %v1574
        %v1662 = vadd.f32 %v1326, %v1577
        %v1663 = vadd.f32 %v1329, %v1580
        %v1664 = vadd.f32 %v1332, %v1583
        %v1665 = vadd.f32 %v1335, %v1586
        %v1666 = vadd.f32 %v1338, %v1589
        %v1667 = vadd.f32 %v1341, %v1592
        %v1668 = vadd.f32 %v1344, %v1595
        %v1669 = vadd.f32 %v1347, %v1598
        %v1670 = vadd.f32 %v1350, %v1601
        %v1671 = vadd.f32 %v1353, %v1604
        %v1672 = vadd.f32 %v1356, %v1607
        %v1673 = vadd.f32 %v1359, %v1610
        %v1674 = vadd.f32 %v1362, %v1613
        %v1675 = vadd.f32 %v1365, %v1616
        %v1676 = vadd.f32 %v1368, %v1619
        %v1677 = vadd.f32 %v1371, %v1622
        %v1678 = vadd.f32 %v1374, %v1625
        %v1679 = vadd.f32 %v1377, %v1628
        %v1680 = vadd.f32 %v1380, %v1631
        %v1681 = vadd.f32 %v1383, %v1634
        %v1682 = vadd.f32 %v1386, %v1637
        %v1683 = vadd.f32 %v1389, %v1640
        %v1684 = vadd.f32 %v1392, %v1643
        %v1685 = vadd.f32 %v1395, %v1646
        %v1686 = vadd.f32 %v1398, %v1649
        %v1687 = vadd.f32 %v1401, %v1652
        %v1688 = vadd.f32 %v1404, %v1655
        %v1689 = vld [vmem:[%s854] sm:$0xff]
        %v1690 = vld [vmem:[%s854 + $0x8] sm:$0xff]
        %v1691 = vld [vmem:[%s854 + $0x18] sm:$0xff]
        %v1692 = vld [vmem:[%s854 + $0x20] sm:$0xff]
        %v1693 = vld [vmem:[%s854 + $0x30] sm:$0xff]
        %v1694 = vld [vmem:[%s854 + $0x38] sm:$0xff]
        %v1695 = vld [vmem:[%s854 + $0x48] sm:$0xff]
        %v1696 = vld [vmem:[%s854 + $0x50] sm:$0xff]
        %v1697 = vld [vmem:[%s854 + $0x60] sm:$0xff]
        %v1698 = vld [vmem:[%s854 + $0x68] sm:$0xff]
        %v1699 = vld [vmem:[%s854 + $0x78] sm:$0xff]
        %v1700 = vld [vmem:[%s854 + $0x80] sm:$0xff]
        %v1701 = vld [vmem:[%s854 + $0x90] sm:$0xff]
        %v1702 = vld [vmem:[%s854 + $0x98] sm:$0xff]
        %v1703 = vld [vmem:[%s854 + $0xa8] sm:$0xff]
        %v1704 = vld [vmem:[%s854 + $0xb0] sm:$0xff]
        %v1705 = vld [vmem:[%s854 + $0xc0] sm:$0xff]
        %v1706 = vld [vmem:[%s854 + $0xc8] sm:$0xff]
        %v1707 = vld [vmem:[%s854 + $0xd8] sm:$0xff]
        %v1708 = vld [vmem:[%s854 + $0xe0] sm:$0xff]
        %v1709 = vld [vmem:[%s854 + $0xf0] sm:$0xff]
        %v1710 = vld [vmem:[%s854 + $0xf8] sm:$0xff]
        %v1711 = vld [vmem:[%s854 + $0x108] sm:$0xff]
        %v1712 = vld [vmem:[%s854 + $0x110] sm:$0xff]
        %v1713 = vld [vmem:[%s854 + $0x120] sm:$0xff]
        %v1714 = vld [vmem:[%s854 + $0x128] sm:$0xff]
        %v1715 = vld [vmem:[%s854 + $0x138] sm:$0xff]
        %v1716 = vld [vmem:[%s854 + $0x140] sm:$0xff]
        %v1717 = vld [vmem:[%s854 + $0x150] sm:$0xff]
        %v1718 = vld [vmem:[%s854 + $0x158] sm:$0xff]
        %v1719 = vld [vmem:[%s854 + $0x168] sm:$0xff]
        %v1720 = vld [vmem:[%s854 + $0x170] sm:$0xff]
        %s1721 = scalar_lea.vmem [#allocation4], 216
        %v1722 = vld [vmem:[%s1721] sm:$0xff]
        %v1723 = vld [vmem:[%s1721 + $0x8] sm:$0xff]
        %v1724 = vld [vmem:[%s1721 + $0x10] sm:$0xff]
        %v1725 = vld [vmem:[%s1721 + $0x18] sm:$0xff]
        %v1726 = vld [vmem:[%s1721 + $0x20] sm:$0xff]
        %v1727 = vld [vmem:[%s1721 + $0x28] sm:$0xff]
        %v1728 = vld [vmem:[%s1721 + $0x30] sm:$0xff]
        %v1729 = vld [vmem:[%s1721 + $0x38] sm:$0xff]
        %v1730 = vld [vmem:[%s1721 + $0x40] sm:$0xff]
        %v1732 = vsel %vm670, %v1689, 0
        %v1735 = vsel %vm670, %v1690, 0
        %v1738 = vsel %vm670, %v1691, 0
        %v1741 = vsel %vm670, %v1692, 0
        %v1744 = vsel %vm670, %v1693, 0
        %v1747 = vsel %vm670, %v1694, 0
        %v1750 = vsel %vm670, %v1695, 0
        %v1753 = vsel %vm670, %v1696, 0
        %v1756 = vsel %vm670, %v1697, 0
        %v1759 = vsel %vm670, %v1698, 0
        %v1762 = vsel %vm670, %v1699, 0
        %v1765 = vsel %vm670, %v1700, 0
        %v1768 = vsel %vm670, %v1701, 0
        %v1771 = vsel %vm670, %v1702, 0
        %v1774 = vsel %vm670, %v1703, 0
        %v1777 = vsel %vm670, %v1704, 0
        %v1780 = vsel %vm670, %v1705, 0
        %v1783 = vsel %vm670, %v1706, 0
        %v1786 = vsel %vm670, %v1707, 0
        %v1789 = vsel %vm670, %v1708, 0
        %v1792 = vsel %vm670, %v1709, 0
        %v1795 = vsel %vm670, %v1710, 0
        %v1798 = vsel %vm670, %v1711, 0
        %v1801 = vsel %vm670, %v1712, 0
        %v1804 = vsel %vm670, %v1713, 0
        %v1807 = vsel %vm670, %v1714, 0
        %v1810 = vsel %vm670, %v1715, 0
        %v1813 = vsel %vm670, %v1716, 0
        %v1816 = vsel %vm670, %v1717, 0
        %v1819 = vsel %vm670, %v1718, 0
        %v1822 = vsel %vm670, %v1719, 0
        %v1825 = vsel %vm670, %v1720, 0
        %1827 = vmatpush.msra.mxu0 0.0
        %1828 = vmatpush.msra.mxu0 0.0
        %1829 = vmatpush.msra.mxu0 0.0
        %1830 = vmatpush.msra.mxu0 0.0
        %1831 = vmatpush.msra.mxu0 0.0
        %1832 = vmatpush.msra.mxu0 0.0
        %1833 = vmatpush.msra.mxu0 0.0
        %1834 = vmatpush.msra.mxu0 %v1730
        %1835 = vmatpush.msra.mxu0 %v1729
        %1836 = vmatpush.msra.mxu0 %v1728
        %1837 = vmatpush.msra.mxu0 %v1727
        %1838 = vmatpush.msra.mxu0 %v1726
        %1839 = vmatpush.msra.mxu0 %v1725
        %1840 = vmatpush.msra.mxu0 %v1724
        %1841 = vmatpush.msra.mxu0 %v1723
        %1842 = vmatpush.msra.mxu0 %v1722
        %1843 = vmatmul.f32.gmra.mxu0 %v1732
        %v1844 = vpop.f32.mrf.mxu0
        %v1845 = vadd.f32 0.0, %v1844
        %1846 = vmatmul.f32.gmra.mxu0 %v1735
        %v1847 = vpop.f32.mrf.mxu0
        %v1848 = vadd.f32 0.0, %v1847
        %1849 = vmatmul.f32.gmra.mxu0 %v1738
        %v1850 = vpop.f32.mrf.mxu0
        %v1851 = vadd.f32 0.0, %v1850
        %1852 = vmatmul.f32.gmra.mxu0 %v1741
        %v1853 = vpop.f32.mrf.mxu0
        %v1854 = vadd.f32 0.0, %v1853
        %1855 = vmatmul.f32.gmra.mxu0 %v1744
        %v1856 = vpop.f32.mrf.mxu0
        %v1857 = vadd.f32 0.0, %v1856
        %1858 = vmatmul.f32.gmra.mxu0 %v1747
        %v1859 = vpop.f32.mrf.mxu0
        %v1860 = vadd.f32 0.0, %v1859
        %1861 = vmatmul.f32.gmra.mxu0 %v1750
        %v1862 = vpop.f32.mrf.mxu0
        %v1863 = vadd.f32 0.0, %v1862
        %1864 = vmatmul.f32.gmra.mxu0 %v1753
        %v1865 = vpop.f32.mrf.mxu0
        %v1866 = vadd.f32 0.0, %v1865
        %1867 = vmatmul.f32.gmra.mxu0 %v1756
        %v1868 = vpop.f32.mrf.mxu0
        %v1869 = vadd.f32 0.0, %v1868
        %1870 = vmatmul.f32.gmra.mxu0 %v1759
        %v1871 = vpop.f32.mrf.mxu0
        %v1872 = vadd.f32 0.0, %v1871
        %1873 = vmatmul.f32.gmra.mxu0 %v1762
        %v1874 = vpop.f32.mrf.mxu0
        %v1875 = vadd.f32 0.0, %v1874
        %1876 = vmatmul.f32.gmra.mxu0 %v1765
        %v1877 = vpop.f32.mrf.mxu0
        %v1878 = vadd.f32 0.0, %v1877
        %1879 = vmatmul.f32.gmra.mxu0 %v1768
        %v1880 = vpop.f32.mrf.mxu0
        %v1881 = vadd.f32 0.0, %v1880
        %1882 = vmatmul.f32.gmra.mxu0 %v1771
        %v1883 = vpop.f32.mrf.mxu0
        %v1884 = vadd.f32 0.0, %v1883
        %1885 = vmatmul.f32.gmra.mxu0 %v1774
        %v1886 = vpop.f32.mrf.mxu0
        %v1887 = vadd.f32 0.0, %v1886
        %1888 = vmatmul.f32.gmra.mxu0 %v1777
        %v1889 = vpop.f32.mrf.mxu0
        %v1890 = vadd.f32 0.0, %v1889
        %1891 = vmatmul.f32.gmra.mxu0 %v1780
        %v1892 = vpop.f32.mrf.mxu0
        %v1893 = vadd.f32 0.0, %v1892
        %1894 = vmatmul.f32.gmra.mxu0 %v1783
        %v1895 = vpop.f32.mrf.mxu0
        %v1896 = vadd.f32 0.0, %v1895
        %1897 = vmatmul.f32.gmra.mxu0 %v1786
        %v1898 = vpop.f32.mrf.mxu0
        %v1899 = vadd.f32 0.0, %v1898
        %1900 = vmatmul.f32.gmra.mxu0 %v1789
        %v1901 = vpop.f32.mrf.mxu0
        %v1902 = vadd.f32 0.0, %v1901
        %1903 = vmatmul.f32.gmra.mxu0 %v1792
        %v1904 = vpop.f32.mrf.mxu0
        %v1905 = vadd.f32 0.0, %v1904
        %1906 = vmatmul.f32.gmra.mxu0 %v1795
        %v1907 = vpop.f32.mrf.mxu0
        %v1908 = vadd.f32 0.0, %v1907
        %1909 = vmatmul.f32.gmra.mxu0 %v1798
        %v1910 = vpop.f32.mrf.mxu0
        %v1911 = vadd.f32 0.0, %v1910
        %1912 = vmatmul.f32.gmra.mxu0 %v1801
        %v1913 = vpop.f32.mrf.mxu0
        %v1914 = vadd.f32 0.0, %v1913
        %1915 = vmatmul.f32.gmra.mxu0 %v1804
        %v1916 = vpop.f32.mrf.mxu0
        %v1917 = vadd.f32 0.0, %v1916
        %1918 = vmatmul.f32.gmra.mxu0 %v1807
        %v1919 = vpop.f32.mrf.mxu0
        %v1920 = vadd.f32 0.0, %v1919
        %1921 = vmatmul.f32.gmra.mxu0 %v1810
        %v1922 = vpop.f32.mrf.mxu0
        %v1923 = vadd.f32 0.0, %v1922
        %1924 = vmatmul.f32.gmra.mxu0 %v1813
        %v1925 = vpop.f32.mrf.mxu0
        %v1926 = vadd.f32 0.0, %v1925
        %1927 = vmatmul.f32.gmra.mxu0 %v1816
        %v1928 = vpop.f32.mrf.mxu0
        %v1929 = vadd.f32 0.0, %v1928
        %1930 = vmatmul.f32.gmra.mxu0 %v1819
        %v1931 = vpop.f32.mrf.mxu0
        %v1932 = vadd.f32 0.0, %v1931
        %1933 = vmatmul.f32.gmra.mxu0 %v1822
        %v1934 = vpop.f32.mrf.mxu0
        %v1935 = vadd.f32 0.0, %v1934
        %1936 = vmatmul.f32.gmra.mxu0 %v1825
        %v1937 = vpop.f32.mrf.mxu0
        %v1938 = vadd.f32 0.0, %v1937
        %1939 = vdwg.mxu0
        %v1940 = vadd.f32 %v1657, %v1845
        %v1941 = vadd.f32 %v1658, %v1848
        %v1942 = vadd.f32 %v1659, %v1851
        %v1943 = vadd.f32 %v1660, %v1854
        %v1944 = vadd.f32 %v1661, %v1857
        %v1945 = vadd.f32 %v1662, %v1860
        %v1946 = vadd.f32 %v1663, %v1863
        %v1947 = vadd.f32 %v1664, %v1866
        %v1948 = vadd.f32 %v1665, %v1869
        %v1949 = vadd.f32 %v1666, %v1872
        %v1950 = vadd.f32 %v1667, %v1875
        %v1951 = vadd.f32 %v1668, %v1878
        %v1952 = vadd.f32 %v1669, %v1881
        %v1953 = vadd.f32 %v1670, %v1884
        %v1954 = vadd.f32 %v1671, %v1887
        %v1955 = vadd.f32 %v1672, %v1890
        %v1956 = vadd.f32 %v1673, %v1893
        %v1957 = vadd.f32 %v1674, %v1896
        %v1958 = vadd.f32 %v1675, %v1899
        %v1959 = vadd.f32 %v1676, %v1902
        %v1960 = vadd.f32 %v1677, %v1905
        %v1961 = vadd.f32 %v1678, %v1908
        %v1962 = vadd.f32 %v1679, %v1911
        %v1963 = vadd.f32 %v1680, %v1914
        %v1964 = vadd.f32 %v1681, %v1917
        %v1965 = vadd.f32 %v1682, %v1920
        %v1966 = vadd.f32 %v1683, %v1923
        %v1967 = vadd.f32 %v1684, %v1926
        %v1968 = vadd.f32 %v1685, %v1929
        %v1969 = vadd.f32 %v1686, %v1932
        %v1970 = vadd.f32 %v1687, %v1935
        %v1971 = vadd.f32 %v1688, %v1938
        %v1972 = vld [vmem:[%s854 + $0x1] sm:$0xff]
        %v1973 = vld [vmem:[%s854 + $0x9] sm:$0xff]
        %v1974 = vld [vmem:[%s854 + $0x19] sm:$0xff]
        %v1975 = vld [vmem:[%s854 + $0x21] sm:$0xff]
        %v1976 = vld [vmem:[%s854 + $0x31] sm:$0xff]
        %v1977 = vld [vmem:[%s854 + $0x39] sm:$0xff]
        %v1978 = vld [vmem:[%s854 + $0x49] sm:$0xff]
        %v1979 = vld [vmem:[%s854 + $0x51] sm:$0xff]
        %v1980 = vld [vmem:[%s854 + $0x61] sm:$0xff]
        %v1981 = vld [vmem:[%s854 + $0x69] sm:$0xff]
        %v1982 = vld [vmem:[%s854 + $0x79] sm:$0xff]
        %v1983 = vld [vmem:[%s854 + $0x81] sm:$0xff]
        %v1984 = vld [vmem:[%s854 + $0x91] sm:$0xff]
        %v1985 = vld [vmem:[%s854 + $0x99] sm:$0xff]
        %v1986 = vld [vmem:[%s854 + $0xa9] sm:$0xff]
        %v1987 = vld [vmem:[%s854 + $0xb1] sm:$0xff]
        %v1988 = vld [vmem:[%s854 + $0xc1] sm:$0xff]
        %v1989 = vld [vmem:[%s854 + $0xc9] sm:$0xff]
        %v1990 = vld [vmem:[%s854 + $0xd9] sm:$0xff]
        %v1991 = vld [vmem:[%s854 + $0xe1] sm:$0xff]
        %v1992 = vld [vmem:[%s854 + $0xf1] sm:$0xff]
        %v1993 = vld [vmem:[%s854 + $0xf9] sm:$0xff]
        %v1994 = vld [vmem:[%s854 + $0x109] sm:$0xff]
        %v1995 = vld [vmem:[%s854 + $0x111] sm:$0xff]
        %v1996 = vld [vmem:[%s854 + $0x121] sm:$0xff]
        %v1997 = vld [vmem:[%s854 + $0x129] sm:$0xff]
        %v1998 = vld [vmem:[%s854 + $0x139] sm:$0xff]
        %v1999 = vld [vmem:[%s854 + $0x141] sm:$0xff]
        %v2000 = vld [vmem:[%s854 + $0x151] sm:$0xff]
        %v2001 = vld [vmem:[%s854 + $0x159] sm:$0xff]
        %v2002 = vld [vmem:[%s854 + $0x169] sm:$0xff]
        %v2003 = vld [vmem:[%s854 + $0x171] sm:$0xff]
        %s2004 = scalar_lea.vmem [#allocation4], 288
        %v2005 = vld [vmem:[%s2004] sm:$0xff]
        %v2006 = vld [vmem:[%s2004 + $0x8] sm:$0xff]
        %v2007 = vld [vmem:[%s2004 + $0x10] sm:$0xff]
        %v2008 = vld [vmem:[%s2004 + $0x18] sm:$0xff]
        %v2009 = vld [vmem:[%s2004 + $0x20] sm:$0xff]
        %v2010 = vld [vmem:[%s2004 + $0x28] sm:$0xff]
        %v2011 = vld [vmem:[%s2004 + $0x30] sm:$0xff]
        %v2012 = vld [vmem:[%s2004 + $0x38] sm:$0xff]
        %v2013 = vld [vmem:[%s2004 + $0x40] sm:$0xff]
        %v2015 = vsel %vm670, %v1972, 0
        %v2018 = vsel %vm670, %v1973, 0
        %v2021 = vsel %vm670, %v1974, 0
        %v2024 = vsel %vm670, %v1975, 0
        %v2027 = vsel %vm670, %v1976, 0
        %v2030 = vsel %vm670, %v1977, 0
        %v2033 = vsel %vm670, %v1978, 0
        %v2036 = vsel %vm670, %v1979, 0
        %v2039 = vsel %vm670, %v1980, 0
        %v2042 = vsel %vm670, %v1981, 0
        %v2045 = vsel %vm670, %v1982, 0
        %v2048 = vsel %vm670, %v1983, 0
        %v2051 = vsel %vm670, %v1984, 0
        %v2054 = vsel %vm670, %v1985, 0
        %v2057 = vsel %vm670, %v1986, 0
        %v2060 = vsel %vm670, %v1987, 0
        %v2063 = vsel %vm670, %v1988, 0
        %v2066 = vsel %vm670, %v1989, 0
        %v2069 = vsel %vm670, %v1990, 0
        %v2072 = vsel %vm670, %v1991, 0
        %v2075 = vsel %vm670, %v1992, 0
        %v2078 = vsel %vm670, %v1993, 0
        %v2081 = vsel %vm670, %v1994, 0
        %v2084 = vsel %vm670, %v1995, 0
        %v2087 = vsel %vm670, %v1996, 0
        %v2090 = vsel %vm670, %v1997, 0
        %v2093 = vsel %vm670, %v1998, 0
        %v2096 = vsel %vm670, %v1999, 0
        %v2099 = vsel %vm670, %v2000, 0
        %v2102 = vsel %vm670, %v2001, 0
        %v2105 = vsel %vm670, %v2002, 0
        %v2108 = vsel %vm670, %v2003, 0
        %2110 = vmatpush.msra.mxu0 0.0
        %2111 = vmatpush.msra.mxu0 0.0
        %2112 = vmatpush.msra.mxu0 0.0
        %2113 = vmatpush.msra.mxu0 0.0
        %2114 = vmatpush.msra.mxu0 0.0
        %2115 = vmatpush.msra.mxu0 0.0
        %2116 = vmatpush.msra.mxu0 0.0
        %2117 = vmatpush.msra.mxu0 %v2013
        %2118 = vmatpush.msra.mxu0 %v2012
        %2119 = vmatpush.msra.mxu0 %v2011
        %2120 = vmatpush.msra.mxu0 %v2010
        %2121 = vmatpush.msra.mxu0 %v2009
        %2122 = vmatpush.msra.mxu0 %v2008
        %2123 = vmatpush.msra.mxu0 %v2007
        %2124 = vmatpush.msra.mxu0 %v2006
        %2125 = vmatpush.msra.mxu0 %v2005
        %2126 = vmatmul.f32.gmra.mxu0 %v2015
        %v2127 = vpop.f32.mrf.mxu0
        %v2128 = vadd.f32 0.0, %v2127
        %2129 = vmatmul.f32.gmra.mxu0 %v2018
        %v2130 = vpop.f32.mrf.mxu0
        %v2131 = vadd.f32 0.0, %v2130
        %2132 = vmatmul.f32.gmra.mxu0 %v2021
        %v2133 = vpop.f32.mrf.mxu0
        %v2134 = vadd.f32 0.0, %v2133
        %2135 = vmatmul.f32.gmra.mxu0 %v2024
        %v2136 = vpop.f32.mrf.mxu0
        %v2137 = vadd.f32 0.0, %v2136
        %2138 = vmatmul.f32.gmra.mxu0 %v2027
        %v2139 = vpop.f32.mrf.mxu0
        %v2140 = vadd.f32 0.0, %v2139
        %2141 = vmatmul.f32.gmra.mxu0 %v2030
        %v2142 = vpop.f32.mrf.mxu0
        %v2143 = vadd.f32 0.0, %v2142
        %2144 = vmatmul.f32.gmra.mxu0 %v2033
        %v2145 = vpop.f32.mrf.mxu0
        %v2146 = vadd.f32 0.0, %v2145
        %2147 = vmatmul.f32.gmra.mxu0 %v2036
        %v2148 = vpop.f32.mrf.mxu0
        %v2149 = vadd.f32 0.0, %v2148
        %2150 = vmatmul.f32.gmra.mxu0 %v2039
        %v2151 = vpop.f32.mrf.mxu0
        %v2152 = vadd.f32 0.0, %v2151
        %2153 = vmatmul.f32.gmra.mxu0 %v2042
        %v2154 = vpop.f32.mrf.mxu0
        %v2155 = vadd.f32 0.0, %v2154
        %2156 = vmatmul.f32.gmra.mxu0 %v2045
        %v2157 = vpop.f32.mrf.mxu0
        %v2158 = vadd.f32 0.0, %v2157
        %2159 = vmatmul.f32.gmra.mxu0 %v2048
        %v2160 = vpop.f32.mrf.mxu0
        %v2161 = vadd.f32 0.0, %v2160
        %2162 = vmatmul.f32.gmra.mxu0 %v2051
        %v2163 = vpop.f32.mrf.mxu0
        %v2164 = vadd.f32 0.0, %v2163
        %2165 = vmatmul.f32.gmra.mxu0 %v2054
        %v2166 = vpop.f32.mrf.mxu0
        %v2167 = vadd.f32 0.0, %v2166
        %2168 = vmatmul.f32.gmra.mxu0 %v2057
        %v2169 = vpop.f32.mrf.mxu0
        %v2170 = vadd.f32 0.0, %v2169
        %2171 = vmatmul.f32.gmra.mxu0 %v2060
        %v2172 = vpop.f32.mrf.mxu0
        %v2173 = vadd.f32 0.0, %v2172
        %2174 = vmatmul.f32.gmra.mxu0 %v2063
        %v2175 = vpop.f32.mrf.mxu0
        %v2176 = vadd.f32 0.0, %v2175
        %2177 = vmatmul.f32.gmra.mxu0 %v2066
        %v2178 = vpop.f32.mrf.mxu0
        %v2179 = vadd.f32 0.0, %v2178
        %2180 = vmatmul.f32.gmra.mxu0 %v2069
        %v2181 = vpop.f32.mrf.mxu0
        %v2182 = vadd.f32 0.0, %v2181
        %2183 = vmatmul.f32.gmra.mxu0 %v2072
        %v2184 = vpop.f32.mrf.mxu0
        %v2185 = vadd.f32 0.0, %v2184
        %2186 = vmatmul.f32.gmra.mxu0 %v2075
        %v2187 = vpop.f32.mrf.mxu0
        %v2188 = vadd.f32 0.0, %v2187
        %2189 = vmatmul.f32.gmra.mxu0 %v2078
        %v2190 = vpop.f32.mrf.mxu0
        %v2191 = vadd.f32 0.0, %v2190
        %2192 = vmatmul.f32.gmra.mxu0 %v2081
        %v2193 = vpop.f32.mrf.mxu0
        %v2194 = vadd.f32 0.0, %v2193
        %2195 = vmatmul.f32.gmra.mxu0 %v2084
        %v2196 = vpop.f32.mrf.mxu0
        %v2197 = vadd.f32 0.0, %v2196
        %2198 = vmatmul.f32.gmra.mxu0 %v2087
        %v2199 = vpop.f32.mrf.mxu0
        %v2200 = vadd.f32 0.0, %v2199
        %2201 = vmatmul.f32.gmra.mxu0 %v2090
        %v2202 = vpop.f32.mrf.mxu0
        %v2203 = vadd.f32 0.0, %v2202
        %2204 = vmatmul.f32.gmra.mxu0 %v2093
        %v2205 = vpop.f32.mrf.mxu0
        %v2206 = vadd.f32 0.0, %v2205
        %2207 = vmatmul.f32.gmra.mxu0 %v2096
        %v2208 = vpop.f32.mrf.mxu0
        %v2209 = vadd.f32 0.0, %v2208
        %2210 = vmatmul.f32.gmra.mxu0 %v2099
        %v2211 = vpop.f32.mrf.mxu0
        %v2212 = vadd.f32 0.0, %v2211
        %2213 = vmatmul.f32.gmra.mxu0 %v2102
        %v2214 = vpop.f32.mrf.mxu0
        %v2215 = vadd.f32 0.0, %v2214
        %2216 = vmatmul.f32.gmra.mxu0 %v2105
        %v2217 = vpop.f32.mrf.mxu0
        %v2218 = vadd.f32 0.0, %v2217
        %2219 = vmatmul.f32.gmra.mxu0 %v2108
        %v2220 = vpop.f32.mrf.mxu0
        %v2221 = vadd.f32 0.0, %v2220
        %2222 = vdwg.mxu0
        %v2223 = vadd.f32 %v1940, %v2128
        %v2224 = vadd.f32 %v1941, %v2131
        %v2225 = vadd.f32 %v1942, %v2134
        %v2226 = vadd.f32 %v1943, %v2137
        %v2227 = vadd.f32 %v1944, %v2140
        %v2228 = vadd.f32 %v1945, %v2143
        %v2229 = vadd.f32 %v1946, %v2146
        %v2230 = vadd.f32 %v1947, %v2149
        %v2231 = vadd.f32 %v1948, %v2152
        %v2232 = vadd.f32 %v1949, %v2155
        %v2233 = vadd.f32 %v1950, %v2158
        %v2234 = vadd.f32 %v1951, %v2161
        %v2235 = vadd.f32 %v1952, %v2164
        %v2236 = vadd.f32 %v1953, %v2167
        %v2237 = vadd.f32 %v1954, %v2170
        %v2238 = vadd.f32 %v1955, %v2173
        %v2239 = vadd.f32 %v1956, %v2176
        %v2240 = vadd.f32 %v1957, %v2179
        %v2241 = vadd.f32 %v1958, %v2182
        %v2242 = vadd.f32 %v1959, %v2185
        %v2243 = vadd.f32 %v1960, %v2188
        %v2244 = vadd.f32 %v1961, %v2191
        %v2245 = vadd.f32 %v1962, %v2194
        %v2246 = vadd.f32 %v1963, %v2197
        %v2247 = vadd.f32 %v1964, %v2200
        %v2248 = vadd.f32 %v1965, %v2203
        %v2249 = vadd.f32 %v1966, %v2206
        %v2250 = vadd.f32 %v1967, %v2209
        %v2251 = vadd.f32 %v1968, %v2212
        %v2252 = vadd.f32 %v1969, %v2215
        %v2253 = vadd.f32 %v1970, %v2218
        %v2254 = vadd.f32 %v1971, %v2221
        %v2255 = vld [vmem:[%s854 + $0x2] sm:$0xff]
        %v2256 = vld [vmem:[%s854 + $0xa] sm:$0xff]
        %v2257 = vld [vmem:[%s854 + $0x1a] sm:$0xff]
        %v2258 = vld [vmem:[%s854 + $0x22] sm:$0xff]
        %v2259 = vld [vmem:[%s854 + $0x32] sm:$0xff]
        %v2260 = vld [vmem:[%s854 + $0x3a] sm:$0xff]
        %v2261 = vld [vmem:[%s854 + $0x4a] sm:$0xff]
        %v2262 = vld [vmem:[%s854 + $0x52] sm:$0xff]
        %v2263 = vld [vmem:[%s854 + $0x62] sm:$0xff]
        %v2264 = vld [vmem:[%s854 + $0x6a] sm:$0xff]
        %v2265 = vld [vmem:[%s854 + $0x7a] sm:$0xff]
        %v2266 = vld [vmem:[%s854 + $0x82] sm:$0xff]
        %v2267 = vld [vmem:[%s854 + $0x92] sm:$0xff]
        %v2268 = vld [vmem:[%s854 + $0x9a] sm:$0xff]
        %v2269 = vld [vmem:[%s854 + $0xaa] sm:$0xff]
        %v2270 = vld [vmem:[%s854 + $0xb2] sm:$0xff]
        %v2271 = vld [vmem:[%s854 + $0xc2] sm:$0xff]
        %v2272 = vld [vmem:[%s854 + $0xca] sm:$0xff]
        %v2273 = vld [vmem:[%s854 + $0xda] sm:$0xff]
        %v2274 = vld [vmem:[%s854 + $0xe2] sm:$0xff]
        %v2275 = vld [vmem:[%s854 + $0xf2] sm:$0xff]
        %v2276 = vld [vmem:[%s854 + $0xfa] sm:$0xff]
        %v2277 = vld [vmem:[%s854 + $0x10a] sm:$0xff]
        %v2278 = vld [vmem:[%s854 + $0x112] sm:$0xff]
        %v2279 = vld [vmem:[%s854 + $0x122] sm:$0xff]
        %v2280 = vld [vmem:[%s854 + $0x12a] sm:$0xff]
        %v2281 = vld [vmem:[%s854 + $0x13a] sm:$0xff]
        %v2282 = vld [vmem:[%s854 + $0x142] sm:$0xff]
        %v2283 = vld [vmem:[%s854 + $0x152] sm:$0xff]
        %v2284 = vld [vmem:[%s854 + $0x15a] sm:$0xff]
        %v2285 = vld [vmem:[%s854 + $0x16a] sm:$0xff]
        %v2286 = vld [vmem:[%s854 + $0x172] sm:$0xff]
        %s2287 = scalar_lea.vmem [#allocation4], 360
        %v2288 = vld [vmem:[%s2287] sm:$0xff]
        %v2289 = vld [vmem:[%s2287 + $0x8] sm:$0xff]
        %v2290 = vld [vmem:[%s2287 + $0x10] sm:$0xff]
        %v2291 = vld [vmem:[%s2287 + $0x18] sm:$0xff]
        %v2292 = vld [vmem:[%s2287 + $0x20] sm:$0xff]
        %v2293 = vld [vmem:[%s2287 + $0x28] sm:$0xff]
        %v2294 = vld [vmem:[%s2287 + $0x30] sm:$0xff]
        %v2295 = vld [vmem:[%s2287 + $0x38] sm:$0xff]
        %v2296 = vld [vmem:[%s2287 + $0x40] sm:$0xff]
        %v2298 = vsel %vm670, %v2255, 0
        %v2301 = vsel %vm670, %v2256, 0
        %v2304 = vsel %vm670, %v2257, 0
        %v2307 = vsel %vm670, %v2258, 0
        %v2310 = vsel %vm670, %v2259, 0
        %v2313 = vsel %vm670, %v2260, 0
        %v2316 = vsel %vm670, %v2261, 0
        %v2319 = vsel %vm670, %v2262, 0
        %v2322 = vsel %vm670, %v2263, 0
        %v2325 = vsel %vm670, %v2264, 0
        %v2328 = vsel %vm670, %v2265, 0
        %v2331 = vsel %vm670, %v2266, 0
        %v2334 = vsel %vm670, %v2267, 0
        %v2337 = vsel %vm670, %v2268, 0
        %v2340 = vsel %vm670, %v2269, 0
        %v2343 = vsel %vm670, %v2270, 0
        %v2346 = vsel %vm670, %v2271, 0
        %v2349 = vsel %vm670, %v2272, 0
        %v2352 = vsel %vm670, %v2273, 0
        %v2355 = vsel %vm670, %v2274, 0
        %v2358 = vsel %vm670, %v2275, 0
        %v2361 = vsel %vm670, %v2276, 0
        %v2364 = vsel %vm670, %v2277, 0
        %v2367 = vsel %vm670, %v2278, 0
        %v2370 = vsel %vm670, %v2279, 0
        %v2373 = vsel %vm670, %v2280, 0
        %v2376 = vsel %vm670, %v2281, 0
        %v2379 = vsel %vm670, %v2282, 0
        %v2382 = vsel %vm670, %v2283, 0
        %v2385 = vsel %vm670, %v2284, 0
        %v2388 = vsel %vm670, %v2285, 0
        %v2391 = vsel %vm670, %v2286, 0
        %2393 = vmatpush.msra.mxu0 0.0
        %2394 = vmatpush.msra.mxu0 0.0
        %2395 = vmatpush.msra.mxu0 0.0
        %2396 = vmatpush.msra.mxu0 0.0
        %2397 = vmatpush.msra.mxu0 0.0
        %2398 = vmatpush.msra.mxu0 0.0
        %2399 = vmatpush.msra.mxu0 0.0
        %2400 = vmatpush.msra.mxu0 %v2296
        %2401 = vmatpush.msra.mxu0 %v2295
        %2402 = vmatpush.msra.mxu0 %v2294
        %2403 = vmatpush.msra.mxu0 %v2293
        %2404 = vmatpush.msra.mxu0 %v2292
        %2405 = vmatpush.msra.mxu0 %v2291
        %2406 = vmatpush.msra.mxu0 %v2290
        %2407 = vmatpush.msra.mxu0 %v2289
        %2408 = vmatpush.msra.mxu0 %v2288
        %2409 = vmatmul.f32.gmra.mxu0 %v2298
        %v2410 = vpop.f32.mrf.mxu0
        %v2411 = vadd.f32 0.0, %v2410
        %2412 = vmatmul.f32.gmra.mxu0 %v2301
        %v2413 = vpop.f32.mrf.mxu0
        %v2414 = vadd.f32 0.0, %v2413
        %2415 = vmatmul.f32.gmra.mxu0 %v2304
        %v2416 = vpop.f32.mrf.mxu0
        %v2417 = vadd.f32 0.0, %v2416
        %2418 = vmatmul.f32.gmra.mxu0 %v2307
        %v2419 = vpop.f32.mrf.mxu0
        %v2420 = vadd.f32 0.0, %v2419
        %2421 = vmatmul.f32.gmra.mxu0 %v2310
        %v2422 = vpop.f32.mrf.mxu0
        %v2423 = vadd.f32 0.0, %v2422
        %2424 = vmatmul.f32.gmra.mxu0 %v2313
        %v2425 = vpop.f32.mrf.mxu0
        %v2426 = vadd.f32 0.0, %v2425
        %2427 = vmatmul.f32.gmra.mxu0 %v2316
        %v2428 = vpop.f32.mrf.mxu0
        %v2429 = vadd.f32 0.0, %v2428
        %2430 = vmatmul.f32.gmra.mxu0 %v2319
        %v2431 = vpop.f32.mrf.mxu0
        %v2432 = vadd.f32 0.0, %v2431
        %2433 = vmatmul.f32.gmra.mxu0 %v2322
        %v2434 = vpop.f32.mrf.mxu0
        %v2435 = vadd.f32 0.0, %v2434
        %2436 = vmatmul.f32.gmra.mxu0 %v2325
        %v2437 = vpop.f32.mrf.mxu0
        %v2438 = vadd.f32 0.0, %v2437
        %2439 = vmatmul.f32.gmra.mxu0 %v2328
        %v2440 = vpop.f32.mrf.mxu0
        %v2441 = vadd.f32 0.0, %v2440
        %2442 = vmatmul.f32.gmra.mxu0 %v2331
        %v2443 = vpop.f32.mrf.mxu0
        %v2444 = vadd.f32 0.0, %v2443
        %2445 = vmatmul.f32.gmra.mxu0 %v2334
        %v2446 = vpop.f32.mrf.mxu0
        %v2447 = vadd.f32 0.0, %v2446
        %2448 = vmatmul.f32.gmra.mxu0 %v2337
        %v2449 = vpop.f32.mrf.mxu0
        %v2450 = vadd.f32 0.0, %v2449
        %2451 = vmatmul.f32.gmra.mxu0 %v2340
        %v2452 = vpop.f32.mrf.mxu0
        %v2453 = vadd.f32 0.0, %v2452
        %2454 = vmatmul.f32.gmra.mxu0 %v2343
        %v2455 = vpop.f32.mrf.mxu0
        %v2456 = vadd.f32 0.0, %v2455
        %2457 = vmatmul.f32.gmra.mxu0 %v2346
        %v2458 = vpop.f32.mrf.mxu0
        %v2459 = vadd.f32 0.0, %v2458
        %2460 = vmatmul.f32.gmra.mxu0 %v2349
        %v2461 = vpop.f32.mrf.mxu0
        %v2462 = vadd.f32 0.0, %v2461
        %2463 = vmatmul.f32.gmra.mxu0 %v2352
        %v2464 = vpop.f32.mrf.mxu0
        %v2465 = vadd.f32 0.0, %v2464
        %2466 = vmatmul.f32.gmra.mxu0 %v2355
        %v2467 = vpop.f32.mrf.mxu0
        %v2468 = vadd.f32 0.0, %v2467
        %2469 = vmatmul.f32.gmra.mxu0 %v2358
        %v2470 = vpop.f32.mrf.mxu0
        %v2471 = vadd.f32 0.0, %v2470
        %2472 = vmatmul.f32.gmra.mxu0 %v2361
        %v2473 = vpop.f32.mrf.mxu0
        %v2474 = vadd.f32 0.0, %v2473
        %2475 = vmatmul.f32.gmra.mxu0 %v2364
        %v2476 = vpop.f32.mrf.mxu0
        %v2477 = vadd.f32 0.0, %v2476
        %2478 = vmatmul.f32.gmra.mxu0 %v2367
        %v2479 = vpop.f32.mrf.mxu0
        %v2480 = vadd.f32 0.0, %v2479
        %2481 = vmatmul.f32.gmra.mxu0 %v2370
        %v2482 = vpop.f32.mrf.mxu0
        %v2483 = vadd.f32 0.0, %v2482
        %2484 = vmatmul.f32.gmra.mxu0 %v2373
        %v2485 = vpop.f32.mrf.mxu0
        %v2486 = vadd.f32 0.0, %v2485
        %2487 = vmatmul.f32.gmra.mxu0 %v2376
        %v2488 = vpop.f32.mrf.mxu0
        %v2489 = vadd.f32 0.0, %v2488
        %2490 = vmatmul.f32.gmra.mxu0 %v2379
        %v2491 = vpop.f32.mrf.mxu0
        %v2492 = vadd.f32 0.0, %v2491
        %2493 = vmatmul.f32.gmra.mxu0 %v2382
        %v2494 = vpop.f32.mrf.mxu0
        %v2495 = vadd.f32 0.0, %v2494
        %2496 = vmatmul.f32.gmra.mxu0 %v2385
        %v2497 = vpop.f32.mrf.mxu0
        %v2498 = vadd.f32 0.0, %v2497
        %2499 = vmatmul.f32.gmra.mxu0 %v2388
        %v2500 = vpop.f32.mrf.mxu0
        %v2501 = vadd.f32 0.0, %v2500
        %2502 = vmatmul.f32.gmra.mxu0 %v2391
        %v2503 = vpop.f32.mrf.mxu0
        %v2504 = vadd.f32 0.0, %v2503
        %2505 = vdwg.mxu0
        %v2506 = vadd.f32 %v2223, %v2411
        %v2507 = vadd.f32 %v2224, %v2414
        %v2508 = vadd.f32 %v2225, %v2417
        %v2509 = vadd.f32 %v2226, %v2420
        %v2510 = vadd.f32 %v2227, %v2423
        %v2511 = vadd.f32 %v2228, %v2426
        %v2512 = vadd.f32 %v2229, %v2429
        %v2513 = vadd.f32 %v2230, %v2432
        %v2514 = vadd.f32 %v2231, %v2435
        %v2515 = vadd.f32 %v2232, %v2438
        %v2516 = vadd.f32 %v2233, %v2441
        %v2517 = vadd.f32 %v2234, %v2444
        %v2518 = vadd.f32 %v2235, %v2447
        %v2519 = vadd.f32 %v2236, %v2450
        %v2520 = vadd.f32 %v2237, %v2453
        %v2521 = vadd.f32 %v2238, %v2456
        %v2522 = vadd.f32 %v2239, %v2459
        %v2523 = vadd.f32 %v2240, %v2462
        %v2524 = vadd.f32 %v2241, %v2465
        %v2525 = vadd.f32 %v2242, %v2468
        %v2526 = vadd.f32 %v2243, %v2471
        %v2527 = vadd.f32 %v2244, %v2474
        %v2528 = vadd.f32 %v2245, %v2477
        %v2529 = vadd.f32 %v2246, %v2480
        %v2530 = vadd.f32 %v2247, %v2483
        %v2531 = vadd.f32 %v2248, %v2486
        %v2532 = vadd.f32 %v2249, %v2489
        %v2533 = vadd.f32 %v2250, %v2492
        %v2534 = vadd.f32 %v2251, %v2495
        %v2535 = vadd.f32 %v2252, %v2498
        %v2536 = vadd.f32 %v2253, %v2501
        %v2537 = vadd.f32 %v2254, %v2504
        %s2538 = scalar_lea.vmem [#allocation2], 48
        %v2539 = vld [vmem:[%s2538] sm:$0xff]
        %v2540 = vld [vmem:[%s2538 + $0x8] sm:$0xff]
        %v2541 = vld [vmem:[%s2538 + $0x18] sm:$0xff]
        %v2542 = vld [vmem:[%s2538 + $0x20] sm:$0xff]
        %v2543 = vld [vmem:[%s2538 + $0x30] sm:$0xff]
        %v2544 = vld [vmem:[%s2538 + $0x38] sm:$0xff]
        %v2545 = vld [vmem:[%s2538 + $0x48] sm:$0xff]
        %v2546 = vld [vmem:[%s2538 + $0x50] sm:$0xff]
        %v2547 = vld [vmem:[%s2538 + $0x60] sm:$0xff]
        %v2548 = vld [vmem:[%s2538 + $0x68] sm:$0xff]
        %v2549 = vld [vmem:[%s2538 + $0x78] sm:$0xff]
        %v2550 = vld [vmem:[%s2538 + $0x80] sm:$0xff]
        %v2551 = vld [vmem:[%s2538 + $0x90] sm:$0xff]
        %v2552 = vld [vmem:[%s2538 + $0x98] sm:$0xff]
        %v2553 = vld [vmem:[%s2538 + $0xa8] sm:$0xff]
        %v2554 = vld [vmem:[%s2538 + $0xb0] sm:$0xff]
        %v2555 = vld [vmem:[%s2538 + $0xc0] sm:$0xff]
        %v2556 = vld [vmem:[%s2538 + $0xc8] sm:$0xff]
        %v2557 = vld [vmem:[%s2538 + $0xd8] sm:$0xff]
        %v2558 = vld [vmem:[%s2538 + $0xe0] sm:$0xff]
        %v2559 = vld [vmem:[%s2538 + $0xf0] sm:$0xff]
        %v2560 = vld [vmem:[%s2538 + $0xf8] sm:$0xff]
        %v2561 = vld [vmem:[%s2538 + $0x108] sm:$0xff]
        %v2562 = vld [vmem:[%s2538 + $0x110] sm:$0xff]
        %v2563 = vld [vmem:[%s2538 + $0x120] sm:$0xff]
        %v2564 = vld [vmem:[%s2538 + $0x128] sm:$0xff]
        %v2565 = vld [vmem:[%s2538 + $0x138] sm:$0xff]
        %v2566 = vld [vmem:[%s2538 + $0x140] sm:$0xff]
        %v2567 = vld [vmem:[%s2538 + $0x150] sm:$0xff]
        %v2568 = vld [vmem:[%s2538 + $0x158] sm:$0xff]
        %v2569 = vld [vmem:[%s2538 + $0x168] sm:$0xff]
        %v2570 = vld [vmem:[%s2538 + $0x170] sm:$0xff]
        %s2571 = scalar_lea.vmem [#allocation4], 432
        %v2572 = vld [vmem:[%s2571] sm:$0xff]
        %v2573 = vld [vmem:[%s2571 + $0x8] sm:$0xff]
        %v2574 = vld [vmem:[%s2571 + $0x10] sm:$0xff]
        %v2575 = vld [vmem:[%s2571 + $0x18] sm:$0xff]
        %v2576 = vld [vmem:[%s2571 + $0x20] sm:$0xff]
        %v2577 = vld [vmem:[%s2571 + $0x28] sm:$0xff]
        %v2578 = vld [vmem:[%s2571 + $0x30] sm:$0xff]
        %v2579 = vld [vmem:[%s2571 + $0x38] sm:$0xff]
        %v2580 = vld [vmem:[%s2571 + $0x40] sm:$0xff]
        %v2582 = vsel %vm670, %v2539, 0
        %v2585 = vsel %vm670, %v2540, 0
        %v2588 = vsel %vm670, %v2541, 0
        %v2591 = vsel %vm670, %v2542, 0
        %v2594 = vsel %vm670, %v2543, 0
        %v2597 = vsel %vm670, %v2544, 0
        %v2600 = vsel %vm670, %v2545, 0
        %v2603 = vsel %vm670, %v2546, 0
        %v2606 = vsel %vm670, %v2547, 0
        %v2609 = vsel %vm670, %v2548, 0
        %v2612 = vsel %vm670, %v2549, 0
        %v2615 = vsel %vm670, %v2550, 0
        %v2618 = vsel %vm670, %v2551, 0
        %v2621 = vsel %vm670, %v2552, 0
        %v2624 = vsel %vm670, %v2553, 0
        %v2627 = vsel %vm670, %v2554, 0
        %v2630 = vsel %vm670, %v2555, 0
        %v2633 = vsel %vm670, %v2556, 0
        %v2636 = vsel %vm670, %v2557, 0
        %v2639 = vsel %vm670, %v2558, 0
        %v2642 = vsel %vm670, %v2559, 0
        %v2645 = vsel %vm670, %v2560, 0
        %v2648 = vsel %vm670, %v2561, 0
        %v2651 = vsel %vm670, %v2562, 0
        %v2654 = vsel %vm670, %v2563, 0
        %v2657 = vsel %vm670, %v2564, 0
        %v2660 = vsel %vm670, %v2565, 0
        %v2663 = vsel %vm670, %v2566, 0
        %v2666 = vsel %vm670, %v2567, 0
        %v2669 = vsel %vm670, %v2568, 0
        %v2672 = vsel %vm670, %v2569, 0
        %v2675 = vsel %vm670, %v2570, 0
        %2677 = vmatpush.msra.mxu0 0.0
        %2678 = vmatpush.msra.mxu0 0.0
        %2679 = vmatpush.msra.mxu0 0.0
        %2680 = vmatpush.msra.mxu0 0.0
        %2681 = vmatpush.msra.mxu0 0.0
        %2682 = vmatpush.msra.mxu0 0.0
        %2683 = vmatpush.msra.mxu0 0.0
        %2684 = vmatpush.msra.mxu0 %v2580
        %2685 = vmatpush.msra.mxu0 %v2579
        %2686 = vmatpush.msra.mxu0 %v2578
        %2687 = vmatpush.msra.mxu0 %v2577
        %2688 = vmatpush.msra.mxu0 %v2576
        %2689 = vmatpush.msra.mxu0 %v2575
        %2690 = vmatpush.msra.mxu0 %v2574
        %2691 = vmatpush.msra.mxu0 %v2573
        %2692 = vmatpush.msra.mxu0 %v2572
        %2693 = vmatmul.f32.gmra.mxu0 %v2582
        %v2694 = vpop.f32.mrf.mxu0
        %v2695 = vadd.f32 0.0, %v2694
        %2696 = vmatmul.f32.gmra.mxu0 %v2585
        %v2697 = vpop.f32.mrf.mxu0
        %v2698 = vadd.f32 0.0, %v2697
        %2699 = vmatmul.f32.gmra.mxu0 %v2588
        %v2700 = vpop.f32.mrf.mxu0
        %v2701 = vadd.f32 0.0, %v2700
        %2702 = vmatmul.f32.gmra.mxu0 %v2591
        %v2703 = vpop.f32.mrf.mxu0
        %v2704 = vadd.f32 0.0, %v2703
        %2705 = vmatmul.f32.gmra.mxu0 %v2594
        %v2706 = vpop.f32.mrf.mxu0
        %v2707 = vadd.f32 0.0, %v2706
        %2708 = vmatmul.f32.gmra.mxu0 %v2597
        %v2709 = vpop.f32.mrf.mxu0
        %v2710 = vadd.f32 0.0, %v2709
        %2711 = vmatmul.f32.gmra.mxu0 %v2600
        %v2712 = vpop.f32.mrf.mxu0
        %v2713 = vadd.f32 0.0, %v2712
        %2714 = vmatmul.f32.gmra.mxu0 %v2603
        %v2715 = vpop.f32.mrf.mxu0
        %v2716 = vadd.f32 0.0, %v2715
        %2717 = vmatmul.f32.gmra.mxu0 %v2606
        %v2718 = vpop.f32.mrf.mxu0
        %v2719 = vadd.f32 0.0, %v2718
        %2720 = vmatmul.f32.gmra.mxu0 %v2609
        %v2721 = vpop.f32.mrf.mxu0
        %v2722 = vadd.f32 0.0, %v2721
        %2723 = vmatmul.f32.gmra.mxu0 %v2612
        %v2724 = vpop.f32.mrf.mxu0
        %v2725 = vadd.f32 0.0, %v2724
        %2726 = vmatmul.f32.gmra.mxu0 %v2615
        %v2727 = vpop.f32.mrf.mxu0
        %v2728 = vadd.f32 0.0, %v2727
        %2729 = vmatmul.f32.gmra.mxu0 %v2618
        %v2730 = vpop.f32.mrf.mxu0
        %v2731 = vadd.f32 0.0, %v2730
        %2732 = vmatmul.f32.gmra.mxu0 %v2621
        %v2733 = vpop.f32.mrf.mxu0
        %v2734 = vadd.f32 0.0, %v2733
        %2735 = vmatmul.f32.gmra.mxu0 %v2624
        %v2736 = vpop.f32.mrf.mxu0
        %v2737 = vadd.f32 0.0, %v2736
        %2738 = vmatmul.f32.gmra.mxu0 %v2627
        %v2739 = vpop.f32.mrf.mxu0
        %v2740 = vadd.f32 0.0, %v2739
        %2741 = vmatmul.f32.gmra.mxu0 %v2630
        %v2742 = vpop.f32.mrf.mxu0
        %v2743 = vadd.f32 0.0, %v2742
        %2744 = vmatmul.f32.gmra.mxu0 %v2633
        %v2745 = vpop.f32.mrf.mxu0
        %v2746 = vadd.f32 0.0, %v2745
        %2747 = vmatmul.f32.gmra.mxu0 %v2636
        %v2748 = vpop.f32.mrf.mxu0
        %v2749 = vadd.f32 0.0, %v2748
        %2750 = vmatmul.f32.gmra.mxu0 %v2639
        %v2751 = vpop.f32.mrf.mxu0
        %v2752 = vadd.f32 0.0, %v2751
        %2753 = vmatmul.f32.gmra.mxu0 %v2642
        %v2754 = vpop.f32.mrf.mxu0
        %v2755 = vadd.f32 0.0, %v2754
        %2756 = vmatmul.f32.gmra.mxu0 %v2645
        %v2757 = vpop.f32.mrf.mxu0
        %v2758 = vadd.f32 0.0, %v2757
        %2759 = vmatmul.f32.gmra.mxu0 %v2648
        %v2760 = vpop.f32.mrf.mxu0
        %v2761 = vadd.f32 0.0, %v2760
        %2762 = vmatmul.f32.gmra.mxu0 %v2651
        %v2763 = vpop.f32.mrf.mxu0
        %v2764 = vadd.f32 0.0, %v2763
        %2765 = vmatmul.f32.gmra.mxu0 %v2654
        %v2766 = vpop.f32.mrf.mxu0
        %v2767 = vadd.f32 0.0, %v2766
        %2768 = vmatmul.f32.gmra.mxu0 %v2657
        %v2769 = vpop.f32.mrf.mxu0
        %v2770 = vadd.f32 0.0, %v2769
        %2771 = vmatmul.f32.gmra.mxu0 %v2660
        %v2772 = vpop.f32.mrf.mxu0
        %v2773 = vadd.f32 0.0, %v2772
        %2774 = vmatmul.f32.gmra.mxu0 %v2663
        %v2775 = vpop.f32.mrf.mxu0
        %v2776 = vadd.f32 0.0, %v2775
        %2777 = vmatmul.f32.gmra.mxu0 %v2666
        %v2778 = vpop.f32.mrf.mxu0
        %v2779 = vadd.f32 0.0, %v2778
        %2780 = vmatmul.f32.gmra.mxu0 %v2669
        %v2781 = vpop.f32.mrf.mxu0
        %v2782 = vadd.f32 0.0, %v2781
        %2783 = vmatmul.f32.gmra.mxu0 %v2672
        %v2784 = vpop.f32.mrf.mxu0
        %v2785 = vadd.f32 0.0, %v2784
        %2786 = vmatmul.f32.gmra.mxu0 %v2675
        %v2787 = vpop.f32.mrf.mxu0
        %v2788 = vadd.f32 0.0, %v2787
        %2789 = vdwg.mxu0
        %v2790 = vadd.f32 %v2506, %v2695
        %v2791 = vadd.f32 %v2507, %v2698
        %v2792 = vadd.f32 %v2508, %v2701
        %v2793 = vadd.f32 %v2509, %v2704
        %v2794 = vadd.f32 %v2510, %v2707
        %v2795 = vadd.f32 %v2511, %v2710
        %v2796 = vadd.f32 %v2512, %v2713
        %v2797 = vadd.f32 %v2513, %v2716
        %v2798 = vadd.f32 %v2514, %v2719
        %v2799 = vadd.f32 %v2515, %v2722
        %v2800 = vadd.f32 %v2516, %v2725
        %v2801 = vadd.f32 %v2517, %v2728
        %v2802 = vadd.f32 %v2518, %v2731
        %v2803 = vadd.f32 %v2519, %v2734
        %v2804 = vadd.f32 %v2520, %v2737
        %v2805 = vadd.f32 %v2521, %v2740
        %v2806 = vadd.f32 %v2522, %v2743
        %v2807 = vadd.f32 %v2523, %v2746
        %v2808 = vadd.f32 %v2524, %v2749
        %v2809 = vadd.f32 %v2525, %v2752
        %v2810 = vadd.f32 %v2526, %v2755
        %v2811 = vadd.f32 %v2527, %v2758
        %v2812 = vadd.f32 %v2528, %v2761
        %v2813 = vadd.f32 %v2529, %v2764
        %v2814 = vadd.f32 %v2530, %v2767
        %v2815 = vadd.f32 %v2531, %v2770
        %v2816 = vadd.f32 %v2532, %v2773
        %v2817 = vadd.f32 %v2533, %v2776
        %v2818 = vadd.f32 %v2534, %v2779
        %v2819 = vadd.f32 %v2535, %v2782
        %v2820 = vadd.f32 %v2536, %v2785
        %v2821 = vadd.f32 %v2537, %v2788
        %v2822 = vld [vmem:[%s2538 + $0x1] sm:$0xff]
        %v2823 = vld [vmem:[%s2538 + $0x9] sm:$0xff]
        %v2824 = vld [vmem:[%s2538 + $0x19] sm:$0xff]
        %v2825 = vld [vmem:[%s2538 + $0x21] sm:$0xff]
        %v2826 = vld [vmem:[%s2538 + $0x31] sm:$0xff]
        %v2827 = vld [vmem:[%s2538 + $0x39] sm:$0xff]
        %v2828 = vld [vmem:[%s2538 + $0x49] sm:$0xff]
        %v2829 = vld [vmem:[%s2538 + $0x51] sm:$0xff]
        %v2830 = vld [vmem:[%s2538 + $0x61] sm:$0xff]
        %v2831 = vld [vmem:[%s2538 + $0x69] sm:$0xff]
        %v2832 = vld [vmem:[%s2538 + $0x79] sm:$0xff]
        %v2833 = vld [vmem:[%s2538 + $0x81] sm:$0xff]
        %v2834 = vld [vmem:[%s2538 + $0x91] sm:$0xff]
        %v2835 = vld [vmem:[%s2538 + $0x99] sm:$0xff]
        %v2836 = vld [vmem:[%s2538 + $0xa9] sm:$0xff]
        %v2837 = vld [vmem:[%s2538 + $0xb1] sm:$0xff]
        %v2838 = vld [vmem:[%s2538 + $0xc1] sm:$0xff]
        %v2839 = vld [vmem:[%s2538 + $0xc9] sm:$0xff]
        %v2840 = vld [vmem:[%s2538 + $0xd9] sm:$0xff]
        %v2841 = vld [vmem:[%s2538 + $0xe1] sm:$0xff]
        %v2842 = vld [vmem:[%s2538 + $0xf1] sm:$0xff]
        %v2843 = vld [vmem:[%s2538 + $0xf9] sm:$0xff]
        %v2844 = vld [vmem:[%s2538 + $0x109] sm:$0xff]
        %v2845 = vld [vmem:[%s2538 + $0x111] sm:$0xff]
        %v2846 = vld [vmem:[%s2538 + $0x121] sm:$0xff]
        %v2847 = vld [vmem:[%s2538 + $0x129] sm:$0xff]
        %v2848 = vld [vmem:[%s2538 + $0x139] sm:$0xff]
        %v2849 = vld [vmem:[%s2538 + $0x141] sm:$0xff]
        %v2850 = vld [vmem:[%s2538 + $0x151] sm:$0xff]
        %v2851 = vld [vmem:[%s2538 + $0x159] sm:$0xff]
        %v2852 = vld [vmem:[%s2538 + $0x169] sm:$0xff]
        %v2853 = vld [vmem:[%s2538 + $0x171] sm:$0xff]
        %s2854 = scalar_lea.vmem [#allocation4], 504
        %v2855 = vld [vmem:[%s2854] sm:$0xff]
        %v2856 = vld [vmem:[%s2854 + $0x8] sm:$0xff]
        %v2857 = vld [vmem:[%s2854 + $0x10] sm:$0xff]
        %v2858 = vld [vmem:[%s2854 + $0x18] sm:$0xff]
        %v2859 = vld [vmem:[%s2854 + $0x20] sm:$0xff]
        %v2860 = vld [vmem:[%s2854 + $0x28] sm:$0xff]
        %v2861 = vld [vmem:[%s2854 + $0x30] sm:$0xff]
        %v2862 = vld [vmem:[%s2854 + $0x38] sm:$0xff]
        %v2863 = vld [vmem:[%s2854 + $0x40] sm:$0xff]
        %v2865 = vsel %vm670, %v2822, 0
        %v2868 = vsel %vm670, %v2823, 0
        %v2871 = vsel %vm670, %v2824, 0
        %v2874 = vsel %vm670, %v2825, 0
        %v2877 = vsel %vm670, %v2826, 0
        %v2880 = vsel %vm670, %v2827, 0
        %v2883 = vsel %vm670, %v2828, 0
        %v2886 = vsel %vm670, %v2829, 0
        %v2889 = vsel %vm670, %v2830, 0
        %v2892 = vsel %vm670, %v2831, 0
        %v2895 = vsel %vm670, %v2832, 0
        %v2898 = vsel %vm670, %v2833, 0
        %v2901 = vsel %vm670, %v2834, 0
        %v2904 = vsel %vm670, %v2835, 0
        %v2907 = vsel %vm670, %v2836, 0
        %v2910 = vsel %vm670, %v2837, 0
        %v2913 = vsel %vm670, %v2838, 0
        %v2916 = vsel %vm670, %v2839, 0
        %v2919 = vsel %vm670, %v2840, 0
        %v2922 = vsel %vm670, %v2841, 0
        %v2925 = vsel %vm670, %v2842, 0
        %v2928 = vsel %vm670, %v2843, 0
        %v2931 = vsel %vm670, %v2844, 0
        %v2934 = vsel %vm670, %v2845, 0
        %v2937 = vsel %vm670, %v2846, 0
        %v2940 = vsel %vm670, %v2847, 0
        %v2943 = vsel %vm670, %v2848, 0
        %v2946 = vsel %vm670, %v2849, 0
        %v2949 = vsel %vm670, %v2850, 0
        %v2952 = vsel %vm670, %v2851, 0
        %v2955 = vsel %vm670, %v2852, 0
        %v2958 = vsel %vm670, %v2853, 0
        %2960 = vmatpush.msra.mxu0 0.0
        %2961 = vmatpush.msra.mxu0 0.0
        %2962 = vmatpush.msra.mxu0 0.0
        %2963 = vmatpush.msra.mxu0 0.0
        %2964 = vmatpush.msra.mxu0 0.0
        %2965 = vmatpush.msra.mxu0 0.0
        %2966 = vmatpush.msra.mxu0 0.0
        %2967 = vmatpush.msra.mxu0 %v2863
        %2968 = vmatpush.msra.mxu0 %v2862
        %2969 = vmatpush.msra.mxu0 %v2861
        %2970 = vmatpush.msra.mxu0 %v2860
        %2971 = vmatpush.msra.mxu0 %v2859
        %2972 = vmatpush.msra.mxu0 %v2858
        %2973 = vmatpush.msra.mxu0 %v2857
        %2974 = vmatpush.msra.mxu0 %v2856
        %2975 = vmatpush.msra.mxu0 %v2855
        %2976 = vmatmul.f32.gmra.mxu0 %v2865
        %v2977 = vpop.f32.mrf.mxu0
        %v2978 = vadd.f32 0.0, %v2977
        %2979 = vmatmul.f32.gmra.mxu0 %v2868
        %v2980 = vpop.f32.mrf.mxu0
        %v2981 = vadd.f32 0.0, %v2980
        %2982 = vmatmul.f32.gmra.mxu0 %v2871
        %v2983 = vpop.f32.mrf.mxu0
        %v2984 = vadd.f32 0.0, %v2983
        %2985 = vmatmul.f32.gmra.mxu0 %v2874
        %v2986 = vpop.f32.mrf.mxu0
        %v2987 = vadd.f32 0.0, %v2986
        %2988 = vmatmul.f32.gmra.mxu0 %v2877
        %v2989 = vpop.f32.mrf.mxu0
        %v2990 = vadd.f32 0.0, %v2989
        %2991 = vmatmul.f32.gmra.mxu0 %v2880
        %v2992 = vpop.f32.mrf.mxu0
        %v2993 = vadd.f32 0.0, %v2992
        %2994 = vmatmul.f32.gmra.mxu0 %v2883
        %v2995 = vpop.f32.mrf.mxu0
        %v2996 = vadd.f32 0.0, %v2995
        %2997 = vmatmul.f32.gmra.mxu0 %v2886
        %v2998 = vpop.f32.mrf.mxu0
        %v2999 = vadd.f32 0.0, %v2998
        %3000 = vmatmul.f32.gmra.mxu0 %v2889
        %v3001 = vpop.f32.mrf.mxu0
        %v3002 = vadd.f32 0.0, %v3001
        %3003 = vmatmul.f32.gmra.mxu0 %v2892
        %v3004 = vpop.f32.mrf.mxu0
        %v3005 = vadd.f32 0.0, %v3004
        %3006 = vmatmul.f32.gmra.mxu0 %v2895
        %v3007 = vpop.f32.mrf.mxu0
        %v3008 = vadd.f32 0.0, %v3007
        %3009 = vmatmul.f32.gmra.mxu0 %v2898
        %v3010 = vpop.f32.mrf.mxu0
        %v3011 = vadd.f32 0.0, %v3010
        %3012 = vmatmul.f32.gmra.mxu0 %v2901
        %v3013 = vpop.f32.mrf.mxu0
        %v3014 = vadd.f32 0.0, %v3013
        %3015 = vmatmul.f32.gmra.mxu0 %v2904
        %v3016 = vpop.f32.mrf.mxu0
        %v3017 = vadd.f32 0.0, %v3016
        %3018 = vmatmul.f32.gmra.mxu0 %v2907
        %v3019 = vpop.f32.mrf.mxu0
        %v3020 = vadd.f32 0.0, %v3019
        %3021 = vmatmul.f32.gmra.mxu0 %v2910
        %v3022 = vpop.f32.mrf.mxu0
        %v3023 = vadd.f32 0.0, %v3022
        %3024 = vmatmul.f32.gmra.mxu0 %v2913
        %v3025 = vpop.f32.mrf.mxu0
        %v3026 = vadd.f32 0.0, %v3025
        %3027 = vmatmul.f32.gmra.mxu0 %v2916
        %v3028 = vpop.f32.mrf.mxu0
        %v3029 = vadd.f32 0.0, %v3028
        %3030 = vmatmul.f32.gmra.mxu0 %v2919
        %v3031 = vpop.f32.mrf.mxu0
        %v3032 = vadd.f32 0.0, %v3031
        %3033 = vmatmul.f32.gmra.mxu0 %v2922
        %v3034 = vpop.f32.mrf.mxu0
        %v3035 = vadd.f32 0.0, %v3034
        %3036 = vmatmul.f32.gmra.mxu0 %v2925
        %v3037 = vpop.f32.mrf.mxu0
        %v3038 = vadd.f32 0.0, %v3037
        %3039 = vmatmul.f32.gmra.mxu0 %v2928
        %v3040 = vpop.f32.mrf.mxu0
        %v3041 = vadd.f32 0.0, %v3040
        %3042 = vmatmul.f32.gmra.mxu0 %v2931
        %v3043 = vpop.f32.mrf.mxu0
        %v3044 = vadd.f32 0.0, %v3043
        %3045 = vmatmul.f32.gmra.mxu0 %v2934
        %v3046 = vpop.f32.mrf.mxu0
        %v3047 = vadd.f32 0.0, %v3046
        %3048 = vmatmul.f32.gmra.mxu0 %v2937
        %v3049 = vpop.f32.mrf.mxu0
        %v3050 = vadd.f32 0.0, %v3049
        %3051 = vmatmul.f32.gmra.mxu0 %v2940
        %v3052 = vpop.f32.mrf.mxu0
        %v3053 = vadd.f32 0.0, %v3052
        %3054 = vmatmul.f32.gmra.mxu0 %v2943
        %v3055 = vpop.f32.mrf.mxu0
        %v3056 = vadd.f32 0.0, %v3055
        %3057 = vmatmul.f32.gmra.mxu0 %v2946
        %v3058 = vpop.f32.mrf.mxu0
        %v3059 = vadd.f32 0.0, %v3058
        %3060 = vmatmul.f32.gmra.mxu0 %v2949
        %v3061 = vpop.f32.mrf.mxu0
        %v3062 = vadd.f32 0.0, %v3061
        %3063 = vmatmul.f32.gmra.mxu0 %v2952
        %v3064 = vpop.f32.mrf.mxu0
        %v3065 = vadd.f32 0.0, %v3064
        %3066 = vmatmul.f32.gmra.mxu0 %v2955
        %v3067 = vpop.f32.mrf.mxu0
        %v3068 = vadd.f32 0.0, %v3067
        %3069 = vmatmul.f32.gmra.mxu0 %v2958
        %v3070 = vpop.f32.mrf.mxu0
        %v3071 = vadd.f32 0.0, %v3070
        %3072 = vdwg.mxu0
        %v3073 = vadd.f32 %v2790, %v2978
        %v3074 = vadd.f32 %v2791, %v2981
        %v3075 = vadd.f32 %v2792, %v2984
        %v3076 = vadd.f32 %v2793, %v2987
        %v3077 = vadd.f32 %v2794, %v2990
        %v3078 = vadd.f32 %v2795, %v2993
        %v3079 = vadd.f32 %v2796, %v2996
        %v3080 = vadd.f32 %v2797, %v2999
        %v3081 = vadd.f32 %v2798, %v3002
        %v3082 = vadd.f32 %v2799, %v3005
        %v3083 = vadd.f32 %v2800, %v3008
        %v3084 = vadd.f32 %v2801, %v3011
        %v3085 = vadd.f32 %v2802, %v3014
        %v3086 = vadd.f32 %v2803, %v3017
        %v3087 = vadd.f32 %v2804, %v3020
        %v3088 = vadd.f32 %v2805, %v3023
        %v3089 = vadd.f32 %v2806, %v3026
        %v3090 = vadd.f32 %v2807, %v3029
        %v3091 = vadd.f32 %v2808, %v3032
        %v3092 = vadd.f32 %v2809, %v3035
        %v3093 = vadd.f32 %v2810, %v3038
        %v3094 = vadd.f32 %v2811, %v3041
        %v3095 = vadd.f32 %v2812, %v3044
        %v3096 = vadd.f32 %v2813, %v3047
        %v3097 = vadd.f32 %v2814, %v3050
        %v3098 = vadd.f32 %v2815, %v3053
        %v3099 = vadd.f32 %v2816, %v3056
        %v3100 = vadd.f32 %v2817, %v3059
        %v3101 = vadd.f32 %v2818, %v3062
        %v3102 = vadd.f32 %v2819, %v3065
        %v3103 = vadd.f32 %v2820, %v3068
        %v3104 = vadd.f32 %v2821, %v3071
        %v3105 = vld [vmem:[%s2538 + $0x2] sm:$0xff]
        %v3106 = vld [vmem:[%s2538 + $0xa] sm:$0xff]
        %v3107 = vld [vmem:[%s2538 + $0x1a] sm:$0xff]
        %v3108 = vld [vmem:[%s2538 + $0x22] sm:$0xff]
        %v3109 = vld [vmem:[%s2538 + $0x32] sm:$0xff]
        %v3110 = vld [vmem:[%s2538 + $0x3a] sm:$0xff]
        %v3111 = vld [vmem:[%s2538 + $0x4a] sm:$0xff]
        %v3112 = vld [vmem:[%s2538 + $0x52] sm:$0xff]
        %v3113 = vld [vmem:[%s2538 + $0x62] sm:$0xff]
        %v3114 = vld [vmem:[%s2538 + $0x6a] sm:$0xff]
        %v3115 = vld [vmem:[%s2538 + $0x7a] sm:$0xff]
        %v3116 = vld [vmem:[%s2538 + $0x82] sm:$0xff]
        %v3117 = vld [vmem:[%s2538 + $0x92] sm:$0xff]
        %v3118 = vld [vmem:[%s2538 + $0x9a] sm:$0xff]
        %v3119 = vld [vmem:[%s2538 + $0xaa] sm:$0xff]
        %v3120 = vld [vmem:[%s2538 + $0xb2] sm:$0xff]
        %v3121 = vld [vmem:[%s2538 + $0xc2] sm:$0xff]
        %v3122 = vld [vmem:[%s2538 + $0xca] sm:$0xff]
        %v3123 = vld [vmem:[%s2538 + $0xda] sm:$0xff]
        %v3124 = vld [vmem:[%s2538 + $0xe2] sm:$0xff]
        %v3125 = vld [vmem:[%s2538 + $0xf2] sm:$0xff]
        %v3126 = vld [vmem:[%s2538 + $0xfa] sm:$0xff]
        %v3127 = vld [vmem:[%s2538 + $0x10a] sm:$0xff]
        %v3128 = vld [vmem:[%s2538 + $0x112] sm:$0xff]
        %v3129 = vld [vmem:[%s2538 + $0x122] sm:$0xff]
        %v3130 = vld [vmem:[%s2538 + $0x12a] sm:$0xff]
        %v3131 = vld [vmem:[%s2538 + $0x13a] sm:$0xff]
        %v3132 = vld [vmem:[%s2538 + $0x142] sm:$0xff]
        %v3133 = vld [vmem:[%s2538 + $0x152] sm:$0xff]
        %v3134 = vld [vmem:[%s2538 + $0x15a] sm:$0xff]
        %v3135 = vld [vmem:[%s2538 + $0x16a] sm:$0xff]
        %v3136 = vld [vmem:[%s2538 + $0x172] sm:$0xff]
        %s3137 = scalar_lea.vmem [#allocation4], 576
        %v3138 = vld [vmem:[%s3137] sm:$0xff]
        %v3139 = vld [vmem:[%s3137 + $0x8] sm:$0xff]
        %v3140 = vld [vmem:[%s3137 + $0x10] sm:$0xff]
        %v3141 = vld [vmem:[%s3137 + $0x18] sm:$0xff]
        %v3142 = vld [vmem:[%s3137 + $0x20] sm:$0xff]
        %v3143 = vld [vmem:[%s3137 + $0x28] sm:$0xff]
        %v3144 = vld [vmem:[%s3137 + $0x30] sm:$0xff]
        %v3145 = vld [vmem:[%s3137 + $0x38] sm:$0xff]
        %v3146 = vld [vmem:[%s3137 + $0x40] sm:$0xff]
        %v3148 = vsel %vm670, %v3105, 0
        %v3151 = vsel %vm670, %v3106, 0
        %v3154 = vsel %vm670, %v3107, 0
        %v3157 = vsel %vm670, %v3108, 0
        %v3160 = vsel %vm670, %v3109, 0
        %v3163 = vsel %vm670, %v3110, 0
        %v3166 = vsel %vm670, %v3111, 0
        %v3169 = vsel %vm670, %v3112, 0
        %v3172 = vsel %vm670, %v3113, 0
        %v3175 = vsel %vm670, %v3114, 0
        %v3178 = vsel %vm670, %v3115, 0
        %v3181 = vsel %vm670, %v3116, 0
        %v3184 = vsel %vm670, %v3117, 0
        %v3187 = vsel %vm670, %v3118, 0
        %v3190 = vsel %vm670, %v3119, 0
        %v3193 = vsel %vm670, %v3120, 0
        %v3196 = vsel %vm670, %v3121, 0
        %v3199 = vsel %vm670, %v3122, 0
        %v3202 = vsel %vm670, %v3123, 0
        %v3205 = vsel %vm670, %v3124, 0
        %v3208 = vsel %vm670, %v3125, 0
        %v3211 = vsel %vm670, %v3126, 0
        %v3214 = vsel %vm670, %v3127, 0
        %v3217 = vsel %vm670, %v3128, 0
        %v3220 = vsel %vm670, %v3129, 0
        %v3223 = vsel %vm670, %v3130, 0
        %v3226 = vsel %vm670, %v3131, 0
        %v3229 = vsel %vm670, %v3132, 0
        %v3232 = vsel %vm670, %v3133, 0
        %v3235 = vsel %vm670, %v3134, 0
        %v3238 = vsel %vm670, %v3135, 0
        %v3241 = vsel %vm670, %v3136, 0
        %3243 = vmatpush.msra.mxu0 0.0
        %3244 = vmatpush.msra.mxu0 0.0
        %3245 = vmatpush.msra.mxu0 0.0
        %3246 = vmatpush.msra.mxu0 0.0
        %3247 = vmatpush.msra.mxu0 0.0
        %3248 = vmatpush.msra.mxu0 0.0
        %3249 = vmatpush.msra.mxu0 0.0
        %3250 = vmatpush.msra.mxu0 %v3146
        %3251 = vmatpush.msra.mxu0 %v3145
        %3252 = vmatpush.msra.mxu0 %v3144
        %3253 = vmatpush.msra.mxu0 %v3143
        %3254 = vmatpush.msra.mxu0 %v3142
        %3255 = vmatpush.msra.mxu0 %v3141
        %3256 = vmatpush.msra.mxu0 %v3140
        %3257 = vmatpush.msra.mxu0 %v3139
        %3258 = vmatpush.msra.mxu0 %v3138
        %3259 = vmatmul.f32.gmra.mxu0 %v3148
        %v3260 = vpop.f32.mrf.mxu0
        %v3261 = vadd.f32 0.0, %v3260
        %3262 = vmatmul.f32.gmra.mxu0 %v3151
        %v3263 = vpop.f32.mrf.mxu0
        %v3264 = vadd.f32 0.0, %v3263
        %3265 = vmatmul.f32.gmra.mxu0 %v3154
        %v3266 = vpop.f32.mrf.mxu0
        %v3267 = vadd.f32 0.0, %v3266
        %3268 = vmatmul.f32.gmra.mxu0 %v3157
        %v3269 = vpop.f32.mrf.mxu0
        %v3270 = vadd.f32 0.0, %v3269
        %3271 = vmatmul.f32.gmra.mxu0 %v3160
        %v3272 = vpop.f32.mrf.mxu0
        %v3273 = vadd.f32 0.0, %v3272
        %3274 = vmatmul.f32.gmra.mxu0 %v3163
        %v3275 = vpop.f32.mrf.mxu0
        %v3276 = vadd.f32 0.0, %v3275
        %3277 = vmatmul.f32.gmra.mxu0 %v3166
        %v3278 = vpop.f32.mrf.mxu0
        %v3279 = vadd.f32 0.0, %v3278
        %3280 = vmatmul.f32.gmra.mxu0 %v3169
        %v3281 = vpop.f32.mrf.mxu0
        %v3282 = vadd.f32 0.0, %v3281
        %3283 = vmatmul.f32.gmra.mxu0 %v3172
        %v3284 = vpop.f32.mrf.mxu0
        %v3285 = vadd.f32 0.0, %v3284
        %3286 = vmatmul.f32.gmra.mxu0 %v3175
        %v3287 = vpop.f32.mrf.mxu0
        %v3288 = vadd.f32 0.0, %v3287
        %3289 = vmatmul.f32.gmra.mxu0 %v3178
        %v3290 = vpop.f32.mrf.mxu0
        %v3291 = vadd.f32 0.0, %v3290
        %3292 = vmatmul.f32.gmra.mxu0 %v3181
        %v3293 = vpop.f32.mrf.mxu0
        %v3294 = vadd.f32 0.0, %v3293
        %3295 = vmatmul.f32.gmra.mxu0 %v3184
        %v3296 = vpop.f32.mrf.mxu0
        %v3297 = vadd.f32 0.0, %v3296
        %3298 = vmatmul.f32.gmra.mxu0 %v3187
        %v3299 = vpop.f32.mrf.mxu0
        %v3300 = vadd.f32 0.0, %v3299
        %3301 = vmatmul.f32.gmra.mxu0 %v3190
        %v3302 = vpop.f32.mrf.mxu0
        %v3303 = vadd.f32 0.0, %v3302
        %3304 = vmatmul.f32.gmra.mxu0 %v3193
        %v3305 = vpop.f32.mrf.mxu0
        %v3306 = vadd.f32 0.0, %v3305
        %3307 = vmatmul.f32.gmra.mxu0 %v3196
        %v3308 = vpop.f32.mrf.mxu0
        %v3309 = vadd.f32 0.0, %v3308
        %3310 = vmatmul.f32.gmra.mxu0 %v3199
        %v3311 = vpop.f32.mrf.mxu0
        %v3312 = vadd.f32 0.0, %v3311
        %3313 = vmatmul.f32.gmra.mxu0 %v3202
        %v3314 = vpop.f32.mrf.mxu0
        %v3315 = vadd.f32 0.0, %v3314
        %3316 = vmatmul.f32.gmra.mxu0 %v3205
        %v3317 = vpop.f32.mrf.mxu0
        %v3318 = vadd.f32 0.0, %v3317
        %3319 = vmatmul.f32.gmra.mxu0 %v3208
        %v3320 = vpop.f32.mrf.mxu0
        %v3321 = vadd.f32 0.0, %v3320
        %3322 = vmatmul.f32.gmra.mxu0 %v3211
        %v3323 = vpop.f32.mrf.mxu0
        %v3324 = vadd.f32 0.0, %v3323
        %3325 = vmatmul.f32.gmra.mxu0 %v3214
        %v3326 = vpop.f32.mrf.mxu0
        %v3327 = vadd.f32 0.0, %v3326
        %3328 = vmatmul.f32.gmra.mxu0 %v3217
        %v3329 = vpop.f32.mrf.mxu0
        %v3330 = vadd.f32 0.0, %v3329
        %3331 = vmatmul.f32.gmra.mxu0 %v3220
        %v3332 = vpop.f32.mrf.mxu0
        %v3333 = vadd.f32 0.0, %v3332
        %3334 = vmatmul.f32.gmra.mxu0 %v3223
        %v3335 = vpop.f32.mrf.mxu0
        %v3336 = vadd.f32 0.0, %v3335
        %3337 = vmatmul.f32.gmra.mxu0 %v3226
        %v3338 = vpop.f32.mrf.mxu0
        %v3339 = vadd.f32 0.0, %v3338
        %3340 = vmatmul.f32.gmra.mxu0 %v3229
        %v3341 = vpop.f32.mrf.mxu0
        %v3342 = vadd.f32 0.0, %v3341
        %3343 = vmatmul.f32.gmra.mxu0 %v3232
        %v3344 = vpop.f32.mrf.mxu0
        %v3345 = vadd.f32 0.0, %v3344
        %3346 = vmatmul.f32.gmra.mxu0 %v3235
        %v3347 = vpop.f32.mrf.mxu0
        %v3348 = vadd.f32 0.0, %v3347
        %3349 = vmatmul.f32.gmra.mxu0 %v3238
        %v3350 = vpop.f32.mrf.mxu0
        %v3351 = vadd.f32 0.0, %v3350
        %3352 = vmatmul.f32.gmra.mxu0 %v3241
        %v3353 = vpop.f32.mrf.mxu0
        %v3354 = vadd.f32 0.0, %v3353
        %3355 = vdwg.mxu0
        %v3356 = vadd.f32 %v3073, %v3261
        %v3357 = vadd.f32 %v3074, %v3264
        %v3358 = vadd.f32 %v3075, %v3267
        %v3359 = vadd.f32 %v3076, %v3270
        %v3360 = vadd.f32 %v3077, %v3273
        %v3361 = vadd.f32 %v3078, %v3276
        %v3362 = vadd.f32 %v3079, %v3279
        %v3363 = vadd.f32 %v3080, %v3282
        %v3364 = vadd.f32 %v3081, %v3285
        %v3365 = vadd.f32 %v3082, %v3288
        %v3366 = vadd.f32 %v3083, %v3291
        %v3367 = vadd.f32 %v3084, %v3294
        %v3368 = vadd.f32 %v3085, %v3297
        %v3369 = vadd.f32 %v3086, %v3300
        %v3370 = vadd.f32 %v3087, %v3303
        %v3371 = vadd.f32 %v3088, %v3306
        %v3372 = vadd.f32 %v3089, %v3309
        %v3373 = vadd.f32 %v3090, %v3312
        %v3374 = vadd.f32 %v3091, %v3315
        %v3375 = vadd.f32 %v3092, %v3318
        %v3376 = vadd.f32 %v3093, %v3321
        %v3377 = vadd.f32 %v3094, %v3324
        %v3378 = vadd.f32 %v3095, %v3327
        %v3379 = vadd.f32 %v3096, %v3330
        %v3380 = vadd.f32 %v3097, %v3333
        %v3381 = vadd.f32 %v3098, %v3336
        %v3382 = vadd.f32 %v3099, %v3339
        %v3383 = vadd.f32 %v3100, %v3342
        %v3384 = vadd.f32 %v3101, %v3345
        %v3385 = vadd.f32 %v3102, %v3348
        %v3386 = vadd.f32 %v3103, %v3351
        %v3387 = vadd.f32 %v3104, %v3354
        %v3388 = vadd.f32 %v3356, %v3357
        %v3389 = vadd.f32 %v3388, %v3358
        %v3390 = vadd.f32 %v3389, %v3359
        %v3391 = vadd.f32 %v3390, %v3360
        %v3392 = vadd.f32 %v3391, %v3361
        %v3393 = vadd.f32 %v3392, %v3362
        %v3394 = vadd.f32 %v3393, %v3363
        %v3395 = vadd.f32 %v3394, %v3364
        %v3396 = vadd.f32 %v3395, %v3365
        %v3397 = vadd.f32 %v3396, %v3366
        %v3398 = vadd.f32 %v3397, %v3367
        %v3399 = vadd.f32 %v3398, %v3368
        %v3400 = vadd.f32 %v3399, %v3369
        %v3401 = vadd.f32 %v3400, %v3370
        %v3402 = vadd.f32 %v3401, %v3371
        %v3403 = vadd.f32 %v3402, %v3372
        %v3404 = vadd.f32 %v3403, %v3373
        %v3405 = vadd.f32 %v3404, %v3374
        %v3406 = vadd.f32 %v3405, %v3375
        %v3407 = vadd.f32 %v3406, %v3376
        %v3408 = vadd.f32 %v3407, %v3377
        %v3409 = vadd.f32 %v3408, %v3378
        %v3410 = vadd.f32 %v3409, %v3379
        %v3411 = vadd.f32 %v3410, %v3380
        %v3412 = vadd.f32 %v3411, %v3381
        %v3413 = vadd.f32 %v3412, %v3382
        %v3414 = vadd.f32 %v3413, %v3383
        %v3415 = vadd.f32 %v3414, %v3384
        %v3416 = vadd.f32 %v3415, %v3385
        %v3417 = vadd.f32 %v3416, %v3386
        %v3418 = vadd.f32 %v3417, %v3387
        %v3419 = vrot.slane %v3418, 4
        %v3420 = vadd.f32 %v3418, %v3419
        %v3421 = vrot.slane %v3420, 2
        %v3422 = vadd.f32 %v3420, %v3421
        %v3423 = vrot.slane %v3422, 1
        %v3424 = vadd.f32 %v3422, %v3423
        %v3425 = vmul.f32 %v3356, %v3356
        %v3426 = vmul.f32 %v3357, %v3357
        %v3427 = vmul.f32 %v3358, %v3358
        %v3428 = vmul.f32 %v3359, %v3359
        %v3429 = vmul.f32 %v3360, %v3360
        %v3430 = vmul.f32 %v3361, %v3361
        %v3431 = vmul.f32 %v3362, %v3362
        %v3432 = vmul.f32 %v3363, %v3363
        %v3433 = vmul.f32 %v3364, %v3364
        %v3434 = vmul.f32 %v3365, %v3365
        %v3435 = vmul.f32 %v3366, %v3366
        %v3436 = vmul.f32 %v3367, %v3367
        %v3437 = vmul.f32 %v3368, %v3368
        %v3438 = vmul.f32 %v3369, %v3369
        %v3439 = vmul.f32 %v3370, %v3370
        %v3440 = vmul.f32 %v3371, %v3371
        %v3441 = vmul.f32 %v3372, %v3372
        %v3442 = vmul.f32 %v3373, %v3373
        %v3443 = vmul.f32 %v3374, %v3374
        %v3444 = vmul.f32 %v3375, %v3375
        %v3445 = vmul.f32 %v3376, %v3376
        %v3446 = vmul.f32 %v3377, %v3377
        %v3447 = vmul.f32 %v3378, %v3378
        %v3448 = vmul.f32 %v3379, %v3379
        %v3449 = vmul.f32 %v3380, %v3380
        %v3450 = vmul.f32 %v3381, %v3381
        %v3451 = vmul.f32 %v3382, %v3382
        %v3452 = vmul.f32 %v3383, %v3383
        %v3453 = vmul.f32 %v3384, %v3384
        %v3454 = vmul.f32 %v3385, %v3385
        %v3455 = vmul.f32 %v3386, %v3386
        %v3456 = vmul.f32 %v3387, %v3387
        %v3457 = vadd.f32 %v3425, %v3426
        %v3458 = vadd.f32 %v3457, %v3427
        %v3459 = vadd.f32 %v3458, %v3428
        %v3460 = vadd.f32 %v3459, %v3429
        %v3461 = vadd.f32 %v3460, %v3430
        %v3462 = vadd.f32 %v3461, %v3431
        %v3463 = vadd.f32 %v3462, %v3432
        %v3464 = vadd.f32 %v3463, %v3433
        %v3465 = vadd.f32 %v3464, %v3434
        %v3466 = vadd.f32 %v3465, %v3435
        %v3467 = vadd.f32 %v3466, %v3436
        %v3468 = vadd.f32 %v3467, %v3437
        %v3469 = vadd.f32 %v3468, %v3438
        %v3470 = vadd.f32 %v3469, %v3439
        %v3471 = vadd.f32 %v3470, %v3440
        %v3472 = vadd.f32 %v3471, %v3441
        %v3473 = vadd.f32 %v3472, %v3442
        %v3474 = vadd.f32 %v3473, %v3443
        %v3475 = vadd.f32 %v3474, %v3444
        %v3476 = vadd.f32 %v3475, %v3445
        %v3477 = vadd.f32 %v3476, %v3446
        %v3478 = vadd.f32 %v3477, %v3447
        %v3479 = vadd.f32 %v3478, %v3448
        %v3480 = vadd.f32 %v3479, %v3449
        %v3481 = vadd.f32 %v3480, %v3450
        %v3482 = vadd.f32 %v3481, %v3451
        %v3483 = vadd.f32 %v3482, %v3452
        %v3484 = vadd.f32 %v3483, %v3453
        %v3485 = vadd.f32 %v3484, %v3454
        %v3486 = vadd.f32 %v3485, %v3455
        %v3487 = vadd.f32 %v3486, %v3456
        %v3488 = vrot.slane %v3487, 4
        %v3489 = vadd.f32 %v3487, %v3488
        %v3490 = vrot.slane %v3489, 2
        %v3491 = vadd.f32 %v3489, %v3490
        %v3492 = vrot.slane %v3491, 1
        %v3493 = vadd.f32 %v3491, %v3492
        %3494 = vmatpush.msra.mxu0 %v903
        %3495 = vmatpush.msra.mxu0 %v902
        %3496 = vmatpush.msra.mxu0 %v901
        %3497 = vmatpush.msra.mxu0 %v900
        %3498 = vmatpush.msra.mxu0 %v899
        %3499 = vmatpush.msra.mxu0 %v898
        %3500 = vmatpush.msra.mxu0 %v897
        %3501 = vmatpush.msra.mxu0 %v896
        %3502 = vmatpush.msra.mxu0 %v895
        %3503 = vmatpush.msra.mxu0 %v894
        %3504 = vmatpush.msra.mxu0 %v893
        %3505 = vmatpush.msra.mxu0 %v892
        %3506 = vmatpush.msra.mxu0 %v891
        %3507 = vmatpush.msra.mxu0 %v890
        %3508 = vmatpush.msra.mxu0 %v889
        %3509 = vmatpush.msra.mxu0 %v888
        %3510 = vmatmul.f32.gmra.mxu0 %v3424
        %v3511 = vpop.f32.mrf.mxu0
        %v3512 = vadd.f32 0.0, %v3511
        %3513 = vdwg.mxu0
        %v3514 = vmul.f32 %v3512, 0.00024414063
        %3515 = vmatpush.msra.mxu0 %v903
        %3516 = vmatpush.msra.mxu0 %v902
        %3517 = vmatpush.msra.mxu0 %v901
        %3518 = vmatpush.msra.mxu0 %v900
        %3519 = vmatpush.msra.mxu0 %v899
        %3520 = vmatpush.msra.mxu0 %v898
        %3521 = vmatpush.msra.mxu0 %v897
        %3522 = vmatpush.msra.mxu0 %v896
        %3523 = vmatpush.msra.mxu0 %v895
        %3524 = vmatpush.msra.mxu0 %v894
        %3525 = vmatpush.msra.mxu0 %v893
        %3526 = vmatpush.msra.mxu0 %v892
        %3527 = vmatpush.msra.mxu0 %v891
        %3528 = vmatpush.msra.mxu0 %v890
        %3529 = vmatpush.msra.mxu0 %v889
        %3530 = vmatpush.msra.mxu0 %v888
        %3531 = vmatmul.f32.gmra.mxu0 %v3493
        %v3532 = vpop.f32.mrf.mxu0
        %v3533 = vadd.f32 0.0, %v3532
        %3534 = vdwg.mxu0
        %v3535 = vmul.f32 %v3533, 0.00024414063
        %v3536 = vmul.f32 %v3514, %v3514
        %v3537 = vsub.f32 %v3535, %v3536
        %v3538 = vadd.f32 %v3537, 1e-05
        %v3539 = vrsqrt.pop %v3538
        %v3540 = vmul.f32 %v3539, %v3538
        %v3541 = vmul.f32 %v3540, %v3539
        %v3542 = vmul.f32 0.5, %v3541
        %v3543 = vsub.f32 1.5, %v3542
        %v3544 = vmul.f32 %v3539, %v3543
        %vm3545 = vweird.f32 %v3538
        %vm3546 = vweird.f32 %v3539
        %vm3547 = vmor %vm3545, %vm3546
        %v3548 = vsel %vm3547, %v3539, %v3544
        %v3550 = vsel %vm391, %v3514, 0
        %3552 = vmatpush.msra.mxu0 0.0
        %3553 = vmatpush.msra.mxu0 0.0
        %3554 = vmatpush.msra.mxu0 0.0
        %3555 = vmatpush.msra.mxu0 0.0
        %3556 = vmatpush.msra.mxu0 0.0
        %3557 = vmatpush.msra.mxu0 0.0
        %3558 = vmatpush.msra.mxu0 0.0
        %3559 = vmatpush.msra.mxu0 0.0
        %3560 = vmatpush.msra.mxu0 0.0
        %3561 = vmatpush.msra.mxu0 0.0
        %3562 = vmatpush.msra.mxu0 0.0
        %3563 = vmatpush.msra.mxu0 0.0
        %3564 = vmatpush.msra.mxu0 0.0
        %3565 = vmatpush.msra.mxu0 0.0
        %3566 = vmatpush.msra.mxu0 0.0
        %3567 = vmatpush.msra.mxu0 %v904
        %3568 = vmatmul.f32.gmra.mxu0 %v3550
        %v3569 = vpop.f32.mrf.mxu0
        %v3570 = vadd.f32 0.0, %v3569
        %3571 = vdwg.mxu0
        %v3573 = vsel %vm391, %v3548, 0
        %3575 = vmatpush.msra.mxu0 0.0
        %3576 = vmatpush.msra.mxu0 0.0
        %3577 = vmatpush.msra.mxu0 0.0
        %3578 = vmatpush.msra.mxu0 0.0
        %3579 = vmatpush.msra.mxu0 0.0
        %3580 = vmatpush.msra.mxu0 0.0
        %3581 = vmatpush.msra.mxu0 0.0
        %3582 = vmatpush.msra.mxu0 0.0
        %3583 = vmatpush.msra.mxu0 0.0
        %3584 = vmatpush.msra.mxu0 0.0
        %3585 = vmatpush.msra.mxu0 0.0
        %3586 = vmatpush.msra.mxu0 0.0
        %3587 = vmatpush.msra.mxu0 0.0
        %3588 = vmatpush.msra.mxu0 0.0
        %3589 = vmatpush.msra.mxu0 0.0
        %3590 = vmatpush.msra.mxu0 %v904
        %3591 = vmatmul.f32.gmra.mxu0 %v3573
        %v3592 = vpop.f32.mrf.mxu0
        %v3593 = vadd.f32 0.0, %v3592
        %3594 = vdwg.mxu0
        %v3595 = vperm.slane %v3570, 0
        %v3596 = vsub.f32 %v3356, %v3595
        %v3597 = vsub.f32 %v3357, %v3595
        %v3598 = vsub.f32 %v3358, %v3595
        %v3599 = vsub.f32 %v3359, %v3595
        %v3600 = vsub.f32 %v3360, %v3595
        %v3601 = vsub.f32 %v3361, %v3595
        %v3602 = vsub.f32 %v3362, %v3595
        %v3603 = vsub.f32 %v3363, %v3595
        %v3604 = vsub.f32 %v3364, %v3595
        %v3605 = vsub.f32 %v3365, %v3595
        %v3606 = vsub.f32 %v3366, %v3595
        %v3607 = vsub.f32 %v3367, %v3595
        %v3608 = vsub.f32 %v3368, %v3595
        %v3609 = vsub.f32 %v3369, %v3595
        %v3610 = vsub.f32 %v3370, %v3595
        %v3611 = vsub.f32 %v3371, %v3595
        %v3612 = vsub.f32 %v3372, %v3595
        %v3613 = vsub.f32 %v3373, %v3595
        %v3614 = vsub.f32 %v3374, %v3595
        %v3615 = vsub.f32 %v3375, %v3595
        %v3616 = vsub.f32 %v3376, %v3595
        %v3617 = vsub.f32 %v3377, %v3595
        %v3618 = vsub.f32 %v3378, %v3595
        %v3619 = vsub.f32 %v3379, %v3595
        %v3620 = vsub.f32 %v3380, %v3595
        %v3621 = vsub.f32 %v3381, %v3595
        %v3622 = vsub.f32 %v3382, %v3595
        %v3623 = vsub.f32 %v3383, %v3595
        %v3624 = vsub.f32 %v3384, %v3595
        %v3625 = vsub.f32 %v3385, %v3595
        %v3626 = vsub.f32 %v3386, %v3595
        %v3627 = vsub.f32 %v3387, %v3595
        %v3628 = vperm.slane %v3593, 0
        %v3629 = vmul.f32 %v3596, %v3628
        %v3630 = vmul.f32 %v3597, %v3628
        %v3631 = vmul.f32 %v3598, %v3628
        %v3632 = vmul.f32 %v3599, %v3628
        %v3633 = vmul.f32 %v3600, %v3628
        %v3634 = vmul.f32 %v3601, %v3628
        %v3635 = vmul.f32 %v3602, %v3628
        %v3636 = vmul.f32 %v3603, %v3628
        %v3637 = vmul.f32 %v3604, %v3628
        %v3638 = vmul.f32 %v3605, %v3628
        %v3639 = vmul.f32 %v3606, %v3628
        %v3640 = vmul.f32 %v3607, %v3628
        %v3641 = vmul.f32 %v3608, %v3628
        %v3642 = vmul.f32 %v3609, %v3628
        %v3643 = vmul.f32 %v3610, %v3628
        %v3644 = vmul.f32 %v3611, %v3628
        %v3645 = vmul.f32 %v3612, %v3628
        %v3646 = vmul.f32 %v3613, %v3628
        %v3647 = vmul.f32 %v3614, %v3628
        %v3648 = vmul.f32 %v3615, %v3628
        %v3649 = vmul.f32 %v3616, %v3628
        %v3650 = vmul.f32 %v3617, %v3628
        %v3651 = vmul.f32 %v3618, %v3628
        %v3652 = vmul.f32 %v3619, %v3628
        %v3653 = vmul.f32 %v3620, %v3628
        %v3654 = vmul.f32 %v3621, %v3628
        %v3655 = vmul.f32 %v3622, %v3628
        %v3656 = vmul.f32 %v3623, %v3628
        %v3657 = vmul.f32 %v3624, %v3628
        %v3658 = vmul.f32 %v3625, %v3628
        %v3659 = vmul.f32 %v3626, %v3628
        %v3660 = vmul.f32 %v3627, %v3628
        %v3661 = vmax.f32 %v3629, 0.0
        %v3662 = vmax.f32 %v3630, 0.0
        %v3663 = vmax.f32 %v3631, 0.0
        %v3664 = vmax.f32 %v3632, 0.0
        %v3665 = vmax.f32 %v3633, 0.0
        %v3666 = vmax.f32 %v3634, 0.0
        %v3667 = vmax.f32 %v3635, 0.0
        %v3668 = vmax.f32 %v3636, 0.0
        %v3669 = vmax.f32 %v3637, 0.0
        %v3670 = vmax.f32 %v3638, 0.0
        %v3671 = vmax.f32 %v3639, 0.0
        %v3672 = vmax.f32 %v3640, 0.0
        %v3673 = vmax.f32 %v3641, 0.0
        %v3674 = vmax.f32 %v3642, 0.0
        %v3675 = vmax.f32 %v3643, 0.0
        %v3676 = vmax.f32 %v3644, 0.0
        %v3677 = vmax.f32 %v3645, 0.0
        %v3678 = vmax.f32 %v3646, 0.0
        %v3679 = vmax.f32 %v3647, 0.0
        %v3680 = vmax.f32 %v3648, 0.0
        %v3681 = vmax.f32 %v3649, 0.0
        %v3682 = vmax.f32 %v3650, 0.0
        %v3683 = vmax.f32 %v3651, 0.0
        %v3684 = vmax.f32 %v3652, 0.0
        %v3685 = vmax.f32 %v3653, 0.0
        %v3686 = vmax.f32 %v3654, 0.0
        %v3687 = vmax.f32 %v3655, 0.0
        %v3688 = vmax.f32 %v3656, 0.0
        %v3689 = vmax.f32 %v3657, 0.0
        %v3690 = vmax.f32 %v3658, 0.0
        %v3691 = vmax.f32 %v3659, 0.0
        %v3692 = vmax.f32 %v3660, 0.0
        %3693 = vst [vmem:[#allocation3] sm:$0xff] 0.0
        %vm3694 = vcmask 130048
        %3695 = vst.msk [vmem:[#allocation3 + $0x8] sm:$0xff] %vm3694, 0.0
        %3696 = vst [vmem:[#allocation3 + $0x10] sm:$0xff] 0.0
        %3697 = vst.msk [vmem:[#allocation3 + $0x18] sm:$0xff] %vm3694, 0.0
        %3698 = vst [vmem:[#allocation3 + $0x20] sm:$0x3] 0.0
        %vm3699 = vcmask 123904
        %3700 = vst.msk [vmem:[#allocation3 + $0x28] sm:$0x3] %vm3699, 0.0
        %3701 = vst [vmem:[#allocation3 + $0x30] sm:$0xff] 0.0
        %3702 = vst.msk [vmem:[#allocation3 + $0x38] sm:$0xff] %vm3694, 0.0
        %3703 = vst [vmem:[#allocation3 + $0x40] sm:$0xff] 0.0
        %3704 = vst.msk [vmem:[#allocation3 + $0x48] sm:$0xff] %vm3694, 0.0
        %3705 = vst [vmem:[#allocation3 + $0x50] sm:$0x3] 0.0
        %3706 = vst.msk [vmem:[#allocation3 + $0x58] sm:$0x3] %vm3699, 0.0
        %3707 = vst [vmem:[#allocation3 + $0x60] sm:$0xff] 0.0
        %3708 = vst.msk [vmem:[#allocation3 + $0x68] sm:$0xff] %vm3694, 0.0
        %3709 = vst [vmem:[#allocation3 + $0x70] sm:$0xff] 0.0
        %3710 = vst.msk [vmem:[#allocation3 + $0x78] sm:$0xff] %vm3694, 0.0
        %3711 = vst [vmem:[#allocation3 + $0x80] sm:$0x3] 0.0
        %3712 = vst.msk [vmem:[#allocation3 + $0x88] sm:$0x3] %vm3699, 0.0
        %3713 = vst [vmem:[#allocation3 + $0x90] sm:$0xff] 0.0
        %3714 = vst.msk [vmem:[#allocation3 + $0x98] sm:$0xff] %vm3694, 0.0
        %3715 = vst [vmem:[#allocation3 + $0xa0] sm:$0xff] 0.0
        %3716 = vst.msk [vmem:[#allocation3 + $0xa8] sm:$0xff] %vm3694, 0.0
        %3717 = vst [vmem:[#allocation3 + $0xb0] sm:$0x3] 0.0
        %3718 = vst.msk [vmem:[#allocation3 + $0xb8] sm:$0x3] %vm3699, 0.0
        %3719 = vst [vmem:[#allocation3 + $0xc0] sm:$0xff] 0.0
        %3720 = vst.msk [vmem:[#allocation3 + $0xc8] sm:$0xff] %vm3694, 0.0
        %3721 = vst [vmem:[#allocation3 + $0xd0] sm:$0xff] 0.0
        %3722 = vst.msk [vmem:[#allocation3 + $0xd8] sm:$0xff] %vm3694, 0.0
        %3723 = vst [vmem:[#allocation3 + $0xe0] sm:$0x3] 0.0
        %3724 = vst.msk [vmem:[#allocation3 + $0xe8] sm:$0x3] %vm3699, 0.0
        %3725 = vst [vmem:[#allocation3 + $0xf0] sm:$0xff] 0.0
        %3726 = vst.msk [vmem:[#allocation3 + $0xf8] sm:$0xff] %vm3694, 0.0
        %3727 = vst [vmem:[#allocation3 + $0x100] sm:$0xff] 0.0
        %3728 = vst.msk [vmem:[#allocation3 + $0x108] sm:$0xff] %vm3694, 0.0
        %3729 = vst [vmem:[#allocation3 + $0x110] sm:$0x3] 0.0
        %3730 = vst.msk [vmem:[#allocation3 + $0x118] sm:$0x3] %vm3699, 0.0
        %3731 = vst [vmem:[#allocation3 + $0x120] sm:$0xff] 0.0
        %3732 = vst.msk [vmem:[#allocation3 + $0x128] sm:$0xff] %vm3694, 0.0
        %3733 = vst [vmem:[#allocation3 + $0x130] sm:$0xff] 0.0
        %3734 = vst.msk [vmem:[#allocation3 + $0x138] sm:$0xff] %vm3694, 0.0
        %3735 = vst [vmem:[#allocation3 + $0x140] sm:$0x3] 0.0
        %3736 = vst.msk [vmem:[#allocation3 + $0x148] sm:$0x3] %vm3699, 0.0
        %3737 = vst [vmem:[#allocation3 + $0x150] sm:$0xff] 0.0
        %3738 = vst.msk [vmem:[#allocation3 + $0x158] sm:$0xff] %vm3694, 0.0
        %3739 = vst [vmem:[#allocation3 + $0x160] sm:$0xff] 0.0
        %3740 = vst.msk [vmem:[#allocation3 + $0x168] sm:$0xff] %vm3694, 0.0
        %3741 = vst [vmem:[#allocation3 + $0x170] sm:$0x3] 0.0
        %3742 = vst.msk [vmem:[#allocation3 + $0x178] sm:$0x3] %vm3699, 0.0
        %3743 = vst [vmem:[#allocation3 + $0x180] sm:$0xff] 0.0
        %3744 = vst.msk [vmem:[#allocation3 + $0x188] sm:$0xff] %vm3694, 0.0
        %3745 = vst [vmem:[#allocation3 + $0x190] sm:$0xff] 0.0
        %3746 = vst.msk [vmem:[#allocation3 + $0x198] sm:$0xff] %vm3694, 0.0
        %3747 = vst [vmem:[#allocation3 + $0x1a0] sm:$0x3] 0.0
        %3748 = vst.msk [vmem:[#allocation3 + $0x1a8] sm:$0x3] %vm3699, 0.0
        %3749 = vst [vmem:[#allocation3 + $0x1b0] sm:$0xff] 0.0
        %3750 = vst.msk [vmem:[#allocation3 + $0x1b8] sm:$0xff] %vm3694, 0.0
        %3751 = vst [vmem:[#allocation3 + $0x1c0] sm:$0xff] 0.0
        %3752 = vst.msk [vmem:[#allocation3 + $0x1c8] sm:$0xff] %vm3694, 0.0
        %3753 = vst [vmem:[#allocation3 + $0x1d0] sm:$0x3] 0.0
        %3754 = vst.msk [vmem:[#allocation3 + $0x1d8] sm:$0x3] %vm3699, 0.0
        %3755 = vst [vmem:[#allocation3 + $0x1e0] sm:$0xff] 0.0
        %3756 = vst.msk [vmem:[#allocation3 + $0x1e8] sm:$0xff] %vm3694, 0.0
        %3757 = vst [vmem:[#allocation3 + $0x1f0] sm:$0xff] 0.0
        %3758 = vst.msk [vmem:[#allocation3 + $0x1f8] sm:$0xff] %vm3694, 0.0
        %3759 = vst [vmem:[#allocation3 + $0x200] sm:$0x3] 0.0
        %3760 = vst.msk [vmem:[#allocation3 + $0x208] sm:$0x3] %vm3699, 0.0
        %3761 = vst [vmem:[#allocation3 + $0x210] sm:$0xff] 0.0
        %3762 = vst.msk [vmem:[#allocation3 + $0x218] sm:$0xff] %vm3694, 0.0
        %3763 = vst [vmem:[#allocation3 + $0x220] sm:$0xff] 0.0
        %3764 = vst.msk [vmem:[#allocation3 + $0x228] sm:$0xff] %vm3694, 0.0
        %3765 = vst [vmem:[#allocation3 + $0x230] sm:$0x3] 0.0
        %3766 = vst.msk [vmem:[#allocation3 + $0x238] sm:$0x3] %vm3699, 0.0
        %3767 = vst [vmem:[#allocation3 + $0x240] sm:$0xff] 0.0
        %3768 = vst.msk [vmem:[#allocation3 + $0x248] sm:$0xff] %vm3694, 0.0
        %3769 = vst [vmem:[#allocation3 + $0x250] sm:$0xff] 0.0
        %3770 = vst.msk [vmem:[#allocation3 + $0x258] sm:$0xff] %vm3694, 0.0
        %3771 = vst [vmem:[#allocation3 + $0x260] sm:$0x3] 0.0
        %3772 = vst.msk [vmem:[#allocation3 + $0x268] sm:$0x3] %vm3699, 0.0
        %3773 = vst [vmem:[#allocation3 + $0x270] sm:$0xff] 0.0
        %3774 = vst.msk [vmem:[#allocation3 + $0x278] sm:$0xff] %vm3694, 0.0
        %3775 = vst [vmem:[#allocation3 + $0x280] sm:$0xff] 0.0
        %3776 = vst.msk [vmem:[#allocation3 + $0x288] sm:$0xff] %vm3694, 0.0
        %3777 = vst [vmem:[#allocation3 + $0x290] sm:$0x3] 0.0
        %3778 = vst.msk [vmem:[#allocation3 + $0x298] sm:$0x3] %vm3699, 0.0
        %3779 = vst [vmem:[#allocation3 + $0x2a0] sm:$0xff] 0.0
        %3780 = vst.msk [vmem:[#allocation3 + $0x2a8] sm:$0xff] %vm3694, 0.0
        %3781 = vst [vmem:[#allocation3 + $0x2b0] sm:$0xff] 0.0
        %3782 = vst.msk [vmem:[#allocation3 + $0x2b8] sm:$0xff] %vm3694, 0.0
        %3783 = vst [vmem:[#allocation3 + $0x2c0] sm:$0x3] 0.0
        %3784 = vst.msk [vmem:[#allocation3 + $0x2c8] sm:$0x3] %vm3699, 0.0
        %3785 = vst [vmem:[#allocation3 + $0x2d0] sm:$0xff] 0.0
        %3786 = vst.msk [vmem:[#allocation3 + $0x2d8] sm:$0xff] %vm3694, 0.0
        %3787 = vst [vmem:[#allocation3 + $0x2e0] sm:$0xff] 0.0
        %3788 = vst.msk [vmem:[#allocation3 + $0x2e8] sm:$0xff] %vm3694, 0.0
        %3789 = vst [vmem:[#allocation3 + $0x2f0] sm:$0x3] 0.0
        %3790 = vst.msk [vmem:[#allocation3 + $0x2f8] sm:$0x3] %vm3699, 0.0
        %3791 = vst [vmem:[#allocation3 + $0x300] sm:$0xff] 0.0
        %3792 = vst.msk [vmem:[#allocation3 + $0x308] sm:$0xff] %vm3694, 0.0
        %3793 = vst [vmem:[#allocation3 + $0x310] sm:$0xff] 0.0
        %3794 = vst.msk [vmem:[#allocation3 + $0x318] sm:$0xff] %vm3694, 0.0
        %3795 = vst [vmem:[#allocation3 + $0x320] sm:$0x3] 0.0
        %3796 = vst.msk [vmem:[#allocation3 + $0x328] sm:$0x3] %vm3699, 0.0
        %3797 = vst [vmem:[#allocation3 + $0x330] sm:$0xff] 0.0
        %3798 = vst.msk [vmem:[#allocation3 + $0x338] sm:$0xff] %vm3694, 0.0
        %3799 = vst [vmem:[#allocation3 + $0x340] sm:$0xff] 0.0
        %3800 = vst.msk [vmem:[#allocation3 + $0x348] sm:$0xff] %vm3694, 0.0
        %3801 = vst [vmem:[#allocation3 + $0x350] sm:$0x3] 0.0
        %3802 = vst.msk [vmem:[#allocation3 + $0x358] sm:$0x3] %vm3699, 0.0
        %vm3835 = vcmask 1040384
        %v3836 = vrot.slane %v3661, 7
        %v3837 = vrot.slane %v3662, 7
        %v3838 = vsel %vm3835, %v3836, %v3837
        %v3839 = vrot.slane %v3663, 7
        %v3840 = vrot.slane %v3664, 7
        %v3841 = vsel %vm3835, %v3839, %v3840
        %v3842 = vrot.slane %v3665, 7
        %v3843 = vrot.slane %v3666, 7
        %v3844 = vsel %vm3835, %v3842, %v3843
        %v3845 = vrot.slane %v3667, 7
        %v3846 = vrot.slane %v3668, 7
        %v3847 = vsel %vm3835, %v3845, %v3846
        %v3848 = vrot.slane %v3669, 7
        %v3849 = vrot.slane %v3670, 7
        %v3850 = vsel %vm3835, %v3848, %v3849
        %v3851 = vrot.slane %v3671, 7
        %v3852 = vrot.slane %v3672, 7
        %v3853 = vsel %vm3835, %v3851, %v3852
        %v3854 = vrot.slane %v3673, 7
        %v3855 = vrot.slane %v3674, 7
        %v3856 = vsel %vm3835, %v3854, %v3855
        %v3857 = vrot.slane %v3675, 7
        %v3858 = vrot.slane %v3676, 7
        %v3859 = vsel %vm3835, %v3857, %v3858
        %v3860 = vrot.slane %v3677, 7
        %v3861 = vrot.slane %v3678, 7
        %v3862 = vsel %vm3835, %v3860, %v3861
        %v3863 = vrot.slane %v3679, 7
        %v3864 = vrot.slane %v3680, 7
        %v3865 = vsel %vm3835, %v3863, %v3864
        %v3866 = vrot.slane %v3681, 7
        %v3867 = vrot.slane %v3682, 7
        %v3868 = vsel %vm3835, %v3866, %v3867
        %v3869 = vrot.slane %v3683, 7
        %v3870 = vrot.slane %v3684, 7
        %v3871 = vsel %vm3835, %v3869, %v3870
        %v3872 = vrot.slane %v3685, 7
        %v3873 = vrot.slane %v3686, 7
        %v3874 = vsel %vm3835, %v3872, %v3873
        %v3875 = vrot.slane %v3687, 7
        %v3876 = vrot.slane %v3688, 7
        %v3877 = vsel %vm3835, %v3875, %v3876
        %v3878 = vrot.slane %v3689, 7
        %v3879 = vrot.slane %v3690, 7
        %v3880 = vsel %vm3835, %v3878, %v3879
        %v3881 = vrot.slane %v3691, 7
        %v3882 = vrot.slane %v3692, 7
        %v3883 = vsel %vm3835, %v3881, %v3882
        %3884 = vrot.lane.b32.xlu0 %v3836, 8
        %v3885 = vpop.permute.xlu0 %3884
        %3886 = vrot.lane.b32.xlu0 %v3838, 8
        %v3887 = vpop.permute.xlu0 %3886
        %3888 = vrot.lane.b32.xlu0 %v3837, 8
        %v3889 = vpop.permute.xlu0 %3888
        %3890 = vrot.lane.b32.xlu0 %v3839, 8
        %v3891 = vpop.permute.xlu0 %3890
        %3892 = vrot.lane.b32.xlu0 %v3841, 8
        %v3893 = vpop.permute.xlu0 %3892
        %3894 = vrot.lane.b32.xlu0 %v3840, 8
        %v3895 = vpop.permute.xlu0 %3894
        %3896 = vrot.lane.b32.xlu0 %v3842, 8
        %v3897 = vpop.permute.xlu0 %3896
        %3898 = vrot.lane.b32.xlu0 %v3844, 8
        %v3899 = vpop.permute.xlu0 %3898
        %3900 = vrot.lane.b32.xlu0 %v3843, 8
        %v3901 = vpop.permute.xlu0 %3900
        %3902 = vrot.lane.b32.xlu0 %v3845, 8
        %v3903 = vpop.permute.xlu0 %3902
        %3904 = vrot.lane.b32.xlu0 %v3847, 8
        %v3905 = vpop.permute.xlu0 %3904
        %3906 = vrot.lane.b32.xlu0 %v3846, 8
        %v3907 = vpop.permute.xlu0 %3906
        %3908 = vrot.lane.b32.xlu0 %v3848, 8
        %v3909 = vpop.permute.xlu0 %3908
        %3910 = vrot.lane.b32.xlu0 %v3850, 8
        %v3911 = vpop.permute.xlu0 %3910
        %3912 = vrot.lane.b32.xlu0 %v3849, 8
        %v3913 = vpop.permute.xlu0 %3912
        %3914 = vrot.lane.b32.xlu0 %v3851, 8
        %v3915 = vpop.permute.xlu0 %3914
        %3916 = vrot.lane.b32.xlu0 %v3853, 8
        %v3917 = vpop.permute.xlu0 %3916
        %3918 = vrot.lane.b32.xlu0 %v3852, 8
        %v3919 = vpop.permute.xlu0 %3918
        %3920 = vrot.lane.b32.xlu0 %v3854, 8
        %v3921 = vpop.permute.xlu0 %3920
        %3922 = vrot.lane.b32.xlu0 %v3856, 8
        %v3923 = vpop.permute.xlu0 %3922
        %3924 = vrot.lane.b32.xlu0 %v3855, 8
        %v3925 = vpop.permute.xlu0 %3924
        %3926 = vrot.lane.b32.xlu0 %v3857, 8
        %v3927 = vpop.permute.xlu0 %3926
        %3928 = vrot.lane.b32.xlu0 %v3859, 8
        %v3929 = vpop.permute.xlu0 %3928
        %3930 = vrot.lane.b32.xlu0 %v3858, 8
        %v3931 = vpop.permute.xlu0 %3930
        %3932 = vrot.lane.b32.xlu0 %v3860, 8
        %v3933 = vpop.permute.xlu0 %3932
        %3934 = vrot.lane.b32.xlu0 %v3862, 8
        %v3935 = vpop.permute.xlu0 %3934
        %3936 = vrot.lane.b32.xlu0 %v3861, 8
        %v3937 = vpop.permute.xlu0 %3936
        %3938 = vrot.lane.b32.xlu0 %v3863, 8
        %v3939 = vpop.permute.xlu0 %3938
        %3940 = vrot.lane.b32.xlu0 %v3865, 8
        %v3941 = vpop.permute.xlu0 %3940
        %3942 = vrot.lane.b32.xlu0 %v3864, 8
        %v3943 = vpop.permute.xlu0 %3942
        %3944 = vrot.lane.b32.xlu0 %v3866, 8
        %v3945 = vpop.permute.xlu0 %3944
        %3946 = vrot.lane.b32.xlu0 %v3868, 8
        %v3947 = vpop.permute.xlu0 %3946
        %3948 = vrot.lane.b32.xlu0 %v3867, 8
        %v3949 = vpop.permute.xlu0 %3948
        %3950 = vrot.lane.b32.xlu0 %v3869, 8
        %v3951 = vpop.permute.xlu0 %3950
        %3952 = vrot.lane.b32.xlu0 %v3871, 8
        %v3953 = vpop.permute.xlu0 %3952
        %3954 = vrot.lane.b32.xlu0 %v3870, 8
        %v3955 = vpop.permute.xlu0 %3954
        %3956 = vrot.lane.b32.xlu0 %v3872, 8
        %v3957 = vpop.permute.xlu0 %3956
        %3958 = vrot.lane.b32.xlu0 %v3874, 8
        %v3959 = vpop.permute.xlu0 %3958
        %3960 = vrot.lane.b32.xlu0 %v3873, 8
        %v3961 = vpop.permute.xlu0 %3960
        %3962 = vrot.lane.b32.xlu0 %v3875, 8
        %v3963 = vpop.permute.xlu0 %3962
        %3964 = vrot.lane.b32.xlu0 %v3877, 8
        %v3965 = vpop.permute.xlu0 %3964
        %3966 = vrot.lane.b32.xlu0 %v3876, 8
        %v3967 = vpop.permute.xlu0 %3966
        %3968 = vrot.lane.b32.xlu0 %v3878, 8
        %v3969 = vpop.permute.xlu0 %3968
        %3970 = vrot.lane.b32.xlu0 %v3880, 8
        %v3971 = vpop.permute.xlu0 %3970
        %3972 = vrot.lane.b32.xlu0 %v3879, 8
        %v3973 = vpop.permute.xlu0 %3972
        %3974 = vrot.lane.b32.xlu0 %v3881, 8
        %v3975 = vpop.permute.xlu0 %3974
        %3976 = vrot.lane.b32.xlu0 %v3883, 8
        %v3977 = vpop.permute.xlu0 %3976
        %3978 = vrot.lane.b32.xlu0 %v3882, 8
        %v3979 = vpop.permute.xlu0 %3978
        %s4028 = scalar_lea.vmem [#allocation3], 48
        %vm4029 = vcmask 1047617
        %4030 = vst.msk [vmem:[%s4028] sm:$0xfe] %vm4029, %v3885
        %vm4031 = vcmask 64513
        %4032 = vst.msk [vmem:[%s4028 + $0x8] sm:$0xfe] %vm4031, %v3885
        %vm4033 = vcmask 1047616
        %4034 = vst.msk [vmem:[%s4028 + $0x10] sm:$0xff] %vm4033, %v3887
        %4035 = vst.msk [vmem:[%s4028 + $0x18] sm:$0xff] %vm391, %v3887
        %vm4036 = vcmask 1040448
        %4037 = vst.msk [vmem:[%s4028 + $0x20] sm:$0x1] %vm4036, %v3889
        %vm4038 = vcmask 57344
        %4039 = vst.msk [vmem:[%s4028 + $0x28] sm:$0x1] %vm4038, %v3889
        %4040 = vst.msk [vmem:[%s4028 + $0x30] sm:$0xfe] %vm4029, %v3891
        %4041 = vst.msk [vmem:[%s4028 + $0x38] sm:$0xfe] %vm4031, %v3891
        %4042 = vst.msk [vmem:[%s4028 + $0x40] sm:$0xff] %vm4033, %v3893
        %4043 = vst.msk [vmem:[%s4028 + $0x48] sm:$0xff] %vm391, %v3893
        %4044 = vst.msk [vmem:[%s4028 + $0x50] sm:$0x1] %vm4036, %v3895
        %4045 = vst.msk [vmem:[%s4028 + $0x58] sm:$0x1] %vm4038, %v3895
        %4046 = vst.msk [vmem:[%s4028 + $0x60] sm:$0xfe] %vm4029, %v3897
        %4047 = vst.msk [vmem:[%s4028 + $0x68] sm:$0xfe] %vm4031, %v3897
        %4048 = vst.msk [vmem:[%s4028 + $0x70] sm:$0xff] %vm4033, %v3899
        %4049 = vst.msk [vmem:[%s4028 + $0x78] sm:$0xff] %vm391, %v3899
        %4050 = vst.msk [vmem:[%s4028 + $0x80] sm:$0x1] %vm4036, %v3901
        %4051 = vst.msk [vmem:[%s4028 + $0x88] sm:$0x1] %vm4038, %v3901
        %4052 = vst.msk [vmem:[%s4028 + $0x90] sm:$0xfe] %vm4029, %v3903
        %4053 = vst.msk [vmem:[%s4028 + $0x98] sm:$0xfe] %vm4031, %v3903
        %4054 = vst.msk [vmem:[%s4028 + $0xa0] sm:$0xff] %vm4033, %v3905
        %4055 = vst.msk [vmem:[%s4028 + $0xa8] sm:$0xff] %vm391, %v3905
        %4056 = vst.msk [vmem:[%s4028 + $0xb0] sm:$0x1] %vm4036, %v3907
        %4057 = vst.msk [vmem:[%s4028 + $0xb8] sm:$0x1] %vm4038, %v3907
        %4058 = vst.msk [vmem:[%s4028 + $0xc0] sm:$0xfe] %vm4029, %v3909
        %4059 = vst.msk [vmem:[%s4028 + $0xc8] sm:$0xfe] %vm4031, %v3909
        %4060 = vst.msk [vmem:[%s4028 + $0xd0] sm:$0xff] %vm4033, %v3911
        %4061 = vst.msk [vmem:[%s4028 + $0xd8] sm:$0xff] %vm391, %v3911
        %4062 = vst.msk [vmem:[%s4028 + $0xe0] sm:$0x1] %vm4036, %v3913
        %4063 = vst.msk [vmem:[%s4028 + $0xe8] sm:$0x1] %vm4038, %v3913
        %4064 = vst.msk [vmem:[%s4028 + $0xf0] sm:$0xfe] %vm4029, %v3915
        %4065 = vst.msk [vmem:[%s4028 + $0xf8] sm:$0xfe] %vm4031, %v3915
        %4066 = vst.msk [vmem:[%s4028 + $0x100] sm:$0xff] %vm4033, %v3917
        %4067 = vst.msk [vmem:[%s4028 + $0x108] sm:$0xff] %vm391, %v3917
        %4068 = vst.msk [vmem:[%s4028 + $0x110] sm:$0x1] %vm4036, %v3919
        %4069 = vst.msk [vmem:[%s4028 + $0x118] sm:$0x1] %vm4038, %v3919
        %4070 = vst.msk [vmem:[%s4028 + $0x120] sm:$0xfe] %vm4029, %v3921
        %4071 = vst.msk [vmem:[%s4028 + $0x128] sm:$0xfe] %vm4031, %v3921
        %4072 = vst.msk [vmem:[%s4028 + $0x130] sm:$0xff] %vm4033, %v3923
        %4073 = vst.msk [vmem:[%s4028 + $0x138] sm:$0xff] %vm391, %v3923
        %4074 = vst.msk [vmem:[%s4028 + $0x140] sm:$0x1] %vm4036, %v3925
        %4075 = vst.msk [vmem:[%s4028 + $0x148] sm:$0x1] %vm4038, %v3925
        %4076 = vst.msk [vmem:[%s4028 + $0x150] sm:$0xfe] %vm4029, %v3927
        %4077 = vst.msk [vmem:[%s4028 + $0x158] sm:$0xfe] %vm4031, %v3927
        %4078 = vst.msk [vmem:[%s4028 + $0x160] sm:$0xff] %vm4033, %v3929
        %4079 = vst.msk [vmem:[%s4028 + $0x168] sm:$0xff] %vm391, %v3929
        %4080 = vst.msk [vmem:[%s4028 + $0x170] sm:$0x1] %vm4036, %v3931
        %4081 = vst.msk [vmem:[%s4028 + $0x178] sm:$0x1] %vm4038, %v3931
        %4082 = vst.msk [vmem:[%s4028 + $0x180] sm:$0xfe] %vm4029, %v3933
        %4083 = vst.msk [vmem:[%s4028 + $0x188] sm:$0xfe] %vm4031, %v3933
        %4084 = vst.msk [vmem:[%s4028 + $0x190] sm:$0xff] %vm4033, %v3935
        %4085 = vst.msk [vmem:[%s4028 + $0x198] sm:$0xff] %vm391, %v3935
        %4086 = vst.msk [vmem:[%s4028 + $0x1a0] sm:$0x1] %vm4036, %v3937
        %4087 = vst.msk [vmem:[%s4028 + $0x1a8] sm:$0x1] %vm4038, %v3937
        %4088 = vst.msk [vmem:[%s4028 + $0x1b0] sm:$0xfe] %vm4029, %v3939
        %4089 = vst.msk [vmem:[%s4028 + $0x1b8] sm:$0xfe] %vm4031, %v3939
        %4090 = vst.msk [vmem:[%s4028 + $0x1c0] sm:$0xff] %vm4033, %v3941
        %4091 = vst.msk [vmem:[%s4028 + $0x1c8] sm:$0xff] %vm391, %v3941
        %4092 = vst.msk [vmem:[%s4028 + $0x1d0] sm:$0x1] %vm4036, %v3943
        %4093 = vst.msk [vmem:[%s4028 + $0x1d8] sm:$0x1] %vm4038, %v3943
        %4094 = vst.msk [vmem:[%s4028 + $0x1e0] sm:$0xfe] %vm4029, %v3945
        %4095 = vst.msk [vmem:[%s4028 + $0x1e8] sm:$0xfe] %vm4031, %v3945
        %4096 = vst.msk [vmem:[%s4028 + $0x1f0] sm:$0xff] %vm4033, %v3947
        %4097 = vst.msk [vmem:[%s4028 + $0x1f8] sm:$0xff] %vm391, %v3947
        %4098 = vst.msk [vmem:[%s4028 + $0x200] sm:$0x1] %vm4036, %v3949
        %4099 = vst.msk [vmem:[%s4028 + $0x208] sm:$0x1] %vm4038, %v3949
        %4100 = vst.msk [vmem:[%s4028 + $0x210] sm:$0xfe] %vm4029, %v3951
        %4101 = vst.msk [vmem:[%s4028 + $0x218] sm:$0xfe] %vm4031, %v3951
        %4102 = vst.msk [vmem:[%s4028 + $0x220] sm:$0xff] %vm4033, %v3953
        %4103 = vst.msk [vmem:[%s4028 + $0x228] sm:$0xff] %vm391, %v3953
        %4104 = vst.msk [vmem:[%s4028 + $0x230] sm:$0x1] %vm4036, %v3955
        %4105 = vst.msk [vmem:[%s4028 + $0x238] sm:$0x1] %vm4038, %v3955
        %4106 = vst.msk [vmem:[%s4028 + $0x240] sm:$0xfe] %vm4029, %v3957
        %4107 = vst.msk [vmem:[%s4028 + $0x248] sm:$0xfe] %vm4031, %v3957
        %4108 = vst.msk [vmem:[%s4028 + $0x250] sm:$0xff] %vm4033, %v3959
        %4109 = vst.msk [vmem:[%s4028 + $0x258] sm:$0xff] %vm391, %v3959
        %4110 = vst.msk [vmem:[%s4028 + $0x260] sm:$0x1] %vm4036, %v3961
        %4111 = vst.msk [vmem:[%s4028 + $0x268] sm:$0x1] %vm4038, %v3961
        %4112 = vst.msk [vmem:[%s4028 + $0x270] sm:$0xfe] %vm4029, %v3963
        %4113 = vst.msk [vmem:[%s4028 + $0x278] sm:$0xfe] %vm4031, %v3963
        %4114 = vst.msk [vmem:[%s4028 + $0x280] sm:$0xff] %vm4033, %v3965
        %4115 = vst.msk [vmem:[%s4028 + $0x288] sm:$0xff] %vm391, %v3965
        %4116 = vst.msk [vmem:[%s4028 + $0x290] sm:$0x1] %vm4036, %v3967
        %4117 = vst.msk [vmem:[%s4028 + $0x298] sm:$0x1] %vm4038, %v3967
        %4118 = vst.msk [vmem:[%s4028 + $0x2a0] sm:$0xfe] %vm4029, %v3969
        %4119 = vst.msk [vmem:[%s4028 + $0x2a8] sm:$0xfe] %vm4031, %v3969
        %4120 = vst.msk [vmem:[%s4028 + $0x2b0] sm:$0xff] %vm4033, %v3971
        %4121 = vst.msk [vmem:[%s4028 + $0x2b8] sm:$0xff] %vm391, %v3971
        %4122 = vst.msk [vmem:[%s4028 + $0x2c0] sm:$0x1] %vm4036, %v3973
        %4123 = vst.msk [vmem:[%s4028 + $0x2c8] sm:$0x1] %vm4038, %v3973
        %4124 = vst.msk [vmem:[%s4028 + $0x2d0] sm:$0xfe] %vm4029, %v3975
        %4125 = vst.msk [vmem:[%s4028 + $0x2d8] sm:$0xfe] %vm4031, %v3975
        %4126 = vst.msk [vmem:[%s4028 + $0x2e0] sm:$0xff] %vm4033, %v3977
        %4127 = vst.msk [vmem:[%s4028 + $0x2e8] sm:$0xff] %vm391, %v3977
        %4128 = vst.msk [vmem:[%s4028 + $0x2f0] sm:$0x1] %vm4036, %v3979
        %4129 = vst.msk [vmem:[%s4028 + $0x2f8] sm:$0x1] %vm4038, %v3979
        %v4130 = vld [vmem:[#allocation3] sm:$0xff]
        %v4131 = vld [vmem:[#allocation3 + $0x8] sm:$0xff]
        %v4132 = vld [vmem:[#allocation3 + $0x10] sm:$0xff]
        %v4133 = vld [vmem:[#allocation3 + $0x18] sm:$0xff]
        %v4134 = vld [vmem:[#allocation3 + $0x30] sm:$0xff]
        %v4135 = vld [vmem:[#allocation3 + $0x38] sm:$0xff]
        %v4136 = vld [vmem:[#allocation3 + $0x40] sm:$0xff]
        %v4137 = vld [vmem:[#allocation3 + $0x48] sm:$0xff]
        %v4138 = vld [vmem:[#allocation3 + $0x60] sm:$0xff]
        %v4139 = vld [vmem:[#allocation3 + $0x68] sm:$0xff]
        %v4140 = vld [vmem:[#allocation3 + $0x70] sm:$0xff]
        %v4141 = vld [vmem:[#allocation3 + $0x78] sm:$0xff]
        %v4142 = vld [vmem:[#allocation3 + $0x90] sm:$0xff]
        %v4143 = vld [vmem:[#allocation3 + $0x98] sm:$0xff]
        %v4144 = vld [vmem:[#allocation3 + $0xa0] sm:$0xff]
        %v4145 = vld [vmem:[#allocation3 + $0xa8] sm:$0xff]
        %v4146 = vld [vmem:[#allocation3 + $0xc0] sm:$0xff]
        %v4147 = vld [vmem:[#allocation3 + $0xc8] sm:$0xff]
        %v4148 = vld [vmem:[#allocation3 + $0xd0] sm:$0xff]
        %v4149 = vld [vmem:[#allocation3 + $0xd8] sm:$0xff]
        %v4150 = vld [vmem:[#allocation3 + $0xf0] sm:$0xff]
        %v4151 = vld [vmem:[#allocation3 + $0xf8] sm:$0xff]
        %v4152 = vld [vmem:[#allocation3 + $0x100] sm:$0xff]
        %v4153 = vld [vmem:[#allocation3 + $0x108] sm:$0xff]
        %v4154 = vld [vmem:[#allocation3 + $0x120] sm:$0xff]
        %v4155 = vld [vmem:[#allocation3 + $0x128] sm:$0xff]
        %v4156 = vld [vmem:[#allocation3 + $0x130] sm:$0xff]
        %v4157 = vld [vmem:[#allocation3 + $0x138] sm:$0xff]
        %v4158 = vld [vmem:[#allocation3 + $0x150] sm:$0xff]
        %v4159 = vld [vmem:[#allocation3 + $0x158] sm:$0xff]
        %v4160 = vld [vmem:[#allocation3 + $0x160] sm:$0xff]
        %v4161 = vld [vmem:[#allocation3 + $0x168] sm:$0xff]
        %v4162 = vld [vmem:[#allocation3 + $0x180] sm:$0xff]
        %v4163 = vld [vmem:[#allocation3 + $0x188] sm:$0xff]
        %v4164 = vld [vmem:[#allocation3 + $0x190] sm:$0xff]
        %v4165 = vld [vmem:[#allocation3 + $0x198] sm:$0xff]
        %v4166 = vld [vmem:[#allocation3 + $0x1b0] sm:$0xff]
        %v4167 = vld [vmem:[#allocation3 + $0x1b8] sm:$0xff]
        %v4168 = vld [vmem:[#allocation3 + $0x1c0] sm:$0xff]
        %v4169 = vld [vmem:[#allocation3 + $0x1c8] sm:$0xff]
        %v4170 = vld [vmem:[#allocation3 + $0x1e0] sm:$0xff]
        %v4171 = vld [vmem:[#allocation3 + $0x1e8] sm:$0xff]
        %v4172 = vld [vmem:[#allocation3 + $0x1f0] sm:$0xff]
        %v4173 = vld [vmem:[#allocation3 + $0x1f8] sm:$0xff]
        %v4174 = vld [vmem:[#allocation3 + $0x210] sm:$0xff]
        %v4175 = vld [vmem:[#allocation3 + $0x218] sm:$0xff]
        %v4176 = vld [vmem:[#allocation3 + $0x220] sm:$0xff]
        %v4177 = vld [vmem:[#allocation3 + $0x228] sm:$0xff]
        %v4178 = vld [vmem:[#allocation3 + $0x240] sm:$0xff]
        %v4179 = vld [vmem:[#allocation3 + $0x248] sm:$0xff]
        %v4180 = vld [vmem:[#allocation3 + $0x250] sm:$0xff]
        %v4181 = vld [vmem:[#allocation3 + $0x258] sm:$0xff]
        %v4182 = vld [vmem:[#allocation3 + $0x270] sm:$0xff]
        %v4183 = vld [vmem:[#allocation3 + $0x278] sm:$0xff]
        %v4184 = vld [vmem:[#allocation3 + $0x280] sm:$0xff]
        %v4185 = vld [vmem:[#allocation3 + $0x288] sm:$0xff]
        %v4186 = vld [vmem:[#allocation3 + $0x2a0] sm:$0xff]
        %v4187 = vld [vmem:[#allocation3 + $0x2a8] sm:$0xff]
        %v4188 = vld [vmem:[#allocation3 + $0x2b0] sm:$0xff]
        %v4189 = vld [vmem:[#allocation3 + $0x2b8] sm:$0xff]
        %v4190 = vld [vmem:[#allocation3 + $0x2d0] sm:$0xff]
        %v4191 = vld [vmem:[#allocation3 + $0x2d8] sm:$0xff]
        %v4192 = vld [vmem:[#allocation3 + $0x2e0] sm:$0xff]
        %v4193 = vld [vmem:[#allocation3 + $0x2e8] sm:$0xff]
        %v4194 = vld [vmem:[#allocation7] sm:$0xff]
        %v4195 = vld [vmem:[#allocation7 + $0x8] sm:$0xff]
        %v4196 = vld [vmem:[#allocation7 + $0x10] sm:$0xff]
        %v4197 = vld [vmem:[#allocation7 + $0x18] sm:$0xff]
        %v4198 = vld [vmem:[#allocation7 + $0x20] sm:$0xff]
        %v4199 = vld [vmem:[#allocation7 + $0x28] sm:$0xff]
        %v4200 = vld [vmem:[#allocation7 + $0x30] sm:$0xff]
        %v4201 = vld [vmem:[#allocation7 + $0x38] sm:$0xff]
        %v4202 = vld [vmem:[#allocation7 + $0x40] sm:$0xff]
        %v4203 = vld [vmem:[#allocation7 + $0x48] sm:$0xff]
        %v4204 = vld [vmem:[#allocation7 + $0x50] sm:$0xff]
        %v4205 = vld [vmem:[#allocation7 + $0x58] sm:$0xff]
        %v4206 = vld [vmem:[#allocation7 + $0x60] sm:$0xff]
        %v4207 = vld [vmem:[#allocation7 + $0x68] sm:$0xff]
        %v4208 = vld [vmem:[#allocation7 + $0x70] sm:$0xff]
        %v4209 = vld [vmem:[#allocation7 + $0x78] sm:$0xff]
        %v4210 = vld [vmem:[#allocation7 + $0x80] sm:$0xff]
        %v4211 = vld [vmem:[#allocation7 + $0x88] sm:$0xff]
        %v4212 = vld [vmem:[#allocation3] sm:$0xfe]
        %v4213 = vld [vmem:[#allocation3 + $0x8] sm:$0xfe]
        %v4214 = vld [vmem:[#allocation3 + $0x20] sm:$0x1]
        %v4215 = vld [vmem:[#allocation3 + $0x28] sm:$0x1]
        %v4216 = vld [vmem:[#allocation3 + $0x30] sm:$0xfe]
        %v4217 = vld [vmem:[#allocation3 + $0x38] sm:$0xfe]
        %v4218 = vld [vmem:[#allocation3 + $0x50] sm:$0x1]
        %v4219 = vld [vmem:[#allocation3 + $0x58] sm:$0x1]
        %v4220 = vld [vmem:[#allocation3 + $0x60] sm:$0xfe]
        %v4221 = vld [vmem:[#allocation3 + $0x68] sm:$0xfe]
        %v4222 = vld [vmem:[#allocation3 + $0x80] sm:$0x1]
        %v4223 = vld [vmem:[#allocation3 + $0x88] sm:$0x1]
        %v4224 = vld [vmem:[#allocation3 + $0x90] sm:$0xfe]
        %v4225 = vld [vmem:[#allocation3 + $0x98] sm:$0xfe]
        %v4226 = vld [vmem:[#allocation3 + $0xb0] sm:$0x1]
        %v4227 = vld [vmem:[#allocation3 + $0xb8] sm:$0x1]
        %v4228 = vld [vmem:[#allocation3 + $0xc0] sm:$0xfe]
        %v4229 = vld [vmem:[#allocation3 + $0xc8] sm:$0xfe]
        %v4230 = vld [vmem:[#allocation3 + $0xe0] sm:$0x1]
        %v4231 = vld [vmem:[#allocation3 + $0xe8] sm:$0x1]
        %v4232 = vld [vmem:[#allocation3 + $0xf0] sm:$0xfe]
        %v4233 = vld [vmem:[#allocation3 + $0xf8] sm:$0xfe]
        %v4234 = vld [vmem:[#allocation3 + $0x110] sm:$0x1]
        %v4235 = vld [vmem:[#allocation3 + $0x118] sm:$0x1]
        %v4236 = vld [vmem:[#allocation3 + $0x120] sm:$0xfe]
        %v4237 = vld [vmem:[#allocation3 + $0x128] sm:$0xfe]
        %v4238 = vld [vmem:[#allocation3 + $0x140] sm:$0x1]
        %v4239 = vld [vmem:[#allocation3 + $0x148] sm:$0x1]
        %v4240 = vld [vmem:[#allocation3 + $0x150] sm:$0xfe]
        %v4241 = vld [vmem:[#allocation3 + $0x158] sm:$0xfe]
        %v4242 = vld [vmem:[#allocation3 + $0x170] sm:$0x1]
        %v4243 = vld [vmem:[#allocation3 + $0x178] sm:$0x1]
        %v4244 = vld [vmem:[#allocation3 + $0x180] sm:$0xfe]
        %v4245 = vld [vmem:[#allocation3 + $0x188] sm:$0xfe]
        %v4246 = vld [vmem:[#allocation3 + $0x1a0] sm:$0x1]
        %v4247 = vld [vmem:[#allocation3 + $0x1a8] sm:$0x1]
        %v4248 = vld [vmem:[#allocation3 + $0x1b0] sm:$0xfe]
        %v4249 = vld [vmem:[#allocation3 + $0x1b8] sm:$0xfe]
        %v4250 = vld [vmem:[#allocation3 + $0x1d0] sm:$0x1]
        %v4251 = vld [vmem:[#allocation3 + $0x1d8] sm:$0x1]
        %v4252 = vld [vmem:[#allocation3 + $0x1e0] sm:$0xfe]
        %v4253 = vld [vmem:[#allocation3 + $0x1e8] sm:$0xfe]
        %v4254 = vld [vmem:[#allocation3 + $0x200] sm:$0x1]
        %v4255 = vld [vmem:[#allocation3 + $0x208] sm:$0x1]
        %v4256 = vld [vmem:[#allocation3 + $0x210] sm:$0xfe]
        %v4257 = vld [vmem:[#allocation3 + $0x218] sm:$0xfe]
        %v4258 = vld [vmem:[#allocation3 + $0x230] sm:$0x1]
        %v4259 = vld [vmem:[#allocation3 + $0x238] sm:$0x1]
        %v4260 = vld [vmem:[#allocation3 + $0x240] sm:$0xfe]
        %v4261 = vld [vmem:[#allocation3 + $0x248] sm:$0xfe]
        %v4262 = vld [vmem:[#allocation3 + $0x260] sm:$0x1]
        %v4263 = vld [vmem:[#allocation3 + $0x268] sm:$0x1]
        %v4264 = vld [vmem:[#allocation3 + $0x270] sm:$0xfe]
        %v4265 = vld [vmem:[#allocation3 + $0x278] sm:$0xfe]
        %v4266 = vld [vmem:[#allocation3 + $0x290] sm:$0x1]
        %v4267 = vld [vmem:[#allocation3 + $0x298] sm:$0x1]
        %v4268 = vld [vmem:[#allocation3 + $0x2a0] sm:$0xfe]
        %v4269 = vld [vmem:[#allocation3 + $0x2a8] sm:$0xfe]
        %v4270 = vld [vmem:[#allocation3 + $0x2c0] sm:$0x1]
        %v4271 = vld [vmem:[#allocation3 + $0x2c8] sm:$0x1]
        %v4272 = vld [vmem:[#allocation3 + $0x2d0] sm:$0xfe]
        %v4273 = vld [vmem:[#allocation3 + $0x2d8] sm:$0xfe]
        %v4274 = vld [vmem:[#allocation3 + $0x2f0] sm:$0x1]
        %v4275 = vld [vmem:[#allocation3 + $0x2f8] sm:$0x1]
        %vm4372 = vcmask 1046528
        %v4373 = vrot.slane %v4212, 1
        %v4374 = vrot.slane %v4132, 1
        %v4375 = vsel %vm4372, %v4373, %v4374
        %v4376 = vrot.slane %v4213, 1
        %v4377 = vrot.slane %v4133, 1
        %v4378 = vsel %vm4372, %v4376, %v4377
        %v4379 = vrot.slane %v4214, 1
        %v4380 = vsel %vm4372, %v4374, %v4379
        %v4381 = vrot.slane %v4215, 1
        %v4382 = vsel %vm4372, %v4377, %v4381
        %v4383 = vrot.slane %v4216, 1
        %v4384 = vrot.slane %v4136, 1
        %v4385 = vsel %vm4372, %v4383, %v4384
        %v4386 = vrot.slane %v4217, 1
        %v4387 = vrot.slane %v4137, 1
        %v4388 = vsel %vm4372, %v4386, %v4387
        %v4389 = vrot.slane %v4218, 1
        %v4390 = vsel %vm4372, %v4384, %v4389
        %v4391 = vrot.slane %v4219, 1
        %v4392 = vsel %vm4372, %v4387, %v4391
        %v4393 = vrot.slane %v4220, 1
        %v4394 = vrot.slane %v4140, 1
        %v4395 = vsel %vm4372, %v4393, %v4394
        %v4396 = vrot.slane %v4221, 1
        %v4397 = vrot.slane %v4141, 1
        %v4398 = vsel %vm4372, %v4396, %v4397
        %v4399 = vrot.slane %v4222, 1
        %v4400 = vsel %vm4372, %v4394, %v4399
        %v4401 = vrot.slane %v4223, 1
        %v4402 = vsel %vm4372, %v4397, %v4401
        %v4403 = vrot.slane %v4224, 1
        %v4404 = vrot.slane %v4144, 1
        %v4405 = vsel %vm4372, %v4403, %v4404
        %v4406 = vrot.slane %v4225, 1
        %v4407 = vrot.slane %v4145, 1
        %v4408 = vsel %vm4372, %v4406, %v4407
        %v4409 = vrot.slane %v4226, 1
        %v4410 = vsel %vm4372, %v4404, %v4409
        %v4411 = vrot.slane %v4227, 1
        %v4412 = vsel %vm4372, %v4407, %v4411
        %v4413 = vrot.slane %v4228, 1
        %v4414 = vrot.slane %v4148, 1
        %v4415 = vsel %vm4372, %v4413, %v4414
        %v4416 = vrot.slane %v4229, 1
        %v4417 = vrot.slane %v4149, 1
        %v4418 = vsel %vm4372, %v4416, %v4417
        %v4419 = vrot.slane %v4230, 1
        %v4420 = vsel %vm4372, %v4414, %v4419
        %v4421 = vrot.slane %v4231, 1
        %v4422 = vsel %vm4372, %v4417, %v4421
        %v4423 = vrot.slane %v4232, 1
        %v4424 = vrot.slane %v4152, 1
        %v4425 = vsel %vm4372, %v4423, %v4424
        %v4426 = vrot.slane %v4233, 1
        %v4427 = vrot.slane %v4153, 1
        %v4428 = vsel %vm4372, %v4426, %v4427
        %v4429 = vrot.slane %v4234, 1
        %v4430 = vsel %vm4372, %v4424, %v4429
        %v4431 = vrot.slane %v4235, 1
        %v4432 = vsel %vm4372, %v4427, %v4431
        %v4433 = vrot.slane %v4236, 1
        %v4434 = vrot.slane %v4156, 1
        %v4435 = vsel %vm4372, %v4433, %v4434
        %v4436 = vrot.slane %v4237, 1
        %v4437 = vrot.slane %v4157, 1
        %v4438 = vsel %vm4372, %v4436, %v4437
        %v4439 = vrot.slane %v4238, 1
        %v4440 = vsel %vm4372, %v4434, %v4439
        %v4441 = vrot.slane %v4239, 1
        %v4442 = vsel %vm4372, %v4437, %v4441
        %v4443 = vrot.slane %v4240, 1
        %v4444 = vrot.slane %v4160, 1
        %v4445 = vsel %vm4372, %v4443, %v4444
        %v4446 = vrot.slane %v4241, 1
        %v4447 = vrot.slane %v4161, 1
        %v4448 = vsel %vm4372, %v4446, %v4447
        %v4449 = vrot.slane %v4242, 1
        %v4450 = vsel %vm4372, %v4444, %v4449
        %v4451 = vrot.slane %v4243, 1
        %v4452 = vsel %vm4372, %v4447, %v4451
        %v4453 = vrot.slane %v4244, 1
        %v4454 = vrot.slane %v4164, 1
        %v4455 = vsel %vm4372, %v4453, %v4454
        %v4456 = vrot.slane %v4245, 1
        %v4457 = vrot.slane %v4165, 1
        %v4458 = vsel %vm4372, %v4456, %v4457
        %v4459 = vrot.slane %v4246, 1
        %v4460 = vsel %vm4372, %v4454, %v4459
        %v4461 = vrot.slane %v4247, 1
        %v4462 = vsel %vm4372, %v4457, %v4461
        %v4463 = vrot.slane %v4248, 1
        %v4464 = vrot.slane %v4168, 1
        %v4465 = vsel %vm4372, %v4463, %v4464
        %v4466 = vrot.slane %v4249, 1
        %v4467 = vrot.slane %v4169, 1
        %v4468 = vsel %vm4372, %v4466, %v4467
        %v4469 = vrot.slane %v4250, 1
        %v4470 = vsel %vm4372, %v4464, %v4469
        %v4471 = vrot.slane %v4251, 1
        %v4472 = vsel %vm4372, %v4467, %v4471
        %v4473 = vrot.slane %v4252, 1
        %v4474 = vrot.slane %v4172, 1
        %v4475 = vsel %vm4372, %v4473, %v4474
        %v4476 = vrot.slane %v4253, 1
        %v4477 = vrot.slane %v4173, 1
        %v4478 = vsel %vm4372, %v4476, %v4477
        %v4479 = vrot.slane %v4254, 1
        %v4480 = vsel %vm4372, %v4474, %v4479
        %v4481 = vrot.slane %v4255, 1
        %v4482 = vsel %vm4372, %v4477, %v4481
        %v4483 = vrot.slane %v4256, 1
        %v4484 = vrot.slane %v4176, 1
        %v4485 = vsel %vm4372, %v4483, %v4484
        %v4486 = vrot.slane %v4257, 1
        %v4487 = vrot.slane %v4177, 1
        %v4488 = vsel %vm4372, %v4486, %v4487
        %v4489 = vrot.slane %v4258, 1
        %v4490 = vsel %vm4372, %v4484, %v4489
        %v4491 = vrot.slane %v4259, 1
        %v4492 = vsel %vm4372, %v4487, %v4491
        %v4493 = vrot.slane %v4260, 1
        %v4494 = vrot.slane %v4180, 1
        %v4495 = vsel %vm4372, %v4493, %v4494
        %v4496 = vrot.slane %v4261, 1
        %v4497 = vrot.slane %v4181, 1
        %v4498 = vsel %vm4372, %v4496, %v4497
        %v4499 = vrot.slane %v4262, 1
        %v4500 = vsel %vm4372, %v4494, %v4499
        %v4501 = vrot.slane %v4263, 1
        %v4502 = vsel %vm4372, %v4497, %v4501
        %v4503 = vrot.slane %v4264, 1
        %v4504 = vrot.slane %v4184, 1
        %v4505 = vsel %vm4372, %v4503, %v4504
        %v4506 = vrot.slane %v4265, 1
        %v4507 = vrot.slane %v4185, 1
        %v4508 = vsel %vm4372, %v4506, %v4507
        %v4509 = vrot.slane %v4266, 1
        %v4510 = vsel %vm4372, %v4504, %v4509
        %v4511 = vrot.slane %v4267, 1
        %v4512 = vsel %vm4372, %v4507, %v4511
        %v4513 = vrot.slane %v4268, 1
        %v4514 = vrot.slane %v4188, 1
        %v4515 = vsel %vm4372, %v4513, %v4514
        %v4516 = vrot.slane %v4269, 1
        %v4517 = vrot.slane %v4189, 1
        %v4518 = vsel %vm4372, %v4516, %v4517
        %v4519 = vrot.slane %v4270, 1
        %v4520 = vsel %vm4372, %v4514, %v4519
        %v4521 = vrot.slane %v4271, 1
        %v4522 = vsel %vm4372, %v4517, %v4521
        %v4523 = vrot.slane %v4272, 1
        %v4524 = vrot.slane %v4192, 1
        %v4525 = vsel %vm4372, %v4523, %v4524
        %v4526 = vrot.slane %v4273, 1
        %v4527 = vrot.slane %v4193, 1
        %v4528 = vsel %vm4372, %v4526, %v4527
        %v4529 = vrot.slane %v4274, 1
        %v4530 = vsel %vm4372, %v4524, %v4529
        %v4531 = vrot.slane %v4275, 1
        %v4532 = vsel %vm4372, %v4527, %v4531
        %s4565 = scalar_lea.vmem [#allocation7], 144
        %v4566 = vld [vmem:[%s4565] sm:$0xff]
        %v4567 = vld [vmem:[%s4565 + $0x8] sm:$0xff]
        %v4568 = vld [vmem:[%s4565 + $0x10] sm:$0xff]
        %v4569 = vld [vmem:[%s4565 + $0x18] sm:$0xff]
        %v4570 = vld [vmem:[%s4565 + $0x20] sm:$0xff]
        %v4571 = vld [vmem:[%s4565 + $0x28] sm:$0xff]
        %v4572 = vld [vmem:[%s4565 + $0x30] sm:$0xff]
        %v4573 = vld [vmem:[%s4565 + $0x38] sm:$0xff]
        %v4574 = vld [vmem:[%s4565 + $0x40] sm:$0xff]
        %v4575 = vld [vmem:[%s4565 + $0x48] sm:$0xff]
        %v4576 = vld [vmem:[%s4565 + $0x50] sm:$0xff]
        %v4577 = vld [vmem:[%s4565 + $0x58] sm:$0xff]
        %v4578 = vld [vmem:[%s4565 + $0x60] sm:$0xff]
        %v4579 = vld [vmem:[%s4565 + $0x68] sm:$0xff]
        %v4580 = vld [vmem:[%s4565 + $0x70] sm:$0xff]
        %v4581 = vld [vmem:[%s4565 + $0x78] sm:$0xff]
        %v4582 = vld [vmem:[%s4565 + $0x80] sm:$0xff]
        %v4583 = vld [vmem:[%s4565 + $0x88] sm:$0xff]
        %v4584 = vsel %vm3694, %v4378, 0
        %v4586 = vsel %vm3694, %v4382, 0
        %v4588 = vsel %vm3694, %v4388, 0
        %v4590 = vsel %vm3694, %v4392, 0
        %v4592 = vsel %vm3694, %v4398, 0
        %v4594 = vsel %vm3694, %v4402, 0
        %v4596 = vsel %vm3694, %v4408, 0
        %v4598 = vsel %vm3694, %v4412, 0
        %v4600 = vsel %vm3694, %v4418, 0
        %v4602 = vsel %vm3694, %v4422, 0
        %v4604 = vsel %vm3694, %v4428, 0
        %v4606 = vsel %vm3694, %v4432, 0
        %v4608 = vsel %vm3694, %v4438, 0
        %v4610 = vsel %vm3694, %v4442, 0
        %v4612 = vsel %vm3694, %v4448, 0
        %v4614 = vsel %vm3694, %v4452, 0
        %v4616 = vsel %vm3694, %v4458, 0
        %v4618 = vsel %vm3694, %v4462, 0
        %v4620 = vsel %vm3694, %v4468, 0
        %v4622 = vsel %vm3694, %v4472, 0
        %v4624 = vsel %vm3694, %v4478, 0
        %v4626 = vsel %vm3694, %v4482, 0
        %v4628 = vsel %vm3694, %v4488, 0
        %v4630 = vsel %vm3694, %v4492, 0
        %v4632 = vsel %vm3694, %v4498, 0
        %v4634 = vsel %vm3694, %v4502, 0
        %v4636 = vsel %vm3694, %v4508, 0
        %v4638 = vsel %vm3694, %v4512, 0
        %v4640 = vsel %vm3694, %v4518, 0
        %v4642 = vsel %vm3694, %v4522, 0
        %v4644 = vsel %vm3694, %v4528, 0
        %v4646 = vsel %vm3694, %v4532, 0
        %4648 = vmatpush.msra.mxu0 %v4581
        %4649 = vmatpush.msra.mxu0 %v4580
        %4650 = vmatpush.msra.mxu0 %v4579
        %4651 = vmatpush.msra.mxu0 %v4578
        %4652 = vmatpush.msra.mxu0 %v4577
        %4653 = vmatpush.msra.mxu0 %v4576
        %4654 = vmatpush.msra.mxu0 %v4575
        %4655 = vmatpush.msra.mxu0 %v4574
        %4656 = vmatpush.msra.mxu0 %v4573
        %4657 = vmatpush.msra.mxu0 %v4572
        %4658 = vmatpush.msra.mxu0 %v4571
        %4659 = vmatpush.msra.mxu0 %v4570
        %4660 = vmatpush.msra.mxu0 %v4569
        %4661 = vmatpush.msra.mxu0 %v4568
        %4662 = vmatpush.msra.mxu0 %v4567
        %4663 = vmatpush.msra.mxu0 %v4566
        %4664 = vmatmul.f32.gmra.mxu0 %v4375
        %v4665 = vpop.f32.mrf.mxu0
        %v4666 = vadd.f32 0.0, %v4665
        %4667 = vmatmul.f32.gmra.mxu0 %v4380
        %v4668 = vpop.f32.mrf.mxu0
        %v4669 = vadd.f32 0.0, %v4668
        %4670 = vmatmul.f32.gmra.mxu0 %v4385
        %v4671 = vpop.f32.mrf.mxu0
        %v4672 = vadd.f32 0.0, %v4671
        %4673 = vmatmul.f32.gmra.mxu0 %v4390
        %v4674 = vpop.f32.mrf.mxu0
        %v4675 = vadd.f32 0.0, %v4674
        %4676 = vmatmul.f32.gmra.mxu0 %v4395
        %v4677 = vpop.f32.mrf.mxu0
        %v4678 = vadd.f32 0.0, %v4677
        %4679 = vmatmul.f32.gmra.mxu0 %v4400
        %v4680 = vpop.f32.mrf.mxu0
        %v4681 = vadd.f32 0.0, %v4680
        %4682 = vmatmul.f32.gmra.mxu0 %v4405
        %v4683 = vpop.f32.mrf.mxu0
        %v4684 = vadd.f32 0.0, %v4683
        %4685 = vmatmul.f32.gmra.mxu0 %v4410
        %v4686 = vpop.f32.mrf.mxu0
        %v4687 = vadd.f32 0.0, %v4686
        %4688 = vmatmul.f32.gmra.mxu0 %v4415
        %v4689 = vpop.f32.mrf.mxu0
        %v4690 = vadd.f32 0.0, %v4689
        %4691 = vmatmul.f32.gmra.mxu0 %v4420
        %v4692 = vpop.f32.mrf.mxu0
        %v4693 = vadd.f32 0.0, %v4692
        %4694 = vmatmul.f32.gmra.mxu0 %v4425
        %v4695 = vpop.f32.mrf.mxu0
        %v4696 = vadd.f32 0.0, %v4695
        %4697 = vmatmul.f32.gmra.mxu0 %v4430
        %v4698 = vpop.f32.mrf.mxu0
        %v4699 = vadd.f32 0.0, %v4698
        %4700 = vmatmul.f32.gmra.mxu0 %v4435
        %v4701 = vpop.f32.mrf.mxu0
        %v4702 = vadd.f32 0.0, %v4701
        %4703 = vmatmul.f32.gmra.mxu0 %v4440
        %v4704 = vpop.f32.mrf.mxu0
        %v4705 = vadd.f32 0.0, %v4704
        %4706 = vmatmul.f32.gmra.mxu0 %v4445
        %v4707 = vpop.f32.mrf.mxu0
        %v4708 = vadd.f32 0.0, %v4707
        %4709 = vmatmul.f32.gmra.mxu0 %v4450
        %v4710 = vpop.f32.mrf.mxu0
        %v4711 = vadd.f32 0.0, %v4710
        %4712 = vmatmul.f32.gmra.mxu0 %v4455
        %v4713 = vpop.f32.mrf.mxu0
        %v4714 = vadd.f32 0.0, %v4713
        %4715 = vmatmul.f32.gmra.mxu0 %v4460
        %v4716 = vpop.f32.mrf.mxu0
        %v4717 = vadd.f32 0.0, %v4716
        %4718 = vmatmul.f32.gmra.mxu0 %v4465
        %v4719 = vpop.f32.mrf.mxu0
        %v4720 = vadd.f32 0.0, %v4719
        %4721 = vmatmul.f32.gmra.mxu0 %v4470
        %v4722 = vpop.f32.mrf.mxu0
        %v4723 = vadd.f32 0.0, %v4722
        %4724 = vmatmul.f32.gmra.mxu0 %v4475
        %v4725 = vpop.f32.mrf.mxu0
        %v4726 = vadd.f32 0.0, %v4725
        %4727 = vmatmul.f32.gmra.mxu0 %v4480
        %v4728 = vpop.f32.mrf.mxu0
        %v4729 = vadd.f32 0.0, %v4728
        %4730 = vmatmul.f32.gmra.mxu0 %v4485
        %v4731 = vpop.f32.mrf.mxu0
        %v4732 = vadd.f32 0.0, %v4731
        %4733 = vmatmul.f32.gmra.mxu0 %v4490
        %v4734 = vpop.f32.mrf.mxu0
        %v4735 = vadd.f32 0.0, %v4734
        %4736 = vmatmul.f32.gmra.mxu0 %v4495
        %v4737 = vpop.f32.mrf.mxu0
        %v4738 = vadd.f32 0.0, %v4737
        %4739 = vmatmul.f32.gmra.mxu0 %v4500
        %v4740 = vpop.f32.mrf.mxu0
        %v4741 = vadd.f32 0.0, %v4740
        %4742 = vmatmul.f32.gmra.mxu0 %v4505
        %v4743 = vpop.f32.mrf.mxu0
        %v4744 = vadd.f32 0.0, %v4743
        %4745 = vmatmul.f32.gmra.mxu0 %v4510
        %v4746 = vpop.f32.mrf.mxu0
        %v4747 = vadd.f32 0.0, %v4746
        %4748 = vmatmul.f32.gmra.mxu0 %v4515
        %v4749 = vpop.f32.mrf.mxu0
        %v4750 = vadd.f32 0.0, %v4749
        %4751 = vmatmul.f32.gmra.mxu0 %v4520
        %v4752 = vpop.f32.mrf.mxu0
        %v4753 = vadd.f32 0.0, %v4752
        %4754 = vmatmul.f32.gmra.mxu0 %v4525
        %v4755 = vpop.f32.mrf.mxu0
        %v4756 = vadd.f32 0.0, %v4755
        %4757 = vmatmul.f32.gmra.mxu0 %v4530
        %v4758 = vpop.f32.mrf.mxu0
        %v4759 = vadd.f32 0.0, %v4758
        %4760 = vdwg.mxu0
        %4761 = vmatpush.msra.mxu0 0.0
        %4762 = vmatpush.msra.mxu0 0.0
        %4763 = vmatpush.msra.mxu0 0.0
        %4764 = vmatpush.msra.mxu0 0.0
        %4765 = vmatpush.msra.mxu0 0.0
        %4766 = vmatpush.msra.mxu0 0.0
        %4767 = vmatpush.msra.mxu0 0.0
        %4768 = vmatpush.msra.mxu0 0.0
        %4769 = vmatpush.msra.mxu0 0.0
        %4770 = vmatpush.msra.mxu0 0.0
        %4771 = vmatpush.msra.mxu0 0.0
        %4772 = vmatpush.msra.mxu0 0.0
        %4773 = vmatpush.msra.mxu0 0.0
        %4774 = vmatpush.msra.mxu0 0.0
        %4775 = vmatpush.msra.mxu0 %v4583
        %4776 = vmatpush.msra.mxu0 %v4582
        %4777 = vmatmul.f32.gmra.mxu0 %v4584
        %v4778 = vpop.f32.mrf.mxu0
        %v4779 = vadd.f32 %v4666, %v4778
        %4780 = vmatmul.f32.gmra.mxu0 %v4586
        %v4781 = vpop.f32.mrf.mxu0
        %v4782 = vadd.f32 %v4669, %v4781
        %4783 = vmatmul.f32.gmra.mxu0 %v4588
        %v4784 = vpop.f32.mrf.mxu0
        %v4785 = vadd.f32 %v4672, %v4784
        %4786 = vmatmul.f32.gmra.mxu0 %v4590
        %v4787 = vpop.f32.mrf.mxu0
        %v4788 = vadd.f32 %v4675, %v4787
        %4789 = vmatmul.f32.gmra.mxu0 %v4592
        %v4790 = vpop.f32.mrf.mxu0
        %v4791 = vadd.f32 %v4678, %v4790
        %4792 = vmatmul.f32.gmra.mxu0 %v4594
        %v4793 = vpop.f32.mrf.mxu0
        %v4794 = vadd.f32 %v4681, %v4793
        %4795 = vmatmul.f32.gmra.mxu0 %v4596
        %v4796 = vpop.f32.mrf.mxu0
        %v4797 = vadd.f32 %v4684, %v4796
        %4798 = vmatmul.f32.gmra.mxu0 %v4598
        %v4799 = vpop.f32.mrf.mxu0
        %v4800 = vadd.f32 %v4687, %v4799
        %4801 = vmatmul.f32.gmra.mxu0 %v4600
        %v4802 = vpop.f32.mrf.mxu0
        %v4803 = vadd.f32 %v4690, %v4802
        %4804 = vmatmul.f32.gmra.mxu0 %v4602
        %v4805 = vpop.f32.mrf.mxu0
        %v4806 = vadd.f32 %v4693, %v4805
        %4807 = vmatmul.f32.gmra.mxu0 %v4604
        %v4808 = vpop.f32.mrf.mxu0
        %v4809 = vadd.f32 %v4696, %v4808
        %4810 = vmatmul.f32.gmra.mxu0 %v4606
        %v4811 = vpop.f32.mrf.mxu0
        %v4812 = vadd.f32 %v4699, %v4811
        %4813 = vmatmul.f32.gmra.mxu0 %v4608
        %v4814 = vpop.f32.mrf.mxu0
        %v4815 = vadd.f32 %v4702, %v4814
        %4816 = vmatmul.f32.gmra.mxu0 %v4610
        %v4817 = vpop.f32.mrf.mxu0
        %v4818 = vadd.f32 %v4705, %v4817
        %4819 = vmatmul.f32.gmra.mxu0 %v4612
        %v4820 = vpop.f32.mrf.mxu0
        %v4821 = vadd.f32 %v4708, %v4820
        %4822 = vmatmul.f32.gmra.mxu0 %v4614
        %v4823 = vpop.f32.mrf.mxu0
        %v4824 = vadd.f32 %v4711, %v4823
        %4825 = vmatmul.f32.gmra.mxu0 %v4616
        %v4826 = vpop.f32.mrf.mxu0
        %v4827 = vadd.f32 %v4714, %v4826
        %4828 = vmatmul.f32.gmra.mxu0 %v4618
        %v4829 = vpop.f32.mrf.mxu0
        %v4830 = vadd.f32 %v4717, %v4829
        %4831 = vmatmul.f32.gmra.mxu0 %v4620
        %v4832 = vpop.f32.mrf.mxu0
        %v4833 = vadd.f32 %v4720, %v4832
        %4834 = vmatmul.f32.gmra.mxu0 %v4622
        %v4835 = vpop.f32.mrf.mxu0
        %v4836 = vadd.f32 %v4723, %v4835
        %4837 = vmatmul.f32.gmra.mxu0 %v4624
        %v4838 = vpop.f32.mrf.mxu0
        %v4839 = vadd.f32 %v4726, %v4838
        %4840 = vmatmul.f32.gmra.mxu0 %v4626
        %v4841 = vpop.f32.mrf.mxu0
        %v4842 = vadd.f32 %v4729, %v4841
        %4843 = vmatmul.f32.gmra.mxu0 %v4628
        %v4844 = vpop.f32.mrf.mxu0
        %v4845 = vadd.f32 %v4732, %v4844
        %4846 = vmatmul.f32.gmra.mxu0 %v4630
        %v4847 = vpop.f32.mrf.mxu0
        %v4848 = vadd.f32 %v4735, %v4847
        %4849 = vmatmul.f32.gmra.mxu0 %v4632
        %v4850 = vpop.f32.mrf.mxu0
        %v4851 = vadd.f32 %v4738, %v4850
        %4852 = vmatmul.f32.gmra.mxu0 %v4634
        %v4853 = vpop.f32.mrf.mxu0
        %v4854 = vadd.f32 %v4741, %v4853
        %4855 = vmatmul.f32.gmra.mxu0 %v4636
        %v4856 = vpop.f32.mrf.mxu0
        %v4857 = vadd.f32 %v4744, %v4856
        %4858 = vmatmul.f32.gmra.mxu0 %v4638
        %v4859 = vpop.f32.mrf.mxu0
        %v4860 = vadd.f32 %v4747, %v4859
        %4861 = vmatmul.f32.gmra.mxu0 %v4640
        %v4862 = vpop.f32.mrf.mxu0
        %v4863 = vadd.f32 %v4750, %v4862
        %4864 = vmatmul.f32.gmra.mxu0 %v4642
        %v4865 = vpop.f32.mrf.mxu0
        %v4866 = vadd.f32 %v4753, %v4865
        %4867 = vmatmul.f32.gmra.mxu0 %v4644
        %v4868 = vpop.f32.mrf.mxu0
        %v4869 = vadd.f32 %v4756, %v4868
        %4870 = vmatmul.f32.gmra.mxu0 %v4646
        %v4871 = vpop.f32.mrf.mxu0
        %v4872 = vadd.f32 %v4759, %v4871
        %4873 = vdwg.mxu0
        %v4875 = vsel %vm3694, %v4131, 0
        %v4877 = vsel %vm3694, %v4133, 0
        %v4880 = vsel %vm3694, %v4135, 0
        %v4882 = vsel %vm3694, %v4137, 0
        %v4885 = vsel %vm3694, %v4139, 0
        %v4887 = vsel %vm3694, %v4141, 0
        %v4890 = vsel %vm3694, %v4143, 0
        %v4892 = vsel %vm3694, %v4145, 0
        %v4895 = vsel %vm3694, %v4147, 0
        %v4897 = vsel %vm3694, %v4149, 0
        %v4900 = vsel %vm3694, %v4151, 0
        %v4902 = vsel %vm3694, %v4153, 0
        %v4905 = vsel %vm3694, %v4155, 0
        %v4907 = vsel %vm3694, %v4157, 0
        %v4910 = vsel %vm3694, %v4159, 0
        %v4912 = vsel %vm3694, %v4161, 0
        %v4915 = vsel %vm3694, %v4163, 0
        %v4917 = vsel %vm3694, %v4165, 0
        %v4920 = vsel %vm3694, %v4167, 0
        %v4922 = vsel %vm3694, %v4169, 0
        %v4925 = vsel %vm3694, %v4171, 0
        %v4927 = vsel %vm3694, %v4173, 0
        %v4930 = vsel %vm3694, %v4175, 0
        %v4932 = vsel %vm3694, %v4177, 0
        %v4935 = vsel %vm3694, %v4179, 0
        %v4937 = vsel %vm3694, %v4181, 0
        %v4940 = vsel %vm3694, %v4183, 0
        %v4942 = vsel %vm3694, %v4185, 0
        %v4945 = vsel %vm3694, %v4187, 0
        %v4947 = vsel %vm3694, %v4189, 0
        %v4950 = vsel %vm3694, %v4191, 0
        %v4952 = vsel %vm3694, %v4193, 0
        %4954 = vmatpush.msra.mxu0 %v4209
        %4955 = vmatpush.msra.mxu0 %v4208
        %4956 = vmatpush.msra.mxu0 %v4207
        %4957 = vmatpush.msra.mxu0 %v4206
        %4958 = vmatpush.msra.mxu0 %v4205
        %4959 = vmatpush.msra.mxu0 %v4204
        %4960 = vmatpush.msra.mxu0 %v4203
        %4961 = vmatpush.msra.mxu0 %v4202
        %4962 = vmatpush.msra.mxu0 %v4201
        %4963 = vmatpush.msra.mxu0 %v4200
        %4964 = vmatpush.msra.mxu0 %v4199
        %4965 = vmatpush.msra.mxu0 %v4198
        %4966 = vmatpush.msra.mxu0 %v4197
        %4967 = vmatpush.msra.mxu0 %v4196
        %4968 = vmatpush.msra.mxu0 %v4195
        %4969 = vmatpush.msra.mxu0 %v4194
        %4970 = vmatmul.f32.gmra.mxu0 %v4130
        %v4971 = vpop.f32.mrf.mxu0
        %v4972 = vadd.f32 %v4779, %v4971
        %4973 = vmatmul.f32.gmra.mxu0 %v4132
        %v4974 = vpop.f32.mrf.mxu0
        %v4975 = vadd.f32 %v4782, %v4974
        %4976 = vmatmul.f32.gmra.mxu0 %v4134
        %v4977 = vpop.f32.mrf.mxu0
        %v4978 = vadd.f32 %v4785, %v4977
        %4979 = vmatmul.f32.gmra.mxu0 %v4136
        %v4980 = vpop.f32.mrf.mxu0
        %v4981 = vadd.f32 %v4788, %v4980
        %4982 = vmatmul.f32.gmra.mxu0 %v4138
        %v4983 = vpop.f32.mrf.mxu0
        %v4984 = vadd.f32 %v4791, %v4983
        %4985 = vmatmul.f32.gmra.mxu0 %v4140
        %v4986 = vpop.f32.mrf.mxu0
        %v4987 = vadd.f32 %v4794, %v4986
        %4988 = vmatmul.f32.gmra.mxu0 %v4142
        %v4989 = vpop.f32.mrf.mxu0
        %v4990 = vadd.f32 %v4797, %v4989
        %4991 = vmatmul.f32.gmra.mxu0 %v4144
        %v4992 = vpop.f32.mrf.mxu0
        %v4993 = vadd.f32 %v4800, %v4992
        %4994 = vmatmul.f32.gmra.mxu0 %v4146
        %v4995 = vpop.f32.mrf.mxu0
        %v4996 = vadd.f32 %v4803, %v4995
        %4997 = vmatmul.f32.gmra.mxu0 %v4148
        %v4998 = vpop.f32.mrf.mxu0
        %v4999 = vadd.f32 %v4806, %v4998
        %5000 = vmatmul.f32.gmra.mxu0 %v4150
        %v5001 = vpop.f32.mrf.mxu0
        %v5002 = vadd.f32 %v4809, %v5001
        %5003 = vmatmul.f32.gmra.mxu0 %v4152
        %v5004 = vpop.f32.mrf.mxu0
        %v5005 = vadd.f32 %v4812, %v5004
        %5006 = vmatmul.f32.gmra.mxu0 %v4154
        %v5007 = vpop.f32.mrf.mxu0
        %v5008 = vadd.f32 %v4815, %v5007
        %5009 = vmatmul.f32.gmra.mxu0 %v4156
        %v5010 = vpop.f32.mrf.mxu0
        %v5011 = vadd.f32 %v4818, %v5010
        %5012 = vmatmul.f32.gmra.mxu0 %v4158
        %v5013 = vpop.f32.mrf.mxu0
        %v5014 = vadd.f32 %v4821, %v5013
        %5015 = vmatmul.f32.gmra.mxu0 %v4160
        %v5016 = vpop.f32.mrf.mxu0
        %v5017 = vadd.f32 %v4824, %v5016
        %5018 = vmatmul.f32.gmra.mxu0 %v4162
        %v5019 = vpop.f32.mrf.mxu0
        %v5020 = vadd.f32 %v4827, %v5019
        %5021 = vmatmul.f32.gmra.mxu0 %v4164
        %v5022 = vpop.f32.mrf.mxu0
        %v5023 = vadd.f32 %v4830, %v5022
        %5024 = vmatmul.f32.gmra.mxu0 %v4166
        %v5025 = vpop.f32.mrf.mxu0
        %v5026 = vadd.f32 %v4833, %v5025
        %5027 = vmatmul.f32.gmra.mxu0 %v4168
        %v5028 = vpop.f32.mrf.mxu0
        %v5029 = vadd.f32 %v4836, %v5028
        %5030 = vmatmul.f32.gmra.mxu0 %v4170
        %v5031 = vpop.f32.mrf.mxu0
        %v5032 = vadd.f32 %v4839, %v5031
        %5033 = vmatmul.f32.gmra.mxu0 %v4172
        %v5034 = vpop.f32.mrf.mxu0
        %v5035 = vadd.f32 %v4842, %v5034
        %5036 = vmatmul.f32.gmra.mxu0 %v4174
        %v5037 = vpop.f32.mrf.mxu0
        %v5038 = vadd.f32 %v4845, %v5037
        %5039 = vmatmul.f32.gmra.mxu0 %v4176
        %v5040 = vpop.f32.mrf.mxu0
        %v5041 = vadd.f32 %v4848, %v5040
        %5042 = vmatmul.f32.gmra.mxu0 %v4178
        %v5043 = vpop.f32.mrf.mxu0
        %v5044 = vadd.f32 %v4851, %v5043
        %5045 = vmatmul.f32.gmra.mxu0 %v4180
        %v5046 = vpop.f32.mrf.mxu0
        %v5047 = vadd.f32 %v4854, %v5046
        %5048 = vmatmul.f32.gmra.mxu0 %v4182
        %v5049 = vpop.f32.mrf.mxu0
        %v5050 = vadd.f32 %v4857, %v5049
        %5051 = vmatmul.f32.gmra.mxu0 %v4184
        %v5052 = vpop.f32.mrf.mxu0
        %v5053 = vadd.f32 %v4860, %v5052
        %5054 = vmatmul.f32.gmra.mxu0 %v4186
        %v5055 = vpop.f32.mrf.mxu0
        %v5056 = vadd.f32 %v4863, %v5055
        %5057 = vmatmul.f32.gmra.mxu0 %v4188
        %v5058 = vpop.f32.mrf.mxu0
        %v5059 = vadd.f32 %v4866, %v5058
        %5060 = vmatmul.f32.gmra.mxu0 %v4190
        %v5061 = vpop.f32.mrf.mxu0
        %v5062 = vadd.f32 %v4869, %v5061
        %5063 = vmatmul.f32.gmra.mxu0 %v4192
        %v5064 = vpop.f32.mrf.mxu0
        %v5065 = vadd.f32 %v4872, %v5064
        %5066 = vdwg.mxu0
        %5067 = vmatpush.msra.mxu0 0.0
        %5068 = vmatpush.msra.mxu0 0.0
        %5069 = vmatpush.msra.mxu0 0.0
        %5070 = vmatpush.msra.mxu0 0.0
        %5071 = vmatpush.msra.mxu0 0.0
        %5072 = vmatpush.msra.mxu0 0.0
        %5073 = vmatpush.msra.mxu0 0.0
        %5074 = vmatpush.msra.mxu0 0.0
        %5075 = vmatpush.msra.mxu0 0.0
        %5076 = vmatpush.msra.mxu0 0.0
        %5077 = vmatpush.msra.mxu0 0.0
        %5078 = vmatpush.msra.mxu0 0.0
        %5079 = vmatpush.msra.mxu0 0.0
        %5080 = vmatpush.msra.mxu0 0.0
        %5081 = vmatpush.msra.mxu0 %v4211
        %5082 = vmatpush.msra.mxu0 %v4210
        %5083 = vmatmul.f32.gmra.mxu0 %v4875
        %v5084 = vpop.f32.mrf.mxu0
        %v5085 = vadd.f32 %v4972, %v5084
        %5086 = vmatmul.f32.gmra.mxu0 %v4877
        %v5087 = vpop.f32.mrf.mxu0
        %v5088 = vadd.f32 %v4975, %v5087
        %5089 = vmatmul.f32.gmra.mxu0 %v4880
        %v5090 = vpop.f32.mrf.mxu0
        %v5091 = vadd.f32 %v4978, %v5090
        %5092 = vmatmul.f32.gmra.mxu0 %v4882
        %v5093 = vpop.f32.mrf.mxu0
        %v5094 = vadd.f32 %v4981, %v5093
        %5095 = vmatmul.f32.gmra.mxu0 %v4885
        %v5096 = vpop.f32.mrf.mxu0
        %v5097 = vadd.f32 %v4984, %v5096
        %5098 = vmatmul.f32.gmra.mxu0 %v4887
        %v5099 = vpop.f32.mrf.mxu0
        %v5100 = vadd.f32 %v4987, %v5099
        %5101 = vmatmul.f32.gmra.mxu0 %v4890
        %v5102 = vpop.f32.mrf.mxu0
        %v5103 = vadd.f32 %v4990, %v5102
        %5104 = vmatmul.f32.gmra.mxu0 %v4892
        %v5105 = vpop.f32.mrf.mxu0
        %v5106 = vadd.f32 %v4993, %v5105
        %5107 = vmatmul.f32.gmra.mxu0 %v4895
        %v5108 = vpop.f32.mrf.mxu0
        %v5109 = vadd.f32 %v4996, %v5108
        %5110 = vmatmul.f32.gmra.mxu0 %v4897
        %v5111 = vpop.f32.mrf.mxu0
        %v5112 = vadd.f32 %v4999, %v5111
        %5113 = vmatmul.f32.gmra.mxu0 %v4900
        %v5114 = vpop.f32.mrf.mxu0
        %v5115 = vadd.f32 %v5002, %v5114
        %5116 = vmatmul.f32.gmra.mxu0 %v4902
        %v5117 = vpop.f32.mrf.mxu0
        %v5118 = vadd.f32 %v5005, %v5117
        %5119 = vmatmul.f32.gmra.mxu0 %v4905
        %v5120 = vpop.f32.mrf.mxu0
        %v5121 = vadd.f32 %v5008, %v5120
        %5122 = vmatmul.f32.gmra.mxu0 %v4907
        %v5123 = vpop.f32.mrf.mxu0
        %v5124 = vadd.f32 %v5011, %v5123
        %5125 = vmatmul.f32.gmra.mxu0 %v4910
        %v5126 = vpop.f32.mrf.mxu0
        %v5127 = vadd.f32 %v5014, %v5126
        %5128 = vmatmul.f32.gmra.mxu0 %v4912
        %v5129 = vpop.f32.mrf.mxu0
        %v5130 = vadd.f32 %v5017, %v5129
        %5131 = vmatmul.f32.gmra.mxu0 %v4915
        %v5132 = vpop.f32.mrf.mxu0
        %v5133 = vadd.f32 %v5020, %v5132
        %5134 = vmatmul.f32.gmra.mxu0 %v4917
        %v5135 = vpop.f32.mrf.mxu0
        %v5136 = vadd.f32 %v5023, %v5135
        %5137 = vmatmul.f32.gmra.mxu0 %v4920
        %v5138 = vpop.f32.mrf.mxu0
        %v5139 = vadd.f32 %v5026, %v5138
        %5140 = vmatmul.f32.gmra.mxu0 %v4922
        %v5141 = vpop.f32.mrf.mxu0
        %v5142 = vadd.f32 %v5029, %v5141
        %5143 = vmatmul.f32.gmra.mxu0 %v4925
        %v5144 = vpop.f32.mrf.mxu0
        %v5145 = vadd.f32 %v5032, %v5144
        %5146 = vmatmul.f32.gmra.mxu0 %v4927
        %v5147 = vpop.f32.mrf.mxu0
        %v5148 = vadd.f32 %v5035, %v5147
        %5149 = vmatmul.f32.gmra.mxu0 %v4930
        %v5150 = vpop.f32.mrf.mxu0
        %v5151 = vadd.f32 %v5038, %v5150
        %5152 = vmatmul.f32.gmra.mxu0 %v4932
        %v5153 = vpop.f32.mrf.mxu0
        %v5154 = vadd.f32 %v5041, %v5153
        %5155 = vmatmul.f32.gmra.mxu0 %v4935
        %v5156 = vpop.f32.mrf.mxu0
        %v5157 = vadd.f32 %v5044, %v5156
        %5158 = vmatmul.f32.gmra.mxu0 %v4937
        %v5159 = vpop.f32.mrf.mxu0
        %v5160 = vadd.f32 %v5047, %v5159
        %5161 = vmatmul.f32.gmra.mxu0 %v4940
        %v5162 = vpop.f32.mrf.mxu0
        %v5163 = vadd.f32 %v5050, %v5162
        %5164 = vmatmul.f32.gmra.mxu0 %v4942
        %v5165 = vpop.f32.mrf.mxu0
        %v5166 = vadd.f32 %v5053, %v5165
        %5167 = vmatmul.f32.gmra.mxu0 %v4945
        %v5168 = vpop.f32.mrf.mxu0
        %v5169 = vadd.f32 %v5056, %v5168
        %5170 = vmatmul.f32.gmra.mxu0 %v4947
        %v5171 = vpop.f32.mrf.mxu0
        %v5172 = vadd.f32 %v5059, %v5171
        %5173 = vmatmul.f32.gmra.mxu0 %v4950
        %v5174 = vpop.f32.mrf.mxu0
        %v5175 = vadd.f32 %v5062, %v5174
        %5176 = vmatmul.f32.gmra.mxu0 %v4952
        %v5177 = vpop.f32.mrf.mxu0
        %v5178 = vadd.f32 %v5065, %v5177
        %5179 = vdwg.mxu0
        %v5180 = vld [vmem:[#allocation3] sm:$0xfc]
        %v5181 = vld [vmem:[#allocation3 + $0x8] sm:$0xfc]
        %v5182 = vld [vmem:[#allocation3 + $0x20] sm:$0x3]
        %v5183 = vld [vmem:[#allocation3 + $0x28] sm:$0x3]
        %v5184 = vld [vmem:[#allocation3 + $0x30] sm:$0xfc]
        %v5185 = vld [vmem:[#allocation3 + $0x38] sm:$0xfc]
        %v5186 = vld [vmem:[#allocation3 + $0x50] sm:$0x3]
        %v5187 = vld [vmem:[#allocation3 + $0x58] sm:$0x3]
        %v5188 = vld [vmem:[#allocation3 + $0x60] sm:$0xfc]
        %v5189 = vld [vmem:[#allocation3 + $0x68] sm:$0xfc]
        %v5190 = vld [vmem:[#allocation3 + $0x80] sm:$0x3]
        %v5191 = vld [vmem:[#allocation3 + $0x88] sm:$0x3]
        %v5192 = vld [vmem:[#allocation3 + $0x90] sm:$0xfc]
        %v5193 = vld [vmem:[#allocation3 + $0x98] sm:$0xfc]
        %v5194 = vld [vmem:[#allocation3 + $0xb0] sm:$0x3]
        %v5195 = vld [vmem:[#allocation3 + $0xb8] sm:$0x3]
        %v5196 = vld [vmem:[#allocation3 + $0xc0] sm:$0xfc]
        %v5197 = vld [vmem:[#allocation3 + $0xc8] sm:$0xfc]
        %v5198 = vld [vmem:[#allocation3 + $0xe0] sm:$0x3]
        %v5199 = vld [vmem:[#allocation3 + $0xe8] sm:$0x3]
        %v5200 = vld [vmem:[#allocation3 + $0xf0] sm:$0xfc]
        %v5201 = vld [vmem:[#allocation3 + $0xf8] sm:$0xfc]
        %v5202 = vld [vmem:[#allocation3 + $0x110] sm:$0x3]
        %v5203 = vld [vmem:[#allocation3 + $0x118] sm:$0x3]
        %v5204 = vld [vmem:[#allocation3 + $0x120] sm:$0xfc]
        %v5205 = vld [vmem:[#allocation3 + $0x128] sm:$0xfc]
        %v5206 = vld [vmem:[#allocation3 + $0x140] sm:$0x3]
        %v5207 = vld [vmem:[#allocation3 + $0x148] sm:$0x3]
        %v5208 = vld [vmem:[#allocation3 + $0x150] sm:$0xfc]
        %v5209 = vld [vmem:[#allocation3 + $0x158] sm:$0xfc]
        %v5210 = vld [vmem:[#allocation3 + $0x170] sm:$0x3]
        %v5211 = vld [vmem:[#allocation3 + $0x178] sm:$0x3]
        %v5212 = vld [vmem:[#allocation3 + $0x180] sm:$0xfc]
        %v5213 = vld [vmem:[#allocation3 + $0x188] sm:$0xfc]
        %v5214 = vld [vmem:[#allocation3 + $0x1a0] sm:$0x3]
        %v5215 = vld [vmem:[#allocation3 + $0x1a8] sm:$0x3]
        %v5216 = vld [vmem:[#allocation3 + $0x1b0] sm:$0xfc]
        %v5217 = vld [vmem:[#allocation3 + $0x1b8] sm:$0xfc]
        %v5218 = vld [vmem:[#allocation3 + $0x1d0] sm:$0x3]
        %v5219 = vld [vmem:[#allocation3 + $0x1d8] sm:$0x3]
        %v5220 = vld [vmem:[#allocation3 + $0x1e0] sm:$0xfc]
        %v5221 = vld [vmem:[#allocation3 + $0x1e8] sm:$0xfc]
        %v5222 = vld [vmem:[#allocation3 + $0x200] sm:$0x3]
        %v5223 = vld [vmem:[#allocation3 + $0x208] sm:$0x3]
        %v5224 = vld [vmem:[#allocation3 + $0x210] sm:$0xfc]
        %v5225 = vld [vmem:[#allocation3 + $0x218] sm:$0xfc]
        %v5226 = vld [vmem:[#allocation3 + $0x230] sm:$0x3]
        %v5227 = vld [vmem:[#allocation3 + $0x238] sm:$0x3]
        %v5228 = vld [vmem:[#allocation3 + $0x240] sm:$0xfc]
        %v5229 = vld [vmem:[#allocation3 + $0x248] sm:$0xfc]
        %v5230 = vld [vmem:[#allocation3 + $0x260] sm:$0x3]
        %v5231 = vld [vmem:[#allocation3 + $0x268] sm:$0x3]
        %v5232 = vld [vmem:[#allocation3 + $0x270] sm:$0xfc]
        %v5233 = vld [vmem:[#allocation3 + $0x278] sm:$0xfc]
        %v5234 = vld [vmem:[#allocation3 + $0x290] sm:$0x3]
        %v5235 = vld [vmem:[#allocation3 + $0x298] sm:$0x3]
        %v5236 = vld [vmem:[#allocation3 + $0x2a0] sm:$0xfc]
        %v5237 = vld [vmem:[#allocation3 + $0x2a8] sm:$0xfc]
        %v5238 = vld [vmem:[#allocation3 + $0x2c0] sm:$0x3]
        %v5239 = vld [vmem:[#allocation3 + $0x2c8] sm:$0x3]
        %v5240 = vld [vmem:[#allocation3 + $0x2d0] sm:$0xfc]
        %v5241 = vld [vmem:[#allocation3 + $0x2d8] sm:$0xfc]
        %v5242 = vld [vmem:[#allocation3 + $0x2f0] sm:$0x3]
        %v5243 = vld [vmem:[#allocation3 + $0x2f8] sm:$0x3]
        %vm5308 = vcmask 1045504
        %v5309 = vrot.slane %v5180, 2
        %v5310 = vrot.slane %v4132, 2
        %v5311 = vsel %vm5308, %v5309, %v5310
        %v5312 = vrot.slane %v5181, 2
        %v5313 = vrot.slane %v4133, 2
        %v5314 = vsel %vm5308, %v5312, %v5313
        %v5315 = vrot.slane %v5182, 2
        %v5316 = vsel %vm5308, %v5310, %v5315
        %v5317 = vrot.slane %v5183, 2
        %v5318 = vsel %vm5308, %v5313, %v5317
        %v5319 = vrot.slane %v5184, 2
        %v5320 = vrot.slane %v4136, 2
        %v5321 = vsel %vm5308, %v5319, %v5320
        %v5322 = vrot.slane %v5185, 2
        %v5323 = vrot.slane %v4137, 2
        %v5324 = vsel %vm5308, %v5322, %v5323
        %v5325 = vrot.slane %v5186, 2
        %v5326 = vsel %vm5308, %v5320, %v5325
        %v5327 = vrot.slane %v5187, 2
        %v5328 = vsel %vm5308, %v5323, %v5327
        %v5329 = vrot.slane %v5188, 2
        %v5330 = vrot.slane %v4140, 2
        %v5331 = vsel %vm5308, %v5329, %v5330
        %v5332 = vrot.slane %v5189, 2
        %v5333 = vrot.slane %v4141, 2
        %v5334 = vsel %vm5308, %v5332, %v5333
        %v5335 = vrot.slane %v5190, 2
        %v5336 = vsel %vm5308, %v5330, %v5335
        %v5337 = vrot.slane %v5191, 2
        %v5338 = vsel %vm5308, %v5333, %v5337
        %v5339 = vrot.slane %v5192, 2
        %v5340 = vrot.slane %v4144, 2
        %v5341 = vsel %vm5308, %v5339, %v5340
        %v5342 = vrot.slane %v5193, 2
        %v5343 = vrot.slane %v4145, 2
        %v5344 = vsel %vm5308, %v5342, %v5343
        %v5345 = vrot.slane %v5194, 2
        %v5346 = vsel %vm5308, %v5340, %v5345
        %v5347 = vrot.slane %v5195, 2
        %v5348 = vsel %vm5308, %v5343, %v5347
        %v5349 = vrot.slane %v5196, 2
        %v5350 = vrot.slane %v4148, 2
        %v5351 = vsel %vm5308, %v5349, %v5350
        %v5352 = vrot.slane %v5197, 2
        %v5353 = vrot.slane %v4149, 2
        %v5354 = vsel %vm5308, %v5352, %v5353
        %v5355 = vrot.slane %v5198, 2
        %v5356 = vsel %vm5308, %v5350, %v5355
        %v5357 = vrot.slane %v5199, 2
        %v5358 = vsel %vm5308, %v5353, %v5357
        %v5359 = vrot.slane %v5200, 2
        %v5360 = vrot.slane %v4152, 2
        %v5361 = vsel %vm5308, %v5359, %v5360
        %v5362 = vrot.slane %v5201, 2
        %v5363 = vrot.slane %v4153, 2
        %v5364 = vsel %vm5308, %v5362, %v5363
        %v5365 = vrot.slane %v5202, 2
        %v5366 = vsel %vm5308, %v5360, %v5365
        %v5367 = vrot.slane %v5203, 2
        %v5368 = vsel %vm5308, %v5363, %v5367
        %v5369 = vrot.slane %v5204, 2
        %v5370 = vrot.slane %v4156, 2
        %v5371 = vsel %vm5308, %v5369, %v5370
        %v5372 = vrot.slane %v5205, 2
        %v5373 = vrot.slane %v4157, 2
        %v5374 = vsel %vm5308, %v5372, %v5373
        %v5375 = vrot.slane %v5206, 2
        %v5376 = vsel %vm5308, %v5370, %v5375
        %v5377 = vrot.slane %v5207, 2
        %v5378 = vsel %vm5308, %v5373, %v5377
        %v5379 = vrot.slane %v5208, 2
        %v5380 = vrot.slane %v4160, 2
        %v5381 = vsel %vm5308, %v5379, %v5380
        %v5382 = vrot.slane %v5209, 2
        %v5383 = vrot.slane %v4161, 2
        %v5384 = vsel %vm5308, %v5382, %v5383
        %v5385 = vrot.slane %v5210, 2
        %v5386 = vsel %vm5308, %v5380, %v5385
        %v5387 = vrot.slane %v5211, 2
        %v5388 = vsel %vm5308, %v5383, %v5387
        %v5389 = vrot.slane %v5212, 2
        %v5390 = vrot.slane %v4164, 2
        %v5391 = vsel %vm5308, %v5389, %v5390
        %v5392 = vrot.slane %v5213, 2
        %v5393 = vrot.slane %v4165, 2
        %v5394 = vsel %vm5308, %v5392, %v5393
        %v5395 = vrot.slane %v5214, 2
        %v5396 = vsel %vm5308, %v5390, %v5395
        %v5397 = vrot.slane %v5215, 2
        %v5398 = vsel %vm5308, %v5393, %v5397
        %v5399 = vrot.slane %v5216, 2
        %v5400 = vrot.slane %v4168, 2
        %v5401 = vsel %vm5308, %v5399, %v5400
        %v5402 = vrot.slane %v5217, 2
        %v5403 = vrot.slane %v4169, 2
        %v5404 = vsel %vm5308, %v5402, %v5403
        %v5405 = vrot.slane %v5218, 2
        %v5406 = vsel %vm5308, %v5400, %v5405
        %v5407 = vrot.slane %v5219, 2
        %v5408 = vsel %vm5308, %v5403, %v5407
        %v5409 = vrot.slane %v5220, 2
        %v5410 = vrot.slane %v4172, 2
        %v5411 = vsel %vm5308, %v5409, %v5410
        %v5412 = vrot.slane %v5221, 2
        %v5413 = vrot.slane %v4173, 2
        %v5414 = vsel %vm5308, %v5412, %v5413
        %v5415 = vrot.slane %v5222, 2
        %v5416 = vsel %vm5308, %v5410, %v5415
        %v5417 = vrot.slane %v5223, 2
        %v5418 = vsel %vm5308, %v5413, %v5417
        %v5419 = vrot.slane %v5224, 2
        %v5420 = vrot.slane %v4176, 2
        %v5421 = vsel %vm5308, %v5419, %v5420
        %v5422 = vrot.slane %v5225, 2
        %v5423 = vrot.slane %v4177, 2
        %v5424 = vsel %vm5308, %v5422, %v5423
        %v5425 = vrot.slane %v5226, 2
        %v5426 = vsel %vm5308, %v5420, %v5425
        %v5427 = vrot.slane %v5227, 2
        %v5428 = vsel %vm5308, %v5423, %v5427
        %v5429 = vrot.slane %v5228, 2
        %v5430 = vrot.slane %v4180, 2
        %v5431 = vsel %vm5308, %v5429, %v5430
        %v5432 = vrot.slane %v5229, 2
        %v5433 = vrot.slane %v4181, 2
        %v5434 = vsel %vm5308, %v5432, %v5433
        %v5435 = vrot.slane %v5230, 2
        %v5436 = vsel %vm5308, %v5430, %v5435
        %v5437 = vrot.slane %v5231, 2
        %v5438 = vsel %vm5308, %v5433, %v5437
        %v5439 = vrot.slane %v5232, 2
        %v5440 = vrot.slane %v4184, 2
        %v5441 = vsel %vm5308, %v5439, %v5440
        %v5442 = vrot.slane %v5233, 2
        %v5443 = vrot.slane %v4185, 2
        %v5444 = vsel %vm5308, %v5442, %v5443
        %v5445 = vrot.slane %v5234, 2
        %v5446 = vsel %vm5308, %v5440, %v5445
        %v5447 = vrot.slane %v5235, 2
        %v5448 = vsel %vm5308, %v5443, %v5447
        %v5449 = vrot.slane %v5236, 2
        %v5450 = vrot.slane %v4188, 2
        %v5451 = vsel %vm5308, %v5449, %v5450
        %v5452 = vrot.slane %v5237, 2
        %v5453 = vrot.slane %v4189, 2
        %v5454 = vsel %vm5308, %v5452, %v5453
        %v5455 = vrot.slane %v5238, 2
        %v5456 = vsel %vm5308, %v5450, %v5455
        %v5457 = vrot.slane %v5239, 2
        %v5458 = vsel %vm5308, %v5453, %v5457
        %v5459 = vrot.slane %v5240, 2
        %v5460 = vrot.slane %v4192, 2
        %v5461 = vsel %vm5308, %v5459, %v5460
        %v5462 = vrot.slane %v5241, 2
        %v5463 = vrot.slane %v4193, 2
        %v5464 = vsel %vm5308, %v5462, %v5463
        %v5465 = vrot.slane %v5242, 2
        %v5466 = vsel %vm5308, %v5460, %v5465
        %v5467 = vrot.slane %v5243, 2
        %v5468 = vsel %vm5308, %v5463, %v5467
        %s5501 = scalar_lea.vmem [#allocation7], 288
        %v5502 = vld [vmem:[%s5501] sm:$0xff]
        %v5503 = vld [vmem:[%s5501 + $0x8] sm:$0xff]
        %v5504 = vld [vmem:[%s5501 + $0x10] sm:$0xff]
        %v5505 = vld [vmem:[%s5501 + $0x18] sm:$0xff]
        %v5506 = vld [vmem:[%s5501 + $0x20] sm:$0xff]
        %v5507 = vld [vmem:[%s5501 + $0x28] sm:$0xff]
        %v5508 = vld [vmem:[%s5501 + $0x30] sm:$0xff]
        %v5509 = vld [vmem:[%s5501 + $0x38] sm:$0xff]
        %v5510 = vld [vmem:[%s5501 + $0x40] sm:$0xff]
        %v5511 = vld [vmem:[%s5501 + $0x48] sm:$0xff]
        %v5512 = vld [vmem:[%s5501 + $0x50] sm:$0xff]
        %v5513 = vld [vmem:[%s5501 + $0x58] sm:$0xff]
        %v5514 = vld [vmem:[%s5501 + $0x60] sm:$0xff]
        %v5515 = vld [vmem:[%s5501 + $0x68] sm:$0xff]
        %v5516 = vld [vmem:[%s5501 + $0x70] sm:$0xff]
        %v5517 = vld [vmem:[%s5501 + $0x78] sm:$0xff]
        %v5518 = vld [vmem:[%s5501 + $0x80] sm:$0xff]
        %v5519 = vld [vmem:[%s5501 + $0x88] sm:$0xff]
        %v5520 = vsel %vm3694, %v5314, 0
        %v5522 = vsel %vm3694, %v5318, 0
        %v5524 = vsel %vm3694, %v5324, 0
        %v5526 = vsel %vm3694, %v5328, 0
        %v5528 = vsel %vm3694, %v5334, 0
        %v5530 = vsel %vm3694, %v5338, 0
        %v5532 = vsel %vm3694, %v5344, 0
        %v5534 = vsel %vm3694, %v5348, 0
        %v5536 = vsel %vm3694, %v5354, 0
        %v5538 = vsel %vm3694, %v5358, 0
        %v5540 = vsel %vm3694, %v5364, 0
        %v5542 = vsel %vm3694, %v5368, 0
        %v5544 = vsel %vm3694, %v5374, 0
        %v5546 = vsel %vm3694, %v5378, 0
        %v5548 = vsel %vm3694, %v5384, 0
        %v5550 = vsel %vm3694, %v5388, 0
        %v5552 = vsel %vm3694, %v5394, 0
        %v5554 = vsel %vm3694, %v5398, 0
        %v5556 = vsel %vm3694, %v5404, 0
        %v5558 = vsel %vm3694, %v5408, 0
        %v5560 = vsel %vm3694, %v5414, 0
        %v5562 = vsel %vm3694, %v5418, 0
        %v5564 = vsel %vm3694, %v5424, 0
        %v5566 = vsel %vm3694, %v5428, 0
        %v5568 = vsel %vm3694, %v5434, 0
        %v5570 = vsel %vm3694, %v5438, 0
        %v5572 = vsel %vm3694, %v5444, 0
        %v5574 = vsel %vm3694, %v5448, 0
        %v5576 = vsel %vm3694, %v5454, 0
        %v5578 = vsel %vm3694, %v5458, 0
        %v5580 = vsel %vm3694, %v5464, 0
        %v5582 = vsel %vm3694, %v5468, 0
        %5584 = vmatpush.msra.mxu0 %v5517
        %5585 = vmatpush.msra.mxu0 %v5516
        %5586 = vmatpush.msra.mxu0 %v5515
        %5587 = vmatpush.msra.mxu0 %v5514
        %5588 = vmatpush.msra.mxu0 %v5513
        %5589 = vmatpush.msra.mxu0 %v5512
        %5590 = vmatpush.msra.mxu0 %v5511
        %5591 = vmatpush.msra.mxu0 %v5510
        %5592 = vmatpush.msra.mxu0 %v5509
        %5593 = vmatpush.msra.mxu0 %v5508
        %5594 = vmatpush.msra.mxu0 %v5507
        %5595 = vmatpush.msra.mxu0 %v5506
        %5596 = vmatpush.msra.mxu0 %v5505
        %5597 = vmatpush.msra.mxu0 %v5504
        %5598 = vmatpush.msra.mxu0 %v5503
        %5599 = vmatpush.msra.mxu0 %v5502
        %5600 = vmatmul.f32.gmra.mxu0 %v5311
        %v5601 = vpop.f32.mrf.mxu0
        %v5602 = vadd.f32 0.0, %v5601
        %5603 = vmatmul.f32.gmra.mxu0 %v5316
        %v5604 = vpop.f32.mrf.mxu0
        %v5605 = vadd.f32 0.0, %v5604
        %5606 = vmatmul.f32.gmra.mxu0 %v5321
        %v5607 = vpop.f32.mrf.mxu0
        %v5608 = vadd.f32 0.0, %v5607
        %5609 = vmatmul.f32.gmra.mxu0 %v5326
        %v5610 = vpop.f32.mrf.mxu0
        %v5611 = vadd.f32 0.0, %v5610
        %5612 = vmatmul.f32.gmra.mxu0 %v5331
        %v5613 = vpop.f32.mrf.mxu0
        %v5614 = vadd.f32 0.0, %v5613
        %5615 = vmatmul.f32.gmra.mxu0 %v5336
        %v5616 = vpop.f32.mrf.mxu0
        %v5617 = vadd.f32 0.0, %v5616
        %5618 = vmatmul.f32.gmra.mxu0 %v5341
        %v5619 = vpop.f32.mrf.mxu0
        %v5620 = vadd.f32 0.0, %v5619
        %5621 = vmatmul.f32.gmra.mxu0 %v5346
        %v5622 = vpop.f32.mrf.mxu0
        %v5623 = vadd.f32 0.0, %v5622
        %5624 = vmatmul.f32.gmra.mxu0 %v5351
        %v5625 = vpop.f32.mrf.mxu0
        %v5626 = vadd.f32 0.0, %v5625
        %5627 = vmatmul.f32.gmra.mxu0 %v5356
        %v5628 = vpop.f32.mrf.mxu0
        %v5629 = vadd.f32 0.0, %v5628
        %5630 = vmatmul.f32.gmra.mxu0 %v5361
        %v5631 = vpop.f32.mrf.mxu0
        %v5632 = vadd.f32 0.0, %v5631
        %5633 = vmatmul.f32.gmra.mxu0 %v5366
        %v5634 = vpop.f32.mrf.mxu0
        %v5635 = vadd.f32 0.0, %v5634
        %5636 = vmatmul.f32.gmra.mxu0 %v5371
        %v5637 = vpop.f32.mrf.mxu0
        %v5638 = vadd.f32 0.0, %v5637
        %5639 = vmatmul.f32.gmra.mxu0 %v5376
        %v5640 = vpop.f32.mrf.mxu0
        %v5641 = vadd.f32 0.0, %v5640
        %5642 = vmatmul.f32.gmra.mxu0 %v5381
        %v5643 = vpop.f32.mrf.mxu0
        %v5644 = vadd.f32 0.0, %v5643
        %5645 = vmatmul.f32.gmra.mxu0 %v5386
        %v5646 = vpop.f32.mrf.mxu0
        %v5647 = vadd.f32 0.0, %v5646
        %5648 = vmatmul.f32.gmra.mxu0 %v5391
        %v5649 = vpop.f32.mrf.mxu0
        %v5650 = vadd.f32 0.0, %v5649
        %5651 = vmatmul.f32.gmra.mxu0 %v5396
        %v5652 = vpop.f32.mrf.mxu0
        %v5653 = vadd.f32 0.0, %v5652
        %5654 = vmatmul.f32.gmra.mxu0 %v5401
        %v5655 = vpop.f32.mrf.mxu0
        %v5656 = vadd.f32 0.0, %v5655
        %5657 = vmatmul.f32.gmra.mxu0 %v5406
        %v5658 = vpop.f32.mrf.mxu0
        %v5659 = vadd.f32 0.0, %v5658
        %5660 = vmatmul.f32.gmra.mxu0 %v5411
        %v5661 = vpop.f32.mrf.mxu0
        %v5662 = vadd.f32 0.0, %v5661
        %5663 = vmatmul.f32.gmra.mxu0 %v5416
        %v5664 = vpop.f32.mrf.mxu0
        %v5665 = vadd.f32 0.0, %v5664
        %5666 = vmatmul.f32.gmra.mxu0 %v5421
        %v5667 = vpop.f32.mrf.mxu0
        %v5668 = vadd.f32 0.0, %v5667
        %5669 = vmatmul.f32.gmra.mxu0 %v5426
        %v5670 = vpop.f32.mrf.mxu0
        %v5671 = vadd.f32 0.0, %v5670
        %5672 = vmatmul.f32.gmra.mxu0 %v5431
        %v5673 = vpop.f32.mrf.mxu0
        %v5674 = vadd.f32 0.0, %v5673
        %5675 = vmatmul.f32.gmra.mxu0 %v5436
        %v5676 = vpop.f32.mrf.mxu0
        %v5677 = vadd.f32 0.0, %v5676
        %5678 = vmatmul.f32.gmra.mxu0 %v5441
        %v5679 = vpop.f32.mrf.mxu0
        %v5680 = vadd.f32 0.0, %v5679
        %5681 = vmatmul.f32.gmra.mxu0 %v5446
        %v5682 = vpop.f32.mrf.mxu0
        %v5683 = vadd.f32 0.0, %v5682
        %5684 = vmatmul.f32.gmra.mxu0 %v5451
        %v5685 = vpop.f32.mrf.mxu0
        %v5686 = vadd.f32 0.0, %v5685
        %5687 = vmatmul.f32.gmra.mxu0 %v5456
        %v5688 = vpop.f32.mrf.mxu0
        %v5689 = vadd.f32 0.0, %v5688
        %5690 = vmatmul.f32.gmra.mxu0 %v5461
        %v5691 = vpop.f32.mrf.mxu0
        %v5692 = vadd.f32 0.0, %v5691
        %5693 = vmatmul.f32.gmra.mxu0 %v5466
        %v5694 = vpop.f32.mrf.mxu0
        %v5695 = vadd.f32 0.0, %v5694
        %5696 = vdwg.mxu0
        %5697 = vmatpush.msra.mxu0 0.0
        %5698 = vmatpush.msra.mxu0 0.0
        %5699 = vmatpush.msra.mxu0 0.0
        %5700 = vmatpush.msra.mxu0 0.0
        %5701 = vmatpush.msra.mxu0 0.0
        %5702 = vmatpush.msra.mxu0 0.0
        %5703 = vmatpush.msra.mxu0 0.0
        %5704 = vmatpush.msra.mxu0 0.0
        %5705 = vmatpush.msra.mxu0 0.0
        %5706 = vmatpush.msra.mxu0 0.0
        %5707 = vmatpush.msra.mxu0 0.0
        %5708 = vmatpush.msra.mxu0 0.0
        %5709 = vmatpush.msra.mxu0 0.0
        %5710 = vmatpush.msra.mxu0 0.0
        %5711 = vmatpush.msra.mxu0 %v5519
        %5712 = vmatpush.msra.mxu0 %v5518
        %5713 = vmatmul.f32.gmra.mxu0 %v5520
        %v5714 = vpop.f32.mrf.mxu0
        %v5715 = vadd.f32 %v5602, %v5714
        %5716 = vmatmul.f32.gmra.mxu0 %v5522
        %v5717 = vpop.f32.mrf.mxu0
        %v5718 = vadd.f32 %v5605, %v5717
        %5719 = vmatmul.f32.gmra.mxu0 %v5524
        %v5720 = vpop.f32.mrf.mxu0
        %v5721 = vadd.f32 %v5608, %v5720
        %5722 = vmatmul.f32.gmra.mxu0 %v5526
        %v5723 = vpop.f32.mrf.mxu0
        %v5724 = vadd.f32 %v5611, %v5723
        %5725 = vmatmul.f32.gmra.mxu0 %v5528
        %v5726 = vpop.f32.mrf.mxu0
        %v5727 = vadd.f32 %v5614, %v5726
        %5728 = vmatmul.f32.gmra.mxu0 %v5530
        %v5729 = vpop.f32.mrf.mxu0
        %v5730 = vadd.f32 %v5617, %v5729
        %5731 = vmatmul.f32.gmra.mxu0 %v5532
        %v5732 = vpop.f32.mrf.mxu0
        %v5733 = vadd.f32 %v5620, %v5732
        %5734 = vmatmul.f32.gmra.mxu0 %v5534
        %v5735 = vpop.f32.mrf.mxu0
        %v5736 = vadd.f32 %v5623, %v5735
        %5737 = vmatmul.f32.gmra.mxu0 %v5536
        %v5738 = vpop.f32.mrf.mxu0
        %v5739 = vadd.f32 %v5626, %v5738
        %5740 = vmatmul.f32.gmra.mxu0 %v5538
        %v5741 = vpop.f32.mrf.mxu0
        %v5742 = vadd.f32 %v5629, %v5741
        %5743 = vmatmul.f32.gmra.mxu0 %v5540
        %v5744 = vpop.f32.mrf.mxu0
        %v5745 = vadd.f32 %v5632, %v5744
        %5746 = vmatmul.f32.gmra.mxu0 %v5542
        %v5747 = vpop.f32.mrf.mxu0
        %v5748 = vadd.f32 %v5635, %v5747
        %5749 = vmatmul.f32.gmra.mxu0 %v5544
        %v5750 = vpop.f32.mrf.mxu0
        %v5751 = vadd.f32 %v5638, %v5750
        %5752 = vmatmul.f32.gmra.mxu0 %v5546
        %v5753 = vpop.f32.mrf.mxu0
        %v5754 = vadd.f32 %v5641, %v5753
        %5755 = vmatmul.f32.gmra.mxu0 %v5548
        %v5756 = vpop.f32.mrf.mxu0
        %v5757 = vadd.f32 %v5644, %v5756
        %5758 = vmatmul.f32.gmra.mxu0 %v5550
        %v5759 = vpop.f32.mrf.mxu0
        %v5760 = vadd.f32 %v5647, %v5759
        %5761 = vmatmul.f32.gmra.mxu0 %v5552
        %v5762 = vpop.f32.mrf.mxu0
        %v5763 = vadd.f32 %v5650, %v5762
        %5764 = vmatmul.f32.gmra.mxu0 %v5554
        %v5765 = vpop.f32.mrf.mxu0
        %v5766 = vadd.f32 %v5653, %v5765
        %5767 = vmatmul.f32.gmra.mxu0 %v5556
        %v5768 = vpop.f32.mrf.mxu0
        %v5769 = vadd.f32 %v5656, %v5768
        %5770 = vmatmul.f32.gmra.mxu0 %v5558
        %v5771 = vpop.f32.mrf.mxu0
        %v5772 = vadd.f32 %v5659, %v5771
        %5773 = vmatmul.f32.gmra.mxu0 %v5560
        %v5774 = vpop.f32.mrf.mxu0
        %v5775 = vadd.f32 %v5662, %v5774
        %5776 = vmatmul.f32.gmra.mxu0 %v5562
        %v5777 = vpop.f32.mrf.mxu0
        %v5778 = vadd.f32 %v5665, %v5777
        %5779 = vmatmul.f32.gmra.mxu0 %v5564
        %v5780 = vpop.f32.mrf.mxu0
        %v5781 = vadd.f32 %v5668, %v5780
        %5782 = vmatmul.f32.gmra.mxu0 %v5566
        %v5783 = vpop.f32.mrf.mxu0
        %v5784 = vadd.f32 %v5671, %v5783
        %5785 = vmatmul.f32.gmra.mxu0 %v5568
        %v5786 = vpop.f32.mrf.mxu0
        %v5787 = vadd.f32 %v5674, %v5786
        %5788 = vmatmul.f32.gmra.mxu0 %v5570
        %v5789 = vpop.f32.mrf.mxu0
        %v5790 = vadd.f32 %v5677, %v5789
        %5791 = vmatmul.f32.gmra.mxu0 %v5572
        %v5792 = vpop.f32.mrf.mxu0
        %v5793 = vadd.f32 %v5680, %v5792
        %5794 = vmatmul.f32.gmra.mxu0 %v5574
        %v5795 = vpop.f32.mrf.mxu0
        %v5796 = vadd.f32 %v5683, %v5795
        %5797 = vmatmul.f32.gmra.mxu0 %v5576
        %v5798 = vpop.f32.mrf.mxu0
        %v5799 = vadd.f32 %v5686, %v5798
        %5800 = vmatmul.f32.gmra.mxu0 %v5578
        %v5801 = vpop.f32.mrf.mxu0
        %v5802 = vadd.f32 %v5689, %v5801
        %5803 = vmatmul.f32.gmra.mxu0 %v5580
        %v5804 = vpop.f32.mrf.mxu0
        %v5805 = vadd.f32 %v5692, %v5804
        %5806 = vmatmul.f32.gmra.mxu0 %v5582
        %v5807 = vpop.f32.mrf.mxu0
        %v5808 = vadd.f32 %v5695, %v5807
        %5809 = vdwg.mxu0
        %v5810 = vadd.f32 %v5085, %v5715
        %v5811 = vadd.f32 %v5088, %v5718
        %v5812 = vadd.f32 %v5091, %v5721
        %v5813 = vadd.f32 %v5094, %v5724
        %v5814 = vadd.f32 %v5097, %v5727
        %v5815 = vadd.f32 %v5100, %v5730
        %v5816 = vadd.f32 %v5103, %v5733
        %v5817 = vadd.f32 %v5106, %v5736
        %v5818 = vadd.f32 %v5109, %v5739
        %v5819 = vadd.f32 %v5112, %v5742
        %v5820 = vadd.f32 %v5115, %v5745
        %v5821 = vadd.f32 %v5118, %v5748
        %v5822 = vadd.f32 %v5121, %v5751
        %v5823 = vadd.f32 %v5124, %v5754
        %v5824 = vadd.f32 %v5127, %v5757
        %v5825 = vadd.f32 %v5130, %v5760
        %v5826 = vadd.f32 %v5133, %v5763
        %v5827 = vadd.f32 %v5136, %v5766
        %v5828 = vadd.f32 %v5139, %v5769
        %v5829 = vadd.f32 %v5142, %v5772
        %v5830 = vadd.f32 %v5145, %v5775
        %v5831 = vadd.f32 %v5148, %v5778
        %v5832 = vadd.f32 %v5151, %v5781
        %v5833 = vadd.f32 %v5154, %v5784
        %v5834 = vadd.f32 %v5157, %v5787
        %v5835 = vadd.f32 %v5160, %v5790
        %v5836 = vadd.f32 %v5163, %v5793
        %v5837 = vadd.f32 %v5166, %v5796
        %v5838 = vadd.f32 %v5169, %v5799
        %v5839 = vadd.f32 %v5172, %v5802
        %v5840 = vadd.f32 %v5175, %v5805
        %v5841 = vadd.f32 %v5178, %v5808
        %v5842 = vld [vmem:[%s4028] sm:$0xff]
        %v5843 = vld [vmem:[%s4028 + $0x8] sm:$0xff]
        %v5844 = vld [vmem:[%s4028 + $0x10] sm:$0xff]
        %v5845 = vld [vmem:[%s4028 + $0x18] sm:$0xff]
        %v5846 = vld [vmem:[%s4028 + $0x30] sm:$0xff]
        %v5847 = vld [vmem:[%s4028 + $0x38] sm:$0xff]
        %v5848 = vld [vmem:[%s4028 + $0x40] sm:$0xff]
        %v5849 = vld [vmem:[%s4028 + $0x48] sm:$0xff]
        %v5850 = vld [vmem:[%s4028 + $0x60] sm:$0xff]
        %v5851 = vld [vmem:[%s4028 + $0x68] sm:$0xff]
        %v5852 = vld [vmem:[%s4028 + $0x70] sm:$0xff]
        %v5853 = vld [vmem:[%s4028 + $0x78] sm:$0xff]
        %v5854 = vld [vmem:[%s4028 + $0x90] sm:$0xff]
        %v5855 = vld [vmem:[%s4028 + $0x98] sm:$0xff]
        %v5856 = vld [vmem:[%s4028 + $0xa0] sm:$0xff]
        %v5857 = vld [vmem:[%s4028 + $0xa8] sm:$0xff]
        %v5858 = vld [vmem:[%s4028 + $0xc0] sm:$0xff]
        %v5859 = vld [vmem:[%s4028 + $0xc8] sm:$0xff]
        %v5860 = vld [vmem:[%s4028 + $0xd0] sm:$0xff]
        %v5861 = vld [vmem:[%s4028 + $0xd8] sm:$0xff]
        %v5862 = vld [vmem:[%s4028 + $0xf0] sm:$0xff]
        %v5863 = vld [vmem:[%s4028 + $0xf8] sm:$0xff]
        %v5864 = vld [vmem:[%s4028 + $0x100] sm:$0xff]
        %v5865 = vld [vmem:[%s4028 + $0x108] sm:$0xff]
        %v5866 = vld [vmem:[%s4028 + $0x120] sm:$0xff]
        %v5867 = vld [vmem:[%s4028 + $0x128] sm:$0xff]
        %v5868 = vld [vmem:[%s4028 + $0x130] sm:$0xff]
        %v5869 = vld [vmem:[%s4028 + $0x138] sm:$0xff]
        %v5870 = vld [vmem:[%s4028 + $0x150] sm:$0xff]
        %v5871 = vld [vmem:[%s4028 + $0x158] sm:$0xff]
        %v5872 = vld [vmem:[%s4028 + $0x160] sm:$0xff]
        %v5873 = vld [vmem:[%s4028 + $0x168] sm:$0xff]
        %v5874 = vld [vmem:[%s4028 + $0x180] sm:$0xff]
        %v5875 = vld [vmem:[%s4028 + $0x188] sm:$0xff]
        %v5876 = vld [vmem:[%s4028 + $0x190] sm:$0xff]
        %v5877 = vld [vmem:[%s4028 + $0x198] sm:$0xff]
        %v5878 = vld [vmem:[%s4028 + $0x1b0] sm:$0xff]
        %v5879 = vld [vmem:[%s4028 + $0x1b8] sm:$0xff]
        %v5880 = vld [vmem:[%s4028 + $0x1c0] sm:$0xff]
        %v5881 = vld [vmem:[%s4028 + $0x1c8] sm:$0xff]
        %v5882 = vld [vmem:[%s4028 + $0x1e0] sm:$0xff]
        %v5883 = vld [vmem:[%s4028 + $0x1e8] sm:$0xff]
        %v5884 = vld [vmem:[%s4028 + $0x1f0] sm:$0xff]
        %v5885 = vld [vmem:[%s4028 + $0x1f8] sm:$0xff]
        %v5886 = vld [vmem:[%s4028 + $0x210] sm:$0xff]
        %v5887 = vld [vmem:[%s4028 + $0x218] sm:$0xff]
        %v5888 = vld [vmem:[%s4028 + $0x220] sm:$0xff]
        %v5889 = vld [vmem:[%s4028 + $0x228] sm:$0xff]
        %v5890 = vld [vmem:[%s4028 + $0x240] sm:$0xff]
        %v5891 = vld [vmem:[%s4028 + $0x248] sm:$0xff]
        %v5892 = vld [vmem:[%s4028 + $0x250] sm:$0xff]
        %v5893 = vld [vmem:[%s4028 + $0x258] sm:$0xff]
        %v5894 = vld [vmem:[%s4028 + $0x270] sm:$0xff]
        %v5895 = vld [vmem:[%s4028 + $0x278] sm:$0xff]
        %v5896 = vld [vmem:[%s4028 + $0x280] sm:$0xff]
        %v5897 = vld [vmem:[%s4028 + $0x288] sm:$0xff]
        %v5898 = vld [vmem:[%s4028 + $0x2a0] sm:$0xff]
        %v5899 = vld [vmem:[%s4028 + $0x2a8] sm:$0xff]
        %v5900 = vld [vmem:[%s4028 + $0x2b0] sm:$0xff]
        %v5901 = vld [vmem:[%s4028 + $0x2b8] sm:$0xff]
        %v5902 = vld [vmem:[%s4028 + $0x2d0] sm:$0xff]
        %v5903 = vld [vmem:[%s4028 + $0x2d8] sm:$0xff]
        %v5904 = vld [vmem:[%s4028 + $0x2e0] sm:$0xff]
        %v5905 = vld [vmem:[%s4028 + $0x2e8] sm:$0xff]
        %s5906 = scalar_lea.vmem [#allocation7], 432
        %v5907 = vld [vmem:[%s5906] sm:$0xff]
        %v5908 = vld [vmem:[%s5906 + $0x8] sm:$0xff]
        %v5909 = vld [vmem:[%s5906 + $0x10] sm:$0xff]
        %v5910 = vld [vmem:[%s5906 + $0x18] sm:$0xff]
        %v5911 = vld [vmem:[%s5906 + $0x20] sm:$0xff]
        %v5912 = vld [vmem:[%s5906 + $0x28] sm:$0xff]
        %v5913 = vld [vmem:[%s5906 + $0x30] sm:$0xff]
        %v5914 = vld [vmem:[%s5906 + $0x38] sm:$0xff]
        %v5915 = vld [vmem:[%s5906 + $0x40] sm:$0xff]
        %v5916 = vld [vmem:[%s5906 + $0x48] sm:$0xff]
        %v5917 = vld [vmem:[%s5906 + $0x50] sm:$0xff]
        %v5918 = vld [vmem:[%s5906 + $0x58] sm:$0xff]
        %v5919 = vld [vmem:[%s5906 + $0x60] sm:$0xff]
        %v5920 = vld [vmem:[%s5906 + $0x68] sm:$0xff]
        %v5921 = vld [vmem:[%s5906 + $0x70] sm:$0xff]
        %v5922 = vld [vmem:[%s5906 + $0x78] sm:$0xff]
        %v5923 = vld [vmem:[%s5906 + $0x80] sm:$0xff]
        %v5924 = vld [vmem:[%s5906 + $0x88] sm:$0xff]
        %v5926 = vsel %vm3694, %v5843, 0
        %v5929 = vsel %vm3694, %v5845, 0
        %v5932 = vsel %vm3694, %v5847, 0
        %v5935 = vsel %vm3694, %v5849, 0
        %v5938 = vsel %vm3694, %v5851, 0
        %v5941 = vsel %vm3694, %v5853, 0
        %v5944 = vsel %vm3694, %v5855, 0
        %v5947 = vsel %vm3694, %v5857, 0
        %v5950 = vsel %vm3694, %v5859, 0
        %v5953 = vsel %vm3694, %v5861, 0
        %v5956 = vsel %vm3694, %v5863, 0
        %v5959 = vsel %vm3694, %v5865, 0
        %v5962 = vsel %vm3694, %v5867, 0
        %v5965 = vsel %vm3694, %v5869, 0
        %v5968 = vsel %vm3694, %v5871, 0
        %v5971 = vsel %vm3694, %v5873, 0
        %v5974 = vsel %vm3694, %v5875, 0
        %v5977 = vsel %vm3694, %v5877, 0
        %v5980 = vsel %vm3694, %v5879, 0
        %v5983 = vsel %vm3694, %v5881, 0
        %v5986 = vsel %vm3694, %v5883, 0
        %v5989 = vsel %vm3694, %v5885, 0
        %v5992 = vsel %vm3694, %v5887, 0
        %v5995 = vsel %vm3694, %v5889, 0
        %v5998 = vsel %vm3694, %v5891, 0
        %v6001 = vsel %vm3694, %v5893, 0
        %v6004 = vsel %vm3694, %v5895, 0
        %v6007 = vsel %vm3694, %v5897, 0
        %v6010 = vsel %vm3694, %v5899, 0
        %v6013 = vsel %vm3694, %v5901, 0
        %v6016 = vsel %vm3694, %v5903, 0
        %v6019 = vsel %vm3694, %v5905, 0
        %6021 = vmatpush.msra.mxu0 %v5922
        %6022 = vmatpush.msra.mxu0 %v5921
        %6023 = vmatpush.msra.mxu0 %v5920
        %6024 = vmatpush.msra.mxu0 %v5919
        %6025 = vmatpush.msra.mxu0 %v5918
        %6026 = vmatpush.msra.mxu0 %v5917
        %6027 = vmatpush.msra.mxu0 %v5916
        %6028 = vmatpush.msra.mxu0 %v5915
        %6029 = vmatpush.msra.mxu0 %v5914
        %6030 = vmatpush.msra.mxu0 %v5913
        %6031 = vmatpush.msra.mxu0 %v5912
        %6032 = vmatpush.msra.mxu0 %v5911
        %6033 = vmatpush.msra.mxu0 %v5910
        %6034 = vmatpush.msra.mxu0 %v5909
        %6035 = vmatpush.msra.mxu0 %v5908
        %6036 = vmatpush.msra.mxu0 %v5907
        %6037 = vmatmul.f32.gmra.mxu0 %v5842
        %v6038 = vpop.f32.mrf.mxu0
        %v6039 = vadd.f32 0.0, %v6038
        %6040 = vmatmul.f32.gmra.mxu0 %v5844
        %v6041 = vpop.f32.mrf.mxu0
        %v6042 = vadd.f32 0.0, %v6041
        %6043 = vmatmul.f32.gmra.mxu0 %v5846
        %v6044 = vpop.f32.mrf.mxu0
        %v6045 = vadd.f32 0.0, %v6044
        %6046 = vmatmul.f32.gmra.mxu0 %v5848
        %v6047 = vpop.f32.mrf.mxu0
        %v6048 = vadd.f32 0.0, %v6047
        %6049 = vmatmul.f32.gmra.mxu0 %v5850
        %v6050 = vpop.f32.mrf.mxu0
        %v6051 = vadd.f32 0.0, %v6050
        %6052 = vmatmul.f32.gmra.mxu0 %v5852
        %v6053 = vpop.f32.mrf.mxu0
        %v6054 = vadd.f32 0.0, %v6053
        %6055 = vmatmul.f32.gmra.mxu0 %v5854
        %v6056 = vpop.f32.mrf.mxu0
        %v6057 = vadd.f32 0.0, %v6056
        %6058 = vmatmul.f32.gmra.mxu0 %v5856
        %v6059 = vpop.f32.mrf.mxu0
        %v6060 = vadd.f32 0.0, %v6059
        %6061 = vmatmul.f32.gmra.mxu0 %v5858
        %v6062 = vpop.f32.mrf.mxu0
        %v6063 = vadd.f32 0.0, %v6062
        %6064 = vmatmul.f32.gmra.mxu0 %v5860
        %v6065 = vpop.f32.mrf.mxu0
        %v6066 = vadd.f32 0.0, %v6065
        %6067 = vmatmul.f32.gmra.mxu0 %v5862
        %v6068 = vpop.f32.mrf.mxu0
        %v6069 = vadd.f32 0.0, %v6068
        %6070 = vmatmul.f32.gmra.mxu0 %v5864
        %v6071 = vpop.f32.mrf.mxu0
        %v6072 = vadd.f32 0.0, %v6071
        %6073 = vmatmul.f32.gmra.mxu0 %v5866
        %v6074 = vpop.f32.mrf.mxu0
        %v6075 = vadd.f32 0.0, %v6074
        %6076 = vmatmul.f32.gmra.mxu0 %v5868
        %v6077 = vpop.f32.mrf.mxu0
        %v6078 = vadd.f32 0.0, %v6077
        %6079 = vmatmul.f32.gmra.mxu0 %v5870
        %v6080 = vpop.f32.mrf.mxu0
        %v6081 = vadd.f32 0.0, %v6080
        %6082 = vmatmul.f32.gmra.mxu0 %v5872
        %v6083 = vpop.f32.mrf.mxu0
        %v6084 = vadd.f32 0.0, %v6083
        %6085 = vmatmul.f32.gmra.mxu0 %v5874
        %v6086 = vpop.f32.mrf.mxu0
        %v6087 = vadd.f32 0.0, %v6086
        %6088 = vmatmul.f32.gmra.mxu0 %v5876
        %v6089 = vpop.f32.mrf.mxu0
        %v6090 = vadd.f32 0.0, %v6089
        %6091 = vmatmul.f32.gmra.mxu0 %v5878
        %v6092 = vpop.f32.mrf.mxu0
        %v6093 = vadd.f32 0.0, %v6092
        %6094 = vmatmul.f32.gmra.mxu0 %v5880
        %v6095 = vpop.f32.mrf.mxu0
        %v6096 = vadd.f32 0.0, %v6095
        %6097 = vmatmul.f32.gmra.mxu0 %v5882
        %v6098 = vpop.f32.mrf.mxu0
        %v6099 = vadd.f32 0.0, %v6098
        %6100 = vmatmul.f32.gmra.mxu0 %v5884
        %v6101 = vpop.f32.mrf.mxu0
        %v6102 = vadd.f32 0.0, %v6101
        %6103 = vmatmul.f32.gmra.mxu0 %v5886
        %v6104 = vpop.f32.mrf.mxu0
        %v6105 = vadd.f32 0.0, %v6104
        %6106 = vmatmul.f32.gmra.mxu0 %v5888
        %v6107 = vpop.f32.mrf.mxu0
        %v6108 = vadd.f32 0.0, %v6107
        %6109 = vmatmul.f32.gmra.mxu0 %v5890
        %v6110 = vpop.f32.mrf.mxu0
        %v6111 = vadd.f32 0.0, %v6110
        %6112 = vmatmul.f32.gmra.mxu0 %v5892
        %v6113 = vpop.f32.mrf.mxu0
        %v6114 = vadd.f32 0.0, %v6113
        %6115 = vmatmul.f32.gmra.mxu0 %v5894
        %v6116 = vpop.f32.mrf.mxu0
        %v6117 = vadd.f32 0.0, %v6116
        %6118 = vmatmul.f32.gmra.mxu0 %v5896
        %v6119 = vpop.f32.mrf.mxu0
        %v6120 = vadd.f32 0.0, %v6119
        %6121 = vmatmul.f32.gmra.mxu0 %v5898
        %v6122 = vpop.f32.mrf.mxu0
        %v6123 = vadd.f32 0.0, %v6122
        %6124 = vmatmul.f32.gmra.mxu0 %v5900
        %v6125 = vpop.f32.mrf.mxu0
        %v6126 = vadd.f32 0.0, %v6125
        %6127 = vmatmul.f32.gmra.mxu0 %v5902
        %v6128 = vpop.f32.mrf.mxu0
        %v6129 = vadd.f32 0.0, %v6128
        %6130 = vmatmul.f32.gmra.mxu0 %v5904
        %v6131 = vpop.f32.mrf.mxu0
        %v6132 = vadd.f32 0.0, %v6131
        %6133 = vdwg.mxu0
        %6134 = vmatpush.msra.mxu0 0.0
        %6135 = vmatpush.msra.mxu0 0.0
        %6136 = vmatpush.msra.mxu0 0.0
        %6137 = vmatpush.msra.mxu0 0.0
        %6138 = vmatpush.msra.mxu0 0.0
        %6139 = vmatpush.msra.mxu0 0.0
        %6140 = vmatpush.msra.mxu0 0.0
        %6141 = vmatpush.msra.mxu0 0.0
        %6142 = vmatpush.msra.mxu0 0.0
        %6143 = vmatpush.msra.mxu0 0.0
        %6144 = vmatpush.msra.mxu0 0.0
        %6145 = vmatpush.msra.mxu0 0.0
        %6146 = vmatpush.msra.mxu0 0.0
        %6147 = vmatpush.msra.mxu0 0.0
        %6148 = vmatpush.msra.mxu0 %v5924
        %6149 = vmatpush.msra.mxu0 %v5923
        %6150 = vmatmul.f32.gmra.mxu0 %v5926
        %v6151 = vpop.f32.mrf.mxu0
        %v6152 = vadd.f32 %v6039, %v6151
        %6153 = vmatmul.f32.gmra.mxu0 %v5929
        %v6154 = vpop.f32.mrf.mxu0
        %v6155 = vadd.f32 %v6042, %v6154
        %6156 = vmatmul.f32.gmra.mxu0 %v5932
        %v6157 = vpop.f32.mrf.mxu0
        %v6158 = vadd.f32 %v6045, %v6157
        %6159 = vmatmul.f32.gmra.mxu0 %v5935
        %v6160 = vpop.f32.mrf.mxu0
        %v6161 = vadd.f32 %v6048, %v6160
        %6162 = vmatmul.f32.gmra.mxu0 %v5938
        %v6163 = vpop.f32.mrf.mxu0
        %v6164 = vadd.f32 %v6051, %v6163
        %6165 = vmatmul.f32.gmra.mxu0 %v5941
        %v6166 = vpop.f32.mrf.mxu0
        %v6167 = vadd.f32 %v6054, %v6166
        %6168 = vmatmul.f32.gmra.mxu0 %v5944
        %v6169 = vpop.f32.mrf.mxu0
        %v6170 = vadd.f32 %v6057, %v6169
        %6171 = vmatmul.f32.gmra.mxu0 %v5947
        %v6172 = vpop.f32.mrf.mxu0
        %v6173 = vadd.f32 %v6060, %v6172
        %6174 = vmatmul.f32.gmra.mxu0 %v5950
        %v6175 = vpop.f32.mrf.mxu0
        %v6176 = vadd.f32 %v6063, %v6175
        %6177 = vmatmul.f32.gmra.mxu0 %v5953
        %v6178 = vpop.f32.mrf.mxu0
        %v6179 = vadd.f32 %v6066, %v6178
        %6180 = vmatmul.f32.gmra.mxu0 %v5956
        %v6181 = vpop.f32.mrf.mxu0
        %v6182 = vadd.f32 %v6069, %v6181
        %6183 = vmatmul.f32.gmra.mxu0 %v5959
        %v6184 = vpop.f32.mrf.mxu0
        %v6185 = vadd.f32 %v6072, %v6184
        %6186 = vmatmul.f32.gmra.mxu0 %v5962
        %v6187 = vpop.f32.mrf.mxu0
        %v6188 = vadd.f32 %v6075, %v6187
        %6189 = vmatmul.f32.gmra.mxu0 %v5965
        %v6190 = vpop.f32.mrf.mxu0
        %v6191 = vadd.f32 %v6078, %v6190
        %6192 = vmatmul.f32.gmra.mxu0 %v5968
        %v6193 = vpop.f32.mrf.mxu0
        %v6194 = vadd.f32 %v6081, %v6193
        %6195 = vmatmul.f32.gmra.mxu0 %v5971
        %v6196 = vpop.f32.mrf.mxu0
        %v6197 = vadd.f32 %v6084, %v6196
        %6198 = vmatmul.f32.gmra.mxu0 %v5974
        %v6199 = vpop.f32.mrf.mxu0
        %v6200 = vadd.f32 %v6087, %v6199
        %6201 = vmatmul.f32.gmra.mxu0 %v5977
        %v6202 = vpop.f32.mrf.mxu0
        %v6203 = vadd.f32 %v6090, %v6202
        %6204 = vmatmul.f32.gmra.mxu0 %v5980
        %v6205 = vpop.f32.mrf.mxu0
        %v6206 = vadd.f32 %v6093, %v6205
        %6207 = vmatmul.f32.gmra.mxu0 %v5983
        %v6208 = vpop.f32.mrf.mxu0
        %v6209 = vadd.f32 %v6096, %v6208
        %6210 = vmatmul.f32.gmra.mxu0 %v5986
        %v6211 = vpop.f32.mrf.mxu0
        %v6212 = vadd.f32 %v6099, %v6211
        %6213 = vmatmul.f32.gmra.mxu0 %v5989
        %v6214 = vpop.f32.mrf.mxu0
        %v6215 = vadd.f32 %v6102, %v6214
        %6216 = vmatmul.f32.gmra.mxu0 %v5992
        %v6217 = vpop.f32.mrf.mxu0
        %v6218 = vadd.f32 %v6105, %v6217
        %6219 = vmatmul.f32.gmra.mxu0 %v5995
        %v6220 = vpop.f32.mrf.mxu0
        %v6221 = vadd.f32 %v6108, %v6220
        %6222 = vmatmul.f32.gmra.mxu0 %v5998
        %v6223 = vpop.f32.mrf.mxu0
        %v6224 = vadd.f32 %v6111, %v6223
        %6225 = vmatmul.f32.gmra.mxu0 %v6001
        %v6226 = vpop.f32.mrf.mxu0
        %v6227 = vadd.f32 %v6114, %v6226
        %6228 = vmatmul.f32.gmra.mxu0 %v6004
        %v6229 = vpop.f32.mrf.mxu0
        %v6230 = vadd.f32 %v6117, %v6229
        %6231 = vmatmul.f32.gmra.mxu0 %v6007
        %v6232 = vpop.f32.mrf.mxu0
        %v6233 = vadd.f32 %v6120, %v6232
        %6234 = vmatmul.f32.gmra.mxu0 %v6010
        %v6235 = vpop.f32.mrf.mxu0
        %v6236 = vadd.f32 %v6123, %v6235
        %6237 = vmatmul.f32.gmra.mxu0 %v6013
        %v6238 = vpop.f32.mrf.mxu0
        %v6239 = vadd.f32 %v6126, %v6238
        %6240 = vmatmul.f32.gmra.mxu0 %v6016
        %v6241 = vpop.f32.mrf.mxu0
        %v6242 = vadd.f32 %v6129, %v6241
        %6243 = vmatmul.f32.gmra.mxu0 %v6019
        %v6244 = vpop.f32.mrf.mxu0
        %v6245 = vadd.f32 %v6132, %v6244
        %6246 = vdwg.mxu0
        %v6247 = vadd.f32 %v5810, %v6152
        %v6248 = vadd.f32 %v5811, %v6155
        %v6249 = vadd.f32 %v5812, %v6158
        %v6250 = vadd.f32 %v5813, %v6161
        %v6251 = vadd.f32 %v5814, %v6164
        %v6252 = vadd.f32 %v5815, %v6167
        %v6253 = vadd.f32 %v5816, %v6170
        %v6254 = vadd.f32 %v5817, %v6173
        %v6255 = vadd.f32 %v5818, %v6176
        %v6256 = vadd.f32 %v5819, %v6179
        %v6257 = vadd.f32 %v5820, %v6182
        %v6258 = vadd.f32 %v5821, %v6185
        %v6259 = vadd.f32 %v5822, %v6188
        %v6260 = vadd.f32 %v5823, %v6191
        %v6261 = vadd.f32 %v5824, %v6194
        %v6262 = vadd.f32 %v5825, %v6197
        %v6263 = vadd.f32 %v5826, %v6200
        %v6264 = vadd.f32 %v5827, %v6203
        %v6265 = vadd.f32 %v5828, %v6206
        %v6266 = vadd.f32 %v5829, %v6209
        %v6267 = vadd.f32 %v5830, %v6212
        %v6268 = vadd.f32 %v5831, %v6215
        %v6269 = vadd.f32 %v5832, %v6218
        %v6270 = vadd.f32 %v5833, %v6221
        %v6271 = vadd.f32 %v5834, %v6224
        %v6272 = vadd.f32 %v5835, %v6227
        %v6273 = vadd.f32 %v5836, %v6230
        %v6274 = vadd.f32 %v5837, %v6233
        %v6275 = vadd.f32 %v5838, %v6236
        %v6276 = vadd.f32 %v5839, %v6239
        %v6277 = vadd.f32 %v5840, %v6242
        %v6278 = vadd.f32 %v5841, %v6245
        %v6279 = vld [vmem:[%s4028] sm:$0xfe]
        %v6280 = vld [vmem:[%s4028 + $0x8] sm:$0xfe]
        %v6281 = vld [vmem:[%s4028 + $0x10] sm:$0xff]
        %v6282 = vld [vmem:[%s4028 + $0x18] sm:$0xff]
        %v6283 = vld [vmem:[%s4028 + $0x20] sm:$0x1]
        %v6284 = vld [vmem:[%s4028 + $0x28] sm:$0x1]
        %v6285 = vld [vmem:[%s4028 + $0x30] sm:$0xfe]
        %v6286 = vld [vmem:[%s4028 + $0x38] sm:$0xfe]
        %v6287 = vld [vmem:[%s4028 + $0x40] sm:$0xff]
        %v6288 = vld [vmem:[%s4028 + $0x48] sm:$0xff]
        %v6289 = vld [vmem:[%s4028 + $0x50] sm:$0x1]
        %v6290 = vld [vmem:[%s4028 + $0x58] sm:$0x1]
        %v6291 = vld [vmem:[%s4028 + $0x60] sm:$0xfe]
        %v6292 = vld [vmem:[%s4028 + $0x68] sm:$0xfe]
        %v6293 = vld [vmem:[%s4028 + $0x70] sm:$0xff]
        %v6294 = vld [vmem:[%s4028 + $0x78] sm:$0xff]
        %v6295 = vld [vmem:[%s4028 + $0x80] sm:$0x1]
        %v6296 = vld [vmem:[%s4028 + $0x88] sm:$0x1]
        %v6297 = vld [vmem:[%s4028 + $0x90] sm:$0xfe]
        %v6298 = vld [vmem:[%s4028 + $0x98] sm:$0xfe]
        %v6299 = vld [vmem:[%s4028 + $0xa0] sm:$0xff]
        %v6300 = vld [vmem:[%s4028 + $0xa8] sm:$0xff]
        %v6301 = vld [vmem:[%s4028 + $0xb0] sm:$0x1]
        %v6302 = vld [vmem:[%s4028 + $0xb8] sm:$0x1]
        %v6303 = vld [vmem:[%s4028 + $0xc0] sm:$0xfe]
        %v6304 = vld [vmem:[%s4028 + $0xc8] sm:$0xfe]
        %v6305 = vld [vmem:[%s4028 + $0xd0] sm:$0xff]
        %v6306 = vld [vmem:[%s4028 + $0xd8] sm:$0xff]
        %v6307 = vld [vmem:[%s4028 + $0xe0] sm:$0x1]
        %v6308 = vld [vmem:[%s4028 + $0xe8] sm:$0x1]
        %v6309 = vld [vmem:[%s4028 + $0xf0] sm:$0xfe]
        %v6310 = vld [vmem:[%s4028 + $0xf8] sm:$0xfe]
        %v6311 = vld [vmem:[%s4028 + $0x100] sm:$0xff]
        %v6312 = vld [vmem:[%s4028 + $0x108] sm:$0xff]
        %v6313 = vld [vmem:[%s4028 + $0x110] sm:$0x1]
        %v6314 = vld [vmem:[%s4028 + $0x118] sm:$0x1]
        %v6315 = vld [vmem:[%s4028 + $0x120] sm:$0xfe]
        %v6316 = vld [vmem:[%s4028 + $0x128] sm:$0xfe]
        %v6317 = vld [vmem:[%s4028 + $0x130] sm:$0xff]
        %v6318 = vld [vmem:[%s4028 + $0x138] sm:$0xff]
        %v6319 = vld [vmem:[%s4028 + $0x140] sm:$0x1]
        %v6320 = vld [vmem:[%s4028 + $0x148] sm:$0x1]
        %v6321 = vld [vmem:[%s4028 + $0x150] sm:$0xfe]
        %v6322 = vld [vmem:[%s4028 + $0x158] sm:$0xfe]
        %v6323 = vld [vmem:[%s4028 + $0x160] sm:$0xff]
        %v6324 = vld [vmem:[%s4028 + $0x168] sm:$0xff]
        %v6325 = vld [vmem:[%s4028 + $0x170] sm:$0x1]
        %v6326 = vld [vmem:[%s4028 + $0x178] sm:$0x1]
        %v6327 = vld [vmem:[%s4028 + $0x180] sm:$0xfe]
        %v6328 = vld [vmem:[%s4028 + $0x188] sm:$0xfe]
        %v6329 = vld [vmem:[%s4028 + $0x190] sm:$0xff]
        %v6330 = vld [vmem:[%s4028 + $0x198] sm:$0xff]
        %v6331 = vld [vmem:[%s4028 + $0x1a0] sm:$0x1]
        %v6332 = vld [vmem:[%s4028 + $0x1a8] sm:$0x1]
        %v6333 = vld [vmem:[%s4028 + $0x1b0] sm:$0xfe]
        %v6334 = vld [vmem:[%s4028 + $0x1b8] sm:$0xfe]
        %v6335 = vld [vmem:[%s4028 + $0x1c0] sm:$0xff]
        %v6336 = vld [vmem:[%s4028 + $0x1c8] sm:$0xff]
        %v6337 = vld [vmem:[%s4028 + $0x1d0] sm:$0x1]
        %v6338 = vld [vmem:[%s4028 + $0x1d8] sm:$0x1]
        %v6339 = vld [vmem:[%s4028 + $0x1e0] sm:$0xfe]
        %v6340 = vld [vmem:[%s4028 + $0x1e8] sm:$0xfe]
        %v6341 = vld [vmem:[%s4028 + $0x1f0] sm:$0xff]
        %v6342 = vld [vmem:[%s4028 + $0x1f8] sm:$0xff]
        %v6343 = vld [vmem:[%s4028 + $0x200] sm:$0x1]
        %v6344 = vld [vmem:[%s4028 + $0x208] sm:$0x1]
        %v6345 = vld [vmem:[%s4028 + $0x210] sm:$0xfe]
        %v6346 = vld [vmem:[%s4028 + $0x218] sm:$0xfe]
        %v6347 = vld [vmem:[%s4028 + $0x220] sm:$0xff]
        %v6348 = vld [vmem:[%s4028 + $0x228] sm:$0xff]
        %v6349 = vld [vmem:[%s4028 + $0x230] sm:$0x1]
        %v6350 = vld [vmem:[%s4028 + $0x238] sm:$0x1]
        %v6351 = vld [vmem:[%s4028 + $0x240] sm:$0xfe]
        %v6352 = vld [vmem:[%s4028 + $0x248] sm:$0xfe]
        %v6353 = vld [vmem:[%s4028 + $0x250] sm:$0xff]
        %v6354 = vld [vmem:[%s4028 + $0x258] sm:$0xff]
        %v6355 = vld [vmem:[%s4028 + $0x260] sm:$0x1]
        %v6356 = vld [vmem:[%s4028 + $0x268] sm:$0x1]
        %v6357 = vld [vmem:[%s4028 + $0x270] sm:$0xfe]
        %v6358 = vld [vmem:[%s4028 + $0x278] sm:$0xfe]
        %v6359 = vld [vmem:[%s4028 + $0x280] sm:$0xff]
        %v6360 = vld [vmem:[%s4028 + $0x288] sm:$0xff]
        %v6361 = vld [vmem:[%s4028 + $0x290] sm:$0x1]
        %v6362 = vld [vmem:[%s4028 + $0x298] sm:$0x1]
        %v6363 = vld [vmem:[%s4028 + $0x2a0] sm:$0xfe]
        %v6364 = vld [vmem:[%s4028 + $0x2a8] sm:$0xfe]
        %v6365 = vld [vmem:[%s4028 + $0x2b0] sm:$0xff]
        %v6366 = vld [vmem:[%s4028 + $0x2b8] sm:$0xff]
        %v6367 = vld [vmem:[%s4028 + $0x2c0] sm:$0x1]
        %v6368 = vld [vmem:[%s4028 + $0x2c8] sm:$0x1]
        %v6369 = vld [vmem:[%s4028 + $0x2d0] sm:$0xfe]
        %v6370 = vld [vmem:[%s4028 + $0x2d8] sm:$0xfe]
        %v6371 = vld [vmem:[%s4028 + $0x2e0] sm:$0xff]
        %v6372 = vld [vmem:[%s4028 + $0x2e8] sm:$0xff]
        %v6373 = vld [vmem:[%s4028 + $0x2f0] sm:$0x1]
        %v6374 = vld [vmem:[%s4028 + $0x2f8] sm:$0x1]
        %v6471 = vrot.slane %v6279, 1
        %v6472 = vrot.slane %v6281, 1
        %v6473 = vsel %vm4372, %v6471, %v6472
        %v6474 = vrot.slane %v6280, 1
        %v6475 = vrot.slane %v6282, 1
        %v6476 = vsel %vm4372, %v6474, %v6475
        %v6477 = vrot.slane %v6283, 1
        %v6478 = vsel %vm4372, %v6472, %v6477
        %v6479 = vrot.slane %v6284, 1
        %v6480 = vsel %vm4372, %v6475, %v6479
        %v6481 = vrot.slane %v6285, 1
        %v6482 = vrot.slane %v6287, 1
        %v6483 = vsel %vm4372, %v6481, %v6482
        %v6484 = vrot.slane %v6286, 1
        %v6485 = vrot.slane %v6288, 1
        %v6486 = vsel %vm4372, %v6484, %v6485
        %v6487 = vrot.slane %v6289, 1
        %v6488 = vsel %vm4372, %v6482, %v6487
        %v6489 = vrot.slane %v6290, 1
        %v6490 = vsel %vm4372, %v6485, %v6489
        %v6491 = vrot.slane %v6291, 1
        %v6492 = vrot.slane %v6293, 1
        %v6493 = vsel %vm4372, %v6491, %v6492
        %v6494 = vrot.slane %v6292, 1
        %v6495 = vrot.slane %v6294, 1
        %v6496 = vsel %vm4372, %v6494, %v6495
        %v6497 = vrot.slane %v6295, 1
        %v6498 = vsel %vm4372, %v6492, %v6497
        %v6499 = vrot.slane %v6296, 1
        %v6500 = vsel %vm4372, %v6495, %v6499
        %v6501 = vrot.slane %v6297, 1
        %v6502 = vrot.slane %v6299, 1
        %v6503 = vsel %vm4372, %v6501, %v6502
        %v6504 = vrot.slane %v6298, 1
        %v6505 = vrot.slane %v6300, 1
        %v6506 = vsel %vm4372, %v6504, %v6505
        %v6507 = vrot.slane %v6301, 1
        %v6508 = vsel %vm4372, %v6502, %v6507
        %v6509 = vrot.slane %v6302, 1
        %v6510 = vsel %vm4372, %v6505, %v6509
        %v6511 = vrot.slane %v6303, 1
        %v6512 = vrot.slane %v6305, 1
        %v6513 = vsel %vm4372, %v6511, %v6512
        %v6514 = vrot.slane %v6304, 1
        %v6515 = vrot.slane %v6306, 1
        %v6516 = vsel %vm4372, %v6514, %v6515
        %v6517 = vrot.slane %v6307, 1
        %v6518 = vsel %vm4372, %v6512, %v6517
        %v6519 = vrot.slane %v6308, 1
        %v6520 = vsel %vm4372, %v6515, %v6519
        %v6521 = vrot.slane %v6309, 1
        %v6522 = vrot.slane %v6311, 1
        %v6523 = vsel %vm4372, %v6521, %v6522
        %v6524 = vrot.slane %v6310, 1
        %v6525 = vrot.slane %v6312, 1
        %v6526 = vsel %vm4372, %v6524, %v6525
        %v6527 = vrot.slane %v6313, 1
        %v6528 = vsel %vm4372, %v6522, %v6527
        %v6529 = vrot.slane %v6314, 1
        %v6530 = vsel %vm4372, %v6525, %v6529
        %v6531 = vrot.slane %v6315, 1
        %v6532 = vrot.slane %v6317, 1
        %v6533 = vsel %vm4372, %v6531, %v6532
        %v6534 = vrot.slane %v6316, 1
        %v6535 = vrot.slane %v6318, 1
        %v6536 = vsel %vm4372, %v6534, %v6535
        %v6537 = vrot.slane %v6319, 1
        %v6538 = vsel %vm4372, %v6532, %v6537
        %v6539 = vrot.slane %v6320, 1
        %v6540 = vsel %vm4372, %v6535, %v6539
        %v6541 = vrot.slane %v6321, 1
        %v6542 = vrot.slane %v6323, 1
        %v6543 = vsel %vm4372, %v6541, %v6542
        %v6544 = vrot.slane %v6322, 1
        %v6545 = vrot.slane %v6324, 1
        %v6546 = vsel %vm4372, %v6544, %v6545
        %v6547 = vrot.slane %v6325, 1
        %v6548 = vsel %vm4372, %v6542, %v6547
        %v6549 = vrot.slane %v6326, 1
        %v6550 = vsel %vm4372, %v6545, %v6549
        %v6551 = vrot.slane %v6327, 1
        %v6552 = vrot.slane %v6329, 1
        %v6553 = vsel %vm4372, %v6551, %v6552
        %v6554 = vrot.slane %v6328, 1
        %v6555 = vrot.slane %v6330, 1
        %v6556 = vsel %vm4372, %v6554, %v6555
        %v6557 = vrot.slane %v6331, 1
        %v6558 = vsel %vm4372, %v6552, %v6557
        %v6559 = vrot.slane %v6332, 1
        %v6560 = vsel %vm4372, %v6555, %v6559
        %v6561 = vrot.slane %v6333, 1
        %v6562 = vrot.slane %v6335, 1
        %v6563 = vsel %vm4372, %v6561, %v6562
        %v6564 = vrot.slane %v6334, 1
        %v6565 = vrot.slane %v6336, 1
        %v6566 = vsel %vm4372, %v6564, %v6565
        %v6567 = vrot.slane %v6337, 1
        %v6568 = vsel %vm4372, %v6562, %v6567
        %v6569 = vrot.slane %v6338, 1
        %v6570 = vsel %vm4372, %v6565, %v6569
        %v6571 = vrot.slane %v6339, 1
        %v6572 = vrot.slane %v6341, 1
        %v6573 = vsel %vm4372, %v6571, %v6572
        %v6574 = vrot.slane %v6340, 1
        %v6575 = vrot.slane %v6342, 1
        %v6576 = vsel %vm4372, %v6574, %v6575
        %v6577 = vrot.slane %v6343, 1
        %v6578 = vsel %vm4372, %v6572, %v6577
        %v6579 = vrot.slane %v6344, 1
        %v6580 = vsel %vm4372, %v6575, %v6579
        %v6581 = vrot.slane %v6345, 1
        %v6582 = vrot.slane %v6347, 1
        %v6583 = vsel %vm4372, %v6581, %v6582
        %v6584 = vrot.slane %v6346, 1
        %v6585 = vrot.slane %v6348, 1
        %v6586 = vsel %vm4372, %v6584, %v6585
        %v6587 = vrot.slane %v6349, 1
        %v6588 = vsel %vm4372, %v6582, %v6587
        %v6589 = vrot.slane %v6350, 1
        %v6590 = vsel %vm4372, %v6585, %v6589
        %v6591 = vrot.slane %v6351, 1
        %v6592 = vrot.slane %v6353, 1
        %v6593 = vsel %vm4372, %v6591, %v6592
        %v6594 = vrot.slane %v6352, 1
        %v6595 = vrot.slane %v6354, 1
        %v6596 = vsel %vm4372, %v6594, %v6595
        %v6597 = vrot.slane %v6355, 1
        %v6598 = vsel %vm4372, %v6592, %v6597
        %v6599 = vrot.slane %v6356, 1
        %v6600 = vsel %vm4372, %v6595, %v6599
        %v6601 = vrot.slane %v6357, 1
        %v6602 = vrot.slane %v6359, 1
        %v6603 = vsel %vm4372, %v6601, %v6602
        %v6604 = vrot.slane %v6358, 1
        %v6605 = vrot.slane %v6360, 1
        %v6606 = vsel %vm4372, %v6604, %v6605
        %v6607 = vrot.slane %v6361, 1
        %v6608 = vsel %vm4372, %v6602, %v6607
        %v6609 = vrot.slane %v6362, 1
        %v6610 = vsel %vm4372, %v6605, %v6609
        %v6611 = vrot.slane %v6363, 1
        %v6612 = vrot.slane %v6365, 1
        %v6613 = vsel %vm4372, %v6611, %v6612
        %v6614 = vrot.slane %v6364, 1
        %v6615 = vrot.slane %v6366, 1
        %v6616 = vsel %vm4372, %v6614, %v6615
        %v6617 = vrot.slane %v6367, 1
        %v6618 = vsel %vm4372, %v6612, %v6617
        %v6619 = vrot.slane %v6368, 1
        %v6620 = vsel %vm4372, %v6615, %v6619
        %v6621 = vrot.slane %v6369, 1
        %v6622 = vrot.slane %v6371, 1
        %v6623 = vsel %vm4372, %v6621, %v6622
        %v6624 = vrot.slane %v6370, 1
        %v6625 = vrot.slane %v6372, 1
        %v6626 = vsel %vm4372, %v6624, %v6625
        %v6627 = vrot.slane %v6373, 1
        %v6628 = vsel %vm4372, %v6622, %v6627
        %v6629 = vrot.slane %v6374, 1
        %v6630 = vsel %vm4372, %v6625, %v6629
        %s6663 = scalar_lea.vmem [#allocation7], 576
        %v6664 = vld [vmem:[%s6663] sm:$0xff]
        %v6665 = vld [vmem:[%s6663 + $0x8] sm:$0xff]
        %v6666 = vld [vmem:[%s6663 + $0x10] sm:$0xff]
        %v6667 = vld [vmem:[%s6663 + $0x18] sm:$0xff]
        %v6668 = vld [vmem:[%s6663 + $0x20] sm:$0xff]
        %v6669 = vld [vmem:[%s6663 + $0x28] sm:$0xff]
        %v6670 = vld [vmem:[%s6663 + $0x30] sm:$0xff]
        %v6671 = vld [vmem:[%s6663 + $0x38] sm:$0xff]
        %v6672 = vld [vmem:[%s6663 + $0x40] sm:$0xff]
        %v6673 = vld [vmem:[%s6663 + $0x48] sm:$0xff]
        %v6674 = vld [vmem:[%s6663 + $0x50] sm:$0xff]
        %v6675 = vld [vmem:[%s6663 + $0x58] sm:$0xff]
        %v6676 = vld [vmem:[%s6663 + $0x60] sm:$0xff]
        %v6677 = vld [vmem:[%s6663 + $0x68] sm:$0xff]
        %v6678 = vld [vmem:[%s6663 + $0x70] sm:$0xff]
        %v6679 = vld [vmem:[%s6663 + $0x78] sm:$0xff]
        %v6680 = vld [vmem:[%s6663 + $0x80] sm:$0xff]
        %v6681 = vld [vmem:[%s6663 + $0x88] sm:$0xff]
        %v6682 = vsel %vm3694, %v6476, 0
        %v6684 = vsel %vm3694, %v6480, 0
        %v6686 = vsel %vm3694, %v6486, 0
        %v6688 = vsel %vm3694, %v6490, 0
        %v6690 = vsel %vm3694, %v6496, 0
        %v6692 = vsel %vm3694, %v6500, 0
        %v6694 = vsel %vm3694, %v6506, 0
        %v6696 = vsel %vm3694, %v6510, 0
        %v6698 = vsel %vm3694, %v6516, 0
        %v6700 = vsel %vm3694, %v6520, 0
        %v6702 = vsel %vm3694, %v6526, 0
        %v6704 = vsel %vm3694, %v6530, 0
        %v6706 = vsel %vm3694, %v6536, 0
        %v6708 = vsel %vm3694, %v6540, 0
        %v6710 = vsel %vm3694, %v6546, 0
        %v6712 = vsel %vm3694, %v6550, 0
        %v6714 = vsel %vm3694, %v6556, 0
        %v6716 = vsel %vm3694, %v6560, 0
        %v6718 = vsel %vm3694, %v6566, 0
        %v6720 = vsel %vm3694, %v6570, 0
        %v6722 = vsel %vm3694, %v6576, 0
        %v6724 = vsel %vm3694, %v6580, 0
        %v6726 = vsel %vm3694, %v6586, 0
        %v6728 = vsel %vm3694, %v6590, 0
        %v6730 = vsel %vm3694, %v6596, 0
        %v6732 = vsel %vm3694, %v6600, 0
        %v6734 = vsel %vm3694, %v6606, 0
        %v6736 = vsel %vm3694, %v6610, 0
        %v6738 = vsel %vm3694, %v6616, 0
        %v6740 = vsel %vm3694, %v6620, 0
        %v6742 = vsel %vm3694, %v6626, 0
        %v6744 = vsel %vm3694, %v6630, 0
        %6746 = vmatpush.msra.mxu0 %v6679
        %6747 = vmatpush.msra.mxu0 %v6678
        %6748 = vmatpush.msra.mxu0 %v6677
        %6749 = vmatpush.msra.mxu0 %v6676
        %6750 = vmatpush.msra.mxu0 %v6675
        %6751 = vmatpush.msra.mxu0 %v6674
        %6752 = vmatpush.msra.mxu0 %v6673
        %6753 = vmatpush.msra.mxu0 %v6672
        %6754 = vmatpush.msra.mxu0 %v6671
        %6755 = vmatpush.msra.mxu0 %v6670
        %6756 = vmatpush.msra.mxu0 %v6669
        %6757 = vmatpush.msra.mxu0 %v6668
        %6758 = vmatpush.msra.mxu0 %v6667
        %6759 = vmatpush.msra.mxu0 %v6666
        %6760 = vmatpush.msra.mxu0 %v6665
        %6761 = vmatpush.msra.mxu0 %v6664
        %6762 = vmatmul.f32.gmra.mxu0 %v6473
        %v6763 = vpop.f32.mrf.mxu0
        %v6764 = vadd.f32 0.0, %v6763
        %6765 = vmatmul.f32.gmra.mxu0 %v6478
        %v6766 = vpop.f32.mrf.mxu0
        %v6767 = vadd.f32 0.0, %v6766
        %6768 = vmatmul.f32.gmra.mxu0 %v6483
        %v6769 = vpop.f32.mrf.mxu0
        %v6770 = vadd.f32 0.0, %v6769
        %6771 = vmatmul.f32.gmra.mxu0 %v6488
        %v6772 = vpop.f32.mrf.mxu0
        %v6773 = vadd.f32 0.0, %v6772
        %6774 = vmatmul.f32.gmra.mxu0 %v6493
        %v6775 = vpop.f32.mrf.mxu0
        %v6776 = vadd.f32 0.0, %v6775
        %6777 = vmatmul.f32.gmra.mxu0 %v6498
        %v6778 = vpop.f32.mrf.mxu0
        %v6779 = vadd.f32 0.0, %v6778
        %6780 = vmatmul.f32.gmra.mxu0 %v6503
        %v6781 = vpop.f32.mrf.mxu0
        %v6782 = vadd.f32 0.0, %v6781
        %6783 = vmatmul.f32.gmra.mxu0 %v6508
        %v6784 = vpop.f32.mrf.mxu0
        %v6785 = vadd.f32 0.0, %v6784
        %6786 = vmatmul.f32.gmra.mxu0 %v6513
        %v6787 = vpop.f32.mrf.mxu0
        %v6788 = vadd.f32 0.0, %v6787
        %6789 = vmatmul.f32.gmra.mxu0 %v6518
        %v6790 = vpop.f32.mrf.mxu0
        %v6791 = vadd.f32 0.0, %v6790
        %6792 = vmatmul.f32.gmra.mxu0 %v6523
        %v6793 = vpop.f32.mrf.mxu0
        %v6794 = vadd.f32 0.0, %v6793
        %6795 = vmatmul.f32.gmra.mxu0 %v6528
        %v6796 = vpop.f32.mrf.mxu0
        %v6797 = vadd.f32 0.0, %v6796
        %6798 = vmatmul.f32.gmra.mxu0 %v6533
        %v6799 = vpop.f32.mrf.mxu0
        %v6800 = vadd.f32 0.0, %v6799
        %6801 = vmatmul.f32.gmra.mxu0 %v6538
        %v6802 = vpop.f32.mrf.mxu0
        %v6803 = vadd.f32 0.0, %v6802
        %6804 = vmatmul.f32.gmra.mxu0 %v6543
        %v6805 = vpop.f32.mrf.mxu0
        %v6806 = vadd.f32 0.0, %v6805
        %6807 = vmatmul.f32.gmra.mxu0 %v6548
        %v6808 = vpop.f32.mrf.mxu0
        %v6809 = vadd.f32 0.0, %v6808
        %6810 = vmatmul.f32.gmra.mxu0 %v6553
        %v6811 = vpop.f32.mrf.mxu0
        %v6812 = vadd.f32 0.0, %v6811
        %6813 = vmatmul.f32.gmra.mxu0 %v6558
        %v6814 = vpop.f32.mrf.mxu0
        %v6815 = vadd.f32 0.0, %v6814
        %6816 = vmatmul.f32.gmra.mxu0 %v6563
        %v6817 = vpop.f32.mrf.mxu0
        %v6818 = vadd.f32 0.0, %v6817
        %6819 = vmatmul.f32.gmra.mxu0 %v6568
        %v6820 = vpop.f32.mrf.mxu0
        %v6821 = vadd.f32 0.0, %v6820
        %6822 = vmatmul.f32.gmra.mxu0 %v6573
        %v6823 = vpop.f32.mrf.mxu0
        %v6824 = vadd.f32 0.0, %v6823
        %6825 = vmatmul.f32.gmra.mxu0 %v6578
        %v6826 = vpop.f32.mrf.mxu0
        %v6827 = vadd.f32 0.0, %v6826
        %6828 = vmatmul.f32.gmra.mxu0 %v6583
        %v6829 = vpop.f32.mrf.mxu0
        %v6830 = vadd.f32 0.0, %v6829
        %6831 = vmatmul.f32.gmra.mxu0 %v6588
        %v6832 = vpop.f32.mrf.mxu0
        %v6833 = vadd.f32 0.0, %v6832
        %6834 = vmatmul.f32.gmra.mxu0 %v6593
        %v6835 = vpop.f32.mrf.mxu0
        %v6836 = vadd.f32 0.0, %v6835
        %6837 = vmatmul.f32.gmra.mxu0 %v6598
        %v6838 = vpop.f32.mrf.mxu0
        %v6839 = vadd.f32 0.0, %v6838
        %6840 = vmatmul.f32.gmra.mxu0 %v6603
        %v6841 = vpop.f32.mrf.mxu0
        %v6842 = vadd.f32 0.0, %v6841
        %6843 = vmatmul.f32.gmra.mxu0 %v6608
        %v6844 = vpop.f32.mrf.mxu0
        %v6845 = vadd.f32 0.0, %v6844
        %6846 = vmatmul.f32.gmra.mxu0 %v6613
        %v6847 = vpop.f32.mrf.mxu0
        %v6848 = vadd.f32 0.0, %v6847
        %6849 = vmatmul.f32.gmra.mxu0 %v6618
        %v6850 = vpop.f32.mrf.mxu0
        %v6851 = vadd.f32 0.0, %v6850
        %6852 = vmatmul.f32.gmra.mxu0 %v6623
        %v6853 = vpop.f32.mrf.mxu0
        %v6854 = vadd.f32 0.0, %v6853
        %6855 = vmatmul.f32.gmra.mxu0 %v6628
        %v6856 = vpop.f32.mrf.mxu0
        %v6857 = vadd.f32 0.0, %v6856
        %6858 = vdwg.mxu0
        %6859 = vmatpush.msra.mxu0 0.0
        %6860 = vmatpush.msra.mxu0 0.0
        %6861 = vmatpush.msra.mxu0 0.0
        %6862 = vmatpush.msra.mxu0 0.0
        %6863 = vmatpush.msra.mxu0 0.0
        %6864 = vmatpush.msra.mxu0 0.0
        %6865 = vmatpush.msra.mxu0 0.0
        %6866 = vmatpush.msra.mxu0 0.0
        %6867 = vmatpush.msra.mxu0 0.0
        %6868 = vmatpush.msra.mxu0 0.0
        %6869 = vmatpush.msra.mxu0 0.0
        %6870 = vmatpush.msra.mxu0 0.0
        %6871 = vmatpush.msra.mxu0 0.0
        %6872 = vmatpush.msra.mxu0 0.0
        %6873 = vmatpush.msra.mxu0 %v6681
        %6874 = vmatpush.msra.mxu0 %v6680
        %6875 = vmatmul.f32.gmra.mxu0 %v6682
        %v6876 = vpop.f32.mrf.mxu0
        %v6877 = vadd.f32 %v6764, %v6876
        %6878 = vmatmul.f32.gmra.mxu0 %v6684
        %v6879 = vpop.f32.mrf.mxu0
        %v6880 = vadd.f32 %v6767, %v6879
        %6881 = vmatmul.f32.gmra.mxu0 %v6686
        %v6882 = vpop.f32.mrf.mxu0
        %v6883 = vadd.f32 %v6770, %v6882
        %6884 = vmatmul.f32.gmra.mxu0 %v6688
        %v6885 = vpop.f32.mrf.mxu0
        %v6886 = vadd.f32 %v6773, %v6885
        %6887 = vmatmul.f32.gmra.mxu0 %v6690
        %v6888 = vpop.f32.mrf.mxu0
        %v6889 = vadd.f32 %v6776, %v6888
        %6890 = vmatmul.f32.gmra.mxu0 %v6692
        %v6891 = vpop.f32.mrf.mxu0
        %v6892 = vadd.f32 %v6779, %v6891
        %6893 = vmatmul.f32.gmra.mxu0 %v6694
        %v6894 = vpop.f32.mrf.mxu0
        %v6895 = vadd.f32 %v6782, %v6894
        %6896 = vmatmul.f32.gmra.mxu0 %v6696
        %v6897 = vpop.f32.mrf.mxu0
        %v6898 = vadd.f32 %v6785, %v6897
        %6899 = vmatmul.f32.gmra.mxu0 %v6698
        %v6900 = vpop.f32.mrf.mxu0
        %v6901 = vadd.f32 %v6788, %v6900
        %6902 = vmatmul.f32.gmra.mxu0 %v6700
        %v6903 = vpop.f32.mrf.mxu0
        %v6904 = vadd.f32 %v6791, %v6903
        %6905 = vmatmul.f32.gmra.mxu0 %v6702
        %v6906 = vpop.f32.mrf.mxu0
        %v6907 = vadd.f32 %v6794, %v6906
        %6908 = vmatmul.f32.gmra.mxu0 %v6704
        %v6909 = vpop.f32.mrf.mxu0
        %v6910 = vadd.f32 %v6797, %v6909
        %6911 = vmatmul.f32.gmra.mxu0 %v6706
        %v6912 = vpop.f32.mrf.mxu0
        %v6913 = vadd.f32 %v6800, %v6912
        %6914 = vmatmul.f32.gmra.mxu0 %v6708
        %v6915 = vpop.f32.mrf.mxu0
        %v6916 = vadd.f32 %v6803, %v6915
        %6917 = vmatmul.f32.gmra.mxu0 %v6710
        %v6918 = vpop.f32.mrf.mxu0
        %v6919 = vadd.f32 %v6806, %v6918
        %6920 = vmatmul.f32.gmra.mxu0 %v6712
        %v6921 = vpop.f32.mrf.mxu0
        %v6922 = vadd.f32 %v6809, %v6921
        %6923 = vmatmul.f32.gmra.mxu0 %v6714
        %v6924 = vpop.f32.mrf.mxu0
        %v6925 = vadd.f32 %v6812, %v6924
        %6926 = vmatmul.f32.gmra.mxu0 %v6716
        %v6927 = vpop.f32.mrf.mxu0
        %v6928 = vadd.f32 %v6815, %v6927
        %6929 = vmatmul.f32.gmra.mxu0 %v6718
        %v6930 = vpop.f32.mrf.mxu0
        %v6931 = vadd.f32 %v6818, %v6930
        %6932 = vmatmul.f32.gmra.mxu0 %v6720
        %v6933 = vpop.f32.mrf.mxu0
        %v6934 = vadd.f32 %v6821, %v6933
        %6935 = vmatmul.f32.gmra.mxu0 %v6722
        %v6936 = vpop.f32.mrf.mxu0
        %v6937 = vadd.f32 %v6824, %v6936
        %6938 = vmatmul.f32.gmra.mxu0 %v6724
        %v6939 = vpop.f32.mrf.mxu0
        %v6940 = vadd.f32 %v6827, %v6939
        %6941 = vmatmul.f32.gmra.mxu0 %v6726
        %v6942 = vpop.f32.mrf.mxu0
        %v6943 = vadd.f32 %v6830, %v6942
        %6944 = vmatmul.f32.gmra.mxu0 %v6728
        %v6945 = vpop.f32.mrf.mxu0
        %v6946 = vadd.f32 %v6833, %v6945
        %6947 = vmatmul.f32.gmra.mxu0 %v6730
        %v6948 = vpop.f32.mrf.mxu0
        %v6949 = vadd.f32 %v6836, %v6948
        %6950 = vmatmul.f32.gmra.mxu0 %v6732
        %v6951 = vpop.f32.mrf.mxu0
        %v6952 = vadd.f32 %v6839, %v6951
        %6953 = vmatmul.f32.gmra.mxu0 %v6734
        %v6954 = vpop.f32.mrf.mxu0
        %v6955 = vadd.f32 %v6842, %v6954
        %6956 = vmatmul.f32.gmra.mxu0 %v6736
        %v6957 = vpop.f32.mrf.mxu0
        %v6958 = vadd.f32 %v6845, %v6957
        %6959 = vmatmul.f32.gmra.mxu0 %v6738
        %v6960 = vpop.f32.mrf.mxu0
        %v6961 = vadd.f32 %v6848, %v6960
        %6962 = vmatmul.f32.gmra.mxu0 %v6740
        %v6963 = vpop.f32.mrf.mxu0
        %v6964 = vadd.f32 %v6851, %v6963
        %6965 = vmatmul.f32.gmra.mxu0 %v6742
        %v6966 = vpop.f32.mrf.mxu0
        %v6967 = vadd.f32 %v6854, %v6966
        %6968 = vmatmul.f32.gmra.mxu0 %v6744
        %v6969 = vpop.f32.mrf.mxu0
        %v6970 = vadd.f32 %v6857, %v6969
        %6971 = vdwg.mxu0
        %v6972 = vadd.f32 %v6247, %v6877
        %v6973 = vadd.f32 %v6248, %v6880
        %v6974 = vadd.f32 %v6249, %v6883
        %v6975 = vadd.f32 %v6250, %v6886
        %v6976 = vadd.f32 %v6251, %v6889
        %v6977 = vadd.f32 %v6252, %v6892
        %v6978 = vadd.f32 %v6253, %v6895
        %v6979 = vadd.f32 %v6254, %v6898
        %v6980 = vadd.f32 %v6255, %v6901
        %v6981 = vadd.f32 %v6256, %v6904
        %v6982 = vadd.f32 %v6257, %v6907
        %v6983 = vadd.f32 %v6258, %v6910
        %v6984 = vadd.f32 %v6259, %v6913
        %v6985 = vadd.f32 %v6260, %v6916
        %v6986 = vadd.f32 %v6261, %v6919
        %v6987 = vadd.f32 %v6262, %v6922
        %v6988 = vadd.f32 %v6263, %v6925
        %v6989 = vadd.f32 %v6264, %v6928
        %v6990 = vadd.f32 %v6265, %v6931
        %v6991 = vadd.f32 %v6266, %v6934
        %v6992 = vadd.f32 %v6267, %v6937
        %v6993 = vadd.f32 %v6268, %v6940
        %v6994 = vadd.f32 %v6269, %v6943
        %v6995 = vadd.f32 %v6270, %v6946
        %v6996 = vadd.f32 %v6271, %v6949
        %v6997 = vadd.f32 %v6272, %v6952
        %v6998 = vadd.f32 %v6273, %v6955
        %v6999 = vadd.f32 %v6274, %v6958
        %v7000 = vadd.f32 %v6275, %v6961
        %v7001 = vadd.f32 %v6276, %v6964
        %v7002 = vadd.f32 %v6277, %v6967
        %v7003 = vadd.f32 %v6278, %v6970
        %v7004 = vld [vmem:[%s4028] sm:$0xfc]
        %v7005 = vld [vmem:[%s4028 + $0x8] sm:$0xfc]
        %v7006 = vld [vmem:[%s4028 + $0x20] sm:$0x3]
        %v7007 = vld [vmem:[%s4028 + $0x28] sm:$0x3]
        %v7008 = vld [vmem:[%s4028 + $0x30] sm:$0xfc]
        %v7009 = vld [vmem:[%s4028 + $0x38] sm:$0xfc]
        %v7010 = vld [vmem:[%s4028 + $0x50] sm:$0x3]
        %v7011 = vld [vmem:[%s4028 + $0x58] sm:$0x3]
        %v7012 = vld [vmem:[%s4028 + $0x60] sm:$0xfc]
        %v7013 = vld [vmem:[%s4028 + $0x68] sm:$0xfc]
        %v7014 = vld [vmem:[%s4028 + $0x80] sm:$0x3]
        %v7015 = vld [vmem:[%s4028 + $0x88] sm:$0x3]
        %v7016 = vld [vmem:[%s4028 + $0x90] sm:$0xfc]
        %v7017 = vld [vmem:[%s4028 + $0x98] sm:$0xfc]
        %v7018 = vld [vmem:[%s4028 + $0xb0] sm:$0x3]
        %v7019 = vld [vmem:[%s4028 + $0xb8] sm:$0x3]
        %v7020 = vld [vmem:[%s4028 + $0xc0] sm:$0xfc]
        %v7021 = vld [vmem:[%s4028 + $0xc8] sm:$0xfc]
        %v7022 = vld [vmem:[%s4028 + $0xe0] sm:$0x3]
        %v7023 = vld [vmem:[%s4028 + $0xe8] sm:$0x3]
        %v7024 = vld [vmem:[%s4028 + $0xf0] sm:$0xfc]
        %v7025 = vld [vmem:[%s4028 + $0xf8] sm:$0xfc]
        %v7026 = vld [vmem:[%s4028 + $0x110] sm:$0x3]
        %v7027 = vld [vmem:[%s4028 + $0x118] sm:$0x3]
        %v7028 = vld [vmem:[%s4028 + $0x120] sm:$0xfc]
        %v7029 = vld [vmem:[%s4028 + $0x128] sm:$0xfc]
        %v7030 = vld [vmem:[%s4028 + $0x140] sm:$0x3]
        %v7031 = vld [vmem:[%s4028 + $0x148] sm:$0x3]
        %v7032 = vld [vmem:[%s4028 + $0x150] sm:$0xfc]
        %v7033 = vld [vmem:[%s4028 + $0x158] sm:$0xfc]
        %v7034 = vld [vmem:[%s4028 + $0x170] sm:$0x3]
        %v7035 = vld [vmem:[%s4028 + $0x178] sm:$0x3]
        %v7036 = vld [vmem:[%s4028 + $0x180] sm:$0xfc]
        %v7037 = vld [vmem:[%s4028 + $0x188] sm:$0xfc]
        %v7038 = vld [vmem:[%s4028 + $0x1a0] sm:$0x3]
        %v7039 = vld [vmem:[%s4028 + $0x1a8] sm:$0x3]
        %v7040 = vld [vmem:[%s4028 + $0x1b0] sm:$0xfc]
        %v7041 = vld [vmem:[%s4028 + $0x1b8] sm:$0xfc]
        %v7042 = vld [vmem:[%s4028 + $0x1d0] sm:$0x3]
        %v7043 = vld [vmem:[%s4028 + $0x1d8] sm:$0x3]
        %v7044 = vld [vmem:[%s4028 + $0x1e0] sm:$0xfc]
        %v7045 = vld [vmem:[%s4028 + $0x1e8] sm:$0xfc]
        %v7046 = vld [vmem:[%s4028 + $0x200] sm:$0x3]
        %v7047 = vld [vmem:[%s4028 + $0x208] sm:$0x3]
        %v7048 = vld [vmem:[%s4028 + $0x210] sm:$0xfc]
        %v7049 = vld [vmem:[%s4028 + $0x218] sm:$0xfc]
        %v7050 = vld [vmem:[%s4028 + $0x230] sm:$0x3]
        %v7051 = vld [vmem:[%s4028 + $0x238] sm:$0x3]
        %v7052 = vld [vmem:[%s4028 + $0x240] sm:$0xfc]
        %v7053 = vld [vmem:[%s4028 + $0x248] sm:$0xfc]
        %v7054 = vld [vmem:[%s4028 + $0x260] sm:$0x3]
        %v7055 = vld [vmem:[%s4028 + $0x268] sm:$0x3]
        %v7056 = vld [vmem:[%s4028 + $0x270] sm:$0xfc]
        %v7057 = vld [vmem:[%s4028 + $0x278] sm:$0xfc]
        %v7058 = vld [vmem:[%s4028 + $0x290] sm:$0x3]
        %v7059 = vld [vmem:[%s4028 + $0x298] sm:$0x3]
        %v7060 = vld [vmem:[%s4028 + $0x2a0] sm:$0xfc]
        %v7061 = vld [vmem:[%s4028 + $0x2a8] sm:$0xfc]
        %v7062 = vld [vmem:[%s4028 + $0x2c0] sm:$0x3]
        %v7063 = vld [vmem:[%s4028 + $0x2c8] sm:$0x3]
        %v7064 = vld [vmem:[%s4028 + $0x2d0] sm:$0xfc]
        %v7065 = vld [vmem:[%s4028 + $0x2d8] sm:$0xfc]
        %v7066 = vld [vmem:[%s4028 + $0x2f0] sm:$0x3]
        %v7067 = vld [vmem:[%s4028 + $0x2f8] sm:$0x3]
        %v7132 = vrot.slane %v7004, 2
        %v7133 = vrot.slane %v6281, 2
        %v7134 = vsel %vm5308, %v7132, %v7133
        %v7135 = vrot.slane %v7005, 2
        %v7136 = vrot.slane %v6282, 2
        %v7137 = vsel %vm5308, %v7135, %v7136
        %v7138 = vrot.slane %v7006, 2
        %v7139 = vsel %vm5308, %v7133, %v7138
        %v7140 = vrot.slane %v7007, 2
        %v7141 = vsel %vm5308, %v7136, %v7140
        %v7142 = vrot.slane %v7008, 2
        %v7143 = vrot.slane %v6287, 2
        %v7144 = vsel %vm5308, %v7142, %v7143
        %v7145 = vrot.slane %v7009, 2
        %v7146 = vrot.slane %v6288, 2
        %v7147 = vsel %vm5308, %v7145, %v7146
        %v7148 = vrot.slane %v7010, 2
        %v7149 = vsel %vm5308, %v7143, %v7148
        %v7150 = vrot.slane %v7011, 2
        %v7151 = vsel %vm5308, %v7146, %v7150
        %v7152 = vrot.slane %v7012, 2
        %v7153 = vrot.slane %v6293, 2
        %v7154 = vsel %vm5308, %v7152, %v7153
        %v7155 = vrot.slane %v7013, 2
        %v7156 = vrot.slane %v6294, 2
        %v7157 = vsel %vm5308, %v7155, %v7156
        %v7158 = vrot.slane %v7014, 2
        %v7159 = vsel %vm5308, %v7153, %v7158
        %v7160 = vrot.slane %v7015, 2
        %v7161 = vsel %vm5308, %v7156, %v7160
        %v7162 = vrot.slane %v7016, 2
        %v7163 = vrot.slane %v6299, 2
        %v7164 = vsel %vm5308, %v7162, %v7163
        %v7165 = vrot.slane %v7017, 2
        %v7166 = vrot.slane %v6300, 2
        %v7167 = vsel %vm5308, %v7165, %v7166
        %v7168 = vrot.slane %v7018, 2
        %v7169 = vsel %vm5308, %v7163, %v7168
        %v7170 = vrot.slane %v7019, 2
        %v7171 = vsel %vm5308, %v7166, %v7170
        %v7172 = vrot.slane %v7020, 2
        %v7173 = vrot.slane %v6305, 2
        %v7174 = vsel %vm5308, %v7172, %v7173
        %v7175 = vrot.slane %v7021, 2
        %v7176 = vrot.slane %v6306, 2
        %v7177 = vsel %vm5308, %v7175, %v7176
        %v7178 = vrot.slane %v7022, 2
        %v7179 = vsel %vm5308, %v7173, %v7178
        %v7180 = vrot.slane %v7023, 2
        %v7181 = vsel %vm5308, %v7176, %v7180
        %v7182 = vrot.slane %v7024, 2
        %v7183 = vrot.slane %v6311, 2
        %v7184 = vsel %vm5308, %v7182, %v7183
        %v7185 = vrot.slane %v7025, 2
        %v7186 = vrot.slane %v6312, 2
        %v7187 = vsel %vm5308, %v7185, %v7186
        %v7188 = vrot.slane %v7026, 2
        %v7189 = vsel %vm5308, %v7183, %v7188
        %v7190 = vrot.slane %v7027, 2
        %v7191 = vsel %vm5308, %v7186, %v7190
        %v7192 = vrot.slane %v7028, 2
        %v7193 = vrot.slane %v6317, 2
        %v7194 = vsel %vm5308, %v7192, %v7193
        %v7195 = vrot.slane %v7029, 2
        %v7196 = vrot.slane %v6318, 2
        %v7197 = vsel %vm5308, %v7195, %v7196
        %v7198 = vrot.slane %v7030, 2
        %v7199 = vsel %vm5308, %v7193, %v7198
        %v7200 = vrot.slane %v7031, 2
        %v7201 = vsel %vm5308, %v7196, %v7200
        %v7202 = vrot.slane %v7032, 2
        %v7203 = vrot.slane %v6323, 2
        %v7204 = vsel %vm5308, %v7202, %v7203
        %v7205 = vrot.slane %v7033, 2
        %v7206 = vrot.slane %v6324, 2
        %v7207 = vsel %vm5308, %v7205, %v7206
        %v7208 = vrot.slane %v7034, 2
        %v7209 = vsel %vm5308, %v7203, %v7208
        %v7210 = vrot.slane %v7035, 2
        %v7211 = vsel %vm5308, %v7206, %v7210
        %v7212 = vrot.slane %v7036, 2
        %v7213 = vrot.slane %v6329, 2
        %v7214 = vsel %vm5308, %v7212, %v7213
        %v7215 = vrot.slane %v7037, 2
        %v7216 = vrot.slane %v6330, 2
        %v7217 = vsel %vm5308, %v7215, %v7216
        %v7218 = vrot.slane %v7038, 2
        %v7219 = vsel %vm5308, %v7213, %v7218
        %v7220 = vrot.slane %v7039, 2
        %v7221 = vsel %vm5308, %v7216, %v7220
        %v7222 = vrot.slane %v7040, 2
        %v7223 = vrot.slane %v6335, 2
        %v7224 = vsel %vm5308, %v7222, %v7223
        %v7225 = vrot.slane %v7041, 2
        %v7226 = vrot.slane %v6336, 2
        %v7227 = vsel %vm5308, %v7225, %v7226
        %v7228 = vrot.slane %v7042, 2
        %v7229 = vsel %vm5308, %v7223, %v7228
        %v7230 = vrot.slane %v7043, 2
        %v7231 = vsel %vm5308, %v7226, %v7230
        %v7232 = vrot.slane %v7044, 2
        %v7233 = vrot.slane %v6341, 2
        %v7234 = vsel %vm5308, %v7232, %v7233
        %v7235 = vrot.slane %v7045, 2
        %v7236 = vrot.slane %v6342, 2
        %v7237 = vsel %vm5308, %v7235, %v7236
        %v7238 = vrot.slane %v7046, 2
        %v7239 = vsel %vm5308, %v7233, %v7238
        %v7240 = vrot.slane %v7047, 2
        %v7241 = vsel %vm5308, %v7236, %v7240
        %v7242 = vrot.slane %v7048, 2
        %v7243 = vrot.slane %v6347, 2
        %v7244 = vsel %vm5308, %v7242, %v7243
        %v7245 = vrot.slane %v7049, 2
        %v7246 = vrot.slane %v6348, 2
        %v7247 = vsel %vm5308, %v7245, %v7246
        %v7248 = vrot.slane %v7050, 2
        %v7249 = vsel %vm5308, %v7243, %v7248
        %v7250 = vrot.slane %v7051, 2
        %v7251 = vsel %vm5308, %v7246, %v7250
        %v7252 = vrot.slane %v7052, 2
        %v7253 = vrot.slane %v6353, 2
        %v7254 = vsel %vm5308, %v7252, %v7253
        %v7255 = vrot.slane %v7053, 2
        %v7256 = vrot.slane %v6354, 2
        %v7257 = vsel %vm5308, %v7255, %v7256
        %v7258 = vrot.slane %v7054, 2
        %v7259 = vsel %vm5308, %v7253, %v7258
        %v7260 = vrot.slane %v7055, 2
        %v7261 = vsel %vm5308, %v7256, %v7260
        %v7262 = vrot.slane %v7056, 2
        %v7263 = vrot.slane %v6359, 2
        %v7264 = vsel %vm5308, %v7262, %v7263
        %v7265 = vrot.slane %v7057, 2
        %v7266 = vrot.slane %v6360, 2
        %v7267 = vsel %vm5308, %v7265, %v7266
        %v7268 = vrot.slane %v7058, 2
        %v7269 = vsel %vm5308, %v7263, %v7268
        %v7270 = vrot.slane %v7059, 2
        %v7271 = vsel %vm5308, %v7266, %v7270
        %v7272 = vrot.slane %v7060, 2
        %v7273 = vrot.slane %v6365, 2
        %v7274 = vsel %vm5308, %v7272, %v7273
        %v7275 = vrot.slane %v7061, 2
        %v7276 = vrot.slane %v6366, 2
        %v7277 = vsel %vm5308, %v7275, %v7276
        %v7278 = vrot.slane %v7062, 2
        %v7279 = vsel %vm5308, %v7273, %v7278
        %v7280 = vrot.slane %v7063, 2
        %v7281 = vsel %vm5308, %v7276, %v7280
        %v7282 = vrot.slane %v7064, 2
        %v7283 = vrot.slane %v6371, 2
        %v7284 = vsel %vm5308, %v7282, %v7283
        %v7285 = vrot.slane %v7065, 2
        %v7286 = vrot.slane %v6372, 2
        %v7287 = vsel %vm5308, %v7285, %v7286
        %v7288 = vrot.slane %v7066, 2
        %v7289 = vsel %vm5308, %v7283, %v7288
        %v7290 = vrot.slane %v7067, 2
        %v7291 = vsel %vm5308, %v7286, %v7290
        %s7324 = scalar_lea.vmem [#allocation7], 720
        %v7325 = vld [vmem:[%s7324] sm:$0xff]
        %v7326 = vld [vmem:[%s7324 + $0x8] sm:$0xff]
        %v7327 = vld [vmem:[%s7324 + $0x10] sm:$0xff]
        %v7328 = vld [vmem:[%s7324 + $0x18] sm:$0xff]
        %v7329 = vld [vmem:[%s7324 + $0x20] sm:$0xff]
        %v7330 = vld [vmem:[%s7324 + $0x28] sm:$0xff]
        %v7331 = vld [vmem:[%s7324 + $0x30] sm:$0xff]
        %v7332 = vld [vmem:[%s7324 + $0x38] sm:$0xff]
        %v7333 = vld [vmem:[%s7324 + $0x40] sm:$0xff]
        %v7334 = vld [vmem:[%s7324 + $0x48] sm:$0xff]
        %v7335 = vld [vmem:[%s7324 + $0x50] sm:$0xff]
        %v7336 = vld [vmem:[%s7324 + $0x58] sm:$0xff]
        %v7337 = vld [vmem:[%s7324 + $0x60] sm:$0xff]
        %v7338 = vld [vmem:[%s7324 + $0x68] sm:$0xff]
        %v7339 = vld [vmem:[%s7324 + $0x70] sm:$0xff]
        %v7340 = vld [vmem:[%s7324 + $0x78] sm:$0xff]
        %v7341 = vld [vmem:[%s7324 + $0x80] sm:$0xff]
        %v7342 = vld [vmem:[%s7324 + $0x88] sm:$0xff]
        %v7343 = vsel %vm3694, %v7137, 0
        %v7345 = vsel %vm3694, %v7141, 0
        %v7347 = vsel %vm3694, %v7147, 0
        %v7349 = vsel %vm3694, %v7151, 0
        %v7351 = vsel %vm3694, %v7157, 0
        %v7353 = vsel %vm3694, %v7161, 0
        %v7355 = vsel %vm3694, %v7167, 0
        %v7357 = vsel %vm3694, %v7171, 0
        %v7359 = vsel %vm3694, %v7177, 0
        %v7361 = vsel %vm3694, %v7181, 0
        %v7363 = vsel %vm3694, %v7187, 0
        %v7365 = vsel %vm3694, %v7191, 0
        %v7367 = vsel %vm3694, %v7197, 0
        %v7369 = vsel %vm3694, %v7201, 0
        %v7371 = vsel %vm3694, %v7207, 0
        %v7373 = vsel %vm3694, %v7211, 0
        %v7375 = vsel %vm3694, %v7217, 0
        %v7377 = vsel %vm3694, %v7221, 0
        %v7379 = vsel %vm3694, %v7227, 0
        %v7381 = vsel %vm3694, %v7231, 0
        %v7383 = vsel %vm3694, %v7237, 0
        %v7385 = vsel %vm3694, %v7241, 0
        %v7387 = vsel %vm3694, %v7247, 0
        %v7389 = vsel %vm3694, %v7251, 0
        %v7391 = vsel %vm3694, %v7257, 0
        %v7393 = vsel %vm3694, %v7261, 0
        %v7395 = vsel %vm3694, %v7267, 0
        %v7397 = vsel %vm3694, %v7271, 0
        %v7399 = vsel %vm3694, %v7277, 0
        %v7401 = vsel %vm3694, %v7281, 0
        %v7403 = vsel %vm3694, %v7287, 0
        %v7405 = vsel %vm3694, %v7291, 0
        %7407 = vmatpush.msra.mxu0 %v7340
        %7408 = vmatpush.msra.mxu0 %v7339
        %7409 = vmatpush.msra.mxu0 %v7338
        %7410 = vmatpush.msra.mxu0 %v7337
        %7411 = vmatpush.msra.mxu0 %v7336
        %7412 = vmatpush.msra.mxu0 %v7335
        %7413 = vmatpush.msra.mxu0 %v7334
        %7414 = vmatpush.msra.mxu0 %v7333
        %7415 = vmatpush.msra.mxu0 %v7332
        %7416 = vmatpush.msra.mxu0 %v7331
        %7417 = vmatpush.msra.mxu0 %v7330
        %7418 = vmatpush.msra.mxu0 %v7329
        %7419 = vmatpush.msra.mxu0 %v7328
        %7420 = vmatpush.msra.mxu0 %v7327
        %7421 = vmatpush.msra.mxu0 %v7326
        %7422 = vmatpush.msra.mxu0 %v7325
        %7423 = vmatmul.f32.gmra.mxu0 %v7134
        %v7424 = vpop.f32.mrf.mxu0
        %v7425 = vadd.f32 0.0, %v7424
        %7426 = vmatmul.f32.gmra.mxu0 %v7139
        %v7427 = vpop.f32.mrf.mxu0
        %v7428 = vadd.f32 0.0, %v7427
        %7429 = vmatmul.f32.gmra.mxu0 %v7144
        %v7430 = vpop.f32.mrf.mxu0
        %v7431 = vadd.f32 0.0, %v7430
        %7432 = vmatmul.f32.gmra.mxu0 %v7149
        %v7433 = vpop.f32.mrf.mxu0
        %v7434 = vadd.f32 0.0, %v7433
        %7435 = vmatmul.f32.gmra.mxu0 %v7154
        %v7436 = vpop.f32.mrf.mxu0
        %v7437 = vadd.f32 0.0, %v7436
        %7438 = vmatmul.f32.gmra.mxu0 %v7159
        %v7439 = vpop.f32.mrf.mxu0
        %v7440 = vadd.f32 0.0, %v7439
        %7441 = vmatmul.f32.gmra.mxu0 %v7164
        %v7442 = vpop.f32.mrf.mxu0
        %v7443 = vadd.f32 0.0, %v7442
        %7444 = vmatmul.f32.gmra.mxu0 %v7169
        %v7445 = vpop.f32.mrf.mxu0
        %v7446 = vadd.f32 0.0, %v7445
        %7447 = vmatmul.f32.gmra.mxu0 %v7174
        %v7448 = vpop.f32.mrf.mxu0
        %v7449 = vadd.f32 0.0, %v7448
        %7450 = vmatmul.f32.gmra.mxu0 %v7179
        %v7451 = vpop.f32.mrf.mxu0
        %v7452 = vadd.f32 0.0, %v7451
        %7453 = vmatmul.f32.gmra.mxu0 %v7184
        %v7454 = vpop.f32.mrf.mxu0
        %v7455 = vadd.f32 0.0, %v7454
        %7456 = vmatmul.f32.gmra.mxu0 %v7189
        %v7457 = vpop.f32.mrf.mxu0
        %v7458 = vadd.f32 0.0, %v7457
        %7459 = vmatmul.f32.gmra.mxu0 %v7194
        %v7460 = vpop.f32.mrf.mxu0
        %v7461 = vadd.f32 0.0, %v7460
        %7462 = vmatmul.f32.gmra.mxu0 %v7199
        %v7463 = vpop.f32.mrf.mxu0
        %v7464 = vadd.f32 0.0, %v7463
        %7465 = vmatmul.f32.gmra.mxu0 %v7204
        %v7466 = vpop.f32.mrf.mxu0
        %v7467 = vadd.f32 0.0, %v7466
        %7468 = vmatmul.f32.gmra.mxu0 %v7209
        %v7469 = vpop.f32.mrf.mxu0
        %v7470 = vadd.f32 0.0, %v7469
        %7471 = vmatmul.f32.gmra.mxu0 %v7214
        %v7472 = vpop.f32.mrf.mxu0
        %v7473 = vadd.f32 0.0, %v7472
        %7474 = vmatmul.f32.gmra.mxu0 %v7219
        %v7475 = vpop.f32.mrf.mxu0
        %v7476 = vadd.f32 0.0, %v7475
        %7477 = vmatmul.f32.gmra.mxu0 %v7224
        %v7478 = vpop.f32.mrf.mxu0
        %v7479 = vadd.f32 0.0, %v7478
        %7480 = vmatmul.f32.gmra.mxu0 %v7229
        %v7481 = vpop.f32.mrf.mxu0
        %v7482 = vadd.f32 0.0, %v7481
        %7483 = vmatmul.f32.gmra.mxu0 %v7234
        %v7484 = vpop.f32.mrf.mxu0
        %v7485 = vadd.f32 0.0, %v7484
        %7486 = vmatmul.f32.gmra.mxu0 %v7239
        %v7487 = vpop.f32.mrf.mxu0
        %v7488 = vadd.f32 0.0, %v7487
        %7489 = vmatmul.f32.gmra.mxu0 %v7244
        %v7490 = vpop.f32.mrf.mxu0
        %v7491 = vadd.f32 0.0, %v7490
        %7492 = vmatmul.f32.gmra.mxu0 %v7249
        %v7493 = vpop.f32.mrf.mxu0
        %v7494 = vadd.f32 0.0, %v7493
        %7495 = vmatmul.f32.gmra.mxu0 %v7254
        %v7496 = vpop.f32.mrf.mxu0
        %v7497 = vadd.f32 0.0, %v7496
        %7498 = vmatmul.f32.gmra.mxu0 %v7259
        %v7499 = vpop.f32.mrf.mxu0
        %v7500 = vadd.f32 0.0, %v7499
        %7501 = vmatmul.f32.gmra.mxu0 %v7264
        %v7502 = vpop.f32.mrf.mxu0
        %v7503 = vadd.f32 0.0, %v7502
        %7504 = vmatmul.f32.gmra.mxu0 %v7269
        %v7505 = vpop.f32.mrf.mxu0
        %v7506 = vadd.f32 0.0, %v7505
        %7507 = vmatmul.f32.gmra.mxu0 %v7274
        %v7508 = vpop.f32.mrf.mxu0
        %v7509 = vadd.f32 0.0, %v7508
        %7510 = vmatmul.f32.gmra.mxu0 %v7279
        %v7511 = vpop.f32.mrf.mxu0
        %v7512 = vadd.f32 0.0, %v7511
        %7513 = vmatmul.f32.gmra.mxu0 %v7284
        %v7514 = vpop.f32.mrf.mxu0
        %v7515 = vadd.f32 0.0, %v7514
        %7516 = vmatmul.f32.gmra.mxu0 %v7289
        %v7517 = vpop.f32.mrf.mxu0
        %v7518 = vadd.f32 0.0, %v7517
        %7519 = vdwg.mxu0
        %7520 = vmatpush.msra.mxu0 0.0
        %7521 = vmatpush.msra.mxu0 0.0
        %7522 = vmatpush.msra.mxu0 0.0
        %7523 = vmatpush.msra.mxu0 0.0
        %7524 = vmatpush.msra.mxu0 0.0
        %7525 = vmatpush.msra.mxu0 0.0
        %7526 = vmatpush.msra.mxu0 0.0
        %7527 = vmatpush.msra.mxu0 0.0
        %7528 = vmatpush.msra.mxu0 0.0
        %7529 = vmatpush.msra.mxu0 0.0
        %7530 = vmatpush.msra.mxu0 0.0
        %7531 = vmatpush.msra.mxu0 0.0
        %7532 = vmatpush.msra.mxu0 0.0
        %7533 = vmatpush.msra.mxu0 0.0
        %7534 = vmatpush.msra.mxu0 %v7342
        %7535 = vmatpush.msra.mxu0 %v7341
        %7536 = vmatmul.f32.gmra.mxu0 %v7343
        %v7537 = vpop.f32.mrf.mxu0
        %v7538 = vadd.f32 %v7425, %v7537
        %7539 = vmatmul.f32.gmra.mxu0 %v7345
        %v7540 = vpop.f32.mrf.mxu0
        %v7541 = vadd.f32 %v7428, %v7540
        %7542 = vmatmul.f32.gmra.mxu0 %v7347
        %v7543 = vpop.f32.mrf.mxu0
        %v7544 = vadd.f32 %v7431, %v7543
        %7545 = vmatmul.f32.gmra.mxu0 %v7349
        %v7546 = vpop.f32.mrf.mxu0
        %v7547 = vadd.f32 %v7434, %v7546
        %7548 = vmatmul.f32.gmra.mxu0 %v7351
        %v7549 = vpop.f32.mrf.mxu0
        %v7550 = vadd.f32 %v7437, %v7549
        %7551 = vmatmul.f32.gmra.mxu0 %v7353
        %v7552 = vpop.f32.mrf.mxu0
        %v7553 = vadd.f32 %v7440, %v7552
        %7554 = vmatmul.f32.gmra.mxu0 %v7355
        %v7555 = vpop.f32.mrf.mxu0
        %v7556 = vadd.f32 %v7443, %v7555
        %7557 = vmatmul.f32.gmra.mxu0 %v7357
        %v7558 = vpop.f32.mrf.mxu0
        %v7559 = vadd.f32 %v7446, %v7558
        %7560 = vmatmul.f32.gmra.mxu0 %v7359
        %v7561 = vpop.f32.mrf.mxu0
        %v7562 = vadd.f32 %v7449, %v7561
        %7563 = vmatmul.f32.gmra.mxu0 %v7361
        %v7564 = vpop.f32.mrf.mxu0
        %v7565 = vadd.f32 %v7452, %v7564
        %7566 = vmatmul.f32.gmra.mxu0 %v7363
        %v7567 = vpop.f32.mrf.mxu0
        %v7568 = vadd.f32 %v7455, %v7567
        %7569 = vmatmul.f32.gmra.mxu0 %v7365
        %v7570 = vpop.f32.mrf.mxu0
        %v7571 = vadd.f32 %v7458, %v7570
        %7572 = vmatmul.f32.gmra.mxu0 %v7367
        %v7573 = vpop.f32.mrf.mxu0
        %v7574 = vadd.f32 %v7461, %v7573
        %7575 = vmatmul.f32.gmra.mxu0 %v7369
        %v7576 = vpop.f32.mrf.mxu0
        %v7577 = vadd.f32 %v7464, %v7576
        %7578 = vmatmul.f32.gmra.mxu0 %v7371
        %v7579 = vpop.f32.mrf.mxu0
        %v7580 = vadd.f32 %v7467, %v7579
        %7581 = vmatmul.f32.gmra.mxu0 %v7373
        %v7582 = vpop.f32.mrf.mxu0
        %v7583 = vadd.f32 %v7470, %v7582
        %7584 = vmatmul.f32.gmra.mxu0 %v7375
        %v7585 = vpop.f32.mrf.mxu0
        %v7586 = vadd.f32 %v7473, %v7585
        %7587 = vmatmul.f32.gmra.mxu0 %v7377
        %v7588 = vpop.f32.mrf.mxu0
        %v7589 = vadd.f32 %v7476, %v7588
        %7590 = vmatmul.f32.gmra.mxu0 %v7379
        %v7591 = vpop.f32.mrf.mxu0
        %v7592 = vadd.f32 %v7479, %v7591
        %7593 = vmatmul.f32.gmra.mxu0 %v7381
        %v7594 = vpop.f32.mrf.mxu0
        %v7595 = vadd.f32 %v7482, %v7594
        %7596 = vmatmul.f32.gmra.mxu0 %v7383
        %v7597 = vpop.f32.mrf.mxu0
        %v7598 = vadd.f32 %v7485, %v7597
        %7599 = vmatmul.f32.gmra.mxu0 %v7385
        %v7600 = vpop.f32.mrf.mxu0
        %v7601 = vadd.f32 %v7488, %v7600
        %7602 = vmatmul.f32.gmra.mxu0 %v7387
        %v7603 = vpop.f32.mrf.mxu0
        %v7604 = vadd.f32 %v7491, %v7603
        %7605 = vmatmul.f32.gmra.mxu0 %v7389
        %v7606 = vpop.f32.mrf.mxu0
        %v7607 = vadd.f32 %v7494, %v7606
        %7608 = vmatmul.f32.gmra.mxu0 %v7391
        %v7609 = vpop.f32.mrf.mxu0
        %v7610 = vadd.f32 %v7497, %v7609
        %7611 = vmatmul.f32.gmra.mxu0 %v7393
        %v7612 = vpop.f32.mrf.mxu0
        %v7613 = vadd.f32 %v7500, %v7612
        %7614 = vmatmul.f32.gmra.mxu0 %v7395
        %v7615 = vpop.f32.mrf.mxu0
        %v7616 = vadd.f32 %v7503, %v7615
        %7617 = vmatmul.f32.gmra.mxu0 %v7397
        %v7618 = vpop.f32.mrf.mxu0
        %v7619 = vadd.f32 %v7506, %v7618
        %7620 = vmatmul.f32.gmra.mxu0 %v7399
        %v7621 = vpop.f32.mrf.mxu0
        %v7622 = vadd.f32 %v7509, %v7621
        %7623 = vmatmul.f32.gmra.mxu0 %v7401
        %v7624 = vpop.f32.mrf.mxu0
        %v7625 = vadd.f32 %v7512, %v7624
        %7626 = vmatmul.f32.gmra.mxu0 %v7403
        %v7627 = vpop.f32.mrf.mxu0
        %v7628 = vadd.f32 %v7515, %v7627
        %7629 = vmatmul.f32.gmra.mxu0 %v7405
        %v7630 = vpop.f32.mrf.mxu0
        %v7631 = vadd.f32 %v7518, %v7630
        %7632 = vdwg.mxu0
        %v7633 = vadd.f32 %v6972, %v7538
        %v7634 = vadd.f32 %v6973, %v7541
        %v7635 = vadd.f32 %v6974, %v7544
        %v7636 = vadd.f32 %v6975, %v7547
        %v7637 = vadd.f32 %v6976, %v7550
        %v7638 = vadd.f32 %v6977, %v7553
        %v7639 = vadd.f32 %v6978, %v7556
        %v7640 = vadd.f32 %v6979, %v7559
        %v7641 = vadd.f32 %v6980, %v7562
        %v7642 = vadd.f32 %v6981, %v7565
        %v7643 = vadd.f32 %v6982, %v7568
        %v7644 = vadd.f32 %v6983, %v7571
        %v7645 = vadd.f32 %v6984, %v7574
        %v7646 = vadd.f32 %v6985, %v7577
        %v7647 = vadd.f32 %v6986, %v7580
        %v7648 = vadd.f32 %v6987, %v7583
        %v7649 = vadd.f32 %v6988, %v7586
        %v7650 = vadd.f32 %v6989, %v7589
        %v7651 = vadd.f32 %v6990, %v7592
        %v7652 = vadd.f32 %v6991, %v7595
        %v7653 = vadd.f32 %v6992, %v7598
        %v7654 = vadd.f32 %v6993, %v7601
        %v7655 = vadd.f32 %v6994, %v7604
        %v7656 = vadd.f32 %v6995, %v7607
        %v7657 = vadd.f32 %v6996, %v7610
        %v7658 = vadd.f32 %v6997, %v7613
        %v7659 = vadd.f32 %v6998, %v7616
        %v7660 = vadd.f32 %v6999, %v7619
        %v7661 = vadd.f32 %v7000, %v7622
        %v7662 = vadd.f32 %v7001, %v7625
        %v7663 = vadd.f32 %v7002, %v7628
        %v7664 = vadd.f32 %v7003, %v7631
        %s7665 = scalar_lea.vmem [#allocation3], 96
        %v7666 = vld [vmem:[%s7665] sm:$0xff]
        %v7667 = vld [vmem:[%s7665 + $0x8] sm:$0xff]
        %v7668 = vld [vmem:[%s7665 + $0x10] sm:$0xff]
        %v7669 = vld [vmem:[%s7665 + $0x18] sm:$0xff]
        %v7670 = vld [vmem:[%s7665 + $0x30] sm:$0xff]
        %v7671 = vld [vmem:[%s7665 + $0x38] sm:$0xff]
        %v7672 = vld [vmem:[%s7665 + $0x40] sm:$0xff]
        %v7673 = vld [vmem:[%s7665 + $0x48] sm:$0xff]
        %v7674 = vld [vmem:[%s7665 + $0x60] sm:$0xff]
        %v7675 = vld [vmem:[%s7665 + $0x68] sm:$0xff]
        %v7676 = vld [vmem:[%s7665 + $0x70] sm:$0xff]
        %v7677 = vld [vmem:[%s7665 + $0x78] sm:$0xff]
        %v7678 = vld [vmem:[%s7665 + $0x90] sm:$0xff]
        %v7679 = vld [vmem:[%s7665 + $0x98] sm:$0xff]
        %v7680 = vld [vmem:[%s7665 + $0xa0] sm:$0xff]
        %v7681 = vld [vmem:[%s7665 + $0xa8] sm:$0xff]
        %v7682 = vld [vmem:[%s7665 + $0xc0] sm:$0xff]
        %v7683 = vld [vmem:[%s7665 + $0xc8] sm:$0xff]
        %v7684 = vld [vmem:[%s7665 + $0xd0] sm:$0xff]
        %v7685 = vld [vmem:[%s7665 + $0xd8] sm:$0xff]
        %v7686 = vld [vmem:[%s7665 + $0xf0] sm:$0xff]
        %v7687 = vld [vmem:[%s7665 + $0xf8] sm:$0xff]
        %v7688 = vld [vmem:[%s7665 + $0x100] sm:$0xff]
        %v7689 = vld [vmem:[%s7665 + $0x108] sm:$0xff]
        %v7690 = vld [vmem:[%s7665 + $0x120] sm:$0xff]
        %v7691 = vld [vmem:[%s7665 + $0x128] sm:$0xff]
        %v7692 = vld [vmem:[%s7665 + $0x130] sm:$0xff]
        %v7693 = vld [vmem:[%s7665 + $0x138] sm:$0xff]
        %v7694 = vld [vmem:[%s7665 + $0x150] sm:$0xff]
        %v7695 = vld [vmem:[%s7665 + $0x158] sm:$0xff]
        %v7696 = vld [vmem:[%s7665 + $0x160] sm:$0xff]
        %v7697 = vld [vmem:[%s7665 + $0x168] sm:$0xff]
        %v7698 = vld [vmem:[%s7665 + $0x180] sm:$0xff]
        %v7699 = vld [vmem:[%s7665 + $0x188] sm:$0xff]
        %v7700 = vld [vmem:[%s7665 + $0x190] sm:$0xff]
        %v7701 = vld [vmem:[%s7665 + $0x198] sm:$0xff]
        %v7702 = vld [vmem:[%s7665 + $0x1b0] sm:$0xff]
        %v7703 = vld [vmem:[%s7665 + $0x1b8] sm:$0xff]
        %v7704 = vld [vmem:[%s7665 + $0x1c0] sm:$0xff]
        %v7705 = vld [vmem:[%s7665 + $0x1c8] sm:$0xff]
        %v7706 = vld [vmem:[%s7665 + $0x1e0] sm:$0xff]
        %v7707 = vld [vmem:[%s7665 + $0x1e8] sm:$0xff]
        %v7708 = vld [vmem:[%s7665 + $0x1f0] sm:$0xff]
        %v7709 = vld [vmem:[%s7665 + $0x1f8] sm:$0xff]
        %v7710 = vld [vmem:[%s7665 + $0x210] sm:$0xff]
        %v7711 = vld [vmem:[%s7665 + $0x218] sm:$0xff]
        %v7712 = vld [vmem:[%s7665 + $0x220] sm:$0xff]
        %v7713 = vld [vmem:[%s7665 + $0x228] sm:$0xff]
        %v7714 = vld [vmem:[%s7665 + $0x240] sm:$0xff]
        %v7715 = vld [vmem:[%s7665 + $0x248] sm:$0xff]
        %v7716 = vld [vmem:[%s7665 + $0x250] sm:$0xff]
        %v7717 = vld [vmem:[%s7665 + $0x258] sm:$0xff]
        %v7718 = vld [vmem:[%s7665 + $0x270] sm:$0xff]
        %v7719 = vld [vmem:[%s7665 + $0x278] sm:$0xff]
        %v7720 = vld [vmem:[%s7665 + $0x280] sm:$0xff]
        %v7721 = vld [vmem:[%s7665 + $0x288] sm:$0xff]
        %v7722 = vld [vmem:[%s7665 + $0x2a0] sm:$0xff]
        %v7723 = vld [vmem:[%s7665 + $0x2a8] sm:$0xff]
        %v7724 = vld [vmem:[%s7665 + $0x2b0] sm:$0xff]
        %v7725 = vld [vmem:[%s7665 + $0x2b8] sm:$0xff]
        %v7726 = vld [vmem:[%s7665 + $0x2d0] sm:$0xff]
        %v7727 = vld [vmem:[%s7665 + $0x2d8] sm:$0xff]
        %v7728 = vld [vmem:[%s7665 + $0x2e0] sm:$0xff]
        %v7729 = vld [vmem:[%s7665 + $0x2e8] sm:$0xff]
        %s7730 = scalar_lea.vmem [#allocation7], 864
        %v7731 = vld [vmem:[%s7730] sm:$0xff]
        %v7732 = vld [vmem:[%s7730 + $0x8] sm:$0xff]
        %v7733 = vld [vmem:[%s7730 + $0x10] sm:$0xff]
        %v7734 = vld [vmem:[%s7730 + $0x18] sm:$0xff]
        %v7735 = vld [vmem:[%s7730 + $0x20] sm:$0xff]
        %v7736 = vld [vmem:[%s7730 + $0x28] sm:$0xff]
        %v7737 = vld [vmem:[%s7730 + $0x30] sm:$0xff]
        %v7738 = vld [vmem:[%s7730 + $0x38] sm:$0xff]
        %v7739 = vld [vmem:[%s7730 + $0x40] sm:$0xff]
        %v7740 = vld [vmem:[%s7730 + $0x48] sm:$0xff]
        %v7741 = vld [vmem:[%s7730 + $0x50] sm:$0xff]
        %v7742 = vld [vmem:[%s7730 + $0x58] sm:$0xff]
        %v7743 = vld [vmem:[%s7730 + $0x60] sm:$0xff]
        %v7744 = vld [vmem:[%s7730 + $0x68] sm:$0xff]
        %v7745 = vld [vmem:[%s7730 + $0x70] sm:$0xff]
        %v7746 = vld [vmem:[%s7730 + $0x78] sm:$0xff]
        %v7747 = vld [vmem:[%s7730 + $0x80] sm:$0xff]
        %v7748 = vld [vmem:[%s7730 + $0x88] sm:$0xff]
        %v7750 = vsel %vm3694, %v7667, 0
        %v7753 = vsel %vm3694, %v7669, 0
        %v7756 = vsel %vm3694, %v7671, 0
        %v7759 = vsel %vm3694, %v7673, 0
        %v7762 = vsel %vm3694, %v7675, 0
        %v7765 = vsel %vm3694, %v7677, 0
        %v7768 = vsel %vm3694, %v7679, 0
        %v7771 = vsel %vm3694, %v7681, 0
        %v7774 = vsel %vm3694, %v7683, 0
        %v7777 = vsel %vm3694, %v7685, 0
        %v7780 = vsel %vm3694, %v7687, 0
        %v7783 = vsel %vm3694, %v7689, 0
        %v7786 = vsel %vm3694, %v7691, 0
        %v7789 = vsel %vm3694, %v7693, 0
        %v7792 = vsel %vm3694, %v7695, 0
        %v7795 = vsel %vm3694, %v7697, 0
        %v7798 = vsel %vm3694, %v7699, 0
        %v7801 = vsel %vm3694, %v7701, 0
        %v7804 = vsel %vm3694, %v7703, 0
        %v7807 = vsel %vm3694, %v7705, 0
        %v7810 = vsel %vm3694, %v7707, 0
        %v7813 = vsel %vm3694, %v7709, 0
        %v7816 = vsel %vm3694, %v7711, 0
        %v7819 = vsel %vm3694, %v7713, 0
        %v7822 = vsel %vm3694, %v7715, 0
        %v7825 = vsel %vm3694, %v7717, 0
        %v7828 = vsel %vm3694, %v7719, 0
        %v7831 = vsel %vm3694, %v7721, 0
        %v7834 = vsel %vm3694, %v7723, 0
        %v7837 = vsel %vm3694, %v7725, 0
        %v7840 = vsel %vm3694, %v7727, 0
        %v7843 = vsel %vm3694, %v7729, 0
        %7845 = vmatpush.msra.mxu0 %v7746
        %7846 = vmatpush.msra.mxu0 %v7745
        %7847 = vmatpush.msra.mxu0 %v7744
        %7848 = vmatpush.msra.mxu0 %v7743
        %7849 = vmatpush.msra.mxu0 %v7742
        %7850 = vmatpush.msra.mxu0 %v7741
        %7851 = vmatpush.msra.mxu0 %v7740
        %7852 = vmatpush.msra.mxu0 %v7739
        %7853 = vmatpush.msra.mxu0 %v7738
        %7854 = vmatpush.msra.mxu0 %v7737
        %7855 = vmatpush.msra.mxu0 %v7736
        %7856 = vmatpush.msra.mxu0 %v7735
        %7857 = vmatpush.msra.mxu0 %v7734
        %7858 = vmatpush.msra.mxu0 %v7733
        %7859 = vmatpush.msra.mxu0 %v7732
        %7860 = vmatpush.msra.mxu0 %v7731
        %7861 = vmatmul.f32.gmra.mxu0 %v7666
        %v7862 = vpop.f32.mrf.mxu0
        %v7863 = vadd.f32 0.0, %v7862
        %7864 = vmatmul.f32.gmra.mxu0 %v7668
        %v7865 = vpop.f32.mrf.mxu0
        %v7866 = vadd.f32 0.0, %v7865
        %7867 = vmatmul.f32.gmra.mxu0 %v7670
        %v7868 = vpop.f32.mrf.mxu0
        %v7869 = vadd.f32 0.0, %v7868
        %7870 = vmatmul.f32.gmra.mxu0 %v7672
        %v7871 = vpop.f32.mrf.mxu0
        %v7872 = vadd.f32 0.0, %v7871
        %7873 = vmatmul.f32.gmra.mxu0 %v7674
        %v7874 = vpop.f32.mrf.mxu0
        %v7875 = vadd.f32 0.0, %v7874
        %7876 = vmatmul.f32.gmra.mxu0 %v7676
        %v7877 = vpop.f32.mrf.mxu0
        %v7878 = vadd.f32 0.0, %v7877
        %7879 = vmatmul.f32.gmra.mxu0 %v7678
        %v7880 = vpop.f32.mrf.mxu0
        %v7881 = vadd.f32 0.0, %v7880
        %7882 = vmatmul.f32.gmra.mxu0 %v7680
        %v7883 = vpop.f32.mrf.mxu0
        %v7884 = vadd.f32 0.0, %v7883
        %7885 = vmatmul.f32.gmra.mxu0 %v7682
        %v7886 = vpop.f32.mrf.mxu0
        %v7887 = vadd.f32 0.0, %v7886
        %7888 = vmatmul.f32.gmra.mxu0 %v7684
        %v7889 = vpop.f32.mrf.mxu0
        %v7890 = vadd.f32 0.0, %v7889
        %7891 = vmatmul.f32.gmra.mxu0 %v7686
        %v7892 = vpop.f32.mrf.mxu0
        %v7893 = vadd.f32 0.0, %v7892
        %7894 = vmatmul.f32.gmra.mxu0 %v7688
        %v7895 = vpop.f32.mrf.mxu0
        %v7896 = vadd.f32 0.0, %v7895
        %7897 = vmatmul.f32.gmra.mxu0 %v7690
        %v7898 = vpop.f32.mrf.mxu0
        %v7899 = vadd.f32 0.0, %v7898
        %7900 = vmatmul.f32.gmra.mxu0 %v7692
        %v7901 = vpop.f32.mrf.mxu0
        %v7902 = vadd.f32 0.0, %v7901
        %7903 = vmatmul.f32.gmra.mxu0 %v7694
        %v7904 = vpop.f32.mrf.mxu0
        %v7905 = vadd.f32 0.0, %v7904
        %7906 = vmatmul.f32.gmra.mxu0 %v7696
        %v7907 = vpop.f32.mrf.mxu0
        %v7908 = vadd.f32 0.0, %v7907
        %7909 = vmatmul.f32.gmra.mxu0 %v7698
        %v7910 = vpop.f32.mrf.mxu0
        %v7911 = vadd.f32 0.0, %v7910
        %7912 = vmatmul.f32.gmra.mxu0 %v7700
        %v7913 = vpop.f32.mrf.mxu0
        %v7914 = vadd.f32 0.0, %v7913
        %7915 = vmatmul.f32.gmra.mxu0 %v7702
        %v7916 = vpop.f32.mrf.mxu0
        %v7917 = vadd.f32 0.0, %v7916
        %7918 = vmatmul.f32.gmra.mxu0 %v7704
        %v7919 = vpop.f32.mrf.mxu0
        %v7920 = vadd.f32 0.0, %v7919
        %7921 = vmatmul.f32.gmra.mxu0 %v7706
        %v7922 = vpop.f32.mrf.mxu0
        %v7923 = vadd.f32 0.0, %v7922
        %7924 = vmatmul.f32.gmra.mxu0 %v7708
        %v7925 = vpop.f32.mrf.mxu0
        %v7926 = vadd.f32 0.0, %v7925
        %7927 = vmatmul.f32.gmra.mxu0 %v7710
        %v7928 = vpop.f32.mrf.mxu0
        %v7929 = vadd.f32 0.0, %v7928
        %7930 = vmatmul.f32.gmra.mxu0 %v7712
        %v7931 = vpop.f32.mrf.mxu0
        %v7932 = vadd.f32 0.0, %v7931
        %7933 = vmatmul.f32.gmra.mxu0 %v7714
        %v7934 = vpop.f32.mrf.mxu0
        %v7935 = vadd.f32 0.0, %v7934
        %7936 = vmatmul.f32.gmra.mxu0 %v7716
        %v7937 = vpop.f32.mrf.mxu0
        %v7938 = vadd.f32 0.0, %v7937
        %7939 = vmatmul.f32.gmra.mxu0 %v7718
        %v7940 = vpop.f32.mrf.mxu0
        %v7941 = vadd.f32 0.0, %v7940
        %7942 = vmatmul.f32.gmra.mxu0 %v7720
        %v7943 = vpop.f32.mrf.mxu0
        %v7944 = vadd.f32 0.0, %v7943
        %7945 = vmatmul.f32.gmra.mxu0 %v7722
        %v7946 = vpop.f32.mrf.mxu0
        %v7947 = vadd.f32 0.0, %v7946
        %7948 = vmatmul.f32.gmra.mxu0 %v7724
        %v7949 = vpop.f32.mrf.mxu0
        %v7950 = vadd.f32 0.0, %v7949
        %7951 = vmatmul.f32.gmra.mxu0 %v7726
        %v7952 = vpop.f32.mrf.mxu0
        %v7953 = vadd.f32 0.0, %v7952
        %7954 = vmatmul.f32.gmra.mxu0 %v7728
        %v7955 = vpop.f32.mrf.mxu0
        %v7956 = vadd.f32 0.0, %v7955
        %7957 = vdwg.mxu0
        %7958 = vmatpush.msra.mxu0 0.0
        %7959 = vmatpush.msra.mxu0 0.0
        %7960 = vmatpush.msra.mxu0 0.0
        %7961 = vmatpush.msra.mxu0 0.0
        %7962 = vmatpush.msra.mxu0 0.0
        %7963 = vmatpush.msra.mxu0 0.0
        %7964 = vmatpush.msra.mxu0 0.0
        %7965 = vmatpush.msra.mxu0 0.0
        %7966 = vmatpush.msra.mxu0 0.0
        %7967 = vmatpush.msra.mxu0 0.0
        %7968 = vmatpush.msra.mxu0 0.0
        %7969 = vmatpush.msra.mxu0 0.0
        %7970 = vmatpush.msra.mxu0 0.0
        %7971 = vmatpush.msra.mxu0 0.0
        %7972 = vmatpush.msra.mxu0 %v7748
        %7973 = vmatpush.msra.mxu0 %v7747
        %7974 = vmatmul.f32.gmra.mxu0 %v7750
        %v7975 = vpop.f32.mrf.mxu0
        %v7976 = vadd.f32 %v7863, %v7975
        %7977 = vmatmul.f32.gmra.mxu0 %v7753
        %v7978 = vpop.f32.mrf.mxu0
        %v7979 = vadd.f32 %v7866, %v7978
        %7980 = vmatmul.f32.gmra.mxu0 %v7756
        %v7981 = vpop.f32.mrf.mxu0
        %v7982 = vadd.f32 %v7869, %v7981
        %7983 = vmatmul.f32.gmra.mxu0 %v7759
        %v7984 = vpop.f32.mrf.mxu0
        %v7985 = vadd.f32 %v7872, %v7984
        %7986 = vmatmul.f32.gmra.mxu0 %v7762
        %v7987 = vpop.f32.mrf.mxu0
        %v7988 = vadd.f32 %v7875, %v7987
        %7989 = vmatmul.f32.gmra.mxu0 %v7765
        %v7990 = vpop.f32.mrf.mxu0
        %v7991 = vadd.f32 %v7878, %v7990
        %7992 = vmatmul.f32.gmra.mxu0 %v7768
        %v7993 = vpop.f32.mrf.mxu0
        %v7994 = vadd.f32 %v7881, %v7993
        %7995 = vmatmul.f32.gmra.mxu0 %v7771
        %v7996 = vpop.f32.mrf.mxu0
        %v7997 = vadd.f32 %v7884, %v7996
        %7998 = vmatmul.f32.gmra.mxu0 %v7774
        %v7999 = vpop.f32.mrf.mxu0
        %v8000 = vadd.f32 %v7887, %v7999
        %8001 = vmatmul.f32.gmra.mxu0 %v7777
        %v8002 = vpop.f32.mrf.mxu0
        %v8003 = vadd.f32 %v7890, %v8002
        %8004 = vmatmul.f32.gmra.mxu0 %v7780
        %v8005 = vpop.f32.mrf.mxu0
        %v8006 = vadd.f32 %v7893, %v8005
        %8007 = vmatmul.f32.gmra.mxu0 %v7783
        %v8008 = vpop.f32.mrf.mxu0
        %v8009 = vadd.f32 %v7896, %v8008
        %8010 = vmatmul.f32.gmra.mxu0 %v7786
        %v8011 = vpop.f32.mrf.mxu0
        %v8012 = vadd.f32 %v7899, %v8011
        %8013 = vmatmul.f32.gmra.mxu0 %v7789
        %v8014 = vpop.f32.mrf.mxu0
        %v8015 = vadd.f32 %v7902, %v8014
        %8016 = vmatmul.f32.gmra.mxu0 %v7792
        %v8017 = vpop.f32.mrf.mxu0
        %v8018 = vadd.f32 %v7905, %v8017
        %8019 = vmatmul.f32.gmra.mxu0 %v7795
        %v8020 = vpop.f32.mrf.mxu0
        %v8021 = vadd.f32 %v7908, %v8020
        %8022 = vmatmul.f32.gmra.mxu0 %v7798
        %v8023 = vpop.f32.mrf.mxu0
        %v8024 = vadd.f32 %v7911, %v8023
        %8025 = vmatmul.f32.gmra.mxu0 %v7801
        %v8026 = vpop.f32.mrf.mxu0
        %v8027 = vadd.f32 %v7914, %v8026
        %8028 = vmatmul.f32.gmra.mxu0 %v7804
        %v8029 = vpop.f32.mrf.mxu0
        %v8030 = vadd.f32 %v7917, %v8029
        %8031 = vmatmul.f32.gmra.mxu0 %v7807
        %v8032 = vpop.f32.mrf.mxu0
        %v8033 = vadd.f32 %v7920, %v8032
        %8034 = vmatmul.f32.gmra.mxu0 %v7810
        %v8035 = vpop.f32.mrf.mxu0
        %v8036 = vadd.f32 %v7923, %v8035
        %8037 = vmatmul.f32.gmra.mxu0 %v7813
        %v8038 = vpop.f32.mrf.mxu0
        %v8039 = vadd.f32 %v7926, %v8038
        %8040 = vmatmul.f32.gmra.mxu0 %v7816
        %v8041 = vpop.f32.mrf.mxu0
        %v8042 = vadd.f32 %v7929, %v8041
        %8043 = vmatmul.f32.gmra.mxu0 %v7819
        %v8044 = vpop.f32.mrf.mxu0
        %v8045 = vadd.f32 %v7932, %v8044
        %8046 = vmatmul.f32.gmra.mxu0 %v7822
        %v8047 = vpop.f32.mrf.mxu0
        %v8048 = vadd.f32 %v7935, %v8047
        %8049 = vmatmul.f32.gmra.mxu0 %v7825
        %v8050 = vpop.f32.mrf.mxu0
        %v8051 = vadd.f32 %v7938, %v8050
        %8052 = vmatmul.f32.gmra.mxu0 %v7828
        %v8053 = vpop.f32.mrf.mxu0
        %v8054 = vadd.f32 %v7941, %v8053
        %8055 = vmatmul.f32.gmra.mxu0 %v7831
        %v8056 = vpop.f32.mrf.mxu0
        %v8057 = vadd.f32 %v7944, %v8056
        %8058 = vmatmul.f32.gmra.mxu0 %v7834
        %v8059 = vpop.f32.mrf.mxu0
        %v8060 = vadd.f32 %v7947, %v8059
        %8061 = vmatmul.f32.gmra.mxu0 %v7837
        %v8062 = vpop.f32.mrf.mxu0
        %v8063 = vadd.f32 %v7950, %v8062
        %8064 = vmatmul.f32.gmra.mxu0 %v7840
        %v8065 = vpop.f32.mrf.mxu0
        %v8066 = vadd.f32 %v7953, %v8065
        %8067 = vmatmul.f32.gmra.mxu0 %v7843
        %v8068 = vpop.f32.mrf.mxu0
        %v8069 = vadd.f32 %v7956, %v8068
        %8070 = vdwg.mxu0
        %v8071 = vadd.f32 %v7633, %v7976
        %v8072 = vadd.f32 %v7634, %v7979
        %v8073 = vadd.f32 %v7635, %v7982
        %v8074 = vadd.f32 %v7636, %v7985
        %v8075 = vadd.f32 %v7637, %v7988
        %v8076 = vadd.f32 %v7638, %v7991
        %v8077 = vadd.f32 %v7639, %v7994
        %v8078 = vadd.f32 %v7640, %v7997
        %v8079 = vadd.f32 %v7641, %v8000
        %v8080 = vadd.f32 %v7642, %v8003
        %v8081 = vadd.f32 %v7643, %v8006
        %v8082 = vadd.f32 %v7644, %v8009
        %v8083 = vadd.f32 %v7645, %v8012
        %v8084 = vadd.f32 %v7646, %v8015
        %v8085 = vadd.f32 %v7647, %v8018
        %v8086 = vadd.f32 %v7648, %v8021
        %v8087 = vadd.f32 %v7649, %v8024
        %v8088 = vadd.f32 %v7650, %v8027
        %v8089 = vadd.f32 %v7651, %v8030
        %v8090 = vadd.f32 %v7652, %v8033
        %v8091 = vadd.f32 %v7653, %v8036
        %v8092 = vadd.f32 %v7654, %v8039
        %v8093 = vadd.f32 %v7655, %v8042
        %v8094 = vadd.f32 %v7656, %v8045
        %v8095 = vadd.f32 %v7657, %v8048
        %v8096 = vadd.f32 %v7658, %v8051
        %v8097 = vadd.f32 %v7659, %v8054
        %v8098 = vadd.f32 %v7660, %v8057
        %v8099 = vadd.f32 %v7661, %v8060
        %v8100 = vadd.f32 %v7662, %v8063
        %v8101 = vadd.f32 %v7663, %v8066
        %v8102 = vadd.f32 %v7664, %v8069
        %v8103 = vld [vmem:[%s7665] sm:$0xfe]
        %v8104 = vld [vmem:[%s7665 + $0x8] sm:$0xfe]
        %v8105 = vld [vmem:[%s7665 + $0x10] sm:$0xff]
        %v8106 = vld [vmem:[%s7665 + $0x18] sm:$0xff]
        %v8107 = vld [vmem:[%s7665 + $0x20] sm:$0x1]
        %v8108 = vld [vmem:[%s7665 + $0x28] sm:$0x1]
        %v8109 = vld [vmem:[%s7665 + $0x30] sm:$0xfe]
        %v8110 = vld [vmem:[%s7665 + $0x38] sm:$0xfe]
        %v8111 = vld [vmem:[%s7665 + $0x40] sm:$0xff]
        %v8112 = vld [vmem:[%s7665 + $0x48] sm:$0xff]
        %v8113 = vld [vmem:[%s7665 + $0x50] sm:$0x1]
        %v8114 = vld [vmem:[%s7665 + $0x58] sm:$0x1]
        %v8115 = vld [vmem:[%s7665 + $0x60] sm:$0xfe]
        %v8116 = vld [vmem:[%s7665 + $0x68] sm:$0xfe]
        %v8117 = vld [vmem:[%s7665 + $0x70] sm:$0xff]
        %v8118 = vld [vmem:[%s7665 + $0x78] sm:$0xff]
        %v8119 = vld [vmem:[%s7665 + $0x80] sm:$0x1]
        %v8120 = vld [vmem:[%s7665 + $0x88] sm:$0x1]
        %v8121 = vld [vmem:[%s7665 + $0x90] sm:$0xfe]
        %v8122 = vld [vmem:[%s7665 + $0x98] sm:$0xfe]
        %v8123 = vld [vmem:[%s7665 + $0xa0] sm:$0xff]
        %v8124 = vld [vmem:[%s7665 + $0xa8] sm:$0xff]
        %v8125 = vld [vmem:[%s7665 + $0xb0] sm:$0x1]
        %v8126 = vld [vmem:[%s7665 + $0xb8] sm:$0x1]
        %v8127 = vld [vmem:[%s7665 + $0xc0] sm:$0xfe]
        %v8128 = vld [vmem:[%s7665 + $0xc8] sm:$0xfe]
        %v8129 = vld [vmem:[%s7665 + $0xd0] sm:$0xff]
        %v8130 = vld [vmem:[%s7665 + $0xd8] sm:$0xff]
        %v8131 = vld [vmem:[%s7665 + $0xe0] sm:$0x1]
        %v8132 = vld [vmem:[%s7665 + $0xe8] sm:$0x1]
        %v8133 = vld [vmem:[%s7665 + $0xf0] sm:$0xfe]
        %v8134 = vld [vmem:[%s7665 + $0xf8] sm:$0xfe]
        %v8135 = vld [vmem:[%s7665 + $0x100] sm:$0xff]
        %v8136 = vld [vmem:[%s7665 + $0x108] sm:$0xff]
        %v8137 = vld [vmem:[%s7665 + $0x110] sm:$0x1]
        %v8138 = vld [vmem:[%s7665 + $0x118] sm:$0x1]
        %v8139 = vld [vmem:[%s7665 + $0x120] sm:$0xfe]
        %v8140 = vld [vmem:[%s7665 + $0x128] sm:$0xfe]
        %v8141 = vld [vmem:[%s7665 + $0x130] sm:$0xff]
        %v8142 = vld [vmem:[%s7665 + $0x138] sm:$0xff]
        %v8143 = vld [vmem:[%s7665 + $0x140] sm:$0x1]
        %v8144 = vld [vmem:[%s7665 + $0x148] sm:$0x1]
        %v8145 = vld [vmem:[%s7665 + $0x150] sm:$0xfe]
        %v8146 = vld [vmem:[%s7665 + $0x158] sm:$0xfe]
        %v8147 = vld [vmem:[%s7665 + $0x160] sm:$0xff]
        %v8148 = vld [vmem:[%s7665 + $0x168] sm:$0xff]
        %v8149 = vld [vmem:[%s7665 + $0x170] sm:$0x1]
        %v8150 = vld [vmem:[%s7665 + $0x178] sm:$0x1]
        %v8151 = vld [vmem:[%s7665 + $0x180] sm:$0xfe]
        %v8152 = vld [vmem:[%s7665 + $0x188] sm:$0xfe]
        %v8153 = vld [vmem:[%s7665 + $0x190] sm:$0xff]
        %v8154 = vld [vmem:[%s7665 + $0x198] sm:$0xff]
        %v8155 = vld [vmem:[%s7665 + $0x1a0] sm:$0x1]
        %v8156 = vld [vmem:[%s7665 + $0x1a8] sm:$0x1]
        %v8157 = vld [vmem:[%s7665 + $0x1b0] sm:$0xfe]
        %v8158 = vld [vmem:[%s7665 + $0x1b8] sm:$0xfe]
        %v8159 = vld [vmem:[%s7665 + $0x1c0] sm:$0xff]
        %v8160 = vld [vmem:[%s7665 + $0x1c8] sm:$0xff]
        %v8161 = vld [vmem:[%s7665 + $0x1d0] sm:$0x1]
        %v8162 = vld [vmem:[%s7665 + $0x1d8] sm:$0x1]
        %v8163 = vld [vmem:[%s7665 + $0x1e0] sm:$0xfe]
        %v8164 = vld [vmem:[%s7665 + $0x1e8] sm:$0xfe]
        %v8165 = vld [vmem:[%s7665 + $0x1f0] sm:$0xff]
        %v8166 = vld [vmem:[%s7665 + $0x1f8] sm:$0xff]
        %v8167 = vld [vmem:[%s7665 + $0x200] sm:$0x1]
        %v8168 = vld [vmem:[%s7665 + $0x208] sm:$0x1]
        %v8169 = vld [vmem:[%s7665 + $0x210] sm:$0xfe]
        %v8170 = vld [vmem:[%s7665 + $0x218] sm:$0xfe]
        %v8171 = vld [vmem:[%s7665 + $0x220] sm:$0xff]
        %v8172 = vld [vmem:[%s7665 + $0x228] sm:$0xff]
        %v8173 = vld [vmem:[%s7665 + $0x230] sm:$0x1]
        %v8174 = vld [vmem:[%s7665 + $0x238] sm:$0x1]
        %v8175 = vld [vmem:[%s7665 + $0x240] sm:$0xfe]
        %v8176 = vld [vmem:[%s7665 + $0x248] sm:$0xfe]
        %v8177 = vld [vmem:[%s7665 + $0x250] sm:$0xff]
        %v8178 = vld [vmem:[%s7665 + $0x258] sm:$0xff]
        %v8179 = vld [vmem:[%s7665 + $0x260] sm:$0x1]
        %v8180 = vld [vmem:[%s7665 + $0x268] sm:$0x1]
        %v8181 = vld [vmem:[%s7665 + $0x270] sm:$0xfe]
        %v8182 = vld [vmem:[%s7665 + $0x278] sm:$0xfe]
        %v8183 = vld [vmem:[%s7665 + $0x280] sm:$0xff]
        %v8184 = vld [vmem:[%s7665 + $0x288] sm:$0xff]
        %v8185 = vld [vmem:[%s7665 + $0x290] sm:$0x1]
        %v8186 = vld [vmem:[%s7665 + $0x298] sm:$0x1]
        %v8187 = vld [vmem:[%s7665 + $0x2a0] sm:$0xfe]
        %v8188 = vld [vmem:[%s7665 + $0x2a8] sm:$0xfe]
        %v8189 = vld [vmem:[%s7665 + $0x2b0] sm:$0xff]
        %v8190 = vld [vmem:[%s7665 + $0x2b8] sm:$0xff]
        %v8191 = vld [vmem:[%s7665 + $0x2c0] sm:$0x1]
        %v8192 = vld [vmem:[%s7665 + $0x2c8] sm:$0x1]
        %v8193 = vld [vmem:[%s7665 + $0x2d0] sm:$0xfe]
        %v8194 = vld [vmem:[%s7665 + $0x2d8] sm:$0xfe]
        %v8195 = vld [vmem:[%s7665 + $0x2e0] sm:$0xff]
        %v8196 = vld [vmem:[%s7665 + $0x2e8] sm:$0xff]
        %v8197 = vld [vmem:[%s7665 + $0x2f0] sm:$0x1]
        %v8198 = vld [vmem:[%s7665 + $0x2f8] sm:$0x1]
        %v8295 = vrot.slane %v8103, 1
        %v8296 = vrot.slane %v8105, 1
        %v8297 = vsel %vm4372, %v8295, %v8296
        %v8298 = vrot.slane %v8104, 1
        %v8299 = vrot.slane %v8106, 1
        %v8300 = vsel %vm4372, %v8298, %v8299
        %v8301 = vrot.slane %v8107, 1
        %v8302 = vsel %vm4372, %v8296, %v8301
        %v8303 = vrot.slane %v8108, 1
        %v8304 = vsel %vm4372, %v8299, %v8303
        %v8305 = vrot.slane %v8109, 1
        %v8306 = vrot.slane %v8111, 1
        %v8307 = vsel %vm4372, %v8305, %v8306
        %v8308 = vrot.slane %v8110, 1
        %v8309 = vrot.slane %v8112, 1
        %v8310 = vsel %vm4372, %v8308, %v8309
        %v8311 = vrot.slane %v8113, 1
        %v8312 = vsel %vm4372, %v8306, %v8311
        %v8313 = vrot.slane %v8114, 1
        %v8314 = vsel %vm4372, %v8309, %v8313
        %v8315 = vrot.slane %v8115, 1
        %v8316 = vrot.slane %v8117, 1
        %v8317 = vsel %vm4372, %v8315, %v8316
        %v8318 = vrot.slane %v8116, 1
        %v8319 = vrot.slane %v8118, 1
        %v8320 = vsel %vm4372, %v8318, %v8319
        %v8321 = vrot.slane %v8119, 1
        %v8322 = vsel %vm4372, %v8316, %v8321
        %v8323 = vrot.slane %v8120, 1
        %v8324 = vsel %vm4372, %v8319, %v8323
        %v8325 = vrot.slane %v8121, 1
        %v8326 = vrot.slane %v8123, 1
        %v8327 = vsel %vm4372, %v8325, %v8326
        %v8328 = vrot.slane %v8122, 1
        %v8329 = vrot.slane %v8124, 1
        %v8330 = vsel %vm4372, %v8328, %v8329
        %v8331 = vrot.slane %v8125, 1
        %v8332 = vsel %vm4372, %v8326, %v8331
        %v8333 = vrot.slane %v8126, 1
        %v8334 = vsel %vm4372, %v8329, %v8333
        %v8335 = vrot.slane %v8127, 1
        %v8336 = vrot.slane %v8129, 1
        %v8337 = vsel %vm4372, %v8335, %v8336
        %v8338 = vrot.slane %v8128, 1
        %v8339 = vrot.slane %v8130, 1
        %v8340 = vsel %vm4372, %v8338, %v8339
        %v8341 = vrot.slane %v8131, 1
        %v8342 = vsel %vm4372, %v8336, %v8341
        %v8343 = vrot.slane %v8132, 1
        %v8344 = vsel %vm4372, %v8339, %v8343
        %v8345 = vrot.slane %v8133, 1
        %v8346 = vrot.slane %v8135, 1
        %v8347 = vsel %vm4372, %v8345, %v8346
        %v8348 = vrot.slane %v8134, 1
        %v8349 = vrot.slane %v8136, 1
        %v8350 = vsel %vm4372, %v8348, %v8349
        %v8351 = vrot.slane %v8137, 1
        %v8352 = vsel %vm4372, %v8346, %v8351
        %v8353 = vrot.slane %v8138, 1
        %v8354 = vsel %vm4372, %v8349, %v8353
        %v8355 = vrot.slane %v8139, 1
        %v8356 = vrot.slane %v8141, 1
        %v8357 = vsel %vm4372, %v8355, %v8356
        %v8358 = vrot.slane %v8140, 1
        %v8359 = vrot.slane %v8142, 1
        %v8360 = vsel %vm4372, %v8358, %v8359
        %v8361 = vrot.slane %v8143, 1
        %v8362 = vsel %vm4372, %v8356, %v8361
        %v8363 = vrot.slane %v8144, 1
        %v8364 = vsel %vm4372, %v8359, %v8363
        %v8365 = vrot.slane %v8145, 1
        %v8366 = vrot.slane %v8147, 1
        %v8367 = vsel %vm4372, %v8365, %v8366
        %v8368 = vrot.slane %v8146, 1
        %v8369 = vrot.slane %v8148, 1
        %v8370 = vsel %vm4372, %v8368, %v8369
        %v8371 = vrot.slane %v8149, 1
        %v8372 = vsel %vm4372, %v8366, %v8371
        %v8373 = vrot.slane %v8150, 1
        %v8374 = vsel %vm4372, %v8369, %v8373
        %v8375 = vrot.slane %v8151, 1
        %v8376 = vrot.slane %v8153, 1
        %v8377 = vsel %vm4372, %v8375, %v8376
        %v8378 = vrot.slane %v8152, 1
        %v8379 = vrot.slane %v8154, 1
        %v8380 = vsel %vm4372, %v8378, %v8379
        %v8381 = vrot.slane %v8155, 1
        %v8382 = vsel %vm4372, %v8376, %v8381
        %v8383 = vrot.slane %v8156, 1
        %v8384 = vsel %vm4372, %v8379, %v8383
        %v8385 = vrot.slane %v8157, 1
        %v8386 = vrot.slane %v8159, 1
        %v8387 = vsel %vm4372, %v8385, %v8386
        %v8388 = vrot.slane %v8158, 1
        %v8389 = vrot.slane %v8160, 1
        %v8390 = vsel %vm4372, %v8388, %v8389
        %v8391 = vrot.slane %v8161, 1
        %v8392 = vsel %vm4372, %v8386, %v8391
        %v8393 = vrot.slane %v8162, 1
        %v8394 = vsel %vm4372, %v8389, %v8393
        %v8395 = vrot.slane %v8163, 1
        %v8396 = vrot.slane %v8165, 1
        %v8397 = vsel %vm4372, %v8395, %v8396
        %v8398 = vrot.slane %v8164, 1
        %v8399 = vrot.slane %v8166, 1
        %v8400 = vsel %vm4372, %v8398, %v8399
        %v8401 = vrot.slane %v8167, 1
        %v8402 = vsel %vm4372, %v8396, %v8401
        %v8403 = vrot.slane %v8168, 1
        %v8404 = vsel %vm4372, %v8399, %v8403
        %v8405 = vrot.slane %v8169, 1
        %v8406 = vrot.slane %v8171, 1
        %v8407 = vsel %vm4372, %v8405, %v8406
        %v8408 = vrot.slane %v8170, 1
        %v8409 = vrot.slane %v8172, 1
        %v8410 = vsel %vm4372, %v8408, %v8409
        %v8411 = vrot.slane %v8173, 1
        %v8412 = vsel %vm4372, %v8406, %v8411
        %v8413 = vrot.slane %v8174, 1
        %v8414 = vsel %vm4372, %v8409, %v8413
        %v8415 = vrot.slane %v8175, 1
        %v8416 = vrot.slane %v8177, 1
        %v8417 = vsel %vm4372, %v8415, %v8416
        %v8418 = vrot.slane %v8176, 1
        %v8419 = vrot.slane %v8178, 1
        %v8420 = vsel %vm4372, %v8418, %v8419
        %v8421 = vrot.slane %v8179, 1
        %v8422 = vsel %vm4372, %v8416, %v8421
        %v8423 = vrot.slane %v8180, 1
        %v8424 = vsel %vm4372, %v8419, %v8423
        %v8425 = vrot.slane %v8181, 1
        %v8426 = vrot.slane %v8183, 1
        %v8427 = vsel %vm4372, %v8425, %v8426
        %v8428 = vrot.slane %v8182, 1
        %v8429 = vrot.slane %v8184, 1
        %v8430 = vsel %vm4372, %v8428, %v8429
        %v8431 = vrot.slane %v8185, 1
        %v8432 = vsel %vm4372, %v8426, %v8431
        %v8433 = vrot.slane %v8186, 1
        %v8434 = vsel %vm4372, %v8429, %v8433
        %v8435 = vrot.slane %v8187, 1
        %v8436 = vrot.slane %v8189, 1
        %v8437 = vsel %vm4372, %v8435, %v8436
        %v8438 = vrot.slane %v8188, 1
        %v8439 = vrot.slane %v8190, 1
        %v8440 = vsel %vm4372, %v8438, %v8439
        %v8441 = vrot.slane %v8191, 1
        %v8442 = vsel %vm4372, %v8436, %v8441
        %v8443 = vrot.slane %v8192, 1
        %v8444 = vsel %vm4372, %v8439, %v8443
        %v8445 = vrot.slane %v8193, 1
        %v8446 = vrot.slane %v8195, 1
        %v8447 = vsel %vm4372, %v8445, %v8446
        %v8448 = vrot.slane %v8194, 1
        %v8449 = vrot.slane %v8196, 1
        %v8450 = vsel %vm4372, %v8448, %v8449
        %v8451 = vrot.slane %v8197, 1
        %v8452 = vsel %vm4372, %v8446, %v8451
        %v8453 = vrot.slane %v8198, 1
        %v8454 = vsel %vm4372, %v8449, %v8453
        %s8487 = scalar_lea.vmem [#allocation7], 1008
        %v8488 = vld [vmem:[%s8487] sm:$0xff]
        %v8489 = vld [vmem:[%s8487 + $0x8] sm:$0xff]
        %v8490 = vld [vmem:[%s8487 + $0x10] sm:$0xff]
        %v8491 = vld [vmem:[%s8487 + $0x18] sm:$0xff]
        %v8492 = vld [vmem:[%s8487 + $0x20] sm:$0xff]
        %v8493 = vld [vmem:[%s8487 + $0x28] sm:$0xff]
        %v8494 = vld [vmem:[%s8487 + $0x30] sm:$0xff]
        %v8495 = vld [vmem:[%s8487 + $0x38] sm:$0xff]
        %v8496 = vld [vmem:[%s8487 + $0x40] sm:$0xff]
        %v8497 = vld [vmem:[%s8487 + $0x48] sm:$0xff]
        %v8498 = vld [vmem:[%s8487 + $0x50] sm:$0xff]
        %v8499 = vld [vmem:[%s8487 + $0x58] sm:$0xff]
        %v8500 = vld [vmem:[%s8487 + $0x60] sm:$0xff]
        %v8501 = vld [vmem:[%s8487 + $0x68] sm:$0xff]
        %v8502 = vld [vmem:[%s8487 + $0x70] sm:$0xff]
        %v8503 = vld [vmem:[%s8487 + $0x78] sm:$0xff]
        %v8504 = vld [vmem:[%s8487 + $0x80] sm:$0xff]
        %v8505 = vld [vmem:[%s8487 + $0x88] sm:$0xff]
        %v8506 = vsel %vm3694, %v8300, 0
        %v8508 = vsel %vm3694, %v8304, 0
        %v8510 = vsel %vm3694, %v8310, 0
        %v8512 = vsel %vm3694, %v8314, 0
        %v8514 = vsel %vm3694, %v8320, 0
        %v8516 = vsel %vm3694, %v8324, 0
        %v8518 = vsel %vm3694, %v8330, 0
        %v8520 = vsel %vm3694, %v8334, 0
        %v8522 = vsel %vm3694, %v8340, 0
        %v8524 = vsel %vm3694, %v8344, 0
        %v8526 = vsel %vm3694, %v8350, 0
        %v8528 = vsel %vm3694, %v8354, 0
        %v8530 = vsel %vm3694, %v8360, 0
        %v8532 = vsel %vm3694, %v8364, 0
        %v8534 = vsel %vm3694, %v8370, 0
        %v8536 = vsel %vm3694, %v8374, 0
        %v8538 = vsel %vm3694, %v8380, 0
        %v8540 = vsel %vm3694, %v8384, 0
        %v8542 = vsel %vm3694, %v8390, 0
        %v8544 = vsel %vm3694, %v8394, 0
        %v8546 = vsel %vm3694, %v8400, 0
        %v8548 = vsel %vm3694, %v8404, 0
        %v8550 = vsel %vm3694, %v8410, 0
        %v8552 = vsel %vm3694, %v8414, 0
        %v8554 = vsel %vm3694, %v8420, 0
        %v8556 = vsel %vm3694, %v8424, 0
        %v8558 = vsel %vm3694, %v8430, 0
        %v8560 = vsel %vm3694, %v8434, 0
        %v8562 = vsel %vm3694, %v8440, 0
        %v8564 = vsel %vm3694, %v8444, 0
        %v8566 = vsel %vm3694, %v8450, 0
        %v8568 = vsel %vm3694, %v8454, 0
        %8570 = vmatpush.msra.mxu0 %v8503
        %8571 = vmatpush.msra.mxu0 %v8502
        %8572 = vmatpush.msra.mxu0 %v8501
        %8573 = vmatpush.msra.mxu0 %v8500
        %8574 = vmatpush.msra.mxu0 %v8499
        %8575 = vmatpush.msra.mxu0 %v8498
        %8576 = vmatpush.msra.mxu0 %v8497
        %8577 = vmatpush.msra.mxu0 %v8496
        %8578 = vmatpush.msra.mxu0 %v8495
        %8579 = vmatpush.msra.mxu0 %v8494
        %8580 = vmatpush.msra.mxu0 %v8493
        %8581 = vmatpush.msra.mxu0 %v8492
        %8582 = vmatpush.msra.mxu0 %v8491
        %8583 = vmatpush.msra.mxu0 %v8490
        %8584 = vmatpush.msra.mxu0 %v8489
        %8585 = vmatpush.msra.mxu0 %v8488
        %8586 = vmatmul.f32.gmra.mxu0 %v8297
        %v8587 = vpop.f32.mrf.mxu0
        %v8588 = vadd.f32 0.0, %v8587
        %8589 = vmatmul.f32.gmra.mxu0 %v8302
        %v8590 = vpop.f32.mrf.mxu0
        %v8591 = vadd.f32 0.0, %v8590
        %8592 = vmatmul.f32.gmra.mxu0 %v8307
        %v8593 = vpop.f32.mrf.mxu0
        %v8594 = vadd.f32 0.0, %v8593
        %8595 = vmatmul.f32.gmra.mxu0 %v8312
        %v8596 = vpop.f32.mrf.mxu0
        %v8597 = vadd.f32 0.0, %v8596
        %8598 = vmatmul.f32.gmra.mxu0 %v8317
        %v8599 = vpop.f32.mrf.mxu0
        %v8600 = vadd.f32 0.0, %v8599
        %8601 = vmatmul.f32.gmra.mxu0 %v8322
        %v8602 = vpop.f32.mrf.mxu0
        %v8603 = vadd.f32 0.0, %v8602
        %8604 = vmatmul.f32.gmra.mxu0 %v8327
        %v8605 = vpop.f32.mrf.mxu0
        %v8606 = vadd.f32 0.0, %v8605
        %8607 = vmatmul.f32.gmra.mxu0 %v8332
        %v8608 = vpop.f32.mrf.mxu0
        %v8609 = vadd.f32 0.0, %v8608
        %8610 = vmatmul.f32.gmra.mxu0 %v8337
        %v8611 = vpop.f32.mrf.mxu0
        %v8612 = vadd.f32 0.0, %v8611
        %8613 = vmatmul.f32.gmra.mxu0 %v8342
        %v8614 = vpop.f32.mrf.mxu0
        %v8615 = vadd.f32 0.0, %v8614
        %8616 = vmatmul.f32.gmra.mxu0 %v8347
        %v8617 = vpop.f32.mrf.mxu0
        %v8618 = vadd.f32 0.0, %v8617
        %8619 = vmatmul.f32.gmra.mxu0 %v8352
        %v8620 = vpop.f32.mrf.mxu0
        %v8621 = vadd.f32 0.0, %v8620
        %8622 = vmatmul.f32.gmra.mxu0 %v8357
        %v8623 = vpop.f32.mrf.mxu0
        %v8624 = vadd.f32 0.0, %v8623
        %8625 = vmatmul.f32.gmra.mxu0 %v8362
        %v8626 = vpop.f32.mrf.mxu0
        %v8627 = vadd.f32 0.0, %v8626
        %8628 = vmatmul.f32.gmra.mxu0 %v8367
        %v8629 = vpop.f32.mrf.mxu0
        %v8630 = vadd.f32 0.0, %v8629
        %8631 = vmatmul.f32.gmra.mxu0 %v8372
        %v8632 = vpop.f32.mrf.mxu0
        %v8633 = vadd.f32 0.0, %v8632
        %8634 = vmatmul.f32.gmra.mxu0 %v8377
        %v8635 = vpop.f32.mrf.mxu0
        %v8636 = vadd.f32 0.0, %v8635
        %8637 = vmatmul.f32.gmra.mxu0 %v8382
        %v8638 = vpop.f32.mrf.mxu0
        %v8639 = vadd.f32 0.0, %v8638
        %8640 = vmatmul.f32.gmra.mxu0 %v8387
        %v8641 = vpop.f32.mrf.mxu0
        %v8642 = vadd.f32 0.0, %v8641
        %8643 = vmatmul.f32.gmra.mxu0 %v8392
        %v8644 = vpop.f32.mrf.mxu0
        %v8645 = vadd.f32 0.0, %v8644
        %8646 = vmatmul.f32.gmra.mxu0 %v8397
        %v8647 = vpop.f32.mrf.mxu0
        %v8648 = vadd.f32 0.0, %v8647
        %8649 = vmatmul.f32.gmra.mxu0 %v8402
        %v8650 = vpop.f32.mrf.mxu0
        %v8651 = vadd.f32 0.0, %v8650
        %8652 = vmatmul.f32.gmra.mxu0 %v8407
        %v8653 = vpop.f32.mrf.mxu0
        %v8654 = vadd.f32 0.0, %v8653
        %8655 = vmatmul.f32.gmra.mxu0 %v8412
        %v8656 = vpop.f32.mrf.mxu0
        %v8657 = vadd.f32 0.0, %v8656
        %8658 = vmatmul.f32.gmra.mxu0 %v8417
        %v8659 = vpop.f32.mrf.mxu0
        %v8660 = vadd.f32 0.0, %v8659
        %8661 = vmatmul.f32.gmra.mxu0 %v8422
        %v8662 = vpop.f32.mrf.mxu0
        %v8663 = vadd.f32 0.0, %v8662
        %8664 = vmatmul.f32.gmra.mxu0 %v8427
        %v8665 = vpop.f32.mrf.mxu0
        %v8666 = vadd.f32 0.0, %v8665
        %8667 = vmatmul.f32.gmra.mxu0 %v8432
        %v8668 = vpop.f32.mrf.mxu0
        %v8669 = vadd.f32 0.0, %v8668
        %8670 = vmatmul.f32.gmra.mxu0 %v8437
        %v8671 = vpop.f32.mrf.mxu0
        %v8672 = vadd.f32 0.0, %v8671
        %8673 = vmatmul.f32.gmra.mxu0 %v8442
        %v8674 = vpop.f32.mrf.mxu0
        %v8675 = vadd.f32 0.0, %v8674
        %8676 = vmatmul.f32.gmra.mxu0 %v8447
        %v8677 = vpop.f32.mrf.mxu0
        %v8678 = vadd.f32 0.0, %v8677
        %8679 = vmatmul.f32.gmra.mxu0 %v8452
        %v8680 = vpop.f32.mrf.mxu0
        %v8681 = vadd.f32 0.0, %v8680
        %8682 = vdwg.mxu0
        %8683 = vmatpush.msra.mxu0 0.0
        %8684 = vmatpush.msra.mxu0 0.0
        %8685 = vmatpush.msra.mxu0 0.0
        %8686 = vmatpush.msra.mxu0 0.0
        %8687 = vmatpush.msra.mxu0 0.0
        %8688 = vmatpush.msra.mxu0 0.0
        %8689 = vmatpush.msra.mxu0 0.0
        %8690 = vmatpush.msra.mxu0 0.0
        %8691 = vmatpush.msra.mxu0 0.0
        %8692 = vmatpush.msra.mxu0 0.0
        %8693 = vmatpush.msra.mxu0 0.0
        %8694 = vmatpush.msra.mxu0 0.0
        %8695 = vmatpush.msra.mxu0 0.0
        %8696 = vmatpush.msra.mxu0 0.0
        %8697 = vmatpush.msra.mxu0 %v8505
        %8698 = vmatpush.msra.mxu0 %v8504
        %8699 = vmatmul.f32.gmra.mxu0 %v8506
        %v8700 = vpop.f32.mrf.mxu0
        %v8701 = vadd.f32 %v8588, %v8700
        %8702 = vmatmul.f32.gmra.mxu0 %v8508
        %v8703 = vpop.f32.mrf.mxu0
        %v8704 = vadd.f32 %v8591, %v8703
        %8705 = vmatmul.f32.gmra.mxu0 %v8510
        %v8706 = vpop.f32.mrf.mxu0
        %v8707 = vadd.f32 %v8594, %v8706
        %8708 = vmatmul.f32.gmra.mxu0 %v8512
        %v8709 = vpop.f32.mrf.mxu0
        %v8710 = vadd.f32 %v8597, %v8709
        %8711 = vmatmul.f32.gmra.mxu0 %v8514
        %v8712 = vpop.f32.mrf.mxu0
        %v8713 = vadd.f32 %v8600, %v8712
        %8714 = vmatmul.f32.gmra.mxu0 %v8516
        %v8715 = vpop.f32.mrf.mxu0
        %v8716 = vadd.f32 %v8603, %v8715
        %8717 = vmatmul.f32.gmra.mxu0 %v8518
        %v8718 = vpop.f32.mrf.mxu0
        %v8719 = vadd.f32 %v8606, %v8718
        %8720 = vmatmul.f32.gmra.mxu0 %v8520
        %v8721 = vpop.f32.mrf.mxu0
        %v8722 = vadd.f32 %v8609, %v8721
        %8723 = vmatmul.f32.gmra.mxu0 %v8522
        %v8724 = vpop.f32.mrf.mxu0
        %v8725 = vadd.f32 %v8612, %v8724
        %8726 = vmatmul.f32.gmra.mxu0 %v8524
        %v8727 = vpop.f32.mrf.mxu0
        %v8728 = vadd.f32 %v8615, %v8727
        %8729 = vmatmul.f32.gmra.mxu0 %v8526
        %v8730 = vpop.f32.mrf.mxu0
        %v8731 = vadd.f32 %v8618, %v8730
        %8732 = vmatmul.f32.gmra.mxu0 %v8528
        %v8733 = vpop.f32.mrf.mxu0
        %v8734 = vadd.f32 %v8621, %v8733
        %8735 = vmatmul.f32.gmra.mxu0 %v8530
        %v8736 = vpop.f32.mrf.mxu0
        %v8737 = vadd.f32 %v8624, %v8736
        %8738 = vmatmul.f32.gmra.mxu0 %v8532
        %v8739 = vpop.f32.mrf.mxu0
        %v8740 = vadd.f32 %v8627, %v8739
        %8741 = vmatmul.f32.gmra.mxu0 %v8534
        %v8742 = vpop.f32.mrf.mxu0
        %v8743 = vadd.f32 %v8630, %v8742
        %8744 = vmatmul.f32.gmra.mxu0 %v8536
        %v8745 = vpop.f32.mrf.mxu0
        %v8746 = vadd.f32 %v8633, %v8745
        %8747 = vmatmul.f32.gmra.mxu0 %v8538
        %v8748 = vpop.f32.mrf.mxu0
        %v8749 = vadd.f32 %v8636, %v8748
        %8750 = vmatmul.f32.gmra.mxu0 %v8540
        %v8751 = vpop.f32.mrf.mxu0
        %v8752 = vadd.f32 %v8639, %v8751
        %8753 = vmatmul.f32.gmra.mxu0 %v8542
        %v8754 = vpop.f32.mrf.mxu0
        %v8755 = vadd.f32 %v8642, %v8754
        %8756 = vmatmul.f32.gmra.mxu0 %v8544
        %v8757 = vpop.f32.mrf.mxu0
        %v8758 = vadd.f32 %v8645, %v8757
        %8759 = vmatmul.f32.gmra.mxu0 %v8546
        %v8760 = vpop.f32.mrf.mxu0
        %v8761 = vadd.f32 %v8648, %v8760
        %8762 = vmatmul.f32.gmra.mxu0 %v8548
        %v8763 = vpop.f32.mrf.mxu0
        %v8764 = vadd.f32 %v8651, %v8763
        %8765 = vmatmul.f32.gmra.mxu0 %v8550
        %v8766 = vpop.f32.mrf.mxu0
        %v8767 = vadd.f32 %v8654, %v8766
        %8768 = vmatmul.f32.gmra.mxu0 %v8552
        %v8769 = vpop.f32.mrf.mxu0
        %v8770 = vadd.f32 %v8657, %v8769
        %8771 = vmatmul.f32.gmra.mxu0 %v8554
        %v8772 = vpop.f32.mrf.mxu0
        %v8773 = vadd.f32 %v8660, %v8772
        %8774 = vmatmul.f32.gmra.mxu0 %v8556
        %v8775 = vpop.f32.mrf.mxu0
        %v8776 = vadd.f32 %v8663, %v8775
        %8777 = vmatmul.f32.gmra.mxu0 %v8558
        %v8778 = vpop.f32.mrf.mxu0
        %v8779 = vadd.f32 %v8666, %v8778
        %8780 = vmatmul.f32.gmra.mxu0 %v8560
        %v8781 = vpop.f32.mrf.mxu0
        %v8782 = vadd.f32 %v8669, %v8781
        %8783 = vmatmul.f32.gmra.mxu0 %v8562
        %v8784 = vpop.f32.mrf.mxu0
        %v8785 = vadd.f32 %v8672, %v8784
        %8786 = vmatmul.f32.gmra.mxu0 %v8564
        %v8787 = vpop.f32.mrf.mxu0
        %v8788 = vadd.f32 %v8675, %v8787
        %8789 = vmatmul.f32.gmra.mxu0 %v8566
        %v8790 = vpop.f32.mrf.mxu0
        %v8791 = vadd.f32 %v8678, %v8790
        %8792 = vmatmul.f32.gmra.mxu0 %v8568
        %v8793 = vpop.f32.mrf.mxu0
        %v8794 = vadd.f32 %v8681, %v8793
        %8795 = vdwg.mxu0
        %v8796 = vadd.f32 %v8071, %v8701
        %v8797 = vadd.f32 %v8072, %v8704
        %v8798 = vadd.f32 %v8073, %v8707
        %v8799 = vadd.f32 %v8074, %v8710
        %v8800 = vadd.f32 %v8075, %v8713
        %v8801 = vadd.f32 %v8076, %v8716
        %v8802 = vadd.f32 %v8077, %v8719
        %v8803 = vadd.f32 %v8078, %v8722
        %v8804 = vadd.f32 %v8079, %v8725
        %v8805 = vadd.f32 %v8080, %v8728
        %v8806 = vadd.f32 %v8081, %v8731
        %v8807 = vadd.f32 %v8082, %v8734
        %v8808 = vadd.f32 %v8083, %v8737
        %v8809 = vadd.f32 %v8084, %v8740
        %v8810 = vadd.f32 %v8085, %v8743
        %v8811 = vadd.f32 %v8086, %v8746
        %v8812 = vadd.f32 %v8087, %v8749
        %v8813 = vadd.f32 %v8088, %v8752
        %v8814 = vadd.f32 %v8089, %v8755
        %v8815 = vadd.f32 %v8090, %v8758
        %v8816 = vadd.f32 %v8091, %v8761
        %v8817 = vadd.f32 %v8092, %v8764
        %v8818 = vadd.f32 %v8093, %v8767
        %v8819 = vadd.f32 %v8094, %v8770
        %v8820 = vadd.f32 %v8095, %v8773
        %v8821 = vadd.f32 %v8096, %v8776
        %v8822 = vadd.f32 %v8097, %v8779
        %v8823 = vadd.f32 %v8098, %v8782
        %v8824 = vadd.f32 %v8099, %v8785
        %v8825 = vadd.f32 %v8100, %v8788
        %v8826 = vadd.f32 %v8101, %v8791
        %v8827 = vadd.f32 %v8102, %v8794
        %v8828 = vld [vmem:[%s7665] sm:$0xfc]
        %v8829 = vld [vmem:[%s7665 + $0x8] sm:$0xfc]
        %v8830 = vld [vmem:[%s7665 + $0x20] sm:$0x3]
        %v8831 = vld [vmem:[%s7665 + $0x28] sm:$0x3]
        %v8832 = vld [vmem:[%s7665 + $0x30] sm:$0xfc]
        %v8833 = vld [vmem:[%s7665 + $0x38] sm:$0xfc]
        %v8834 = vld [vmem:[%s7665 + $0x50] sm:$0x3]
        %v8835 = vld [vmem:[%s7665 + $0x58] sm:$0x3]
        %v8836 = vld [vmem:[%s7665 + $0x60] sm:$0xfc]
        %v8837 = vld [vmem:[%s7665 + $0x68] sm:$0xfc]
        %v8838 = vld [vmem:[%s7665 + $0x80] sm:$0x3]
        %v8839 = vld [vmem:[%s7665 + $0x88] sm:$0x3]
        %v8840 = vld [vmem:[%s7665 + $0x90] sm:$0xfc]
        %v8841 = vld [vmem:[%s7665 + $0x98] sm:$0xfc]
        %v8842 = vld [vmem:[%s7665 + $0xb0] sm:$0x3]
        %v8843 = vld [vmem:[%s7665 + $0xb8] sm:$0x3]
        %v8844 = vld [vmem:[%s7665 + $0xc0] sm:$0xfc]
        %v8845 = vld [vmem:[%s7665 + $0xc8] sm:$0xfc]
        %v8846 = vld [vmem:[%s7665 + $0xe0] sm:$0x3]
        %v8847 = vld [vmem:[%s7665 + $0xe8] sm:$0x3]
        %v8848 = vld [vmem:[%s7665 + $0xf0] sm:$0xfc]
        %v8849 = vld [vmem:[%s7665 + $0xf8] sm:$0xfc]
        %v8850 = vld [vmem:[%s7665 + $0x110] sm:$0x3]
        %v8851 = vld [vmem:[%s7665 + $0x118] sm:$0x3]
        %v8852 = vld [vmem:[%s7665 + $0x120] sm:$0xfc]
        %v8853 = vld [vmem:[%s7665 + $0x128] sm:$0xfc]
        %v8854 = vld [vmem:[%s7665 + $0x140] sm:$0x3]
        %v8855 = vld [vmem:[%s7665 + $0x148] sm:$0x3]
        %v8856 = vld [vmem:[%s7665 + $0x150] sm:$0xfc]
        %v8857 = vld [vmem:[%s7665 + $0x158] sm:$0xfc]
        %v8858 = vld [vmem:[%s7665 + $0x170] sm:$0x3]
        %v8859 = vld [vmem:[%s7665 + $0x178] sm:$0x3]
        %v8860 = vld [vmem:[%s7665 + $0x180] sm:$0xfc]
        %v8861 = vld [vmem:[%s7665 + $0x188] sm:$0xfc]
        %v8862 = vld [vmem:[%s7665 + $0x1a0] sm:$0x3]
        %v8863 = vld [vmem:[%s7665 + $0x1a8] sm:$0x3]
        %v8864 = vld [vmem:[%s7665 + $0x1b0] sm:$0xfc]
        %v8865 = vld [vmem:[%s7665 + $0x1b8] sm:$0xfc]
        %v8866 = vld [vmem:[%s7665 + $0x1d0] sm:$0x3]
        %v8867 = vld [vmem:[%s7665 + $0x1d8] sm:$0x3]
        %v8868 = vld [vmem:[%s7665 + $0x1e0] sm:$0xfc]
        %v8869 = vld [vmem:[%s7665 + $0x1e8] sm:$0xfc]
        %v8870 = vld [vmem:[%s7665 + $0x200] sm:$0x3]
        %v8871 = vld [vmem:[%s7665 + $0x208] sm:$0x3]
        %v8872 = vld [vmem:[%s7665 + $0x210] sm:$0xfc]
        %v8873 = vld [vmem:[%s7665 + $0x218] sm:$0xfc]
        %v8874 = vld [vmem:[%s7665 + $0x230] sm:$0x3]
        %v8875 = vld [vmem:[%s7665 + $0x238] sm:$0x3]
        %v8876 = vld [vmem:[%s7665 + $0x240] sm:$0xfc]
        %v8877 = vld [vmem:[%s7665 + $0x248] sm:$0xfc]
        %v8878 = vld [vmem:[%s7665 + $0x260] sm:$0x3]
        %v8879 = vld [vmem:[%s7665 + $0x268] sm:$0x3]
        %v8880 = vld [vmem:[%s7665 + $0x270] sm:$0xfc]
        %v8881 = vld [vmem:[%s7665 + $0x278] sm:$0xfc]
        %v8882 = vld [vmem:[%s7665 + $0x290] sm:$0x3]
        %v8883 = vld [vmem:[%s7665 + $0x298] sm:$0x3]
        %v8884 = vld [vmem:[%s7665 + $0x2a0] sm:$0xfc]
        %v8885 = vld [vmem:[%s7665 + $0x2a8] sm:$0xfc]
        %v8886 = vld [vmem:[%s7665 + $0x2c0] sm:$0x3]
        %v8887 = vld [vmem:[%s7665 + $0x2c8] sm:$0x3]
        %v8888 = vld [vmem:[%s7665 + $0x2d0] sm:$0xfc]
        %v8889 = vld [vmem:[%s7665 + $0x2d8] sm:$0xfc]
        %v8890 = vld [vmem:[%s7665 + $0x2f0] sm:$0x3]
        %v8891 = vld [vmem:[%s7665 + $0x2f8] sm:$0x3]
        %v8956 = vrot.slane %v8828, 2
        %v8957 = vrot.slane %v8105, 2
        %v8958 = vsel %vm5308, %v8956, %v8957
        %v8959 = vrot.slane %v8829, 2
        %v8960 = vrot.slane %v8106, 2
        %v8961 = vsel %vm5308, %v8959, %v8960
        %v8962 = vrot.slane %v8830, 2
        %v8963 = vsel %vm5308, %v8957, %v8962
        %v8964 = vrot.slane %v8831, 2
        %v8965 = vsel %vm5308, %v8960, %v8964
        %v8966 = vrot.slane %v8832, 2
        %v8967 = vrot.slane %v8111, 2
        %v8968 = vsel %vm5308, %v8966, %v8967
        %v8969 = vrot.slane %v8833, 2
        %v8970 = vrot.slane %v8112, 2
        %v8971 = vsel %vm5308, %v8969, %v8970
        %v8972 = vrot.slane %v8834, 2
        %v8973 = vsel %vm5308, %v8967, %v8972
        %v8974 = vrot.slane %v8835, 2
        %v8975 = vsel %vm5308, %v8970, %v8974
        %v8976 = vrot.slane %v8836, 2
        %v8977 = vrot.slane %v8117, 2
        %v8978 = vsel %vm5308, %v8976, %v8977
        %v8979 = vrot.slane %v8837, 2
        %v8980 = vrot.slane %v8118, 2
        %v8981 = vsel %vm5308, %v8979, %v8980
        %v8982 = vrot.slane %v8838, 2
        %v8983 = vsel %vm5308, %v8977, %v8982
        %v8984 = vrot.slane %v8839, 2
        %v8985 = vsel %vm5308, %v8980, %v8984
        %v8986 = vrot.slane %v8840, 2
        %v8987 = vrot.slane %v8123, 2
        %v8988 = vsel %vm5308, %v8986, %v8987
        %v8989 = vrot.slane %v8841, 2
        %v8990 = vrot.slane %v8124, 2
        %v8991 = vsel %vm5308, %v8989, %v8990
        %v8992 = vrot.slane %v8842, 2
        %v8993 = vsel %vm5308, %v8987, %v8992
        %v8994 = vrot.slane %v8843, 2
        %v8995 = vsel %vm5308, %v8990, %v8994
        %v8996 = vrot.slane %v8844, 2
        %v8997 = vrot.slane %v8129, 2
        %v8998 = vsel %vm5308, %v8996, %v8997
        %v8999 = vrot.slane %v8845, 2
        %v9000 = vrot.slane %v8130, 2
        %v9001 = vsel %vm5308, %v8999, %v9000
        %v9002 = vrot.slane %v8846, 2
        %v9003 = vsel %vm5308, %v8997, %v9002
        %v9004 = vrot.slane %v8847, 2
        %v9005 = vsel %vm5308, %v9000, %v9004
        %v9006 = vrot.slane %v8848, 2
        %v9007 = vrot.slane %v8135, 2
        %v9008 = vsel %vm5308, %v9006, %v9007
        %v9009 = vrot.slane %v8849, 2
        %v9010 = vrot.slane %v8136, 2
        %v9011 = vsel %vm5308, %v9009, %v9010
        %v9012 = vrot.slane %v8850, 2
        %v9013 = vsel %vm5308, %v9007, %v9012
        %v9014 = vrot.slane %v8851, 2
        %v9015 = vsel %vm5308, %v9010, %v9014
        %v9016 = vrot.slane %v8852, 2
        %v9017 = vrot.slane %v8141, 2
        %v9018 = vsel %vm5308, %v9016, %v9017
        %v9019 = vrot.slane %v8853, 2
        %v9020 = vrot.slane %v8142, 2
        %v9021 = vsel %vm5308, %v9019, %v9020
        %v9022 = vrot.slane %v8854, 2
        %v9023 = vsel %vm5308, %v9017, %v9022
        %v9024 = vrot.slane %v8855, 2
        %v9025 = vsel %vm5308, %v9020, %v9024
        %v9026 = vrot.slane %v8856, 2
        %v9027 = vrot.slane %v8147, 2
        %v9028 = vsel %vm5308, %v9026, %v9027
        %v9029 = vrot.slane %v8857, 2
        %v9030 = vrot.slane %v8148, 2
        %v9031 = vsel %vm5308, %v9029, %v9030
        %v9032 = vrot.slane %v8858, 2
        %v9033 = vsel %vm5308, %v9027, %v9032
        %v9034 = vrot.slane %v8859, 2
        %v9035 = vsel %vm5308, %v9030, %v9034
        %v9036 = vrot.slane %v8860, 2
        %v9037 = vrot.slane %v8153, 2
        %v9038 = vsel %vm5308, %v9036, %v9037
        %v9039 = vrot.slane %v8861, 2
        %v9040 = vrot.slane %v8154, 2
        %v9041 = vsel %vm5308, %v9039, %v9040
        %v9042 = vrot.slane %v8862, 2
        %v9043 = vsel %vm5308, %v9037, %v9042
        %v9044 = vrot.slane %v8863, 2
        %v9045 = vsel %vm5308, %v9040, %v9044
        %v9046 = vrot.slane %v8864, 2
        %v9047 = vrot.slane %v8159, 2
        %v9048 = vsel %vm5308, %v9046, %v9047
        %v9049 = vrot.slane %v8865, 2
        %v9050 = vrot.slane %v8160, 2
        %v9051 = vsel %vm5308, %v9049, %v9050
        %v9052 = vrot.slane %v8866, 2
        %v9053 = vsel %vm5308, %v9047, %v9052
        %v9054 = vrot.slane %v8867, 2
        %v9055 = vsel %vm5308, %v9050, %v9054
        %v9056 = vrot.slane %v8868, 2
        %v9057 = vrot.slane %v8165, 2
        %v9058 = vsel %vm5308, %v9056, %v9057
        %v9059 = vrot.slane %v8869, 2
        %v9060 = vrot.slane %v8166, 2
        %v9061 = vsel %vm5308, %v9059, %v9060
        %v9062 = vrot.slane %v8870, 2
        %v9063 = vsel %vm5308, %v9057, %v9062
        %v9064 = vrot.slane %v8871, 2
        %v9065 = vsel %vm5308, %v9060, %v9064
        %v9066 = vrot.slane %v8872, 2
        %v9067 = vrot.slane %v8171, 2
        %v9068 = vsel %vm5308, %v9066, %v9067
        %v9069 = vrot.slane %v8873, 2
        %v9070 = vrot.slane %v8172, 2
        %v9071 = vsel %vm5308, %v9069, %v9070
        %v9072 = vrot.slane %v8874, 2
        %v9073 = vsel %vm5308, %v9067, %v9072
        %v9074 = vrot.slane %v8875, 2
        %v9075 = vsel %vm5308, %v9070, %v9074
        %v9076 = vrot.slane %v8876, 2
        %v9077 = vrot.slane %v8177, 2
        %v9078 = vsel %vm5308, %v9076, %v9077
        %v9079 = vrot.slane %v8877, 2
        %v9080 = vrot.slane %v8178, 2
        %v9081 = vsel %vm5308, %v9079, %v9080
        %v9082 = vrot.slane %v8878, 2
        %v9083 = vsel %vm5308, %v9077, %v9082
        %v9084 = vrot.slane %v8879, 2
        %v9085 = vsel %vm5308, %v9080, %v9084
        %v9086 = vrot.slane %v8880, 2
        %v9087 = vrot.slane %v8183, 2
        %v9088 = vsel %vm5308, %v9086, %v9087
        %v9089 = vrot.slane %v8881, 2
        %v9090 = vrot.slane %v8184, 2
        %v9091 = vsel %vm5308, %v9089, %v9090
        %v9092 = vrot.slane %v8882, 2
        %v9093 = vsel %vm5308, %v9087, %v9092
        %v9094 = vrot.slane %v8883, 2
        %v9095 = vsel %vm5308, %v9090, %v9094
        %v9096 = vrot.slane %v8884, 2
        %v9097 = vrot.slane %v8189, 2
        %v9098 = vsel %vm5308, %v9096, %v9097
        %v9099 = vrot.slane %v8885, 2
        %v9100 = vrot.slane %v8190, 2
        %v9101 = vsel %vm5308, %v9099, %v9100
        %v9102 = vrot.slane %v8886, 2
        %v9103 = vsel %vm5308, %v9097, %v9102
        %v9104 = vrot.slane %v8887, 2
        %v9105 = vsel %vm5308, %v9100, %v9104
        %v9106 = vrot.slane %v8888, 2
        %v9107 = vrot.slane %v8195, 2
        %v9108 = vsel %vm5308, %v9106, %v9107
        %v9109 = vrot.slane %v8889, 2
        %v9110 = vrot.slane %v8196, 2
        %v9111 = vsel %vm5308, %v9109, %v9110
        %v9112 = vrot.slane %v8890, 2
        %v9113 = vsel %vm5308, %v9107, %v9112
        %v9114 = vrot.slane %v8891, 2
        %v9115 = vsel %vm5308, %v9110, %v9114
        %s9148 = scalar_lea.vmem [#allocation7], 1152
        %v9149 = vld [vmem:[%s9148] sm:$0xff]
        %v9150 = vld [vmem:[%s9148 + $0x8] sm:$0xff]
        %v9151 = vld [vmem:[%s9148 + $0x10] sm:$0xff]
        %v9152 = vld [vmem:[%s9148 + $0x18] sm:$0xff]
        %v9153 = vld [vmem:[%s9148 + $0x20] sm:$0xff]
        %v9154 = vld [vmem:[%s9148 + $0x28] sm:$0xff]
        %v9155 = vld [vmem:[%s9148 + $0x30] sm:$0xff]
        %v9156 = vld [vmem:[%s9148 + $0x38] sm:$0xff]
        %v9157 = vld [vmem:[%s9148 + $0x40] sm:$0xff]
        %v9158 = vld [vmem:[%s9148 + $0x48] sm:$0xff]
        %v9159 = vld [vmem:[%s9148 + $0x50] sm:$0xff]
        %v9160 = vld [vmem:[%s9148 + $0x58] sm:$0xff]
        %v9161 = vld [vmem:[%s9148 + $0x60] sm:$0xff]
        %v9162 = vld [vmem:[%s9148 + $0x68] sm:$0xff]
        %v9163 = vld [vmem:[%s9148 + $0x70] sm:$0xff]
        %v9164 = vld [vmem:[%s9148 + $0x78] sm:$0xff]
        %v9165 = vld [vmem:[%s9148 + $0x80] sm:$0xff]
        %v9166 = vld [vmem:[%s9148 + $0x88] sm:$0xff]
        %v9167 = vsel %vm3694, %v8961, 0
        %v9169 = vsel %vm3694, %v8965, 0
        %v9171 = vsel %vm3694, %v8971, 0
        %v9173 = vsel %vm3694, %v8975, 0
        %v9175 = vsel %vm3694, %v8981, 0
        %v9177 = vsel %vm3694, %v8985, 0
        %v9179 = vsel %vm3694, %v8991, 0
        %v9181 = vsel %vm3694, %v8995, 0
        %v9183 = vsel %vm3694, %v9001, 0
        %v9185 = vsel %vm3694, %v9005, 0
        %v9187 = vsel %vm3694, %v9011, 0
        %v9189 = vsel %vm3694, %v9015, 0
        %v9191 = vsel %vm3694, %v9021, 0
        %v9193 = vsel %vm3694, %v9025, 0
        %v9195 = vsel %vm3694, %v9031, 0
        %v9197 = vsel %vm3694, %v9035, 0
        %v9199 = vsel %vm3694, %v9041, 0
        %v9201 = vsel %vm3694, %v9045, 0
        %v9203 = vsel %vm3694, %v9051, 0
        %v9205 = vsel %vm3694, %v9055, 0
        %v9207 = vsel %vm3694, %v9061, 0
        %v9209 = vsel %vm3694, %v9065, 0
        %v9211 = vsel %vm3694, %v9071, 0
        %v9213 = vsel %vm3694, %v9075, 0
        %v9215 = vsel %vm3694, %v9081, 0
        %v9217 = vsel %vm3694, %v9085, 0
        %v9219 = vsel %vm3694, %v9091, 0
        %v9221 = vsel %vm3694, %v9095, 0
        %v9223 = vsel %vm3694, %v9101, 0
        %v9225 = vsel %vm3694, %v9105, 0
        %v9227 = vsel %vm3694, %v9111, 0
        %v9229 = vsel %vm3694, %v9115, 0
        %9231 = vmatpush.msra.mxu0 %v9164
        %9232 = vmatpush.msra.mxu0 %v9163
        %9233 = vmatpush.msra.mxu0 %v9162
        %9234 = vmatpush.msra.mxu0 %v9161
        %9235 = vmatpush.msra.mxu0 %v9160
        %9236 = vmatpush.msra.mxu0 %v9159
        %9237 = vmatpush.msra.mxu0 %v9158
        %9238 = vmatpush.msra.mxu0 %v9157
        %9239 = vmatpush.msra.mxu0 %v9156
        %9240 = vmatpush.msra.mxu0 %v9155
        %9241 = vmatpush.msra.mxu0 %v9154
        %9242 = vmatpush.msra.mxu0 %v9153
        %9243 = vmatpush.msra.mxu0 %v9152
        %9244 = vmatpush.msra.mxu0 %v9151
        %9245 = vmatpush.msra.mxu0 %v9150
        %9246 = vmatpush.msra.mxu0 %v9149
        %9247 = vmatmul.f32.gmra.mxu0 %v8958
        %v9248 = vpop.f32.mrf.mxu0
        %v9249 = vadd.f32 0.0, %v9248
        %9250 = vmatmul.f32.gmra.mxu0 %v8963
        %v9251 = vpop.f32.mrf.mxu0
        %v9252 = vadd.f32 0.0, %v9251
        %9253 = vmatmul.f32.gmra.mxu0 %v8968
        %v9254 = vpop.f32.mrf.mxu0
        %v9255 = vadd.f32 0.0, %v9254
        %9256 = vmatmul.f32.gmra.mxu0 %v8973
        %v9257 = vpop.f32.mrf.mxu0
        %v9258 = vadd.f32 0.0, %v9257
        %9259 = vmatmul.f32.gmra.mxu0 %v8978
        %v9260 = vpop.f32.mrf.mxu0
        %v9261 = vadd.f32 0.0, %v9260
        %9262 = vmatmul.f32.gmra.mxu0 %v8983
        %v9263 = vpop.f32.mrf.mxu0
        %v9264 = vadd.f32 0.0, %v9263
        %9265 = vmatmul.f32.gmra.mxu0 %v8988
        %v9266 = vpop.f32.mrf.mxu0
        %v9267 = vadd.f32 0.0, %v9266
        %9268 = vmatmul.f32.gmra.mxu0 %v8993
        %v9269 = vpop.f32.mrf.mxu0
        %v9270 = vadd.f32 0.0, %v9269
        %9271 = vmatmul.f32.gmra.mxu0 %v8998
        %v9272 = vpop.f32.mrf.mxu0
        %v9273 = vadd.f32 0.0, %v9272
        %9274 = vmatmul.f32.gmra.mxu0 %v9003
        %v9275 = vpop.f32.mrf.mxu0
        %v9276 = vadd.f32 0.0, %v9275
        %9277 = vmatmul.f32.gmra.mxu0 %v9008
        %v9278 = vpop.f32.mrf.mxu0
        %v9279 = vadd.f32 0.0, %v9278
        %9280 = vmatmul.f32.gmra.mxu0 %v9013
        %v9281 = vpop.f32.mrf.mxu0
        %v9282 = vadd.f32 0.0, %v9281
        %9283 = vmatmul.f32.gmra.mxu0 %v9018
        %v9284 = vpop.f32.mrf.mxu0
        %v9285 = vadd.f32 0.0, %v9284
        %9286 = vmatmul.f32.gmra.mxu0 %v9023
        %v9287 = vpop.f32.mrf.mxu0
        %v9288 = vadd.f32 0.0, %v9287
        %9289 = vmatmul.f32.gmra.mxu0 %v9028
        %v9290 = vpop.f32.mrf.mxu0
        %v9291 = vadd.f32 0.0, %v9290
        %9292 = vmatmul.f32.gmra.mxu0 %v9033
        %v9293 = vpop.f32.mrf.mxu0
        %v9294 = vadd.f32 0.0, %v9293
        %9295 = vmatmul.f32.gmra.mxu0 %v9038
        %v9296 = vpop.f32.mrf.mxu0
        %v9297 = vadd.f32 0.0, %v9296
        %9298 = vmatmul.f32.gmra.mxu0 %v9043
        %v9299 = vpop.f32.mrf.mxu0
        %v9300 = vadd.f32 0.0, %v9299
        %9301 = vmatmul.f32.gmra.mxu0 %v9048
        %v9302 = vpop.f32.mrf.mxu0
        %v9303 = vadd.f32 0.0, %v9302
        %9304 = vmatmul.f32.gmra.mxu0 %v9053
        %v9305 = vpop.f32.mrf.mxu0
        %v9306 = vadd.f32 0.0, %v9305
        %9307 = vmatmul.f32.gmra.mxu0 %v9058
        %v9308 = vpop.f32.mrf.mxu0
        %v9309 = vadd.f32 0.0, %v9308
        %9310 = vmatmul.f32.gmra.mxu0 %v9063
        %v9311 = vpop.f32.mrf.mxu0
        %v9312 = vadd.f32 0.0, %v9311
        %9313 = vmatmul.f32.gmra.mxu0 %v9068
        %v9314 = vpop.f32.mrf.mxu0
        %v9315 = vadd.f32 0.0, %v9314
        %9316 = vmatmul.f32.gmra.mxu0 %v9073
        %v9317 = vpop.f32.mrf.mxu0
        %v9318 = vadd.f32 0.0, %v9317
        %9319 = vmatmul.f32.gmra.mxu0 %v9078
        %v9320 = vpop.f32.mrf.mxu0
        %v9321 = vadd.f32 0.0, %v9320
        %9322 = vmatmul.f32.gmra.mxu0 %v9083
        %v9323 = vpop.f32.mrf.mxu0
        %v9324 = vadd.f32 0.0, %v9323
        %9325 = vmatmul.f32.gmra.mxu0 %v9088
        %v9326 = vpop.f32.mrf.mxu0
        %v9327 = vadd.f32 0.0, %v9326
        %9328 = vmatmul.f32.gmra.mxu0 %v9093
        %v9329 = vpop.f32.mrf.mxu0
        %v9330 = vadd.f32 0.0, %v9329
        %9331 = vmatmul.f32.gmra.mxu0 %v9098
        %v9332 = vpop.f32.mrf.mxu0
        %v9333 = vadd.f32 0.0, %v9332
        %9334 = vmatmul.f32.gmra.mxu0 %v9103
        %v9335 = vpop.f32.mrf.mxu0
        %v9336 = vadd.f32 0.0, %v9335
        %9337 = vmatmul.f32.gmra.mxu0 %v9108
        %v9338 = vpop.f32.mrf.mxu0
        %v9339 = vadd.f32 0.0, %v9338
        %9340 = vmatmul.f32.gmra.mxu0 %v9113
        %v9341 = vpop.f32.mrf.mxu0
        %v9342 = vadd.f32 0.0, %v9341
        %9343 = vdwg.mxu0
        %9344 = vmatpush.msra.mxu0 0.0
        %9345 = vmatpush.msra.mxu0 0.0
        %9346 = vmatpush.msra.mxu0 0.0
        %9347 = vmatpush.msra.mxu0 0.0
        %9348 = vmatpush.msra.mxu0 0.0
        %9349 = vmatpush.msra.mxu0 0.0
        %9350 = vmatpush.msra.mxu0 0.0
        %9351 = vmatpush.msra.mxu0 0.0
        %9352 = vmatpush.msra.mxu0 0.0
        %9353 = vmatpush.msra.mxu0 0.0
        %9354 = vmatpush.msra.mxu0 0.0
        %9355 = vmatpush.msra.mxu0 0.0
        %9356 = vmatpush.msra.mxu0 0.0
        %9357 = vmatpush.msra.mxu0 0.0
        %9358 = vmatpush.msra.mxu0 %v9166
        %9359 = vmatpush.msra.mxu0 %v9165
        %9360 = vmatmul.f32.gmra.mxu0 %v9167
        %v9361 = vpop.f32.mrf.mxu0
        %v9362 = vadd.f32 %v9249, %v9361
        %9363 = vmatmul.f32.gmra.mxu0 %v9169
        %v9364 = vpop.f32.mrf.mxu0
        %v9365 = vadd.f32 %v9252, %v9364
        %9366 = vmatmul.f32.gmra.mxu0 %v9171
        %v9367 = vpop.f32.mrf.mxu0
        %v9368 = vadd.f32 %v9255, %v9367
        %9369 = vmatmul.f32.gmra.mxu0 %v9173
        %v9370 = vpop.f32.mrf.mxu0
        %v9371 = vadd.f32 %v9258, %v9370
        %9372 = vmatmul.f32.gmra.mxu0 %v9175
        %v9373 = vpop.f32.mrf.mxu0
        %v9374 = vadd.f32 %v9261, %v9373
        %9375 = vmatmul.f32.gmra.mxu0 %v9177
        %v9376 = vpop.f32.mrf.mxu0
        %v9377 = vadd.f32 %v9264, %v9376
        %9378 = vmatmul.f32.gmra.mxu0 %v9179
        %v9379 = vpop.f32.mrf.mxu0
        %v9380 = vadd.f32 %v9267, %v9379
        %9381 = vmatmul.f32.gmra.mxu0 %v9181
        %v9382 = vpop.f32.mrf.mxu0
        %v9383 = vadd.f32 %v9270, %v9382
        %9384 = vmatmul.f32.gmra.mxu0 %v9183
        %v9385 = vpop.f32.mrf.mxu0
        %v9386 = vadd.f32 %v9273, %v9385
        %9387 = vmatmul.f32.gmra.mxu0 %v9185
        %v9388 = vpop.f32.mrf.mxu0
        %v9389 = vadd.f32 %v9276, %v9388
        %9390 = vmatmul.f32.gmra.mxu0 %v9187
        %v9391 = vpop.f32.mrf.mxu0
        %v9392 = vadd.f32 %v9279, %v9391
        %9393 = vmatmul.f32.gmra.mxu0 %v9189
        %v9394 = vpop.f32.mrf.mxu0
        %v9395 = vadd.f32 %v9282, %v9394
        %9396 = vmatmul.f32.gmra.mxu0 %v9191
        %v9397 = vpop.f32.mrf.mxu0
        %v9398 = vadd.f32 %v9285, %v9397
        %9399 = vmatmul.f32.gmra.mxu0 %v9193
        %v9400 = vpop.f32.mrf.mxu0
        %v9401 = vadd.f32 %v9288, %v9400
        %9402 = vmatmul.f32.gmra.mxu0 %v9195
        %v9403 = vpop.f32.mrf.mxu0
        %v9404 = vadd.f32 %v9291, %v9403
        %9405 = vmatmul.f32.gmra.mxu0 %v9197
        %v9406 = vpop.f32.mrf.mxu0
        %v9407 = vadd.f32 %v9294, %v9406
        %9408 = vmatmul.f32.gmra.mxu0 %v9199
        %v9409 = vpop.f32.mrf.mxu0
        %v9410 = vadd.f32 %v9297, %v9409
        %9411 = vmatmul.f32.gmra.mxu0 %v9201
        %v9412 = vpop.f32.mrf.mxu0
        %v9413 = vadd.f32 %v9300, %v9412
        %9414 = vmatmul.f32.gmra.mxu0 %v9203
        %v9415 = vpop.f32.mrf.mxu0
        %v9416 = vadd.f32 %v9303, %v9415
        %9417 = vmatmul.f32.gmra.mxu0 %v9205
        %v9418 = vpop.f32.mrf.mxu0
        %v9419 = vadd.f32 %v9306, %v9418
        %9420 = vmatmul.f32.gmra.mxu0 %v9207
        %v9421 = vpop.f32.mrf.mxu0
        %v9422 = vadd.f32 %v9309, %v9421
        %9423 = vmatmul.f32.gmra.mxu0 %v9209
        %v9424 = vpop.f32.mrf.mxu0
        %v9425 = vadd.f32 %v9312, %v9424
        %9426 = vmatmul.f32.gmra.mxu0 %v9211
        %v9427 = vpop.f32.mrf.mxu0
        %v9428 = vadd.f32 %v9315, %v9427
        %9429 = vmatmul.f32.gmra.mxu0 %v9213
        %v9430 = vpop.f32.mrf.mxu0
        %v9431 = vadd.f32 %v9318, %v9430
        %9432 = vmatmul.f32.gmra.mxu0 %v9215
        %v9433 = vpop.f32.mrf.mxu0
        %v9434 = vadd.f32 %v9321, %v9433
        %9435 = vmatmul.f32.gmra.mxu0 %v9217
        %v9436 = vpop.f32.mrf.mxu0
        %v9437 = vadd.f32 %v9324, %v9436
        %9438 = vmatmul.f32.gmra.mxu0 %v9219
        %v9439 = vpop.f32.mrf.mxu0
        %v9440 = vadd.f32 %v9327, %v9439
        %9441 = vmatmul.f32.gmra.mxu0 %v9221
        %v9442 = vpop.f32.mrf.mxu0
        %v9443 = vadd.f32 %v9330, %v9442
        %9444 = vmatmul.f32.gmra.mxu0 %v9223
        %v9445 = vpop.f32.mrf.mxu0
        %v9446 = vadd.f32 %v9333, %v9445
        %9447 = vmatmul.f32.gmra.mxu0 %v9225
        %v9448 = vpop.f32.mrf.mxu0
        %v9449 = vadd.f32 %v9336, %v9448
        %9450 = vmatmul.f32.gmra.mxu0 %v9227
        %v9451 = vpop.f32.mrf.mxu0
        %v9452 = vadd.f32 %v9339, %v9451
        %9453 = vmatmul.f32.gmra.mxu0 %v9229
        %v9454 = vpop.f32.mrf.mxu0
        %v9455 = vadd.f32 %v9342, %v9454
        %9456 = vdwg.mxu0
        %v9457 = vadd.f32 %v8796, %v9362
        %v9458 = vadd.f32 %v8797, %v9365
        %v9459 = vadd.f32 %v8798, %v9368
        %v9460 = vadd.f32 %v8799, %v9371
        %v9461 = vadd.f32 %v8800, %v9374
        %v9462 = vadd.f32 %v8801, %v9377
        %v9463 = vadd.f32 %v8802, %v9380
        %v9464 = vadd.f32 %v8803, %v9383
        %v9465 = vadd.f32 %v8804, %v9386
        %v9466 = vadd.f32 %v8805, %v9389
        %v9467 = vadd.f32 %v8806, %v9392
        %v9468 = vadd.f32 %v8807, %v9395
        %v9469 = vadd.f32 %v8808, %v9398
        %v9470 = vadd.f32 %v8809, %v9401
        %v9471 = vadd.f32 %v8810, %v9404
        %v9472 = vadd.f32 %v8811, %v9407
        %v9473 = vadd.f32 %v8812, %v9410
        %v9474 = vadd.f32 %v8813, %v9413
        %v9475 = vadd.f32 %v8814, %v9416
        %v9476 = vadd.f32 %v8815, %v9419
        %v9477 = vadd.f32 %v8816, %v9422
        %v9478 = vadd.f32 %v8817, %v9425
        %v9479 = vadd.f32 %v8818, %v9428
        %v9480 = vadd.f32 %v8819, %v9431
        %v9481 = vadd.f32 %v8820, %v9434
        %v9482 = vadd.f32 %v8821, %v9437
        %v9483 = vadd.f32 %v8822, %v9440
        %v9484 = vadd.f32 %v8823, %v9443
        %v9485 = vadd.f32 %v8824, %v9446
        %v9486 = vadd.f32 %v8825, %v9449
        %v9487 = vadd.f32 %v8826, %v9452
        %v9488 = vadd.f32 %v8827, %v9455
        %v9489 = vadd.f32 %v9457, %v9458
        %v9490 = vadd.f32 %v9489, %v9459
        %v9491 = vadd.f32 %v9490, %v9460
        %v9492 = vadd.f32 %v9491, %v9461
        %v9493 = vadd.f32 %v9492, %v9462
        %v9494 = vadd.f32 %v9493, %v9463
        %v9495 = vadd.f32 %v9494, %v9464
        %v9496 = vadd.f32 %v9495, %v9465
        %v9497 = vadd.f32 %v9496, %v9466
        %v9498 = vadd.f32 %v9497, %v9467
        %v9499 = vadd.f32 %v9498, %v9468
        %v9500 = vadd.f32 %v9499, %v9469
        %v9501 = vadd.f32 %v9500, %v9470
        %v9502 = vadd.f32 %v9501, %v9471
        %v9503 = vadd.f32 %v9502, %v9472
        %v9504 = vadd.f32 %v9503, %v9473
        %v9505 = vadd.f32 %v9504, %v9474
        %v9506 = vadd.f32 %v9505, %v9475
        %v9507 = vadd.f32 %v9506, %v9476
        %v9508 = vadd.f32 %v9507, %v9477
        %v9509 = vadd.f32 %v9508, %v9478
        %v9510 = vadd.f32 %v9509, %v9479
        %v9511 = vadd.f32 %v9510, %v9480
        %v9512 = vadd.f32 %v9511, %v9481
        %v9513 = vadd.f32 %v9512, %v9482
        %v9514 = vadd.f32 %v9513, %v9483
        %v9515 = vadd.f32 %v9514, %v9484
        %v9516 = vadd.f32 %v9515, %v9485
        %v9517 = vadd.f32 %v9516, %v9486
        %v9518 = vadd.f32 %v9517, %v9487
        %v9519 = vadd.f32 %v9518, %v9488
        %v9520 = vrot.slane %v9519, 4
        %v9521 = vadd.f32 %v9519, %v9520
        %v9522 = vrot.slane %v9521, 2
        %v9523 = vadd.f32 %v9521, %v9522
        %v9524 = vrot.slane %v9523, 1
        %v9525 = vadd.f32 %v9523, %v9524
        %v9526 = vmul.f32 %v9457, %v9457
        %v9527 = vmul.f32 %v9458, %v9458
        %v9528 = vmul.f32 %v9459, %v9459
        %v9529 = vmul.f32 %v9460, %v9460
        %v9530 = vmul.f32 %v9461, %v9461
        %v9531 = vmul.f32 %v9462, %v9462
        %v9532 = vmul.f32 %v9463, %v9463
        %v9533 = vmul.f32 %v9464, %v9464
        %v9534 = vmul.f32 %v9465, %v9465
        %v9535 = vmul.f32 %v9466, %v9466
        %v9536 = vmul.f32 %v9467, %v9467
        %v9537 = vmul.f32 %v9468, %v9468
        %v9538 = vmul.f32 %v9469, %v9469
        %v9539 = vmul.f32 %v9470, %v9470
        %v9540 = vmul.f32 %v9471, %v9471
        %v9541 = vmul.f32 %v9472, %v9472
        %v9542 = vmul.f32 %v9473, %v9473
        %v9543 = vmul.f32 %v9474, %v9474
        %v9544 = vmul.f32 %v9475, %v9475
        %v9545 = vmul.f32 %v9476, %v9476
        %v9546 = vmul.f32 %v9477, %v9477
        %v9547 = vmul.f32 %v9478, %v9478
        %v9548 = vmul.f32 %v9479, %v9479
        %v9549 = vmul.f32 %v9480, %v9480
        %v9550 = vmul.f32 %v9481, %v9481
        %v9551 = vmul.f32 %v9482, %v9482
        %v9552 = vmul.f32 %v9483, %v9483
        %v9553 = vmul.f32 %v9484, %v9484
        %v9554 = vmul.f32 %v9485, %v9485
        %v9555 = vmul.f32 %v9486, %v9486
        %v9556 = vmul.f32 %v9487, %v9487
        %v9557 = vmul.f32 %v9488, %v9488
        %v9558 = vadd.f32 %v9526, %v9527
        %v9559 = vadd.f32 %v9558, %v9528
        %v9560 = vadd.f32 %v9559, %v9529
        %v9561 = vadd.f32 %v9560, %v9530
        %v9562 = vadd.f32 %v9561, %v9531
        %v9563 = vadd.f32 %v9562, %v9532
        %v9564 = vadd.f32 %v9563, %v9533
        %v9565 = vadd.f32 %v9564, %v9534
        %v9566 = vadd.f32 %v9565, %v9535
        %v9567 = vadd.f32 %v9566, %v9536
        %v9568 = vadd.f32 %v9567, %v9537
        %v9569 = vadd.f32 %v9568, %v9538
        %v9570 = vadd.f32 %v9569, %v9539
        %v9571 = vadd.f32 %v9570, %v9540
        %v9572 = vadd.f32 %v9571, %v9541
        %v9573 = vadd.f32 %v9572, %v9542
        %v9574 = vadd.f32 %v9573, %v9543
        %v9575 = vadd.f32 %v9574, %v9544
        %v9576 = vadd.f32 %v9575, %v9545
        %v9577 = vadd.f32 %v9576, %v9546
        %v9578 = vadd.f32 %v9577, %v9547
        %v9579 = vadd.f32 %v9578, %v9548
        %v9580 = vadd.f32 %v9579, %v9549
        %v9581 = vadd.f32 %v9580, %v9550
        %v9582 = vadd.f32 %v9581, %v9551
        %v9583 = vadd.f32 %v9582, %v9552
        %v9584 = vadd.f32 %v9583, %v9553
        %v9585 = vadd.f32 %v9584, %v9554
        %v9586 = vadd.f32 %v9585, %v9555
        %v9587 = vadd.f32 %v9586, %v9556
        %v9588 = vadd.f32 %v9587, %v9557
        %v9589 = vrot.slane %v9588, 4
        %v9590 = vadd.f32 %v9588, %v9589
        %v9591 = vrot.slane %v9590, 2
        %v9592 = vadd.f32 %v9590, %v9591
        %v9593 = vrot.slane %v9592, 1
        %v9594 = vadd.f32 %v9592, %v9593
        %9595 = vmatpush.msra.mxu0 %v903
        %9596 = vmatpush.msra.mxu0 %v902
        %9597 = vmatpush.msra.mxu0 %v901
        %9598 = vmatpush.msra.mxu0 %v900
        %9599 = vmatpush.msra.mxu0 %v899
        %9600 = vmatpush.msra.mxu0 %v898
        %9601 = vmatpush.msra.mxu0 %v897
        %9602 = vmatpush.msra.mxu0 %v896
        %9603 = vmatpush.msra.mxu0 %v895
        %9604 = vmatpush.msra.mxu0 %v894
        %9605 = vmatpush.msra.mxu0 %v893
        %9606 = vmatpush.msra.mxu0 %v892
        %9607 = vmatpush.msra.mxu0 %v891
        %9608 = vmatpush.msra.mxu0 %v890
        %9609 = vmatpush.msra.mxu0 %v889
        %9610 = vmatpush.msra.mxu0 %v888
        %9611 = vmatmul.f32.gmra.mxu0 %v9525
        %v9612 = vpop.f32.mrf.mxu0
        %v9613 = vadd.f32 0.0, %v9612
        %9614 = vdwg.mxu0
        %v9615 = vmul.f32 %v9613, 0.00024414063
        %9616 = vmatpush.msra.mxu0 %v903
        %9617 = vmatpush.msra.mxu0 %v902
        %9618 = vmatpush.msra.mxu0 %v901
        %9619 = vmatpush.msra.mxu0 %v900
        %9620 = vmatpush.msra.mxu0 %v899
        %9621 = vmatpush.msra.mxu0 %v898
        %9622 = vmatpush.msra.mxu0 %v897
        %9623 = vmatpush.msra.mxu0 %v896
        %9624 = vmatpush.msra.mxu0 %v895
        %9625 = vmatpush.msra.mxu0 %v894
        %9626 = vmatpush.msra.mxu0 %v893
        %9627 = vmatpush.msra.mxu0 %v892
        %9628 = vmatpush.msra.mxu0 %v891
        %9629 = vmatpush.msra.mxu0 %v890
        %9630 = vmatpush.msra.mxu0 %v889
        %9631 = vmatpush.msra.mxu0 %v888
        %9632 = vmatmul.f32.gmra.mxu0 %v9594
        %v9633 = vpop.f32.mrf.mxu0
        %v9634 = vadd.f32 0.0, %v9633
        %9635 = vdwg.mxu0
        %v9636 = vmul.f32 %v9634, 0.00024414063
        %v9637 = vmul.f32 %v9615, %v9615
        %v9638 = vsub.f32 %v9636, %v9637
        %v9639 = vadd.f32 %v9638, 1e-05
        %v9640 = vrsqrt.pop %v9639
        %v9641 = vmul.f32 %v9640, %v9639
        %v9642 = vmul.f32 %v9641, %v9640
        %v9643 = vmul.f32 0.5, %v9642
        %v9644 = vsub.f32 1.5, %v9643
        %v9645 = vmul.f32 %v9640, %v9644
        %vm9646 = vweird.f32 %v9639
        %vm9647 = vweird.f32 %v9640
        %vm9648 = vmor %vm9646, %vm9647
        %v9649 = vsel %vm9648, %v9640, %v9645
        %v9651 = vsel %vm391, %v9615, 0
        %9653 = vmatpush.msra.mxu0 0.0
        %9654 = vmatpush.msra.mxu0 0.0
        %9655 = vmatpush.msra.mxu0 0.0
        %9656 = vmatpush.msra.mxu0 0.0
        %9657 = vmatpush.msra.mxu0 0.0
        %9658 = vmatpush.msra.mxu0 0.0
        %9659 = vmatpush.msra.mxu0 0.0
        %9660 = vmatpush.msra.mxu0 0.0
        %9661 = vmatpush.msra.mxu0 0.0
        %9662 = vmatpush.msra.mxu0 0.0
        %9663 = vmatpush.msra.mxu0 0.0
        %9664 = vmatpush.msra.mxu0 0.0
        %9665 = vmatpush.msra.mxu0 0.0
        %9666 = vmatpush.msra.mxu0 0.0
        %9667 = vmatpush.msra.mxu0 0.0
        %9668 = vmatpush.msra.mxu0 %v904
        %9669 = vmatmul.f32.gmra.mxu0 %v9651
        %v9670 = vpop.f32.mrf.mxu0
        %v9671 = vadd.f32 0.0, %v9670
        %9672 = vdwg.mxu0
        %v9674 = vsel %vm391, %v9649, 0
        %9676 = vmatpush.msra.mxu0 0.0
        %9677 = vmatpush.msra.mxu0 0.0
        %9678 = vmatpush.msra.mxu0 0.0
        %9679 = vmatpush.msra.mxu0 0.0
        %9680 = vmatpush.msra.mxu0 0.0
        %9681 = vmatpush.msra.mxu0 0.0
        %9682 = vmatpush.msra.mxu0 0.0
        %9683 = vmatpush.msra.mxu0 0.0
        %9684 = vmatpush.msra.mxu0 0.0
        %9685 = vmatpush.msra.mxu0 0.0
        %9686 = vmatpush.msra.mxu0 0.0
        %9687 = vmatpush.msra.mxu0 0.0
        %9688 = vmatpush.msra.mxu0 0.0
        %9689 = vmatpush.msra.mxu0 0.0
        %9690 = vmatpush.msra.mxu0 0.0
        %9691 = vmatpush.msra.mxu0 %v904
        %9692 = vmatmul.f32.gmra.mxu0 %v9674
        %v9693 = vpop.f32.mrf.mxu0
        %v9694 = vadd.f32 0.0, %v9693
        %9695 = vdwg.mxu0
        %v9696 = vperm.slane %v9671, 0
        %v9697 = vsub.f32 %v9457, %v9696
        %v9698 = vsub.f32 %v9458, %v9696
        %v9699 = vsub.f32 %v9459, %v9696
        %v9700 = vsub.f32 %v9460, %v9696
        %v9701 = vsub.f32 %v9461, %v9696
        %v9702 = vsub.f32 %v9462, %v9696
        %v9703 = vsub.f32 %v9463, %v9696
        %v9704 = vsub.f32 %v9464, %v9696
        %v9705 = vsub.f32 %v9465, %v9696
        %v9706 = vsub.f32 %v9466, %v9696
        %v9707 = vsub.f32 %v9467, %v9696
        %v9708 = vsub.f32 %v9468, %v9696
        %v9709 = vsub.f32 %v9469, %v9696
        %v9710 = vsub.f32 %v9470, %v9696
        %v9711 = vsub.f32 %v9471, %v9696
        %v9712 = vsub.f32 %v9472, %v9696
        %v9713 = vsub.f32 %v9473, %v9696
        %v9714 = vsub.f32 %v9474, %v9696
        %v9715 = vsub.f32 %v9475, %v9696
        %v9716 = vsub.f32 %v9476, %v9696
        %v9717 = vsub.f32 %v9477, %v9696
        %v9718 = vsub.f32 %v9478, %v9696
        %v9719 = vsub.f32 %v9479, %v9696
        %v9720 = vsub.f32 %v9480, %v9696
        %v9721 = vsub.f32 %v9481, %v9696
        %v9722 = vsub.f32 %v9482, %v9696
        %v9723 = vsub.f32 %v9483, %v9696
        %v9724 = vsub.f32 %v9484, %v9696
        %v9725 = vsub.f32 %v9485, %v9696
        %v9726 = vsub.f32 %v9486, %v9696
        %v9727 = vsub.f32 %v9487, %v9696
        %v9728 = vsub.f32 %v9488, %v9696
        %v9729 = vperm.slane %v9694, 0
        %v9730 = vmul.f32 %v9697, %v9729
        %v9731 = vmul.f32 %v9698, %v9729
        %v9732 = vmul.f32 %v9699, %v9729
        %v9733 = vmul.f32 %v9700, %v9729
        %v9734 = vmul.f32 %v9701, %v9729
        %v9735 = vmul.f32 %v9702, %v9729
        %v9736 = vmul.f32 %v9703, %v9729
        %v9737 = vmul.f32 %v9704, %v9729
        %v9738 = vmul.f32 %v9705, %v9729
        %v9739 = vmul.f32 %v9706, %v9729
        %v9740 = vmul.f32 %v9707, %v9729
        %v9741 = vmul.f32 %v9708, %v9729
        %v9742 = vmul.f32 %v9709, %v9729
        %v9743 = vmul.f32 %v9710, %v9729
        %v9744 = vmul.f32 %v9711, %v9729
        %v9745 = vmul.f32 %v9712, %v9729
        %v9746 = vmul.f32 %v9713, %v9729
        %v9747 = vmul.f32 %v9714, %v9729
        %v9748 = vmul.f32 %v9715, %v9729
        %v9749 = vmul.f32 %v9716, %v9729
        %v9750 = vmul.f32 %v9717, %v9729
        %v9751 = vmul.f32 %v9718, %v9729
        %v9752 = vmul.f32 %v9719, %v9729
        %v9753 = vmul.f32 %v9720, %v9729
        %v9754 = vmul.f32 %v9721, %v9729
        %v9755 = vmul.f32 %v9722, %v9729
        %v9756 = vmul.f32 %v9723, %v9729
        %v9757 = vmul.f32 %v9724, %v9729
        %v9758 = vmul.f32 %v9725, %v9729
        %v9759 = vmul.f32 %v9726, %v9729
        %v9760 = vmul.f32 %v9727, %v9729
        %v9761 = vmul.f32 %v9728, %v9729
        %v9762 = vmax.f32 %v9730, 0.0
        %v9763 = vmax.f32 %v9731, 0.0
        %v9764 = vmax.f32 %v9732, 0.0
        %v9765 = vmax.f32 %v9733, 0.0
        %v9766 = vmax.f32 %v9734, 0.0
        %v9767 = vmax.f32 %v9735, 0.0
        %v9768 = vmax.f32 %v9736, 0.0
        %v9769 = vmax.f32 %v9737, 0.0
        %v9770 = vmax.f32 %v9738, 0.0
        %v9771 = vmax.f32 %v9739, 0.0
        %v9772 = vmax.f32 %v9740, 0.0
        %v9773 = vmax.f32 %v9741, 0.0
        %v9774 = vmax.f32 %v9742, 0.0
        %v9775 = vmax.f32 %v9743, 0.0
        %v9776 = vmax.f32 %v9744, 0.0
        %v9777 = vmax.f32 %v9745, 0.0
        %v9778 = vmax.f32 %v9746, 0.0
        %v9779 = vmax.f32 %v9747, 0.0
        %v9780 = vmax.f32 %v9748, 0.0
        %v9781 = vmax.f32 %v9749, 0.0
        %v9782 = vmax.f32 %v9750, 0.0
        %v9783 = vmax.f32 %v9751, 0.0
        %v9784 = vmax.f32 %v9752, 0.0
        %v9785 = vmax.f32 %v9753, 0.0
        %v9786 = vmax.f32 %v9754, 0.0
        %v9787 = vmax.f32 %v9755, 0.0
        %v9788 = vmax.f32 %v9756, 0.0
        %v9789 = vmax.f32 %v9757, 0.0
        %v9790 = vmax.f32 %v9758, 0.0
        %v9791 = vmax.f32 %v9759, 0.0
        %v9792 = vmax.f32 %v9760, 0.0
        %v9793 = vmax.f32 %v9761, 0.0
        %9794 = vst [vmem:[%s305] sm:$0xff] %v9762
        %9795 = vst [vmem:[%s305 + $0x8] sm:$0xff] %v9763
        %9796 = vst [vmem:[%s305 + $0x10] sm:$0xff] %v9764
        %9797 = vst [vmem:[%s305 + $0x18] sm:$0xff] %v9765
        %9798 = vst [vmem:[%s305 + $0x20] sm:$0xff] %v9766
        %9799 = vst [vmem:[%s305 + $0x28] sm:$0xff] %v9767
        %9800 = vst [vmem:[%s305 + $0x30] sm:$0xff] %v9768
        %9801 = vst [vmem:[%s305 + $0x38] sm:$0xff] %v9769
        %9802 = vst [vmem:[%s305 + $0x40] sm:$0xff] %v9770
        %9803 = vst [vmem:[%s305 + $0x48] sm:$0xff] %v9771
        %9804 = vst [vmem:[%s305 + $0x50] sm:$0xff] %v9772
        %9805 = vst [vmem:[%s305 + $0x58] sm:$0xff] %v9773
        %9806 = vst [vmem:[%s305 + $0x60] sm:$0xff] %v9774
        %9807 = vst [vmem:[%s305 + $0x68] sm:$0xff] %v9775
        %9808 = vst [vmem:[%s305 + $0x70] sm:$0xff] %v9776
        %9809 = vst [vmem:[%s305 + $0x78] sm:$0xff] %v9777
        %9810 = vst [vmem:[%s305 + $0x80] sm:$0xff] %v9778
        %9811 = vst [vmem:[%s305 + $0x88] sm:$0xff] %v9779
        %9812 = vst [vmem:[%s305 + $0x90] sm:$0xff] %v9780
        %9813 = vst [vmem:[%s305 + $0x98] sm:$0xff] %v9781
        %9814 = vst [vmem:[%s305 + $0xa0] sm:$0xff] %v9782
        %9815 = vst [vmem:[%s305 + $0xa8] sm:$0xff] %v9783
        %9816 = vst [vmem:[%s305 + $0xb0] sm:$0xff] %v9784
        %9817 = vst [vmem:[%s305 + $0xb8] sm:$0xff] %v9785
        %9818 = vst [vmem:[%s305 + $0xc0] sm:$0xff] %v9786
        %9819 = vst [vmem:[%s305 + $0xc8] sm:$0xff] %v9787
        %9820 = vst [vmem:[%s305 + $0xd0] sm:$0xff] %v9788
        %9821 = vst [vmem:[%s305 + $0xd8] sm:$0xff] %v9789
        %9822 = vst [vmem:[%s305 + $0xe0] sm:$0xff] %v9790
        %9823 = vst [vmem:[%s305 + $0xe8] sm:$0xff] %v9791
        %9824 = vst [vmem:[%s305 + $0xf0] sm:$0xff] %v9792
        %9825 = vst [vmem:[%s305 + $0xf8] sm:$0xff] %v9793
        %s9826 = sand.u32 %s183, 1
        %s9827 = scalar_lea.sflag [#allocation6], %s9826
        %s9828 = sand.u32 %s183, 1
        %s9829 = smul.addr %s9828, 256
        %s9830 = scalar_lea.vmem [#allocation9], %s9829
        // Predicated region
        $region57: #{tpu_custom_call.1} parent=47 // pred_check
          %p9831 = pneg %p193
        $region58: #{tpu_custom_call.1} parent=47 // pred_check_branch
          %9833 = sbr.rel (%p9831) target = $region60
        $region59: #{tpu_custom_call.1} parent=47 // pred_region
          %9835 = vsyncadd %s9827, 0
          %s9836 = smul.addr %s23, 32
          %s9837 = smul.addr %s9836, 8
          %s9838 = scalar_lea.hbm %s7, %s9837
          %s9839 = sshll.u32 %s9830, 4
          %s9840 = int_to_ptr.vmem [resolvable:$true] %s9839
          %s9841 = sshll.u32 %s9838, 4
          %s9842 = int_to_ptr.hbm [resolvable:$true] %s9841
          %9847 = dma.vmem_to_hbm [thread:$0]  %s9840, 4096, %s9842, %s9827, 128, 128, 8
        $region60: #{tpu_custom_call.1} parent=47 // pred_fallthru
          _
      $region48: #{tpu_custom_call.1} parent=5 // pred_fallthru
        _
      %p9848 = scmp.le.s32.totalorder 2, %s18
      // Predicated region
      $region61: #{tpu_custom_call.1} parent=5 // pred_check
        %p9849 = pneg %p9848
      $region62: #{tpu_custom_call.1} parent=5 // pred_check_branch
        %9851 = sbr.rel (%p9849) target = $region64
      $region63: #{tpu_custom_call.1} parent=5 // pred_region
        %s9852 = ssub.s32 %s18, 2
        // Predicated region
        $region65: #{tpu_custom_call.1} parent=63 // pred_check
          %p9853 = pneg %p199
        $region66: #{tpu_custom_call.1} parent=63 // pred_check_branch
          %9855 = sbr.rel (%p9853) target = $region68
        $region67: #{tpu_custom_call.1} parent=63 // pred_region
          %s9856 = sand.u32 %s184, 1
          %s9857 = scalar_lea.sflag [#allocation6], %s9856
          %s9858 = sand.u32 %s184, 1
          %s9859 = smul.addr %s9858, 256
          %s9860 = scalar_lea.vmem [#allocation9], %s9859
          %9862 = dma.done %s9857, 4096
        $region68: #{tpu_custom_call.1} parent=63 // pred_fallthru
          _
      $region64: #{tpu_custom_call.1} parent=5 // pred_fallthru
        _
    $region6: #{tpu_custom_call.1} parent=1 // loop_footer
      %s22 = sadd.s32 1, %s18
    $region7: #{tpu_custom_call.1} parent=1 // loop_footer_branch
      %17 = sbr.rel target = $region3
    $region8: #{tpu_custom_call.1} parent=1 // loop_exit
      _
    %9863 = vsyncpa [#allocation5], 1
    %s9864 = scalar_lea.sflag [#allocation5], 1
    %9865 = vsyncpa %s9864, 1
    %9866 = vsyncpa [#allocation8], 1
    %9867 = vsyncpa [#allocation6], 1
    %s9868 = scalar_lea.sflag [#allocation6], 1
    %9869 = vsyncpa %s9868, 1

</llo_original>
